<compile_context>
chip_gen: v5e
topology: v5e:2x2
jax: 0.10.0
libtpu: 0.0.40
codegen_flags: <defaults>
</compile_context>

<pallas_src>
import functools
import math

import jax
import jax.numpy as jnp
import numpy as np
from jax import lax
from jax.experimental import pallas as pl
from jax.experimental.pallas import tpu as pltpu

# Set to jnp.bfloat16 on v6e/v7x for higher MXU throughput (accumulation stays
# f32).  f32 default keeps full accuracy on every generation (v5e has no bf16
# VPU/EUP path anyway).
_MXU_DTYPE = jnp.float32
_VMEM_LIMIT = 32 * 1024 * 1024


def _dot(a, b):
    return jnp.dot(a.astype(_MXU_DTYPE), b.astype(_MXU_DTYPE),
                   preferred_element_type=jnp.float32)


# ---------------------------------------------------------------------------
# Kernel 1/2: fused conv5x5 + bias + tanh + avgpool2x2 (one matmul per image)
# ---------------------------------------------------------------------------
def _conv_tanh_pool_kernel(x_ref, w_ref, b_ref, o_ref, *, wo, cout):
    # x_ref: (bn, Hs, Ws*4*Cin)      space-to-depth rows, s2d channels minor
    # w_ref: (3*Ws*4*Cin, 4*wo*cout) effective weight, cols ordered (q, ox, co)
    # b_ref: (1, 4*wo*cout)
    # o_ref: (bn, Hs-2, wo*cout)     pooled tanh activations, cols (ox, co)
    bn, hs, _ = x_ref.shape
    ho = hs - 2
    blk = wo * cout
    for i in range(bn):                      # static unroll over the batch block
        img = x_ref[i]                       # (Hs, Ws*4*Cin)
        patches = jnp.concatenate(
            [img[0:ho, :], img[1:ho + 1, :], img[2:ho + 2, :]], axis=-1)
        acc = _dot(patches, w_ref[...]) + b_ref[...]     # == conv pre-activation
        t = jnp.tanh(acc)                                # (ho, 4*wo*cout)
        pooled = 0.25 * (t[:, 0:blk] + t[:, blk:2 * blk]
                         + t[:, 2 * blk:3 * blk] + t[:, 3 * blk:4 * blk])
        o_ref[i] = pooled


def _conv_tanh_pool(x_s2d, w_eff, b_eff, *, wo, cout, bn):
    n, hs, wsc = x_s2d.shape
    ho = hs - 2
    k, ncol = w_eff.shape
    kernel = functools.partial(_conv_tanh_pool_kernel, wo=wo, cout=cout)
    cost = pl.CostEstimate(
        flops=2 * n * ho * k * ncol,
        transcendentals=n * ho * ncol,
        bytes_accessed=4 * (x_s2d.size + w_eff.size + b_eff.size
                            + n * ho * wo * cout),
    )
    return pl.pallas_call(
        kernel,
        out_shape=jax.ShapeDtypeStruct((n, ho, wo * cout), jnp.float32),
        grid=(n // bn,),
        in_specs=[
            pl.BlockSpec((bn, hs, wsc), lambda i: (i, 0, 0)),
            pl.BlockSpec(w_eff.shape, lambda i: (0, 0)),
            pl.BlockSpec(b_eff.shape, lambda i: (0, 0)),
        ],
        out_specs=pl.BlockSpec((bn, ho, wo * cout), lambda i: (i, 0, 0)),
        compiler_params=pltpu.CompilerParams(
            dimension_semantics=("parallel",),
            vmem_limit_bytes=_VMEM_LIMIT,
        ),
        cost_estimate=cost,
    )(x_s2d, w_eff, b_eff)


# ---------------------------------------------------------------------------
# Kernel 3: fused FC1+Tanh -> FC2+Tanh -> FC3 -> Softmax
# ---------------------------------------------------------------------------
def _fc_softmax_kernel(x_ref, w1_ref, b1_ref, w2_ref, b2_ref, w3_ref, b3_ref,
                       o_ref):
    h = jnp.tanh(_dot(x_ref[...], w1_ref[...]) + b1_ref[...])
    h = jnp.tanh(_dot(h, w2_ref[...]) + b2_ref[...])
    logits = _dot(h, w3_ref[...]) + b3_ref[...]          # (bn, 10) exact logits
    m = jnp.max(logits, axis=-1, keepdims=True)
    e = jnp.exp(logits - m)
    s = jnp.sum(e, axis=-1, keepdims=True)
    r = pl.reciprocal(s, approx=True)                    # EUP seed
    r = r * (2.0 - s * r)                                # one Newton step
    o_ref[...] = e * r


def _fc_softmax(feat, w1, b1, w2, b2, w3, b3, *, bn):
    n, d = feat.shape
    consts = (w1, b1, w2, b2, w3, b3)
    cost = pl.CostEstimate(
        flops=2 * n * (400 * 128 + 128 * 128 + 128 * 10),
        transcendentals=n * (128 + 128 + 10),
        bytes_accessed=4 * (feat.size + sum(a.size for a in consts) + n * 10),
    )
    return pl.pallas_call(
        _fc_softmax_kernel,
        out_shape=jax.ShapeDtypeStruct((n, 10), jnp.float32),
        grid=(n // bn,),
        in_specs=[pl.BlockSpec((bn, d), lambda i: (i, 0))]
        + [pl.BlockSpec(a.shape, lambda i: (0, 0)) for a in consts],
        out_specs=pl.BlockSpec((bn, 10), lambda i: (i, 0)),
        compiler_params=pltpu.CompilerParams(
            dimension_semantics=("parallel",),
            vmem_limit_bytes=_VMEM_LIMIT,
        ),
        cost_estimate=cost,
    )(feat, *consts)


# ---------------------------------------------------------------------------
# Wrapper-side (XLA) glue: tiny reshapes/transposes + effective weights
# ---------------------------------------------------------------------------
def _space_to_depth(x):
    # (N, H, W, C) -> (N, H//2, W//2, 4*C);  c' = (y%2)*2*C + (x%2)*C + c
    n, h, w, c = x.shape
    x = x.reshape(n, h // 2, 2, w // 2, 2, c)
    x = x.transpose(0, 1, 3, 2, 4, 5)
    return x.reshape(n, h // 2, w // 2, 4 * c)


def _pooled_conv_matrices(w, b, ws_in):
    """Effective (K, Nout) matmul operands for fused conv5x5 + tanh + avgpool2.

    Kernel contract (per image):
      patches[oy, (u, X, a, bb, ci)] = x[2*(oy+u)+a, 2*X+bb, ci]
      acc = patches @ w_eff + b_eff, cols ordered (q=(dy,dx), ox, co)
      acc[oy, (q, ox, co)] == conv[2*oy+dy, 2*ox+dx, co]   (pre-tanh, exact)
    """
    cout, cin, kh, kw = w.shape              # PyTorch OIHW: (Cout, Cin, 5, 5)
    wo = ws_in - 2
    zero = jnp.zeros((cin, cout), w.dtype)
    blocks = []
    for u in range(3):
        for v in range(3):
            for a in range(2):
                for bb in range(2):
                    cols = []
                    for dy in range(2):
                        for dx in range(2):
                            ky, kx = 2 * u + a - dy, 2 * v + bb - dx
                            ok = 0 <= ky < kh and 0 <= kx < kw
                            cols.append(w[:, :, ky, kx].T if ok else zero)
                    blocks.append(jnp.stack(cols, axis=1))      # (cin, 4, cout)
    e = jnp.stack(blocks, axis=0).reshape(3, 3, 4 * cin, 4, cout)
    # band[v, X, ox] = 1 iff X == ox + v  (block-Toeplitz expansion over ox)
    band = np.zeros((3, ws_in, wo), np.float32)
    for v in range(3):
        band[v, v:v + wo, :] = np.eye(wo, dtype=np.float32)
    w_eff = jnp.einsum("vXo,uvcqd->uXcqod", band, e)
    w_eff = w_eff.reshape(3 * ws_in * 4 * cin, 4 * wo * cout)
    b_eff = jnp.tile(b, 4 * wo)[None, :]
    return w_eff, b_eff


def _fc_matrices(p):
    # Our flatten order is NHWC (oy, ox, c); permute fc1's columns to match
    # PyTorch's NCHW flatten (c, oy, ox), then zero-pad to 128 lanes.
    j = np.arange(400)
    oy, ox, c = j // 80, (j // 16) % 5, j % 16
    perm = c * 25 + oy * 5 + ox
    w1 = jnp.pad(p["w_fc1"][:, perm].T, ((0, 0), (0, 8)))       # (400, 128)
    b1 = jnp.pad(p["b_fc1"], (0, 8))[None, :]
    w2 = jnp.pad(p["w_fc2"].T, ((0, 8), (0, 44)))               # (128, 128)
    b2 = jnp.pad(p["b_fc2"], (0, 44))[None, :]
    w3 = jnp.pad(p["w_fc3"].T, ((0, 44), (0, 0)))               # (128, 10)
    b3 = p["b_fc3"][None, :]
    return w1, b1, w2, b2, w3, b3


# ---------------------------------------------------------------------------
# Deterministic parameter init (PyTorch-style uniform +-1/sqrt(fan_in))
# ---------------------------------------------------------------------------
def init_params(key):
    def uni(k, shape, fan_in):
        b = 1.0 / math.sqrt(fan_in)
        return jax.random.uniform(k, shape, jnp.float32, -b, b)

    ks = jax.random.split(key, 10)
    return dict(
        w_conv1=uni(ks[0], (6, 1, 5, 5), 1 * 25),
        b_conv1=uni(ks[1], (6,), 1 * 25),
        w_conv2=uni(ks[2], (16, 6, 5, 5), 6 * 25),
        b_conv2=uni(ks[3], (16,), 6 * 25),
        w_fc1=uni(ks[4], (120, 400), 400),
        b_fc1=uni(ks[5], (120,), 400),
        w_fc2=uni(ks[6], (84, 120), 120),
        b_fc2=uni(ks[7], (84,), 120),
        w_fc3=uni(ks[8], (10, 84), 84),
        b_fc3=uni(ks[9], (10,), 84),
    )


# ---------------------------------------------------------------------------
# Forward pass
# ---------------------------------------------------------------------------
def lenet5_forward(x, p, *, block_n=8):
    n = x.shape[0]
    n_pad = -(-n // block_n) * block_n
    x = x.reshape(n, 28, 28)                              # Cin == 1
    if n_pad != n:
        x = jnp.pad(x, ((0, n_pad - n), (0, 0), (0, 0)))

    # feature: Conv2d(1,6,5,pad=2) -> Tanh -> AvgPool2d(2)
    xp = jnp.pad(x, ((0, 0), (2, 2), (2, 2)))[..., None]  # (N, 32, 32, 1)
    xs = _space_to_depth(xp).reshape(n_pad, 16, 16 * 4)
    w1e, b1e = _pooled_conv_matrices(p["w_conv1"], p["b_conv1"], ws_in=16)
    y1 = _conv_tanh_pool(xs, w1e, b1e, wo=14, cout=6, bn=block_n)   # (N,14,84)

    # feature: Conv2d(6,16,5) -> Tanh -> AvgPool2d(2)
    x2 = _space_to_depth(y1.reshape(n_pad, 14, 14, 6)).reshape(n_pad, 7, 7 * 24)
    w2e, b2e = _pooled_conv_matrices(p["w_conv2"], p["b_conv2"], ws_in=7)
    y2 = _conv_tanh_pool(x2, w2e, b2e, wo=5, cout=16, bn=block_n)   # (N,5,80)

    # classifier: Flatten -> Linear/Tanh x2 -> Linear -> Softmax
    feat = y2.reshape(n_pad, 400)                         # NHWC flatten
    out = _fc_softmax(feat, *_fc_matrices(p), bn=block_n)
    return out[:n]


# ---------------------------------------------------------------------------
# Pure-JAX reference (for correctness check only)
# ---------------------------------------------------------------------------
def lenet5_reference(x, p):
    dn = lax.conv_dimension_numbers(x.shape, p["w_conv1"].shape,
                                    ("NCHW", "OIHW", "NCHW"))
    y = lax.conv_general_dilated(x, p["w_conv1"], (1, 1), ((2, 2), (2, 2)),
                                 dimension_numbers=dn)
    y = jnp.tanh(y + p["b_conv1"][None, :, None, None])
    y = y.reshape(y.shape[0], y.shape[1], 14, 2, 14, 2).mean(axis=(3, 5))
    dn2 = lax.conv_dimension_numbers(y.shape, p["w_conv2"].shape,
                                     ("NCHW", "OIHW", "NCHW"))
    y = lax.conv_general_dilated(y, p["w_conv2"], (1, 1), "VALID",
                                 dimension_numbers=dn2)
    y = jnp.tanh(y + p["b_conv2"][None, :, None, None])
    y = y.reshape(y.shape[0], y.shape[1], 5, 2, 5, 2).mean(axis=(3, 5))
    f = y.reshape(y.shape[0], -1)
    f = jnp.tanh(f @ p["w_fc1"].T + p["b_fc1"])
    f = jnp.tanh(f @ p["w_fc2"].T + p["b_fc2"])
    logits = f @ p["w_fc3"].T + p["b_fc3"]
    return jax.nn.softmax(logits, axis=1)


if __name__ == "__main__":
    key = jax.random.PRNGKey(0)
    pkey, xkey = jax.random.split(key)
    params = init_params(pkey)
    # MNIST-shaped input (spatial must be 28x28 for the 16*5*5 Flatten); batch=2.
    x = jax.random.normal(xkey, (2, 1, 28, 28), jnp.float32)

    out = jax.jit(lenet5_forward)(x, params)
    out = jax.block_until_ready(out)

    ref = lenet5_reference(x, params)
    assert out.shape == (2, 10), out.shape
    assert bool(jnp.all(jnp.isfinite(out)))
    assert bool(jnp.allclose(jnp.sum(out, axis=1), 1.0, atol=2e-3))
    assert bool(jnp.allclose(out, ref, atol=2e-3, rtol=2e-3)), float(
        jnp.max(jnp.abs(out - ref)))
    print("KERNEL_OK")
</pallas_src>

<mosaic_0001>
module attributes {stable_mosaic.version = 11 : i64} {
  func.func @_conv_tanh_pool_kernel(%arg0: i32, %arg1: memref<8x16x64xf32, #tpu.memory_space<vmem>>, %arg2: memref<192x336xf32, #tpu.memory_space<vmem>>, %arg3: memref<1x336xf32, #tpu.memory_space<vmem>>, %arg4: memref<8x14x84xf32, #tpu.memory_space<vmem>>) attributes {dimension_semantics = [#tpu.dimension_semantics<parallel>], iteration_bounds = array<i64: 1>, scalar_prefetch = 0 : i64, scratch_operands = 0 : i64, tpu.core_type = #tpu.core_type<tc>, window_params = [{transform_indices = @transform_0, window_bounds = array<i64: 8, 16, 64>}, {pipeline_mode = #tpu.pipeline_mode<synchronous>, transform_indices = @transform_1, window_bounds = array<i64: 192, 336>}, {pipeline_mode = #tpu.pipeline_mode<synchronous>, transform_indices = @transform_2, window_bounds = array<i64: 1, 336>}, {transform_indices = @transform_3, window_bounds = array<i64: 8, 14, 84>}]} {
    %c0 = arith.constant 0 : index
    %c0_0 = arith.constant 0 : index
    %c0_1 = arith.constant 0 : index
    %0 = vector.load %arg1[%c0, %c0_0, %c0_1] : memref<8x16x64xf32, #tpu.memory_space<vmem>>, vector<1x16x64xf32>
    %1 = vector.shape_cast %0 : vector<1x16x64xf32> to vector<16x64xf32>
    %2 = vector.extract_strided_slice %1 {offsets = [0, 0], sizes = [14, 64], strides = [1, 1]} : vector<16x64xf32> to vector<14x64xf32>
    %3 = vector.extract_strided_slice %1 {offsets = [1, 0], sizes = [14, 64], strides = [1, 1]} : vector<16x64xf32> to vector<14x64xf32>
    %4 = vector.extract_strided_slice %1 {offsets = [2, 0], sizes = [14, 64], strides = [1, 1]} : vector<16x64xf32> to vector<14x64xf32>
    %5 = tpu.concatenate %2, %3, %4 in 1 : vector<14x64xf32>, vector<14x64xf32>, vector<14x64xf32> -> vector<14x192xf32>
    %c0_2 = arith.constant 0 : index
    %c0_3 = arith.constant 0 : index
    %6 = vector.load %arg2[%c0_2, %c0_3] : memref<192x336xf32, #tpu.memory_space<vmem>>, vector<192x336xf32>
    %cst = arith.constant dense<0.000000e+00> : vector<14x336xf32>
    %7 = tpu.matmul %5, %6, %cst {dimension_numbers = #tpu.dot_dimension_numbers<[1], [0], [0], [1], [0, 0, 1, 1], [], []>} : vector<14x192xf32>, vector<192x336xf32>, vector<14x336xf32> -> vector<14x336xf32>
    %c0_4 = arith.constant 0 : index
    %c0_5 = arith.constant 0 : index
    %8 = vector.load %arg3[%c0_4, %c0_5] : memref<1x336xf32, #tpu.memory_space<vmem>>, vector<1x336xf32>
    %9 = vector.broadcast %8 : vector<1x336xf32> to vector<14x336xf32>
    %10 = arith.addf %7, %9 : vector<14x336xf32>
    %11 = math.tanh %10 : vector<14x336xf32>
    %12 = vector.extract_strided_slice %11 {offsets = [0, 0], sizes = [14, 84], strides = [1, 1]} : vector<14x336xf32> to vector<14x84xf32>
    %13 = vector.extract_strided_slice %11 {offsets = [0, 84], sizes = [14, 84], strides = [1, 1]} : vector<14x336xf32> to vector<14x84xf32>
    %14 = arith.addf %12, %13 : vector<14x84xf32>
    %15 = vector.extract_strided_slice %11 {offsets = [0, 168], sizes = [14, 84], strides = [1, 1]} : vector<14x336xf32> to vector<14x84xf32>
    %16 = arith.addf %14, %15 : vector<14x84xf32>
    %17 = vector.extract_strided_slice %11 {offsets = [0, 252], sizes = [14, 84], strides = [1, 1]} : vector<14x336xf32> to vector<14x84xf32>
    %18 = arith.addf %16, %17 : vector<14x84xf32>
    %cst_6 = arith.constant 2.500000e-01 : f32
    %19 = vector.broadcast %cst_6 : f32 to vector<14x84xf32>
    %20 = arith.mulf %19, %18 : vector<14x84xf32>
    %c0_7 = arith.constant 0 : index
    %c0_8 = arith.constant 0 : index
    %c0_9 = arith.constant 0 : index
    %21 = vector.load %arg4[%c0_7, %c0_8, %c0_9] : memref<8x14x84xf32, #tpu.memory_space<vmem>>, vector<1x14x84xf32>
    %22 = vector.shape_cast %21 : vector<1x14x84xf32> to vector<14x84xf32>
    %23 = vector.shape_cast %20 : vector<14x84xf32> to vector<1x14x84xf32>
    tpu.vector_store %arg4[%c0_7, %c0_8, %c0_9], %23 {strides = array<i32>} : memref<8x14x84xf32, #tpu.memory_space<vmem>>, vector<1x14x84xf32>,
    %c1 = arith.constant 1 : index
    %c0_10 = arith.constant 0 : index
    %c0_11 = arith.constant 0 : index
    %24 = vector.load %arg1[%c1, %c0_10, %c0_11] : memref<8x16x64xf32, #tpu.memory_space<vmem>>, vector<1x16x64xf32>
    %25 = vector.shape_cast %24 : vector<1x16x64xf32> to vector<16x64xf32>
    %26 = vector.extract_strided_slice %25 {offsets = [0, 0], sizes = [14, 64], strides = [1, 1]} : vector<16x64xf32> to vector<14x64xf32>
    %27 = vector.extract_strided_slice %25 {offsets = [1, 0], sizes = [14, 64], strides = [1, 1]} : vector<16x64xf32> to vector<14x64xf32>
    %28 = vector.extract_strided_slice %25 {offsets = [2, 0], sizes = [14, 64], strides = [1, 1]} : vector<16x64xf32> to vector<14x64xf32>
    %29 = tpu.concatenate %26, %27, %28 in 1 : vector<14x64xf32>, vector<14x64xf32>, vector<14x64xf32> -> vector<14x192xf32>
    %c0_12 = arith.constant 0 : index
    %c0_13 = arith.constant 0 : index
    %30 = vector.load %arg2[%c0_12, %c0_13] : memref<192x336xf32, #tpu.memory_space<vmem>>, vector<192x336xf32>
    %cst_14 = arith.constant dense<0.000000e+00> : vector<14x336xf32>
    %31 = tpu.matmul %29, %30, %cst_14 {dimension_numbers = #tpu.dot_dimension_numbers<[1], [0], [0], [1], [0, 0, 1, 1], [], []>} : vector<14x192xf32>, vector<192x336xf32>, vector<14x336xf32> -> vector<14x336xf32>
    %c0_15 = arith.constant 0 : index
    %c0_16 = arith.constant 0 : index
    %32 = vector.load %arg3[%c0_15, %c0_16] : memref<1x336xf32, #tpu.memory_space<vmem>>, vector<1x336xf32>
    %33 = vector.broadcast %32 : vector<1x336xf32> to vector<14x336xf32>
    %34 = arith.addf %31, %33 : vector<14x336xf32>
    %35 = math.tanh %34 : vector<14x336xf32>
    %36 = vector.extract_strided_slice %35 {offsets = [0, 0], sizes = [14, 84], strides = [1, 1]} : vector<14x336xf32> to vector<14x84xf32>
    %37 = vector.extract_strided_slice %35 {offsets = [0, 84], sizes = [14, 84], strides = [1, 1]} : vector<14x336xf32> to vector<14x84xf32>
    %38 = arith.addf %36, %37 : vector<14x84xf32>
    %39 = vector.extract_strided_slice %35 {offsets = [0, 168], sizes = [14, 84], strides = [1, 1]} : vector<14x336xf32> to vector<14x84xf32>
    %40 = arith.addf %38, %39 : vector<14x84xf32>
    %41 = vector.extract_strided_slice %35 {offsets = [0, 252], sizes = [14, 84], strides = [1, 1]} : vector<14x336xf32> to vector<14x84xf32>
    %42 = arith.addf %40, %41 : vector<14x84xf32>
    %cst_17 = arith.constant 2.500000e-01 : f32
    %43 = vector.broadcast %cst_17 : f32 to vector<14x84xf32>
    %44 = arith.mulf %43, %42 : vector<14x84xf32>
    %c1_18 = arith.constant 1 : index
    %c0_19 = arith.constant 0 : index
    %c0_20 = arith.constant 0 : index
    %45 = vector.load %arg4[%c1_18, %c0_19, %c0_20] : memref<8x14x84xf32, #tpu.memory_space<vmem>>, vector<1x14x84xf32>
    %46 = vector.shape_cast %45 : vector<1x14x84xf32> to vector<14x84xf32>
    %47 = vector.shape_cast %44 : vector<14x84xf32> to vector<1x14x84xf32>
    tpu.vector_store %arg4[%c1_18, %c0_19, %c0_20], %47 {strides = array<i32>} : memref<8x14x84xf32, #tpu.memory_space<vmem>>, vector<1x14x84xf32>,
    %c2 = arith.constant 2 : index
    %c0_21 = arith.constant 0 : index
    %c0_22 = arith.constant 0 : index
    %48 = vector.load %arg1[%c2, %c0_21, %c0_22] : memref<8x16x64xf32, #tpu.memory_space<vmem>>, vector<1x16x64xf32>
    %49 = vector.shape_cast %48 : vector<1x16x64xf32> to vector<16x64xf32>
    %50 = vector.extract_strided_slice %49 {offsets = [0, 0], sizes = [14, 64], strides = [1, 1]} : vector<16x64xf32> to vector<14x64xf32>
    %51 = vector.extract_strided_slice %49 {offsets = [1, 0], sizes = [14, 64], strides = [1, 1]} : vector<16x64xf32> to vector<14x64xf32>
    %52 = vector.extract_strided_slice %49 {offsets = [2, 0], sizes = [14, 64], strides = [1, 1]} : vector<16x64xf32> to vector<14x64xf32>
    %53 = tpu.concatenate %50, %51, %52 in 1 : vector<14x64xf32>, vector<14x64xf32>, vector<14x64xf32> -> vector<14x192xf32>
    %c0_23 = arith.constant 0 : index
    %c0_24 = arith.constant 0 : index
    %54 = vector.load %arg2[%c0_23, %c0_24] : memref<192x336xf32, #tpu.memory_space<vmem>>, vector<192x336xf32>
    %cst_25 = arith.constant dense<0.000000e+00> : vector<14x336xf32>
    %55 = tpu.matmul %53, %54, %cst_25 {dimension_numbers = #tpu.dot_dimension_numbers<[1], [0], [0], [1], [0, 0, 1, 1], [], []>} : vector<14x192xf32>, vector<192x336xf32>, vector<14x336xf32> -> vector<14x336xf32>
    %c0_26 = arith.constant 0 : index
    %c0_27 = arith.constant 0 : index
    %56 = vector.load %arg3[%c0_26, %c0_27] : memref<1x336xf32, #tpu.memory_space<vmem>>, vector<1x336xf32>
    %57 = vector.broadcast %56 : vector<1x336xf32> to vector<14x336xf32>
    %58 = arith.addf %55, %57 : vector<14x336xf32>
    %59 = math.tanh %58 : vector<14x336xf32>
    %60 = vector.extract_strided_slice %59 {offsets = [0, 0], sizes = [14, 84], strides = [1, 1]} : vector<14x336xf32> to vector<14x84xf32>
    %61 = vector.extract_strided_slice %59 {offsets = [0, 84], sizes = [14, 84], strides = [1, 1]} : vector<14x336xf32> to vector<14x84xf32>
    %62 = arith.addf %60, %61 : vector<14x84xf32>
    %63 = vector.extract_strided_slice %59 {offsets = [0, 168], sizes = [14, 84], strides = [1, 1]} : vector<14x336xf32> to vector<14x84xf32>
    %64 = arith.addf %62, %63 : vector<14x84xf32>
    %65 = vector.extract_strided_slice %59 {offsets = [0, 252], sizes = [14, 84], strides = [1, 1]} : vector<14x336xf32> to vector<14x84xf32>
    %66 = arith.addf %64, %65 : vector<14x84xf32>
    %cst_28 = arith.constant 2.500000e-01 : f32
    %67 = vector.broadcast %cst_28 : f32 to vector<14x84xf32>
    %68 = arith.mulf %67, %66 : vector<14x84xf32>
    %c2_29 = arith.constant 2 : index
    %c0_30 = arith.constant 0 : index
    %c0_31 = arith.constant 0 : index
    %69 = vector.load %arg4[%c2_29, %c0_30, %c0_31] : memref<8x14x84xf32, #tpu.memory_space<vmem>>, vector<1x14x84xf32>
    %70 = vector.shape_cast %69 : vector<1x14x84xf32> to vector<14x84xf32>
    %71 = vector.shape_cast %68 : vector<14x84xf32> to vector<1x14x84xf32>
    tpu.vector_store %arg4[%c2_29, %c0_30, %c0_31], %71 {strides = array<i32>} : memref<8x14x84xf32, #tpu.memory_space<vmem>>, vector<1x14x84xf32>,
    %c3 = arith.constant 3 : index
    %c0_32 = arith.constant 0 : index
    %c0_33 = arith.constant 0 : index
    %72 = vector.load %arg1[%c3, %c0_32, %c0_33] : memref<8x16x64xf32, #tpu.memory_space<vmem>>, vector<1x16x64xf32>
    %73 = vector.shape_cast %72 : vector<1x16x64xf32> to vector<16x64xf32>
    %74 = vector.extract_strided_slice %73 {offsets = [0, 0], sizes = [14, 64], strides = [1, 1]} : vector<16x64xf32> to vector<14x64xf32>
    %75 = vector.extract_strided_slice %73 {offsets = [1, 0], sizes = [14, 64], strides = [1, 1]} : vector<16x64xf32> to vector<14x64xf32>
    %76 = vector.extract_strided_slice %73 {offsets = [2, 0], sizes = [14, 64], strides = [1, 1]} : vector<16x64xf32> to vector<14x64xf32>
    %77 = tpu.concatenate %74, %75, %76 in 1 : vector<14x64xf32>, vector<14x64xf32>, vector<14x64xf32> -> vector<14x192xf32>
    %c0_34 = arith.constant 0 : index
    %c0_35 = arith.constant 0 : index
    %78 = vector.load %arg2[%c0_34, %c0_35] : memref<192x336xf32, #tpu.memory_space<vmem>>, vector<192x336xf32>
    %cst_36 = arith.constant dense<0.000000e+00> : vector<14x336xf32>
    %79 = tpu.matmul %77, %78, %cst_36 {dimension_numbers = #tpu.dot_dimension_numbers<[1], [0], [0], [1], [0, 0, 1, 1], [], []>} : vector<14x192xf32>, vector<192x336xf32>, vector<14x336xf32> -> vector<14x336xf32>
    %c0_37 = arith.constant 0 : index
    %c0_38 = arith.constant 0 : index
    %80 = vector.load %arg3[%c0_37, %c0_38] : memref<1x336xf32, #tpu.memory_space<vmem>>, vector<1x336xf32>
    %81 = vector.broadcast %80 : vector<1x336xf32> to vector<14x336xf32>
    %82 = arith.addf %79, %81 : vector<14x336xf32>
    %83 = math.tanh %82 : vector<14x336xf32>
    %84 = vector.extract_strided_slice %83 {offsets = [0, 0], sizes = [14, 84], strides = [1, 1]} : vector<14x336xf32> to vector<14x84xf32>
    %85 = vector.extract_strided_slice %83 {offsets = [0, 84], sizes = [14, 84], strides = [1, 1]} : vector<14x336xf32> to vector<14x84xf32>
    %86 = arith.addf %84, %85 : vector<14x84xf32>
    %87 = vector.extract_strided_slice %83 {offsets = [0, 168], sizes = [14, 84], strides = [1, 1]} : vector<14x336xf32> to vector<14x84xf32>
    %88 = arith.addf %86, %87 : vector<14x84xf32>
    %89 = vector.extract_strided_slice %83 {offsets = [0, 252], sizes = [14, 84], strides = [1, 1]} : vector<14x336xf32> to vector<14x84xf32>
    %90 = arith.addf %88, %89 : vector<14x84xf32>
    %cst_39 = arith.constant 2.500000e-01 : f32
    %91 = vector.broadcast %cst_39 : f32 to vector<14x84xf32>
    %92 = arith.mulf %91, %90 : vector<14x84xf32>
    %c3_40 = arith.constant 3 : index
    %c0_41 = arith.constant 0 : index
    %c0_42 = arith.constant 0 : index
    %93 = vector.load %arg4[%c3_40, %c0_41, %c0_42] : memref<8x14x84xf32, #tpu.memory_space<vmem>>, vector<1x14x84xf32>
    %94 = vector.shape_cast %93 : vector<1x14x84xf32> to vector<14x84xf32>
    %95 = vector.shape_cast %92 : vector<14x84xf32> to vector<1x14x84xf32>
    tpu.vector_store %arg4[%c3_40, %c0_41, %c0_42], %95 {strides = array<i32>} : memref<8x14x84xf32, #tpu.memory_space<vmem>>, vector<1x14x84xf32>,
    %c4 = arith.constant 4 : index
    %c0_43 = arith.constant 0 : index
    %c0_44 = arith.constant 0 : index
    %96 = vector.load %arg1[%c4, %c0_43, %c0_44] : memref<8x16x64xf32, #tpu.memory_space<vmem>>, vector<1x16x64xf32>
    %97 = vector.shape_cast %96 : vector<1x16x64xf32> to vector<16x64xf32>
    %98 = vector.extract_strided_slice %97 {offsets = [0, 0], sizes = [14, 64], strides = [1, 1]} : vector<16x64xf32> to vector<14x64xf32>
    %99 = vector.extract_strided_slice %97 {offsets = [1, 0], sizes = [14, 64], strides = [1, 1]} : vector<16x64xf32> to vector<14x64xf32>
    %100 = vector.extract_strided_slice %97 {offsets = [2, 0], sizes = [14, 64], strides = [1, 1]} : vector<16x64xf32> to vector<14x64xf32>
    %101 = tpu.concatenate %98, %99, %100 in 1 : vector<14x64xf32>, vector<14x64xf32>, vector<14x64xf32> -> vector<14x192xf32>
    %c0_45 = arith.constant 0 : index
    %c0_46 = arith.constant 0 : index
    %102 = vector.load %arg2[%c0_45, %c0_46] : memref<192x336xf32, #tpu.memory_space<vmem>>, vector<192x336xf32>
    %cst_47 = arith.constant dense<0.000000e+00> : vector<14x336xf32>
    %103 = tpu.matmul %101, %102, %cst_47 {dimension_numbers = #tpu.dot_dimension_numbers<[1], [0], [0], [1], [0, 0, 1, 1], [], []>} : vector<14x192xf32>, vector<192x336xf32>, vector<14x336xf32> -> vector<14x336xf32>
    %c0_48 = arith.constant 0 : index
    %c0_49 = arith.constant 0 : index
    %104 = vector.load %arg3[%c0_48, %c0_49] : memref<1x336xf32, #tpu.memory_space<vmem>>, vector<1x336xf32>
    %105 = vector.broadcast %104 : vector<1x336xf32> to vector<14x336xf32>
    %106 = arith.addf %103, %105 : vector<14x336xf32>
    %107 = math.tanh %106 : vector<14x336xf32>
    %108 = vector.extract_strided_slice %107 {offsets = [0, 0], sizes = [14, 84], strides = [1, 1]} : vector<14x336xf32> to vector<14x84xf32>
    %109 = vector.extract_strided_slice %107 {offsets = [0, 84], sizes = [14, 84], strides = [1, 1]} : vector<14x336xf32> to vector<14x84xf32>
    %110 = arith.addf %108, %109 : vector<14x84xf32>
    %111 = vector.extract_strided_slice %107 {offsets = [0, 168], sizes = [14, 84], strides = [1, 1]} : vector<14x336xf32> to vector<14x84xf32>
    %112 = arith.addf %110, %111 : vector<14x84xf32>
    %113 = vector.extract_strided_slice %107 {offsets = [0, 252], sizes = [14, 84], strides = [1, 1]} : vector<14x336xf32> to vector<14x84xf32>
    %114 = arith.addf %112, %113 : vector<14x84xf32>
    %cst_50 = arith.constant 2.500000e-01 : f32
    %115 = vector.broadcast %cst_50 : f32 to vector<14x84xf32>
    %116 = arith.mulf %115, %114 : vector<14x84xf32>
    %c4_51 = arith.constant 4 : index
    %c0_52 = arith.constant 0 : index
    %c0_53 = arith.constant 0 : index
    %117 = vector.load %arg4[%c4_51, %c0_52, %c0_53] : memref<8x14x84xf32, #tpu.memory_space<vmem>>, vector<1x14x84xf32>
    %118 = vector.shape_cast %117 : vector<1x14x84xf32> to vector<14x84xf32>
    %119 = vector.shape_cast %116 : vector<14x84xf32> to vector<1x14x84xf32>
    tpu.vector_store %arg4[%c4_51, %c0_52, %c0_53], %119 {strides = array<i32>} : memref<8x14x84xf32, #tpu.memory_space<vmem>>, vector<1x14x84xf32>,
    %c5 = arith.constant 5 : index
    %c0_54 = arith.constant 0 : index
    %c0_55 = arith.constant 0 : index
    %120 = vector.load %arg1[%c5, %c0_54, %c0_55] : memref<8x16x64xf32, #tpu.memory_space<vmem>>, vector<1x16x64xf32>
    %121 = vector.shape_cast %120 : vector<1x16x64xf32> to vector<16x64xf32>
    %122 = vector.extract_strided_slice %121 {offsets = [0, 0], sizes = [14, 64], strides = [1, 1]} : vector<16x64xf32> to vector<14x64xf32>
    %123 = vector.extract_strided_slice %121 {offsets = [1, 0], sizes = [14, 64], strides = [1, 1]} : vector<16x64xf32> to vector<14x64xf32>
    %124 = vector.extract_strided_slice %121 {offsets = [2, 0], sizes = [14, 64], strides = [1, 1]} : vector<16x64xf32> to vector<14x64xf32>
    %125 = tpu.concatenate %122, %123, %124 in 1 : vector<14x64xf32>, vector<14x64xf32>, vector<14x64xf32> -> vector<14x192xf32>
    %c0_56 = arith.constant 0 : index
    %c0_57 = arith.constant 0 : index
    %126 = vector.load %arg2[%c0_56, %c0_57] : memref<192x336xf32, #tpu.memory_space<vmem>>, vector<192x336xf32>
    %cst_58 = arith.constant dense<0.000000e+00> : vector<14x336xf32>
    %127 = tpu.matmul %125, %126, %cst_58 {dimension_numbers = #tpu.dot_dimension_numbers<[1], [0], [0], [1], [0, 0, 1, 1], [], []>} : vector<14x192xf32>, vector<192x336xf32>, vector<14x336xf32> -> vector<14x336xf32>
    %c0_59 = arith.constant 0 : index
    %c0_60 = arith.constant 0 : index
    %128 = vector.load %arg3[%c0_59, %c0_60] : memref<1x336xf32, #tpu.memory_space<vmem>>, vector<1x336xf32>
    %129 = vector.broadcast %128 : vector<1x336xf32> to vector<14x336xf32>
    %130 = arith.addf %127, %129 : vector<14x336xf32>
    %131 = math.tanh %130 : vector<14x336xf32>
    %132 = vector.extract_strided_slice %131 {offsets = [0, 0], sizes = [14, 84], strides = [1, 1]} : vector<14x336xf32> to vector<14x84xf32>
    %133 = vector.extract_strided_slice %131 {offsets = [0, 84], sizes = [14, 84], strides = [1, 1]} : vector<14x336xf32> to vector<14x84xf32>
    %134 = arith.addf %132, %133 : vector<14x84xf32>
    %135 = vector.extract_strided_slice %131 {offsets = [0, 168], sizes = [14, 84], strides = [1, 1]} : vector<14x336xf32> to vector<14x84xf32>
    %136 = arith.addf %134, %135 : vector<14x84xf32>
    %137 = vector.extract_strided_slice %131 {offsets = [0, 252], sizes = [14, 84], strides = [1, 1]} : vector<14x336xf32> to vector<14x84xf32>
    %138 = arith.addf %136, %137 : vector<14x84xf32>
    %cst_61 = arith.constant 2.500000e-01 : f32
    %139 = vector.broadcast %cst_61 : f32 to vector<14x84xf32>
    %140 = arith.mulf %139, %138 : vector<14x84xf32>
    %c5_62 = arith.constant 5 : index
    %c0_63 = arith.constant 0 : index
    %c0_64 = arith.constant 0 : index
    %141 = vector.load %arg4[%c5_62, %c0_63, %c0_64] : memref<8x14x84xf32, #tpu.memory_space<vmem>>, vector<1x14x84xf32>
    %142 = vector.shape_cast %141 : vector<1x14x84xf32> to vector<14x84xf32>
    %143 = vector.shape_cast %140 : vector<14x84xf32> to vector<1x14x84xf32>
    tpu.vector_store %arg4[%c5_62, %c0_63, %c0_64], %143 {strides = array<i32>} : memref<8x14x84xf32, #tpu.memory_space<vmem>>, vector<1x14x84xf32>,
    %c6 = arith.constant 6 : index
    %c0_65 = arith.constant 0 : index
    %c0_66 = arith.constant 0 : index
    %144 = vector.load %arg1[%c6, %c0_65, %c0_66] : memref<8x16x64xf32, #tpu.memory_space<vmem>>, vector<1x16x64xf32>
    %145 = vector.shape_cast %144 : vector<1x16x64xf32> to vector<16x64xf32>
    %146 = vector.extract_strided_slice %145 {offsets = [0, 0], sizes = [14, 64], strides = [1, 1]} : vector<16x64xf32> to vector<14x64xf32>
    %147 = vector.extract_strided_slice %145 {offsets = [1, 0], sizes = [14, 64], strides = [1, 1]} : vector<16x64xf32> to vector<14x64xf32>
    %148 = vector.extract_strided_slice %145 {offsets = [2, 0], sizes = [14, 64], strides = [1, 1]} : vector<16x64xf32> to vector<14x64xf32>
    %149 = tpu.concatenate %146, %147, %148 in 1 : vector<14x64xf32>, vector<14x64xf32>, vector<14x64xf32> -> vector<14x192xf32>
    %c0_67 = arith.constant 0 : index
    %c0_68 = arith.constant 0 : index
    %150 = vector.load %arg2[%c0_67, %c0_68] : memref<192x336xf32, #tpu.memory_space<vmem>>, vector<192x336xf32>
    %cst_69 = arith.constant dense<0.000000e+00> : vector<14x336xf32>
    %151 = tpu.matmul %149, %150, %cst_69 {dimension_numbers = #tpu.dot_dimension_numbers<[1], [0], [0], [1], [0, 0, 1, 1], [], []>} : vector<14x192xf32>, vector<192x336xf32>, vector<14x336xf32> -> vector<14x336xf32>
    %c0_70 = arith.constant 0 : index
    %c0_71 = arith.constant 0 : index
    %152 = vector.load %arg3[%c0_70, %c0_71] : memref<1x336xf32, #tpu.memory_space<vmem>>, vector<1x336xf32>
    %153 = vector.broadcast %152 : vector<1x336xf32> to vector<14x336xf32>
    %154 = arith.addf %151, %153 : vector<14x336xf32>
    %155 = math.tanh %154 : vector<14x336xf32>
    %156 = vector.extract_strided_slice %155 {offsets = [0, 0], sizes = [14, 84], strides = [1, 1]} : vector<14x336xf32> to vector<14x84xf32>
    %157 = vector.extract_strided_slice %155 {offsets = [0, 84], sizes = [14, 84], strides = [1, 1]} : vector<14x336xf32> to vector<14x84xf32>
    %158 = arith.addf %156, %157 : vector<14x84xf32>
    %159 = vector.extract_strided_slice %155 {offsets = [0, 168], sizes = [14, 84], strides = [1, 1]} : vector<14x336xf32> to vector<14x84xf32>
    %160 = arith.addf %158, %159 : vector<14x84xf32>
    %161 = vector.extract_strided_slice %155 {offsets = [0, 252], sizes = [14, 84], strides = [1, 1]} : vector<14x336xf32> to vector<14x84xf32>
    %162 = arith.addf %160, %161 : vector<14x84xf32>
    %cst_72 = arith.constant 2.500000e-01 : f32
    %163 = vector.broadcast %cst_72 : f32 to vector<14x84xf32>
    %164 = arith.mulf %163, %162 : vector<14x84xf32>
    %c6_73 = arith.constant 6 : index
    %c0_74 = arith.constant 0 : index
    %c0_75 = arith.constant 0 : index
    %165 = vector.load %arg4[%c6_73, %c0_74, %c0_75] : memref<8x14x84xf32, #tpu.memory_space<vmem>>, vector<1x14x84xf32>
    %166 = vector.shape_cast %165 : vector<1x14x84xf32> to vector<14x84xf32>
    %167 = vector.shape_cast %164 : vector<14x84xf32> to vector<1x14x84xf32>
    tpu.vector_store %arg4[%c6_73, %c0_74, %c0_75], %167 {strides = array<i32>} : memref<8x14x84xf32, #tpu.memory_space<vmem>>, vector<1x14x84xf32>,
    %c7 = arith.constant 7 : index
    %c0_76 = arith.constant 0 : index
    %c0_77 = arith.constant 0 : index
    %168 = vector.load %arg1[%c7, %c0_76, %c0_77] : memref<8x16x64xf32, #tpu.memory_space<vmem>>, vector<1x16x64xf32>
    %169 = vector.shape_cast %168 : vector<1x16x64xf32> to vector<16x64xf32>
    %170 = vector.extract_strided_slice %169 {offsets = [0, 0], sizes = [14, 64], strides = [1, 1]} : vector<16x64xf32> to vector<14x64xf32>
    %171 = vector.extract_strided_slice %169 {offsets = [1, 0], sizes = [14, 64], strides = [1, 1]} : vector<16x64xf32> to vector<14x64xf32>
    %172 = vector.extract_strided_slice %169 {offsets = [2, 0], sizes = [14, 64], strides = [1, 1]} : vector<16x64xf32> to vector<14x64xf32>
    %173 = tpu.concatenate %170, %171, %172 in 1 : vector<14x64xf32>, vector<14x64xf32>, vector<14x64xf32> -> vector<14x192xf32>
    %c0_78 = arith.constant 0 : index
    %c0_79 = arith.constant 0 : index
    %174 = vector.load %arg2[%c0_78, %c0_79] : memref<192x336xf32, #tpu.memory_space<vmem>>, vector<192x336xf32>
    %cst_80 = arith.constant dense<0.000000e+00> : vector<14x336xf32>
    %175 = tpu.matmul %173, %174, %cst_80 {dimension_numbers = #tpu.dot_dimension_numbers<[1], [0], [0], [1], [0, 0, 1, 1], [], []>} : vector<14x192xf32>, vector<192x336xf32>, vector<14x336xf32> -> vector<14x336xf32>
    %c0_81 = arith.constant 0 : index
    %c0_82 = arith.constant 0 : index
    %176 = vector.load %arg3[%c0_81, %c0_82] : memref<1x336xf32, #tpu.memory_space<vmem>>, vector<1x336xf32>
    %177 = vector.broadcast %176 : vector<1x336xf32> to vector<14x336xf32>
    %178 = arith.addf %175, %177 : vector<14x336xf32>
    %179 = math.tanh %178 : vector<14x336xf32>
    %180 = vector.extract_strided_slice %179 {offsets = [0, 0], sizes = [14, 84], strides = [1, 1]} : vector<14x336xf32> to vector<14x84xf32>
    %181 = vector.extract_strided_slice %179 {offsets = [0, 84], sizes = [14, 84], strides = [1, 1]} : vector<14x336xf32> to vector<14x84xf32>
    %182 = arith.addf %180, %181 : vector<14x84xf32>
    %183 = vector.extract_strided_slice %179 {offsets = [0, 168], sizes = [14, 84], strides = [1, 1]} : vector<14x336xf32> to vector<14x84xf32>
    %184 = arith.addf %182, %183 : vector<14x84xf32>
    %185 = vector.extract_strided_slice %179 {offsets = [0, 252], sizes = [14, 84], strides = [1, 1]} : vector<14x336xf32> to vector<14x84xf32>
    %186 = arith.addf %184, %185 : vector<14x84xf32>
    %cst_83 = arith.constant 2.500000e-01 : f32
    %187 = vector.broadcast %cst_83 : f32 to vector<14x84xf32>
    %188 = arith.mulf %187, %186 : vector<14x84xf32>
    %c7_84 = arith.constant 7 : index
    %c0_85 = arith.constant 0 : index
    %c0_86 = arith.constant 0 : index
    %189 = vector.load %arg4[%c7_84, %c0_85, %c0_86] : memref<8x14x84xf32, #tpu.memory_space<vmem>>, vector<1x14x84xf32>
    %190 = vector.shape_cast %189 : vector<1x14x84xf32> to vector<14x84xf32>
    %191 = vector.shape_cast %188 : vector<14x84xf32> to vector<1x14x84xf32>
    tpu.vector_store %arg4[%c7_84, %c0_85, %c0_86], %191 {strides = array<i32>} : memref<8x14x84xf32, #tpu.memory_space<vmem>>, vector<1x14x84xf32>,
    return
  }
  func.func @transform_0(%arg0: i32) -> (i32, i32, i32) {
    %c0_i32 = arith.constant 0 : i32
    %c0_i32_0 = arith.constant 0 : i32
    %c0_i32_1 = arith.constant 0 : i32
    return %arg0, %c0_i32, %c0_i32_0 : i32, i32, i32
  }
  func.func @transform_1(%arg0: i32) -> (i32, i32) {
    %c0_i32 = arith.constant 0 : i32
    %c0_i32_0 = arith.constant 0 : i32
    %c0_i32_1 = arith.constant 0 : i32
    return %c0_i32, %c0_i32_0 : i32, i32
  }
  func.func @transform_2(%arg0: i32) -> (i32, i32) {
    %c0_i32 = arith.constant 0 : i32
    %c0_i32_0 = arith.constant 0 : i32
    %c0_i32_1 = arith.constant 0 : i32
    return %c0_i32, %c0_i32_0 : i32, i32
  }
  func.func @transform_3(%arg0: i32) -> (i32, i32, i32) {
    %c0_i32 = arith.constant 0 : i32
    %c0_i32_0 = arith.constant 0 : i32
    %c0_i32_1 = arith.constant 0 : i32
    return %arg0, %c0_i32, %c0_i32_0 : i32, i32, i32
  }
}

module attributes {stable_mosaic.version = 11 : i64} {
  func.func @_conv_tanh_pool_kernel(%arg0: i32, %arg1: memref<8x7x168xf32, #tpu.memory_space<vmem>>, %arg2: memref<504x320xf32, #tpu.memory_space<vmem>>, %arg3: memref<1x320xf32, #tpu.memory_space<vmem>>, %arg4: memref<8x5x80xf32, #tpu.memory_space<vmem>>) attributes {dimension_semantics = [#tpu.dimension_semantics<parallel>], iteration_bounds = array<i64: 1>, scalar_prefetch = 0 : i64, scratch_operands = 0 : i64, tpu.core_type = #tpu.core_type<tc>, window_params = [{transform_indices = @transform_0, window_bounds = array<i64: 8, 7, 168>}, {pipeline_mode = #tpu.pipeline_mode<synchronous>, transform_indices = @transform_1, window_bounds = array<i64: 504, 320>}, {pipeline_mode = #tpu.pipeline_mode<synchronous>, transform_indices = @transform_2, window_bounds = array<i64: 1, 320>}, {transform_indices = @transform_3, window_bounds = array<i64: 8, 5, 80>}]} {
    %c0 = arith.constant 0 : index
    %c0_0 = arith.constant 0 : index
    %c0_1 = arith.constant 0 : index
    %0 = vector.load %arg1[%c0, %c0_0, %c0_1] : memref<8x7x168xf32, #tpu.memory_space<vmem>>, vector<1x7x168xf32>
    %1 = vector.shape_cast %0 : vector<1x7x168xf32> to vector<7x168xf32>
    %2 = vector.extract_strided_slice %1 {offsets = [0, 0], sizes = [5, 168], strides = [1, 1]} : vector<7x168xf32> to vector<5x168xf32>
    %3 = vector.extract_strided_slice %1 {offsets = [1, 0], sizes = [5, 168], strides = [1, 1]} : vector<7x168xf32> to vector<5x168xf32>
    %4 = vector.extract_strided_slice %1 {offsets = [2, 0], sizes = [5, 168], strides = [1, 1]} : vector<7x168xf32> to vector<5x168xf32>
    %5 = tpu.concatenate %2, %3, %4 in 1 : vector<5x168xf32>, vector<5x168xf32>, vector<5x168xf32> -> vector<5x504xf32>
    %c0_2 = arith.constant 0 : index
    %c0_3 = arith.constant 0 : index
    %6 = vector.load %arg2[%c0_2, %c0_3] : memref<504x320xf32, #tpu.memory_space<vmem>>, vector<504x320xf32>
    %cst = arith.constant dense<0.000000e+00> : vector<5x320xf32>
    %7 = tpu.matmul %5, %6, %cst {dimension_numbers = #tpu.dot_dimension_numbers<[1], [0], [0], [1], [0, 0, 1, 1], [], []>} : vector<5x504xf32>, vector<504x320xf32>, vector<5x320xf32> -> vector<5x320xf32>
    %c0_4 = arith.constant 0 : index
    %c0_5 = arith.constant 0 : index
    %8 = vector.load %arg3[%c0_4, %c0_5] : memref<1x320xf32, #tpu.memory_space<vmem>>, vector<1x320xf32>
    %9 = vector.broadcast %8 : vector<1x320xf32> to vector<5x320xf32>
    %10 = arith.addf %7, %9 : vector<5x320xf32>
    %11 = math.tanh %10 : vector<5x320xf32>
    %12 = vector.extract_strided_slice %11 {offsets = [0, 0], sizes = [5, 80], strides = [1, 1]} : vector<5x320xf32> to vector<5x80xf32>
    %13 = vector.extract_strided_slice %11 {offsets = [0, 80], sizes = [5, 80], strides = [1, 1]} : vector<5x320xf32> to vector<5x80xf32>
    %14 = arith.addf %12, %13 : vector<5x80xf32>
    %15 = vector.extract_strided_slice %11 {offsets = [0, 160], sizes = [5, 80], strides = [1, 1]} : vector<5x320xf32> to vector<5x80xf32>
    %16 = arith.addf %14, %15 : vector<5x80xf32>
    %17 = vector.extract_strided_slice %11 {offsets = [0, 240], sizes = [5, 80], strides = [1, 1]} : vector<5x320xf32> to vector<5x80xf32>
    %18 = arith.addf %16, %17 : vector<5x80xf32>
    %cst_6 = arith.constant 2.500000e-01 : f32
    %19 = vector.broadcast %cst_6 : f32 to vector<5x80xf32>
    %20 = arith.mulf %19, %18 : vector<5x80xf32>
    %c0_7 = arith.constant 0 : index
    %c0_8 = arith.constant 0 : index
    %c0_9 = arith.constant 0 : index
    %21 = vector.load %arg4[%c0_7, %c0_8, %c0_9] : memref<8x5x80xf32, #tpu.memory_space<vmem>>, vector<1x5x80xf32>
    %22 = vector.shape_cast %21 : vector<1x5x80xf32> to vector<5x80xf32>
    %23 = vector.shape_cast %20 : vector<5x80xf32> to vector<1x5x80xf32>
    tpu.vector_store %arg4[%c0_7, %c0_8, %c0_9], %23 {strides = array<i32>} : memref<8x5x80xf32, #tpu.memory_space<vmem>>, vector<1x5x80xf32>,
    %c1 = arith.constant 1 : index
    %c0_10 = arith.constant 0 : index
    %c0_11 = arith.constant 0 : index
    %24 = vector.load %arg1[%c1, %c0_10, %c0_11] : memref<8x7x168xf32, #tpu.memory_space<vmem>>, vector<1x7x168xf32>
    %25 = vector.shape_cast %24 : vector<1x7x168xf32> to vector<7x168xf32>
    %26 = vector.extract_strided_slice %25 {offsets = [0, 0], sizes = [5, 168], strides = [1, 1]} : vector<7x168xf32> to vector<5x168xf32>
    %27 = vector.extract_strided_slice %25 {offsets = [1, 0], sizes = [5, 168], strides = [1, 1]} : vector<7x168xf32> to vector<5x168xf32>
    %28 = vector.extract_strided_slice %25 {offsets = [2, 0], sizes = [5, 168], strides = [1, 1]} : vector<7x168xf32> to vector<5x168xf32>
    %29 = tpu.concatenate %26, %27, %28 in 1 : vector<5x168xf32>, vector<5x168xf32>, vector<5x168xf32> -> vector<5x504xf32>
    %c0_12 = arith.constant 0 : index
    %c0_13 = arith.constant 0 : index
    %30 = vector.load %arg2[%c0_12, %c0_13] : memref<504x320xf32, #tpu.memory_space<vmem>>, vector<504x320xf32>
    %cst_14 = arith.constant dense<0.000000e+00> : vector<5x320xf32>
    %31 = tpu.matmul %29, %30, %cst_14 {dimension_numbers = #tpu.dot_dimension_numbers<[1], [0], [0], [1], [0, 0, 1, 1], [], []>} : vector<5x504xf32>, vector<504x320xf32>, vector<5x320xf32> -> vector<5x320xf32>
    %c0_15 = arith.constant 0 : index
    %c0_16 = arith.constant 0 : index
    %32 = vector.load %arg3[%c0_15, %c0_16] : memref<1x320xf32, #tpu.memory_space<vmem>>, vector<1x320xf32>
    %33 = vector.broadcast %32 : vector<1x320xf32> to vector<5x320xf32>
    %34 = arith.addf %31, %33 : vector<5x320xf32>
    %35 = math.tanh %34 : vector<5x320xf32>
    %36 = vector.extract_strided_slice %35 {offsets = [0, 0], sizes = [5, 80], strides = [1, 1]} : vector<5x320xf32> to vector<5x80xf32>
    %37 = vector.extract_strided_slice %35 {offsets = [0, 80], sizes = [5, 80], strides = [1, 1]} : vector<5x320xf32> to vector<5x80xf32>
    %38 = arith.addf %36, %37 : vector<5x80xf32>
    %39 = vector.extract_strided_slice %35 {offsets = [0, 160], sizes = [5, 80], strides = [1, 1]} : vector<5x320xf32> to vector<5x80xf32>
    %40 = arith.addf %38, %39 : vector<5x80xf32>
    %41 = vector.extract_strided_slice %35 {offsets = [0, 240], sizes = [5, 80], strides = [1, 1]} : vector<5x320xf32> to vector<5x80xf32>
    %42 = arith.addf %40, %41 : vector<5x80xf32>
    %cst_17 = arith.constant 2.500000e-01 : f32
    %43 = vector.broadcast %cst_17 : f32 to vector<5x80xf32>
    %44 = arith.mulf %43, %42 : vector<5x80xf32>
    %c1_18 = arith.constant 1 : index
    %c0_19 = arith.constant 0 : index
    %c0_20 = arith.constant 0 : index
    %45 = vector.load %arg4[%c1_18, %c0_19, %c0_20] : memref<8x5x80xf32, #tpu.memory_space<vmem>>, vector<1x5x80xf32>
    %46 = vector.shape_cast %45 : vector<1x5x80xf32> to vector<5x80xf32>
    %47 = vector.shape_cast %44 : vector<5x80xf32> to vector<1x5x80xf32>
    tpu.vector_store %arg4[%c1_18, %c0_19, %c0_20], %47 {strides = array<i32>} : memref<8x5x80xf32, #tpu.memory_space<vmem>>, vector<1x5x80xf32>,
    %c2 = arith.constant 2 : index
    %c0_21 = arith.constant 0 : index
    %c0_22 = arith.constant 0 : index
    %48 = vector.load %arg1[%c2, %c0_21, %c0_22] : memref<8x7x168xf32, #tpu.memory_space<vmem>>, vector<1x7x168xf32>
    %49 = vector.shape_cast %48 : vector<1x7x168xf32> to vector<7x168xf32>
    %50 = vector.extract_strided_slice %49 {offsets = [0, 0], sizes = [5, 168], strides = [1, 1]} : vector<7x168xf32> to vector<5x168xf32>
    %51 = vector.extract_strided_slice %49 {offsets = [1, 0], sizes = [5, 168], strides = [1, 1]} : vector<7x168xf32> to vector<5x168xf32>
    %52 = vector.extract_strided_slice %49 {offsets = [2, 0], sizes = [5, 168], strides = [1, 1]} : vector<7x168xf32> to vector<5x168xf32>
    %53 = tpu.concatenate %50, %51, %52 in 1 : vector<5x168xf32>, vector<5x168xf32>, vector<5x168xf32> -> vector<5x504xf32>
    %c0_23 = arith.constant 0 : index
    %c0_24 = arith.constant 0 : index
    %54 = vector.load %arg2[%c0_23, %c0_24] : memref<504x320xf32, #tpu.memory_space<vmem>>, vector<504x320xf32>
    %cst_25 = arith.constant dense<0.000000e+00> : vector<5x320xf32>
    %55 = tpu.matmul %53, %54, %cst_25 {dimension_numbers = #tpu.dot_dimension_numbers<[1], [0], [0], [1], [0, 0, 1, 1], [], []>} : vector<5x504xf32>, vector<504x320xf32>, vector<5x320xf32> -> vector<5x320xf32>
    %c0_26 = arith.constant 0 : index
    %c0_27 = arith.constant 0 : index
    %56 = vector.load %arg3[%c0_26, %c0_27] : memref<1x320xf32, #tpu.memory_space<vmem>>, vector<1x320xf32>
    %57 = vector.broadcast %56 : vector<1x320xf32> to vector<5x320xf32>
    %58 = arith.addf %55, %57 : vector<5x320xf32>
    %59 = math.tanh %58 : vector<5x320xf32>
    %60 = vector.extract_strided_slice %59 {offsets = [0, 0], sizes = [5, 80], strides = [1, 1]} : vector<5x320xf32> to vector<5x80xf32>
    %61 = vector.extract_strided_slice %59 {offsets = [0, 80], sizes = [5, 80], strides = [1, 1]} : vector<5x320xf32> to vector<5x80xf32>
    %62 = arith.addf %60, %61 : vector<5x80xf32>
    %63 = vector.extract_strided_slice %59 {offsets = [0, 160], sizes = [5, 80], strides = [1, 1]} : vector<5x320xf32> to vector<5x80xf32>
    %64 = arith.addf %62, %63 : vector<5x80xf32>
    %65 = vector.extract_strided_slice %59 {offsets = [0, 240], sizes = [5, 80], strides = [1, 1]} : vector<5x320xf32> to vector<5x80xf32>
    %66 = arith.addf %64, %65 : vector<5x80xf32>
    %cst_28 = arith.constant 2.500000e-01 : f32
    %67 = vector.broadcast %cst_28 : f32 to vector<5x80xf32>
    %68 = arith.mulf %67, %66 : vector<5x80xf32>
    %c2_29 = arith.constant 2 : index
    %c0_30 = arith.constant 0 : index
    %c0_31 = arith.constant 0 : index
    %69 = vector.load %arg4[%c2_29, %c0_30, %c0_31] : memref<8x5x80xf32, #tpu.memory_space<vmem>>, vector<1x5x80xf32>
    %70 = vector.shape_cast %69 : vector<1x5x80xf32> to vector<5x80xf32>
    %71 = vector.shape_cast %68 : vector<5x80xf32> to vector<1x5x80xf32>
    tpu.vector_store %arg4[%c2_29, %c0_30, %c0_31], %71 {strides = array<i32>} : memref<8x5x80xf32, #tpu.memory_space<vmem>>, vector<1x5x80xf32>,
    %c3 = arith.constant 3 : index
    %c0_32 = arith.constant 0 : index
    %c0_33 = arith.constant 0 : index
    %72 = vector.load %arg1[%c3, %c0_32, %c0_33] : memref<8x7x168xf32, #tpu.memory_space<vmem>>, vector<1x7x168xf32>
    %73 = vector.shape_cast %72 : vector<1x7x168xf32> to vector<7x168xf32>
    %74 = vector.extract_strided_slice %73 {offsets = [0, 0], sizes = [5, 168], strides = [1, 1]} : vector<7x168xf32> to vector<5x168xf32>
    %75 = vector.extract_strided_slice %73 {offsets = [1, 0], sizes = [5, 168], strides = [1, 1]} : vector<7x168xf32> to vector<5x168xf32>
    %76 = vector.extract_strided_slice %73 {offsets = [2, 0], sizes = [5, 168], strides = [1, 1]} : vector<7x168xf32> to vector<5x168xf32>
    %77 = tpu.concatenate %74, %75, %76 in 1 : vector<5x168xf32>, vector<5x168xf32>, vector<5x168xf32> -> vector<5x504xf32>
    %c0_34 = arith.constant 0 : index
    %c0_35 = arith.constant 0 : index
    %78 = vector.load %arg2[%c0_34, %c0_35] : memref<504x320xf32, #tpu.memory_space<vmem>>, vector<504x320xf32>
    %cst_36 = arith.constant dense<0.000000e+00> : vector<5x320xf32>
    %79 = tpu.matmul %77, %78, %cst_36 {dimension_numbers = #tpu.dot_dimension_numbers<[1], [0], [0], [1], [0, 0, 1, 1], [], []>} : vector<5x504xf32>, vector<504x320xf32>, vector<5x320xf32> -> vector<5x320xf32>
    %c0_37 = arith.constant 0 : index
    %c0_38 = arith.constant 0 : index
    %80 = vector.load %arg3[%c0_37, %c0_38] : memref<1x320xf32, #tpu.memory_space<vmem>>, vector<1x320xf32>
    %81 = vector.broadcast %80 : vector<1x320xf32> to vector<5x320xf32>
    %82 = arith.addf %79, %81 : vector<5x320xf32>
    %83 = math.tanh %82 : vector<5x320xf32>
    %84 = vector.extract_strided_slice %83 {offsets = [0, 0], sizes = [5, 80], strides = [1, 1]} : vector<5x320xf32> to vector<5x80xf32>
    %85 = vector.extract_strided_slice %83 {offsets = [0, 80], sizes = [5, 80], strides = [1, 1]} : vector<5x320xf32> to vector<5x80xf32>
    %86 = arith.addf %84, %85 : vector<5x80xf32>
    %87 = vector.extract_strided_slice %83 {offsets = [0, 160], sizes = [5, 80], strides = [1, 1]} : vector<5x320xf32> to vector<5x80xf32>
    %88 = arith.addf %86, %87 : vector<5x80xf32>
    %89 = vector.extract_strided_slice %83 {offsets = [0, 240], sizes = [5, 80], strides = [1, 1]} : vector<5x320xf32> to vector<5x80xf32>
    %90 = arith.addf %88, %89 : vector<5x80xf32>
    %cst_39 = arith.constant 2.500000e-01 : f32
    %91 = vector.broadcast %cst_39 : f32 to vector<5x80xf32>
    %92 = arith.mulf %91, %90 : vector<5x80xf32>
    %c3_40 = arith.constant 3 : index
    %c0_41 = arith.constant 0 : index
    %c0_42 = arith.constant 0 : index
    %93 = vector.load %arg4[%c3_40, %c0_41, %c0_42] : memref<8x5x80xf32, #tpu.memory_space<vmem>>, vector<1x5x80xf32>
    %94 = vector.shape_cast %93 : vector<1x5x80xf32> to vector<5x80xf32>
    %95 = vector.shape_cast %92 : vector<5x80xf32> to vector<1x5x80xf32>
    tpu.vector_store %arg4[%c3_40, %c0_41, %c0_42], %95 {strides = array<i32>} : memref<8x5x80xf32, #tpu.memory_space<vmem>>, vector<1x5x80xf32>,
    %c4 = arith.constant 4 : index
    %c0_43 = arith.constant 0 : index
    %c0_44 = arith.constant 0 : index
    %96 = vector.load %arg1[%c4, %c0_43, %c0_44] : memref<8x7x168xf32, #tpu.memory_space<vmem>>, vector<1x7x168xf32>
    %97 = vector.shape_cast %96 : vector<1x7x168xf32> to vector<7x168xf32>
    %98 = vector.extract_strided_slice %97 {offsets = [0, 0], sizes = [5, 168], strides = [1, 1]} : vector<7x168xf32> to vector<5x168xf32>
    %99 = vector.extract_strided_slice %97 {offsets = [1, 0], sizes = [5, 168], strides = [1, 1]} : vector<7x168xf32> to vector<5x168xf32>
    %100 = vector.extract_strided_slice %97 {offsets = [2, 0], sizes = [5, 168], strides = [1, 1]} : vector<7x168xf32> to vector<5x168xf32>
    %101 = tpu.concatenate %98, %99, %100 in 1 : vector<5x168xf32>, vector<5x168xf32>, vector<5x168xf32> -> vector<5x504xf32>
    %c0_45 = arith.constant 0 : index
    %c0_46 = arith.constant 0 : index
    %102 = vector.load %arg2[%c0_45, %c0_46] : memref<504x320xf32, #tpu.memory_space<vmem>>, vector<504x320xf32>
    %cst_47 = arith.constant dense<0.000000e+00> : vector<5x320xf32>
    %103 = tpu.matmul %101, %102, %cst_47 {dimension_numbers = #tpu.dot_dimension_numbers<[1], [0], [0], [1], [0, 0, 1, 1], [], []>} : vector<5x504xf32>, vector<504x320xf32>, vector<5x320xf32> -> vector<5x320xf32>
    %c0_48 = arith.constant 0 : index
    %c0_49 = arith.constant 0 : index
    %104 = vector.load %arg3[%c0_48, %c0_49] : memref<1x320xf32, #tpu.memory_space<vmem>>, vector<1x320xf32>
    %105 = vector.broadcast %104 : vector<1x320xf32> to vector<5x320xf32>
    %106 = arith.addf %103, %105 : vector<5x320xf32>
    %107 = math.tanh %106 : vector<5x320xf32>
    %108 = vector.extract_strided_slice %107 {offsets = [0, 0], sizes = [5, 80], strides = [1, 1]} : vector<5x320xf32> to vector<5x80xf32>
    %109 = vector.extract_strided_slice %107 {offsets = [0, 80], sizes = [5, 80], strides = [1, 1]} : vector<5x320xf32> to vector<5x80xf32>
    %110 = arith.addf %108, %109 : vector<5x80xf32>
    %111 = vector.extract_strided_slice %107 {offsets = [0, 160], sizes = [5, 80], strides = [1, 1]} : vector<5x320xf32> to vector<5x80xf32>
    %112 = arith.addf %110, %111 : vector<5x80xf32>
    %113 = vector.extract_strided_slice %107 {offsets = [0, 240], sizes = [5, 80], strides = [1, 1]} : vector<5x320xf32> to vector<5x80xf32>
    %114 = arith.addf %112, %113 : vector<5x80xf32>
    %cst_50 = arith.constant 2.500000e-01 : f32
    %115 = vector.broadcast %cst_50 : f32 to vector<5x80xf32>
    %116 = arith.mulf %115, %114 : vector<5x80xf32>
    %c4_51 = arith.constant 4 : index
    %c0_52 = arith.constant 0 : index
    %c0_53 = arith.constant 0 : index
    %117 = vector.load %arg4[%c4_51, %c0_52, %c0_53] : memref<8x5x80xf32, #tpu.memory_space<vmem>>, vector<1x5x80xf32>
    %118 = vector.shape_cast %117 : vector<1x5x80xf32> to vector<5x80xf32>
    %119 = vector.shape_cast %116 : vector<5x80xf32> to vector<1x5x80xf32>
    tpu.vector_store %arg4[%c4_51, %c0_52, %c0_53], %119 {strides = array<i32>} : memref<8x5x80xf32, #tpu.memory_space<vmem>>, vector<1x5x80xf32>,
    %c5 = arith.constant 5 : index
    %c0_54 = arith.constant 0 : index
    %c0_55 = arith.constant 0 : index
    %120 = vector.load %arg1[%c5, %c0_54, %c0_55] : memref<8x7x168xf32, #tpu.memory_space<vmem>>, vector<1x7x168xf32>
    %121 = vector.shape_cast %120 : vector<1x7x168xf32> to vector<7x168xf32>
    %122 = vector.extract_strided_slice %121 {offsets = [0, 0], sizes = [5, 168], strides = [1, 1]} : vector<7x168xf32> to vector<5x168xf32>
    %123 = vector.extract_strided_slice %121 {offsets = [1, 0], sizes = [5, 168], strides = [1, 1]} : vector<7x168xf32> to vector<5x168xf32>
    %124 = vector.extract_strided_slice %121 {offsets = [2, 0], sizes = [5, 168], strides = [1, 1]} : vector<7x168xf32> to vector<5x168xf32>
    %125 = tpu.concatenate %122, %123, %124 in 1 : vector<5x168xf32>, vector<5x168xf32>, vector<5x168xf32> -> vector<5x504xf32>
    %c0_56 = arith.constant 0 : index
    %c0_57 = arith.constant 0 : index
    %126 = vector.load %arg2[%c0_56, %c0_57] : memref<504x320xf32, #tpu.memory_space<vmem>>, vector<504x320xf32>
    %cst_58 = arith.constant dense<0.000000e+00> : vector<5x320xf32>
    %127 = tpu.matmul %125, %126, %cst_58 {dimension_numbers = #tpu.dot_dimension_numbers<[1], [0], [0], [1], [0, 0, 1, 1], [], []>} : vector<5x504xf32>, vector<504x320xf32>, vector<5x320xf32> -> vector<5x320xf32>
    %c0_59 = arith.constant 0 : index
    %c0_60 = arith.constant 0 : index
    %128 = vector.load %arg3[%c0_59, %c0_60] : memref<1x320xf32, #tpu.memory_space<vmem>>, vector<1x320xf32>
    %129 = vector.broadcast %128 : vector<1x320xf32> to vector<5x320xf32>
    %130 = arith.addf %127, %129 : vector<5x320xf32>
    %131 = math.tanh %130 : vector<5x320xf32>
    %132 = vector.extract_strided_slice %131 {offsets = [0, 0], sizes = [5, 80], strides = [1, 1]} : vector<5x320xf32> to vector<5x80xf32>
    %133 = vector.extract_strided_slice %131 {offsets = [0, 80], sizes = [5, 80], strides = [1, 1]} : vector<5x320xf32> to vector<5x80xf32>
    %134 = arith.addf %132, %133 : vector<5x80xf32>
    %135 = vector.extract_strided_slice %131 {offsets = [0, 160], sizes = [5, 80], strides = [1, 1]} : vector<5x320xf32> to vector<5x80xf32>
    %136 = arith.addf %134, %135 : vector<5x80xf32>
    %137 = vector.extract_strided_slice %131 {offsets = [0, 240], sizes = [5, 80], strides = [1, 1]} : vector<5x320xf32> to vector<5x80xf32>
    %138 = arith.addf %136, %137 : vector<5x80xf32>
    %cst_61 = arith.constant 2.500000e-01 : f32
    %139 = vector.broadcast %cst_61 : f32 to vector<5x80xf32>
    %140 = arith.mulf %139, %138 : vector<5x80xf32>
    %c5_62 = arith.constant 5 : index
    %c0_63 = arith.constant 0 : index
    %c0_64 = arith.constant 0 : index
    %141 = vector.load %arg4[%c5_62, %c0_63, %c0_64] : memref<8x5x80xf32, #tpu.memory_space<vmem>>, vector<1x5x80xf32>
    %142 = vector.shape_cast %141 : vector<1x5x80xf32> to vector<5x80xf32>
    %143 = vector.shape_cast %140 : vector<5x80xf32> to vector<1x5x80xf32>
    tpu.vector_store %arg4[%c5_62, %c0_63, %c0_64], %143 {strides = array<i32>} : memref<8x5x80xf32, #tpu.memory_space<vmem>>, vector<1x5x80xf32>,
    %c6 = arith.constant 6 : index
    %c0_65 = arith.constant 0 : index
    %c0_66 = arith.constant 0 : index
    %144 = vector.load %arg1[%c6, %c0_65, %c0_66] : memref<8x7x168xf32, #tpu.memory_space<vmem>>, vector<1x7x168xf32>
    %145 = vector.shape_cast %144 : vector<1x7x168xf32> to vector<7x168xf32>
    %146 = vector.extract_strided_slice %145 {offsets = [0, 0], sizes = [5, 168], strides = [1, 1]} : vector<7x168xf32> to vector<5x168xf32>
    %147 = vector.extract_strided_slice %145 {offsets = [1, 0], sizes = [5, 168], strides = [1, 1]} : vector<7x168xf32> to vector<5x168xf32>
    %148 = vector.extract_strided_slice %145 {offsets = [2, 0], sizes = [5, 168], strides = [1, 1]} : vector<7x168xf32> to vector<5x168xf32>
    %149 = tpu.concatenate %146, %147, %148 in 1 : vector<5x168xf32>, vector<5x168xf32>, vector<5x168xf32> -> vector<5x504xf32>
    %c0_67 = arith.constant 0 : index
    %c0_68 = arith.constant 0 : index
    %150 = vector.load %arg2[%c0_67, %c0_68] : memref<504x320xf32, #tpu.memory_space<vmem>>, vector<504x320xf32>
    %cst_69 = arith.constant dense<0.000000e+00> : vector<5x320xf32>
    %151 = tpu.matmul %149, %150, %cst_69 {dimension_numbers = #tpu.dot_dimension_numbers<[1], [0], [0], [1], [0, 0, 1, 1], [], []>} : vector<5x504xf32>, vector<504x320xf32>, vector<5x320xf32> -> vector<5x320xf32>
    %c0_70 = arith.constant 0 : index
    %c0_71 = arith.constant 0 : index
    %152 = vector.load %arg3[%c0_70, %c0_71] : memref<1x320xf32, #tpu.memory_space<vmem>>, vector<1x320xf32>
    %153 = vector.broadcast %152 : vector<1x320xf32> to vector<5x320xf32>
    %154 = arith.addf %151, %153 : vector<5x320xf32>
    %155 = math.tanh %154 : vector<5x320xf32>
    %156 = vector.extract_strided_slice %155 {offsets = [0, 0], sizes = [5, 80], strides = [1, 1]} : vector<5x320xf32> to vector<5x80xf32>
    %157 = vector.extract_strided_slice %155 {offsets = [0, 80], sizes = [5, 80], strides = [1, 1]} : vector<5x320xf32> to vector<5x80xf32>
    %158 = arith.addf %156, %157 : vector<5x80xf32>
    %159 = vector.extract_strided_slice %155 {offsets = [0, 160], sizes = [5, 80], strides = [1, 1]} : vector<5x320xf32> to vector<5x80xf32>
    %160 = arith.addf %158, %159 : vector<5x80xf32>
    %161 = vector.extract_strided_slice %155 {offsets = [0, 240], sizes = [5, 80], strides = [1, 1]} : vector<5x320xf32> to vector<5x80xf32>
    %162 = arith.addf %160, %161 : vector<5x80xf32>
    %cst_72 = arith.constant 2.500000e-01 : f32
    %163 = vector.broadcast %cst_72 : f32 to vector<5x80xf32>
    %164 = arith.mulf %163, %162 : vector<5x80xf32>
    %c6_73 = arith.constant 6 : index
    %c0_74 = arith.constant 0 : index
    %c0_75 = arith.constant 0 : index
    %165 = vector.load %arg4[%c6_73, %c0_74, %c0_75] : memref<8x5x80xf32, #tpu.memory_space<vmem>>, vector<1x5x80xf32>
    %166 = vector.shape_cast %165 : vector<1x5x80xf32> to vector<5x80xf32>
    %167 = vector.shape_cast %164 : vector<5x80xf32> to vector<1x5x80xf32>
    tpu.vector_store %arg4[%c6_73, %c0_74, %c0_75], %167 {strides = array<i32>} : memref<8x5x80xf32, #tpu.memory_space<vmem>>, vector<1x5x80xf32>,
    %c7 = arith.constant 7 : index
    %c0_76 = arith.constant 0 : index
    %c0_77 = arith.constant 0 : index
    %168 = vector.load %arg1[%c7, %c0_76, %c0_77] : memref<8x7x168xf32, #tpu.memory_space<vmem>>, vector<1x7x168xf32>
    %169 = vector.shape_cast %168 : vector<1x7x168xf32> to vector<7x168xf32>
    %170 = vector.extract_strided_slice %169 {offsets = [0, 0], sizes = [5, 168], strides = [1, 1]} : vector<7x168xf32> to vector<5x168xf32>
    %171 = vector.extract_strided_slice %169 {offsets = [1, 0], sizes = [5, 168], strides = [1, 1]} : vector<7x168xf32> to vector<5x168xf32>
    %172 = vector.extract_strided_slice %169 {offsets = [2, 0], sizes = [5, 168], strides = [1, 1]} : vector<7x168xf32> to vector<5x168xf32>
    %173 = tpu.concatenate %170, %171, %172 in 1 : vector<5x168xf32>, vector<5x168xf32>, vector<5x168xf32> -> vector<5x504xf32>
    %c0_78 = arith.constant 0 : index
    %c0_79 = arith.constant 0 : index
    %174 = vector.load %arg2[%c0_78, %c0_79] : memref<504x320xf32, #tpu.memory_space<vmem>>, vector<504x320xf32>
    %cst_80 = arith.constant dense<0.000000e+00> : vector<5x320xf32>
    %175 = tpu.matmul %173, %174, %cst_80 {dimension_numbers = #tpu.dot_dimension_numbers<[1], [0], [0], [1], [0, 0, 1, 1], [], []>} : vector<5x504xf32>, vector<504x320xf32>, vector<5x320xf32> -> vector<5x320xf32>
    %c0_81 = arith.constant 0 : index
    %c0_82 = arith.constant 0 : index
    %176 = vector.load %arg3[%c0_81, %c0_82] : memref<1x320xf32, #tpu.memory_space<vmem>>, vector<1x320xf32>
    %177 = vector.broadcast %176 : vector<1x320xf32> to vector<5x320xf32>
    %178 = arith.addf %175, %177 : vector<5x320xf32>
    %179 = math.tanh %178 : vector<5x320xf32>
    %180 = vector.extract_strided_slice %179 {offsets = [0, 0], sizes = [5, 80], strides = [1, 1]} : vector<5x320xf32> to vector<5x80xf32>
    %181 = vector.extract_strided_slice %179 {offsets = [0, 80], sizes = [5, 80], strides = [1, 1]} : vector<5x320xf32> to vector<5x80xf32>
    %182 = arith.addf %180, %181 : vector<5x80xf32>
    %183 = vector.extract_strided_slice %179 {offsets = [0, 160], sizes = [5, 80], strides = [1, 1]} : vector<5x320xf32> to vector<5x80xf32>
    %184 = arith.addf %182, %183 : vector<5x80xf32>
    %185 = vector.extract_strided_slice %179 {offsets = [0, 240], sizes = [5, 80], strides = [1, 1]} : vector<5x320xf32> to vector<5x80xf32>
    %186 = arith.addf %184, %185 : vector<5x80xf32>
    %cst_83 = arith.constant 2.500000e-01 : f32
    %187 = vector.broadcast %cst_83 : f32 to vector<5x80xf32>
    %188 = arith.mulf %187, %186 : vector<5x80xf32>
    %c7_84 = arith.constant 7 : index
    %c0_85 = arith.constant 0 : index
    %c0_86 = arith.constant 0 : index
    %189 = vector.load %arg4[%c7_84, %c0_85, %c0_86] : memref<8x5x80xf32, #tpu.memory_space<vmem>>, vector<1x5x80xf32>
    %190 = vector.shape_cast %189 : vector<1x5x80xf32> to vector<5x80xf32>
    %191 = vector.shape_cast %188 : vector<5x80xf32> to vector<1x5x80xf32>
    tpu.vector_store %arg4[%c7_84, %c0_85, %c0_86], %191 {strides = array<i32>} : memref<8x5x80xf32, #tpu.memory_space<vmem>>, vector<1x5x80xf32>,
    return
  }
  func.func @transform_0(%arg0: i32) -> (i32, i32, i32) {
    %c0_i32 = arith.constant 0 : i32
    %c0_i32_0 = arith.constant 0 : i32
    %c0_i32_1 = arith.constant 0 : i32
    return %arg0, %c0_i32, %c0_i32_0 : i32, i32, i32
  }
  func.func @transform_1(%arg0: i32) -> (i32, i32) {
    %c0_i32 = arith.constant 0 : i32
    %c0_i32_0 = arith.constant 0 : i32
    %c0_i32_1 = arith.constant 0 : i32
    return %c0_i32, %c0_i32_0 : i32, i32
  }
  func.func @transform_2(%arg0: i32) -> (i32, i32) {
    %c0_i32 = arith.constant 0 : i32
    %c0_i32_0 = arith.constant 0 : i32
    %c0_i32_1 = arith.constant 0 : i32
    return %c0_i32, %c0_i32_0 : i32, i32
  }
  func.func @transform_3(%arg0: i32) -> (i32, i32, i32) {
    %c0_i32 = arith.constant 0 : i32
    %c0_i32_0 = arith.constant 0 : i32
    %c0_i32_1 = arith.constant 0 : i32
    return %arg0, %c0_i32, %c0_i32_0 : i32, i32, i32
  }
}

module attributes {stable_mosaic.version = 11 : i64} {
  func.func @_fc_softmax_kernel(%arg0: i32, %arg1: memref<8x400xf32, #tpu.memory_space<vmem>>, %arg2: memref<400x128xf32, #tpu.memory_space<vmem>>, %arg3: memref<1x128xf32, #tpu.memory_space<vmem>>, %arg4: memref<128x128xf32, #tpu.memory_space<vmem>>, %arg5: memref<1x128xf32, #tpu.memory_space<vmem>>, %arg6: memref<128x10xf32, #tpu.memory_space<vmem>>, %arg7: memref<1x10xf32, #tpu.memory_space<vmem>>, %arg8: memref<8x10xf32, #tpu.memory_space<vmem>>) attributes {dimension_semantics = [#tpu.dimension_semantics<parallel>], iteration_bounds = array<i64: 1>, scalar_prefetch = 0 : i64, scratch_operands = 0 : i64, tpu.core_type = #tpu.core_type<tc>, window_params = [{transform_indices = @transform_0, window_bounds = array<i64: 8, 400>}, {pipeline_mode = #tpu.pipeline_mode<synchronous>, transform_indices = @transform_1, window_bounds = array<i64: 400, 128>}, {pipeline_mode = #tpu.pipeline_mode<synchronous>, transform_indices = @transform_2, window_bounds = array<i64: 1, 128>}, {pipeline_mode = #tpu.pipeline_mode<synchronous>, transform_indices = @transform_3, window_bounds = array<i64: 128, 128>}, {pipeline_mode = #tpu.pipeline_mode<synchronous>, transform_indices = @transform_4, window_bounds = array<i64: 1, 128>}, {pipeline_mode = #tpu.pipeline_mode<synchronous>, transform_indices = @transform_5, window_bounds = array<i64: 128, 10>}, {pipeline_mode = #tpu.pipeline_mode<synchronous>, transform_indices = @transform_6, window_bounds = array<i64: 1, 10>}, {transform_indices = @transform_7, window_bounds = array<i64: 8, 10>}]} {
    %c0 = arith.constant 0 : index
    %c0_0 = arith.constant 0 : index
    %0 = vector.load %arg1[%c0, %c0_0] : memref<8x400xf32, #tpu.memory_space<vmem>>, vector<8x400xf32>
    %c0_1 = arith.constant 0 : index
    %c0_2 = arith.constant 0 : index
    %1 = vector.load %arg2[%c0_1, %c0_2] : memref<400x128xf32, #tpu.memory_space<vmem>>, vector<400x128xf32>
    %cst = arith.constant dense<0.000000e+00> : vector<8x128xf32>
    %2 = tpu.matmul %0, %1, %cst {dimension_numbers = #tpu.dot_dimension_numbers<[1], [0], [0], [1], [0, 0, 1, 1], [], []>} : vector<8x400xf32>, vector<400x128xf32>, vector<8x128xf32> -> vector<8x128xf32>
    %c0_3 = arith.constant 0 : index
    %c0_4 = arith.constant 0 : index
    %3 = vector.load %arg3[%c0_3, %c0_4] : memref<1x128xf32, #tpu.memory_space<vmem>>, vector<1x128xf32>
    %4 = vector.broadcast %3 : vector<1x128xf32> to vector<8x128xf32>
    %5 = arith.addf %2, %4 : vector<8x128xf32>
    %6 = math.tanh %5 : vector<8x128xf32>
    %c0_5 = arith.constant 0 : index
    %c0_6 = arith.constant 0 : index
    %7 = vector.load %arg4[%c0_5, %c0_6] : memref<128x128xf32, #tpu.memory_space<vmem>>, vector<128x128xf32>
    %cst_7 = arith.constant dense<0.000000e+00> : vector<8x128xf32>
    %8 = tpu.matmul %6, %7, %cst_7 {dimension_numbers = #tpu.dot_dimension_numbers<[1], [0], [0], [1], [0, 0, 1, 1], [], []>} : vector<8x128xf32>, vector<128x128xf32>, vector<8x128xf32> -> vector<8x128xf32>
    %c0_8 = arith.constant 0 : index
    %c0_9 = arith.constant 0 : index
    %9 = vector.load %arg5[%c0_8, %c0_9] : memref<1x128xf32, #tpu.memory_space<vmem>>, vector<1x128xf32>
    %10 = vector.broadcast %9 : vector<1x128xf32> to vector<8x128xf32>
    %11 = arith.addf %8, %10 : vector<8x128xf32>
    %12 = math.tanh %11 : vector<8x128xf32>
    %c0_10 = arith.constant 0 : index
    %c0_11 = arith.constant 0 : index
    %13 = vector.load %arg6[%c0_10, %c0_11] : memref<128x10xf32, #tpu.memory_space<vmem>>, vector<128x10xf32>
    %cst_12 = arith.constant dense<0.000000e+00> : vector<8x10xf32>
    %14 = tpu.matmul %12, %13, %cst_12 {dimension_numbers = #tpu.dot_dimension_numbers<[1], [0], [0], [1], [0, 0, 1, 1], [], []>} : vector<8x128xf32>, vector<128x10xf32>, vector<8x10xf32> -> vector<8x10xf32>
    %c0_13 = arith.constant 0 : index
    %c0_14 = arith.constant 0 : index
    %15 = vector.load %arg7[%c0_13, %c0_14] : memref<1x10xf32, #tpu.memory_space<vmem>>, vector<1x10xf32>
    %16 = vector.broadcast %15 : vector<1x10xf32> to vector<8x10xf32>
    %17 = arith.addf %14, %16 : vector<8x10xf32>
    %cst_15 = arith.constant dense<0xFF800000> : vector<8xf32>
    %18 = vector.multi_reduction <maximumf>, %17, %cst_15 [1] : vector<8x10xf32> to vector<8xf32>
    %19 = vector.shape_cast %18 : vector<8xf32> to vector<8x1xf32>
    %20 = vector.broadcast %19 : vector<8x1xf32> to vector<8x10xf32>
    %21 = arith.subf %17, %20 : vector<8x10xf32>
    %22 = math.exp %21 : vector<8x10xf32>
    %cst_16 = arith.constant dense<0.000000e+00> : vector<8xf32>
    %23 = vector.multi_reduction <add>, %22, %cst_16 [1] : vector<8x10xf32> to vector<8xf32>
    %24 = vector.shape_cast %23 : vector<8xf32> to vector<8x1xf32>
    %25 = tpu.reciprocal %24 {approx = true} : vector<8x1xf32> -> vector<8x1xf32>
    %26 = arith.mulf %24, %25 : vector<8x1xf32>
    %cst_17 = arith.constant 2.000000e+00 : f32
    %27 = vector.broadcast %cst_17 : f32 to vector<8x1xf32>
    %28 = arith.subf %27, %26 : vector<8x1xf32>
    %29 = arith.mulf %25, %28 : vector<8x1xf32>
    %30 = vector.broadcast %29 : vector<8x1xf32> to vector<8x10xf32>
    %31 = arith.mulf %22, %30 : vector<8x10xf32>
    %c0_18 = arith.constant 0 : index
    %c0_19 = arith.constant 0 : index
    %32 = vector.load %arg8[%c0_18, %c0_19] : memref<8x10xf32, #tpu.memory_space<vmem>>, vector<8x10xf32>
    tpu.vector_store %arg8[%c0_18, %c0_19], %31 {strides = array<i32>} : memref<8x10xf32, #tpu.memory_space<vmem>>, vector<8x10xf32>,
    return
  }
  func.func @transform_0(%arg0: i32) -> (i32, i32) {
    %c0_i32 = arith.constant 0 : i32
    %c0_i32_0 = arith.constant 0 : i32
    return %arg0, %c0_i32 : i32, i32
  }
  func.func @transform_1(%arg0: i32) -> (i32, i32) {
    %c0_i32 = arith.constant 0 : i32
    %c0_i32_0 = arith.constant 0 : i32
    %c0_i32_1 = arith.constant 0 : i32
    return %c0_i32, %c0_i32_0 : i32, i32
  }
  func.func @transform_2(%arg0: i32) -> (i32, i32) {
    %c0_i32 = arith.constant 0 : i32
    %c0_i32_0 = arith.constant 0 : i32
    %c0_i32_1 = arith.constant 0 : i32
    return %c0_i32, %c0_i32_0 : i32, i32
  }
  func.func @transform_3(%arg0: i32) -> (i32, i32) {
    %c0_i32 = arith.constant 0 : i32
    %c0_i32_0 = arith.constant 0 : i32
    %c0_i32_1 = arith.constant 0 : i32
    return %c0_i32, %c0_i32_0 : i32, i32
  }
  func.func @transform_4(%arg0: i32) -> (i32, i32) {
    %c0_i32 = arith.constant 0 : i32
    %c0_i32_0 = arith.constant 0 : i32
    %c0_i32_1 = arith.constant 0 : i32
    return %c0_i32, %c0_i32_0 : i32, i32
  }
  func.func @transform_5(%arg0: i32) -> (i32, i32) {
    %c0_i32 = arith.constant 0 : i32
    %c0_i32_0 = arith.constant 0 : i32
    %c0_i32_1 = arith.constant 0 : i32
    return %c0_i32, %c0_i32_0 : i32, i32
  }
  func.func @transform_6(%arg0: i32) -> (i32, i32) {
    %c0_i32 = arith.constant 0 : i32
    %c0_i32_0 = arith.constant 0 : i32
    %c0_i32_1 = arith.constant 0 : i32
    return %c0_i32, %c0_i32_0 : i32, i32
  }
  func.func @transform_7(%arg0: i32) -> (i32, i32) {
    %c0_i32 = arith.constant 0 : i32
    %c0_i32_0 = arith.constant 0 : i32
    return %arg0, %c0_i32 : i32, i32
  }
}

</mosaic_0001>

<llo_original>
// kernel: tile.13
$region0: #{tile.13}
  #allocation0 [shape = 's32[1]{0}', space=sflag, size = 0x4, scoped, tag = 'scoped memory for tile.13']
  %s0 = inlined_call_operand.vmem [shape: f32[6], index: 0, kind: input, shape index: {}]
  %s1 = inlined_call_operand.vmem [shape: f32[56,6], index: 1, kind: output, shape index: {}]
  // Predicated region
  $region2: #{tile.13} parent=0 // pred_check
    _
  $region3: #{tile.13} parent=0 // pred_check_branch
    %3 = sbr.rel (0) target = $region5
  $region4: #{tile.13} parent=0 // pred_region
    _
  $region5: #{tile.13} parent=0 // pred_fallthru
    _
  %v4 = vld [vmem:[%s0] ss:$0 sm:$0xff]
  %5 = vst [vmem:[%s1] sm:$0xff] %v4
  %s6 = scalar_lea.vmem %s1, 8
  %7 = vst [vmem:[%s6] sm:$0xff] %v4
  %s8 = scalar_lea.vmem %s1, 16
  %9 = vst [vmem:[%s8] sm:$0xff] %v4
  %s10 = scalar_lea.vmem %s1, 24
  %11 = vst [vmem:[%s10] sm:$0xff] %v4
  %s12 = scalar_lea.vmem %s1, 32
  %13 = vst [vmem:[%s12] sm:$0xff] %v4
  %s14 = scalar_lea.vmem %s1, 40
  %15 = vst [vmem:[%s14] sm:$0xff] %v4
  %s16 = scalar_lea.vmem %s1, 48
  %17 = vst [vmem:[%s16] sm:$0xff] %v4

// kernel: tile.14
$region0: #{tile.14}
  %s0 = inlined_call_operand.vmem [shape: f32[56,6], index: 0, kind: input, shape index: {}]
  %s1 = inlined_call_operand.vmem [shape: f32[1,336], index: 1, kind: output, shape index: {}]
  $region1: #{tile.14} parent=0
    #allocation0 [shape = 'u8[12288]{0}', space=vmem, size = 0x3000, scoped, tag = 'scoped mem for output reshape']
    %v2 = vld [vmem:[%s0] sm:$0x1]
    %vm3 = vcmask 48128
    %4 = vst.msk [vmem:[#allocation0] sm:$0x1] %vm3, %v2
    %s5 = scalar_lea.vmem %s0, 21
    %v6 = vld [vmem:[%s5] sm:$0x1]
    %s7 = scalar_lea.vmem %s0, 21
    %v8 = vld [vmem:[%s7] sm:$0x1]
    %vm9 = vcmask 15360
    %v10 = vsel %vm9, %v8, %v6
    %11 = vrot.lane.b32.xlu0 %v10, 126
    %v12 = vpop.permute.xlu0 %11
    %vm13 = vcmask 31744
    %s14 = scalar_lea.vmem [#allocation0], 8
    %15 = vst.msk [vmem:[%s14] sm:$0x1] %vm13, %v12
    %vm16 = vcmask 1048560
    %17 = vst.msk [vmem:[#allocation0] sm:$0x1] %vm16, %v12
    %s18 = scalar_lea.vmem %s0, 42
    %v19 = vld [vmem:[%s18] sm:$0x1]
    %s20 = scalar_lea.vmem %s0, 42
    %v21 = vld [vmem:[%s20] sm:$0x1]
    %vm22 = vcmask 31744
    %v23 = vsel %vm22, %v21, %v19
    %24 = vrot.lane.b32.xlu0 %v23, 124
    %v25 = vpop.permute.xlu0 %24
    %vm26 = vcmask 15360
    %s27 = scalar_lea.vmem [#allocation0], 16
    %28 = vst.msk [vmem:[%s27] sm:$0x1] %vm26, %v25
    %vm29 = vcmask 1048544
    %s30 = scalar_lea.vmem [#allocation0], 8
    %31 = vst.msk [vmem:[%s30] sm:$0x1] %vm29, %v25
    %s32 = scalar_lea.vmem %s0, 20
    %v33 = vld [vmem:[%s32] sm:$0x1]
    %34 = vrot.lane.b32.xlu0 %v33, 120
    %v35 = vpop.permute.xlu0 %34
    %vm36 = vcmask 1032128
    %37 = vst.msk [vmem:[#allocation0] sm:$0x1] %vm36, %v35
    %s38 = scalar_lea.vmem %s0, 41
    %v39 = vld [vmem:[%s38] sm:$0x1]
    %40 = vrot.lane.b32.xlu0 %v39, 118
    %v41 = vpop.permute.xlu0 %40
    %vm42 = vcmask 1015728
    %s43 = scalar_lea.vmem [#allocation0], 8
    %44 = vst.msk [vmem:[%s43] sm:$0x1] %vm42, %v41
    %s45 = scalar_lea.vmem %s0, 19
    %v46 = vld [vmem:[%s45] sm:$0x1]
    %47 = vrot.lane.b32.xlu0 %v46, 114
    %v48 = vpop.permute.xlu0 %47
    %vm49 = vcmask 982928
    %50 = vst.msk [vmem:[#allocation0] sm:$0x1] %vm49, %v48
    %s51 = scalar_lea.vmem %s0, 40
    %v52 = vld [vmem:[%s51] sm:$0x1]
    %53 = vrot.lane.b32.xlu0 %v52, 112
    %v54 = vpop.permute.xlu0 %53
    %vm55 = vcmask 966528
    %s56 = scalar_lea.vmem [#allocation0], 8
    %57 = vst.msk [vmem:[%s56] sm:$0x1] %vm55, %v54
    %s58 = scalar_lea.vmem %s0, 18
    %v59 = vld [vmem:[%s58] sm:$0x1]
    %60 = vrot.lane.b32.xlu0 %v59, 108
    %v61 = vpop.permute.xlu0 %60
    %vm62 = vcmask 933728
    %63 = vst.msk [vmem:[#allocation0] sm:$0x1] %vm62, %v61
    %s64 = scalar_lea.vmem %s0, 39
    %v65 = vld [vmem:[%s64] sm:$0x1]
    %66 = vrot.lane.b32.xlu0 %v65, 106
    %v67 = vpop.permute.xlu0 %66
    %vm68 = vcmask 917328
    %s69 = scalar_lea.vmem [#allocation0], 8
    %70 = vst.msk [vmem:[%s69] sm:$0x1] %vm68, %v67
    %s71 = scalar_lea.vmem %s0, 17
    %v72 = vld [vmem:[%s71] sm:$0x1]
    %73 = vrot.lane.b32.xlu0 %v72, 102
    %v74 = vpop.permute.xlu0 %73
    %vm75 = vcmask 884528
    %76 = vst.msk [vmem:[#allocation0] sm:$0x1] %vm75, %v74
    %s77 = scalar_lea.vmem %s0, 38
    %v78 = vld [vmem:[%s77] sm:$0x1]
    %79 = vrot.lane.b32.xlu0 %v78, 100
    %v80 = vpop.permute.xlu0 %79
    %vm81 = vcmask 868128
    %s82 = scalar_lea.vmem [#allocation0], 8
    %83 = vst.msk [vmem:[%s82] sm:$0x1] %vm81, %v80
    %s84 = scalar_lea.vmem %s0, 16
    %v85 = vld [vmem:[%s84] sm:$0x1]
    %86 = vrot.lane.b32.xlu0 %v85, 96
    %v87 = vpop.permute.xlu0 %86
    %vm88 = vcmask 835328
    %89 = vst.msk [vmem:[#allocation0] sm:$0x1] %vm88, %v87
    %s90 = scalar_lea.vmem %s0, 37
    %v91 = vld [vmem:[%s90] sm:$0x1]
    %92 = vrot.lane.b32.xlu0 %v91, 94
    %v93 = vpop.permute.xlu0 %92
    %vm94 = vcmask 818928
    %s95 = scalar_lea.vmem [#allocation0], 8
    %96 = vst.msk [vmem:[%s95] sm:$0x1] %vm94, %v93
    %s97 = scalar_lea.vmem %s0, 15
    %v98 = vld [vmem:[%s97] sm:$0x1]
    %99 = vrot.lane.b32.xlu0 %v98, 90
    %v100 = vpop.permute.xlu0 %99
    %vm101 = vcmask 786128
    %102 = vst.msk [vmem:[#allocation0] sm:$0x1] %vm101, %v100
    %s103 = scalar_lea.vmem %s0, 36
    %v104 = vld [vmem:[%s103] sm:$0x1]
    %105 = vrot.lane.b32.xlu0 %v104, 88
    %v106 = vpop.permute.xlu0 %105
    %vm107 = vcmask 769728
    %s108 = scalar_lea.vmem [#allocation0], 8
    %109 = vst.msk [vmem:[%s108] sm:$0x1] %vm107, %v106
    %s110 = scalar_lea.vmem %s0, 14
    %v111 = vld [vmem:[%s110] sm:$0x1]
    %112 = vrot.lane.b32.xlu0 %v111, 84
    %v113 = vpop.permute.xlu0 %112
    %vm114 = vcmask 736928
    %115 = vst.msk [vmem:[#allocation0] sm:$0x1] %vm114, %v113
    %s116 = scalar_lea.vmem %s0, 35
    %v117 = vld [vmem:[%s116] sm:$0x1]
    %118 = vrot.lane.b32.xlu0 %v117, 82
    %v119 = vpop.permute.xlu0 %118
    %vm120 = vcmask 720528
    %s121 = scalar_lea.vmem [#allocation0], 8
    %122 = vst.msk [vmem:[%s121] sm:$0x1] %vm120, %v119
    %s123 = scalar_lea.vmem %s0, 13
    %v124 = vld [vmem:[%s123] sm:$0x1]
    %125 = vrot.lane.b32.xlu0 %v124, 78
    %v126 = vpop.permute.xlu0 %125
    %vm127 = vcmask 687728
    %128 = vst.msk [vmem:[#allocation0] sm:$0x1] %vm127, %v126
    %s129 = scalar_lea.vmem %s0, 34
    %v130 = vld [vmem:[%s129] sm:$0x1]
    %131 = vrot.lane.b32.xlu0 %v130, 76
    %v132 = vpop.permute.xlu0 %131
    %vm133 = vcmask 671328
    %s134 = scalar_lea.vmem [#allocation0], 8
    %135 = vst.msk [vmem:[%s134] sm:$0x1] %vm133, %v132
    %s136 = scalar_lea.vmem %s0, 55
    %v137 = vld [vmem:[%s136] sm:$0x1]
    %138 = vrot.lane.b32.xlu0 %v137, 74
    %v139 = vpop.permute.xlu0 %138
    %vm140 = vcmask 654928
    %s141 = scalar_lea.vmem [#allocation0], 16
    %142 = vst.msk [vmem:[%s141] sm:$0x1] %vm140, %v139
    %s143 = scalar_lea.vmem %s0, 12
    %v144 = vld [vmem:[%s143] sm:$0x1]
    %145 = vrot.lane.b32.xlu0 %v144, 72
    %v146 = vpop.permute.xlu0 %145
    %vm147 = vcmask 638528
    %148 = vst.msk [vmem:[#allocation0] sm:$0x1] %vm147, %v146
    %s149 = scalar_lea.vmem %s0, 33
    %v150 = vld [vmem:[%s149] sm:$0x1]
    %151 = vrot.lane.b32.xlu0 %v150, 70
    %v152 = vpop.permute.xlu0 %151
    %vm153 = vcmask 622128
    %s154 = scalar_lea.vmem [#allocation0], 8
    %155 = vst.msk [vmem:[%s154] sm:$0x1] %vm153, %v152
    %s156 = scalar_lea.vmem %s0, 54
    %v157 = vld [vmem:[%s156] sm:$0x1]
    %158 = vrot.lane.b32.xlu0 %v157, 68
    %v159 = vpop.permute.xlu0 %158
    %vm160 = vcmask 605728
    %s161 = scalar_lea.vmem [#allocation0], 16
    %162 = vst.msk [vmem:[%s161] sm:$0x1] %vm160, %v159
    %s163 = scalar_lea.vmem %s0, 11
    %v164 = vld [vmem:[%s163] sm:$0x1]
    %165 = vrot.lane.b32.xlu0 %v164, 66
    %v166 = vpop.permute.xlu0 %165
    %vm167 = vcmask 589328
    %168 = vst.msk [vmem:[#allocation0] sm:$0x1] %vm167, %v166
    %s169 = scalar_lea.vmem %s0, 32
    %v170 = vld [vmem:[%s169] sm:$0x1]
    %171 = vrot.lane.b32.xlu0 %v170, 64
    %v172 = vpop.permute.xlu0 %171
    %vm173 = vcmask 572928
    %s174 = scalar_lea.vmem [#allocation0], 8
    %175 = vst.msk [vmem:[%s174] sm:$0x1] %vm173, %v172
    %s176 = scalar_lea.vmem %s0, 53
    %v177 = vld [vmem:[%s176] sm:$0x1]
    %178 = vrot.lane.b32.xlu0 %v177, 62
    %v179 = vpop.permute.xlu0 %178
    %vm180 = vcmask 556528
    %s181 = scalar_lea.vmem [#allocation0], 16
    %182 = vst.msk [vmem:[%s181] sm:$0x1] %vm180, %v179
    %s183 = scalar_lea.vmem %s0, 10
    %v184 = vld [vmem:[%s183] sm:$0x1]
    %185 = vrot.lane.b32.xlu0 %v184, 60
    %v186 = vpop.permute.xlu0 %185
    %vm187 = vcmask 540128
    %188 = vst.msk [vmem:[#allocation0] sm:$0x1] %vm187, %v186
    %s189 = scalar_lea.vmem %s0, 31
    %v190 = vld [vmem:[%s189] sm:$0x1]
    %191 = vrot.lane.b32.xlu0 %v190, 58
    %v192 = vpop.permute.xlu0 %191
    %vm193 = vcmask 523728
    %s194 = scalar_lea.vmem [#allocation0], 8
    %195 = vst.msk [vmem:[%s194] sm:$0x1] %vm193, %v192
    %s196 = scalar_lea.vmem %s0, 52
    %v197 = vld [vmem:[%s196] sm:$0x1]
    %198 = vrot.lane.b32.xlu0 %v197, 56
    %v199 = vpop.permute.xlu0 %198
    %vm200 = vcmask 507328
    %s201 = scalar_lea.vmem [#allocation0], 16
    %202 = vst.msk [vmem:[%s201] sm:$0x1] %vm200, %v199
    %s203 = scalar_lea.vmem %s0, 9
    %v204 = vld [vmem:[%s203] sm:$0x1]
    %205 = vrot.lane.b32.xlu0 %v204, 54
    %v206 = vpop.permute.xlu0 %205
    %vm207 = vcmask 490928
    %208 = vst.msk [vmem:[#allocation0] sm:$0x1] %vm207, %v206
    %s209 = scalar_lea.vmem %s0, 30
    %v210 = vld [vmem:[%s209] sm:$0x1]
    %211 = vrot.lane.b32.xlu0 %v210, 52
    %v212 = vpop.permute.xlu0 %211
    %vm213 = vcmask 474528
    %s214 = scalar_lea.vmem [#allocation0], 8
    %215 = vst.msk [vmem:[%s214] sm:$0x1] %vm213, %v212
    %s216 = scalar_lea.vmem %s0, 51
    %v217 = vld [vmem:[%s216] sm:$0x1]
    %218 = vrot.lane.b32.xlu0 %v217, 50
    %v219 = vpop.permute.xlu0 %218
    %vm220 = vcmask 458128
    %s221 = scalar_lea.vmem [#allocation0], 16
    %222 = vst.msk [vmem:[%s221] sm:$0x1] %vm220, %v219
    %s223 = scalar_lea.vmem %s0, 8
    %v224 = vld [vmem:[%s223] sm:$0x1]
    %225 = vrot.lane.b32.xlu0 %v224, 48
    %v226 = vpop.permute.xlu0 %225
    %vm227 = vcmask 441728
    %228 = vst.msk [vmem:[#allocation0] sm:$0x1] %vm227, %v226
    %s229 = scalar_lea.vmem %s0, 29
    %v230 = vld [vmem:[%s229] sm:$0x1]
    %231 = vrot.lane.b32.xlu0 %v230, 46
    %v232 = vpop.permute.xlu0 %231
    %vm233 = vcmask 425328
    %s234 = scalar_lea.vmem [#allocation0], 8
    %235 = vst.msk [vmem:[%s234] sm:$0x1] %vm233, %v232
    %s236 = scalar_lea.vmem %s0, 50
    %v237 = vld [vmem:[%s236] sm:$0x1]
    %238 = vrot.lane.b32.xlu0 %v237, 44
    %v239 = vpop.permute.xlu0 %238
    %vm240 = vcmask 408928
    %s241 = scalar_lea.vmem [#allocation0], 16
    %242 = vst.msk [vmem:[%s241] sm:$0x1] %vm240, %v239
    %s243 = scalar_lea.vmem %s0, 7
    %v244 = vld [vmem:[%s243] sm:$0x1]
    %245 = vrot.lane.b32.xlu0 %v244, 42
    %v246 = vpop.permute.xlu0 %245
    %vm247 = vcmask 392528
    %248 = vst.msk [vmem:[#allocation0] sm:$0x1] %vm247, %v246
    %s249 = scalar_lea.vmem %s0, 28
    %v250 = vld [vmem:[%s249] sm:$0x1]
    %251 = vrot.lane.b32.xlu0 %v250, 40
    %v252 = vpop.permute.xlu0 %251
    %vm253 = vcmask 376128
    %s254 = scalar_lea.vmem [#allocation0], 8
    %255 = vst.msk [vmem:[%s254] sm:$0x1] %vm253, %v252
    %s256 = scalar_lea.vmem %s0, 49
    %v257 = vld [vmem:[%s256] sm:$0x1]
    %258 = vrot.lane.b32.xlu0 %v257, 38
    %v259 = vpop.permute.xlu0 %258
    %vm260 = vcmask 359728
    %s261 = scalar_lea.vmem [#allocation0], 16
    %262 = vst.msk [vmem:[%s261] sm:$0x1] %vm260, %v259
    %s263 = scalar_lea.vmem %s0, 6
    %v264 = vld [vmem:[%s263] sm:$0x1]
    %265 = vrot.lane.b32.xlu0 %v264, 36
    %v266 = vpop.permute.xlu0 %265
    %vm267 = vcmask 343328
    %268 = vst.msk [vmem:[#allocation0] sm:$0x1] %vm267, %v266
    %s269 = scalar_lea.vmem %s0, 27
    %v270 = vld [vmem:[%s269] sm:$0x1]
    %271 = vrot.lane.b32.xlu0 %v270, 34
    %v272 = vpop.permute.xlu0 %271
    %vm273 = vcmask 326928
    %s274 = scalar_lea.vmem [#allocation0], 8
    %275 = vst.msk [vmem:[%s274] sm:$0x1] %vm273, %v272
    %s276 = scalar_lea.vmem %s0, 48
    %v277 = vld [vmem:[%s276] sm:$0x1]
    %278 = vrot.lane.b32.xlu0 %v277, 32
    %v279 = vpop.permute.xlu0 %278
    %vm280 = vcmask 310528
    %s281 = scalar_lea.vmem [#allocation0], 16
    %282 = vst.msk [vmem:[%s281] sm:$0x1] %vm280, %v279
    %s283 = scalar_lea.vmem %s0, 5
    %v284 = vld [vmem:[%s283] sm:$0x1]
    %285 = vrot.lane.b32.xlu0 %v284, 30
    %v286 = vpop.permute.xlu0 %285
    %vm287 = vcmask 294128
    %288 = vst.msk [vmem:[#allocation0] sm:$0x1] %vm287, %v286
    %s289 = scalar_lea.vmem %s0, 26
    %v290 = vld [vmem:[%s289] sm:$0x1]
    %291 = vrot.lane.b32.xlu0 %v290, 28
    %v292 = vpop.permute.xlu0 %291
    %vm293 = vcmask 277728
    %s294 = scalar_lea.vmem [#allocation0], 8
    %295 = vst.msk [vmem:[%s294] sm:$0x1] %vm293, %v292
    %s296 = scalar_lea.vmem %s0, 47
    %v297 = vld [vmem:[%s296] sm:$0x1]
    %298 = vrot.lane.b32.xlu0 %v297, 26
    %v299 = vpop.permute.xlu0 %298
    %vm300 = vcmask 261328
    %s301 = scalar_lea.vmem [#allocation0], 16
    %302 = vst.msk [vmem:[%s301] sm:$0x1] %vm300, %v299
    %s303 = scalar_lea.vmem %s0, 4
    %v304 = vld [vmem:[%s303] sm:$0x1]
    %305 = vrot.lane.b32.xlu0 %v304, 24
    %v306 = vpop.permute.xlu0 %305
    %vm307 = vcmask 244928
    %308 = vst.msk [vmem:[#allocation0] sm:$0x1] %vm307, %v306
    %s309 = scalar_lea.vmem %s0, 25
    %v310 = vld [vmem:[%s309] sm:$0x1]
    %311 = vrot.lane.b32.xlu0 %v310, 22
    %v312 = vpop.permute.xlu0 %311
    %vm313 = vcmask 228528
    %s314 = scalar_lea.vmem [#allocation0], 8
    %315 = vst.msk [vmem:[%s314] sm:$0x1] %vm313, %v312
    %s316 = scalar_lea.vmem %s0, 46
    %v317 = vld [vmem:[%s316] sm:$0x1]
    %318 = vrot.lane.b32.xlu0 %v317, 20
    %v319 = vpop.permute.xlu0 %318
    %vm320 = vcmask 212128
    %s321 = scalar_lea.vmem [#allocation0], 16
    %322 = vst.msk [vmem:[%s321] sm:$0x1] %vm320, %v319
    %s323 = scalar_lea.vmem %s0, 3
    %v324 = vld [vmem:[%s323] sm:$0x1]
    %325 = vrot.lane.b32.xlu0 %v324, 18
    %v326 = vpop.permute.xlu0 %325
    %vm327 = vcmask 195728
    %328 = vst.msk [vmem:[#allocation0] sm:$0x1] %vm327, %v326
    %s329 = scalar_lea.vmem %s0, 24
    %v330 = vld [vmem:[%s329] sm:$0x1]
    %331 = vrot.lane.b32.xlu0 %v330, 16
    %v332 = vpop.permute.xlu0 %331
    %vm333 = vcmask 179328
    %s334 = scalar_lea.vmem [#allocation0], 8
    %335 = vst.msk [vmem:[%s334] sm:$0x1] %vm333, %v332
    %s336 = scalar_lea.vmem %s0, 45
    %v337 = vld [vmem:[%s336] sm:$0x1]
    %338 = vrot.lane.b32.xlu0 %v337, 14
    %v339 = vpop.permute.xlu0 %338
    %vm340 = vcmask 162928
    %s341 = scalar_lea.vmem [#allocation0], 16
    %342 = vst.msk [vmem:[%s341] sm:$0x1] %vm340, %v339
    %s343 = scalar_lea.vmem %s0, 2
    %v344 = vld [vmem:[%s343] sm:$0x1]
    %345 = vrot.lane.b32.xlu0 %v344, 12
    %v346 = vpop.permute.xlu0 %345
    %vm347 = vcmask 146528
    %348 = vst.msk [vmem:[#allocation0] sm:$0x1] %vm347, %v346
    %s349 = scalar_lea.vmem %s0, 23
    %v350 = vld [vmem:[%s349] sm:$0x1]
    %351 = vrot.lane.b32.xlu0 %v350, 10
    %v352 = vpop.permute.xlu0 %351
    %vm353 = vcmask 130128
    %s354 = scalar_lea.vmem [#allocation0], 8
    %355 = vst.msk [vmem:[%s354] sm:$0x1] %vm353, %v352
    %s356 = scalar_lea.vmem %s0, 44
    %v357 = vld [vmem:[%s356] sm:$0x1]
    %358 = vrot.lane.b32.xlu0 %v357, 8
    %v359 = vpop.permute.xlu0 %358
    %vm360 = vcmask 113728
    %s361 = scalar_lea.vmem [#allocation0], 16
    %362 = vst.msk [vmem:[%s361] sm:$0x1] %vm360, %v359
    %s363 = scalar_lea.vmem %s0, 1
    %v364 = vld [vmem:[%s363] sm:$0x1]
    %365 = vrot.lane.b32.xlu0 %v364, 6
    %v366 = vpop.permute.xlu0 %365
    %vm367 = vcmask 97328
    %368 = vst.msk [vmem:[#allocation0] sm:$0x1] %vm367, %v366
    %s369 = scalar_lea.vmem %s0, 22
    %v370 = vld [vmem:[%s369] sm:$0x1]
    %371 = vrot.lane.b32.xlu0 %v370, 4
    %v372 = vpop.permute.xlu0 %371
    %vm373 = vcmask 80928
    %s374 = scalar_lea.vmem [#allocation0], 8
    %375 = vst.msk [vmem:[%s374] sm:$0x1] %vm373, %v372
    %s376 = scalar_lea.vmem %s0, 43
    %v377 = vld [vmem:[%s376] sm:$0x1]
    %378 = vrot.lane.b32.xlu0 %v377, 2
    %v379 = vpop.permute.xlu0 %378
    %vm380 = vcmask 64528
    %s381 = scalar_lea.vmem [#allocation0], 16
    %382 = vst.msk [vmem:[%s381] sm:$0x1] %vm380, %v379
    %s384 = ssub.s32 2, 1
    %v385 = vld [vmem:[#allocation0] sm:%s384]
    %s387 = ssub.s32 2, 1
    %388 = vst [vmem:[%s1] sm:%s387] %v385
    %s389 = scalar_lea.vmem [#allocation0], 8
    %v390 = vld [vmem:[%s389] sm:%s384]
    %s392 = ssub.s32 2, 1
    %s393 = scalar_lea.vmem %s1, 1
    %394 = vst [vmem:[%s393] sm:%s392] %v390
    %s395 = scalar_lea.vmem [#allocation0], 16
    %v396 = vld [vmem:[%s395] sm:%s384]
    %s398 = ssub.s32 2, 1
    %s399 = scalar_lea.vmem %s1, 2
    %400 = vst [vmem:[%s399] sm:%s398] %v396

// kernel: lenet5_forward.3
$region0: #{lenet5_forward.3}
  #allocation0 [shape = 'u32[]', space=smem, size = 0x4, offset = 0x4, fixed_abs, tag = 'smem constant byte address 0x4 - core index']
  #allocation1 [shape = 'u32[72,128]{1,0:T(1,128)}', space=vmem, size = 0x9000, scoped, tag = 'internal scratch']
  %s0 = inlined_call_operand.vmem [shape: f32[8,16,64], index: 0, kind: input, shape index: {}]
  %s1 = inlined_call_operand.vmem [shape: f32[192,336], index: 1, kind: input, shape index: {}]
  %s2 = inlined_call_operand.vmem [shape: f32[1,336], index: 2, kind: input, shape index: {}]
  %s3 = inlined_call_operand.vmem [shape: f32[8,14,84], index: 3, kind: output, shape index: {}]
  %s4 = sld [smem:[#allocation0]]
  $region22: #{lenet5_forward.3} parent=0
    _
  %s6 = ssub.s32 1, %s4
  %s7 = scalar_select 0, %s6, %s4
  // Predicated region
  $region2: #{lenet5_forward.3} parent=0 // pred_check
    _
  $region3: #{lenet5_forward.3} parent=0 // pred_check_branch
    %9 = sbr.rel (0) target = $region5
  $region4: #{lenet5_forward.3} parent=0 // pred_region
    _
  $region5: #{lenet5_forward.3} parent=0 // pred_fallthru
    _
  // Predicated region
  $region6: #{lenet5_forward.3} parent=0 // pred_check
    _
  $region7: #{lenet5_forward.3} parent=0 // pred_check_branch
    %11 = sbr.rel (0) target = $region9
  $region8: #{lenet5_forward.3} parent=0 // pred_region
    _
  $region9: #{lenet5_forward.3} parent=0 // pred_fallthru
    _
  // Predicated region
  $region10: #{lenet5_forward.3} parent=0 // pred_check
    _
  $region11: #{lenet5_forward.3} parent=0 // pred_check_branch
    %13 = sbr.rel (0) target = $region13
  $region12: #{lenet5_forward.3} parent=0 // pred_region
    _
  $region13: #{lenet5_forward.3} parent=0 // pred_fallthru
    _
  %v14 = vld [vmem:[%s0] sm:$0xff]
  %v15 = vld [vmem:[%s0 + $0x8] sm:$0xff]
  %vm18 = vcmask 1046528
  %v19 = vrot.slane %v14, 1
  %v20 = vrot.slane %v15, 1
  %v21 = vsel %vm18, %v19, %v20
  %22 = vrot.lane.b32.xlu0 %v21, 64
  %v23 = vpop.permute.xlu0 %22
  %24 = vrot.lane.b32.xlu0 %v20, 64
  %v25 = vpop.permute.xlu0 %24
  %vm28 = vcmask 1045504
  %v29 = vrot.slane %v14, 2
  %v30 = vrot.slane %v15, 2
  %v31 = vsel %vm28, %v29, %v30
  %vm32 = vcmask 523264
  %v33 = vsel %vm32, %v14, %v23
  %v34 = vsel %vm32, %v15, %v25
  %v35 = vld [vmem:[%s1] sm:$0xff]
  %v36 = vld [vmem:[%s1 + $0x8] sm:$0xff]
  %v37 = vld [vmem:[%s1 + $0x10] sm:$0xff]
  %v38 = vld [vmem:[%s1 + $0x18] sm:$0xff]
  %v39 = vld [vmem:[%s1 + $0x20] sm:$0xff]
  %v40 = vld [vmem:[%s1 + $0x28] sm:$0xff]
  %v41 = vld [vmem:[%s1 + $0x30] sm:$0xff]
  %v42 = vld [vmem:[%s1 + $0x38] sm:$0xff]
  %v43 = vld [vmem:[%s1 + $0x40] sm:$0xff]
  %v44 = vld [vmem:[%s1 + $0x48] sm:$0xff]
  %v45 = vld [vmem:[%s1 + $0x50] sm:$0xff]
  %v46 = vld [vmem:[%s1 + $0x58] sm:$0xff]
  %v47 = vld [vmem:[%s1 + $0x60] sm:$0xff]
  %v48 = vld [vmem:[%s1 + $0x68] sm:$0xff]
  %v49 = vld [vmem:[%s1 + $0x70] sm:$0xff]
  %v50 = vld [vmem:[%s1 + $0x78] sm:$0xff]
  %v51 = vld [vmem:[%s1 + $0x80] sm:$0xff]
  %v52 = vld [vmem:[%s1 + $0x88] sm:$0xff]
  %v53 = vld [vmem:[%s1 + $0x90] sm:$0xff]
  %v54 = vld [vmem:[%s1 + $0x98] sm:$0xff]
  %v55 = vld [vmem:[%s1 + $0xa0] sm:$0xff]
  %v56 = vld [vmem:[%s1 + $0xa8] sm:$0xff]
  %v57 = vld [vmem:[%s1 + $0xb0] sm:$0xff]
  %v58 = vld [vmem:[%s1 + $0xb8] sm:$0xff]
  %v59 = vld [vmem:[%s1 + $0xc0] sm:$0xff]
  %v60 = vld [vmem:[%s1 + $0xc8] sm:$0xff]
  %v61 = vld [vmem:[%s1 + $0xd0] sm:$0xff]
  %v62 = vld [vmem:[%s1 + $0xd8] sm:$0xff]
  %v63 = vld [vmem:[%s1 + $0xe0] sm:$0xff]
  %v64 = vld [vmem:[%s1 + $0xe8] sm:$0xff]
  %v65 = vld [vmem:[%s1 + $0xf0] sm:$0xff]
  %v66 = vld [vmem:[%s1 + $0xf8] sm:$0xff]
  %v67 = vld [vmem:[%s1 + $0x100] sm:$0xff]
  %v68 = vld [vmem:[%s1 + $0x108] sm:$0xff]
  %v69 = vld [vmem:[%s1 + $0x110] sm:$0xff]
  %v70 = vld [vmem:[%s1 + $0x118] sm:$0xff]
  %v71 = vld [vmem:[%s1 + $0x120] sm:$0xff]
  %v72 = vld [vmem:[%s1 + $0x128] sm:$0xff]
  %v73 = vld [vmem:[%s1 + $0x130] sm:$0xff]
  %v74 = vld [vmem:[%s1 + $0x138] sm:$0xff]
  %v75 = vld [vmem:[%s1 + $0x140] sm:$0xff]
  %v76 = vld [vmem:[%s1 + $0x148] sm:$0xff]
  %v77 = vld [vmem:[%s1 + $0x150] sm:$0xff]
  %v78 = vld [vmem:[%s1 + $0x158] sm:$0xff]
  %v79 = vld [vmem:[%s1 + $0x160] sm:$0xff]
  %v80 = vld [vmem:[%s1 + $0x168] sm:$0xff]
  %v81 = vld [vmem:[%s1 + $0x170] sm:$0xff]
  %v82 = vld [vmem:[%s1 + $0x178] sm:$0xff]
  %v83 = vld [vmem:[%s1 + $0x180] sm:$0xff]
  %v84 = vld [vmem:[%s1 + $0x188] sm:$0xff]
  %v85 = vld [vmem:[%s1 + $0x190] sm:$0xff]
  %v86 = vld [vmem:[%s1 + $0x198] sm:$0xff]
  %v87 = vld [vmem:[%s1 + $0x1a0] sm:$0xff]
  %v88 = vld [vmem:[%s1 + $0x1a8] sm:$0xff]
  %v89 = vld [vmem:[%s1 + $0x1b0] sm:$0xff]
  %v90 = vld [vmem:[%s1 + $0x1b8] sm:$0xff]
  %v91 = vld [vmem:[%s1 + $0x1c0] sm:$0xff]
  %v92 = vld [vmem:[%s1 + $0x1c8] sm:$0xff]
  %v93 = vld [vmem:[%s1 + $0x1d0] sm:$0xff]
  %v94 = vld [vmem:[%s1 + $0x1d8] sm:$0xff]
  %v95 = vld [vmem:[%s1 + $0x1e0] sm:$0xff]
  %v96 = vld [vmem:[%s1 + $0x1e8] sm:$0xff]
  %v97 = vld [vmem:[%s1 + $0x1f0] sm:$0xff]
  %v98 = vld [vmem:[%s1 + $0x1f8] sm:$0xff]
  %v99 = vld [vmem:[%s1 + $0x200] sm:$0xff]
  %v100 = vld [vmem:[%s1 + $0x208] sm:$0xff]
  %v101 = vld [vmem:[%s1 + $0x210] sm:$0xff]
  %v102 = vld [vmem:[%s1 + $0x218] sm:$0xff]
  %v103 = vld [vmem:[%s1 + $0x220] sm:$0xff]
  %v104 = vld [vmem:[%s1 + $0x228] sm:$0xff]
  %v105 = vld [vmem:[%s1 + $0x230] sm:$0xff]
  %v106 = vld [vmem:[%s1 + $0x238] sm:$0xff]
  %v107 = vld [vmem:[%s2] sm:$0x7]
  %v109 = vperm.slane %v107, 0
  %v110 = vperm.slane %v107, 1
  %v111 = vperm.slane %v107, 2
  %v115 = vsel %vm32, %v31, 0
  %v117 = vsel %vm32, %v30, 0
  %119 = vmatpush.msra.mxu0 %v80
  %120 = vmatpush.msra.mxu0 %v77
  %121 = vmatpush.msra.mxu0 %v74
  %122 = vmatpush.msra.mxu0 %v71
  %123 = vmatpush.msra.mxu0 %v68
  %124 = vmatpush.msra.mxu0 %v65
  %125 = vmatpush.msra.mxu0 %v62
  %126 = vmatpush.msra.mxu0 %v59
  %127 = vmatpush.msra.mxu0 %v56
  %128 = vmatpush.msra.mxu0 %v53
  %129 = vmatpush.msra.mxu0 %v50
  %130 = vmatpush.msra.mxu0 %v47
  %131 = vmatpush.msra.mxu0 %v44
  %132 = vmatpush.msra.mxu0 %v41
  %133 = vmatpush.msra.mxu0 %v38
  %134 = vmatpush.msra.mxu0 %v35
  %135 = vmatmul.f32.gmra.mxu0 %v33
  %v136 = vpop.f32.mrf.mxu0
  %v137 = vadd.f32 %v109, %v136
  %138 = vmatmul.f32.gmra.mxu0 %v34
  %v139 = vpop.f32.mrf.mxu0
  %v140 = vadd.f32 %v109, %v139
  %141 = vdwg.mxu0
  %142 = vmatpush.msra.mxu0 0.0
  %143 = vmatpush.msra.mxu0 0.0
  %144 = vmatpush.msra.mxu0 0.0
  %145 = vmatpush.msra.mxu0 0.0
  %146 = vmatpush.msra.mxu0 0.0
  %147 = vmatpush.msra.mxu0 0.0
  %148 = vmatpush.msra.mxu0 0.0
  %149 = vmatpush.msra.mxu0 0.0
  %150 = vmatpush.msra.mxu0 %v104
  %151 = vmatpush.msra.mxu0 %v101
  %152 = vmatpush.msra.mxu0 %v98
  %153 = vmatpush.msra.mxu0 %v95
  %154 = vmatpush.msra.mxu0 %v92
  %155 = vmatpush.msra.mxu0 %v89
  %156 = vmatpush.msra.mxu0 %v86
  %157 = vmatpush.msra.mxu0 %v83
  %158 = vmatmul.f32.gmra.mxu0 %v115
  %v159 = vpop.f32.mrf.mxu0
  %v160 = vadd.f32 %v137, %v159
  %161 = vmatmul.f32.gmra.mxu0 %v117
  %v162 = vpop.f32.mrf.mxu0
  %v163 = vadd.f32 %v140, %v162
  %164 = vdwg.mxu0
  %165 = vmatpush.msra.mxu0 %v81
  %166 = vmatpush.msra.mxu0 %v78
  %167 = vmatpush.msra.mxu0 %v75
  %168 = vmatpush.msra.mxu0 %v72
  %169 = vmatpush.msra.mxu0 %v69
  %170 = vmatpush.msra.mxu0 %v66
  %171 = vmatpush.msra.mxu0 %v63
  %172 = vmatpush.msra.mxu0 %v60
  %173 = vmatpush.msra.mxu0 %v57
  %174 = vmatpush.msra.mxu0 %v54
  %175 = vmatpush.msra.mxu0 %v51
  %176 = vmatpush.msra.mxu0 %v48
  %177 = vmatpush.msra.mxu0 %v45
  %178 = vmatpush.msra.mxu0 %v42
  %179 = vmatpush.msra.mxu0 %v39
  %180 = vmatpush.msra.mxu0 %v36
  %181 = vmatmul.f32.gmra.mxu0 %v33
  %v182 = vpop.f32.mrf.mxu0
  %v183 = vadd.f32 %v110, %v182
  %184 = vmatmul.f32.gmra.mxu0 %v34
  %v185 = vpop.f32.mrf.mxu0
  %v186 = vadd.f32 %v110, %v185
  %187 = vdwg.mxu0
  %188 = vmatpush.msra.mxu0 0.0
  %189 = vmatpush.msra.mxu0 0.0
  %190 = vmatpush.msra.mxu0 0.0
  %191 = vmatpush.msra.mxu0 0.0
  %192 = vmatpush.msra.mxu0 0.0
  %193 = vmatpush.msra.mxu0 0.0
  %194 = vmatpush.msra.mxu0 0.0
  %195 = vmatpush.msra.mxu0 0.0
  %196 = vmatpush.msra.mxu0 %v105
  %197 = vmatpush.msra.mxu0 %v102
  %198 = vmatpush.msra.mxu0 %v99
  %199 = vmatpush.msra.mxu0 %v96
  %200 = vmatpush.msra.mxu0 %v93
  %201 = vmatpush.msra.mxu0 %v90
  %202 = vmatpush.msra.mxu0 %v87
  %203 = vmatpush.msra.mxu0 %v84
  %204 = vmatmul.f32.gmra.mxu0 %v115
  %v205 = vpop.f32.mrf.mxu0
  %v206 = vadd.f32 %v183, %v205
  %207 = vmatmul.f32.gmra.mxu0 %v117
  %v208 = vpop.f32.mrf.mxu0
  %v209 = vadd.f32 %v186, %v208
  %210 = vdwg.mxu0
  %211 = vmatpush.msra.mxu0 %v82
  %212 = vmatpush.msra.mxu0 %v79
  %213 = vmatpush.msra.mxu0 %v76
  %214 = vmatpush.msra.mxu0 %v73
  %215 = vmatpush.msra.mxu0 %v70
  %216 = vmatpush.msra.mxu0 %v67
  %217 = vmatpush.msra.mxu0 %v64
  %218 = vmatpush.msra.mxu0 %v61
  %219 = vmatpush.msra.mxu0 %v58
  %220 = vmatpush.msra.mxu0 %v55
  %221 = vmatpush.msra.mxu0 %v52
  %222 = vmatpush.msra.mxu0 %v49
  %223 = vmatpush.msra.mxu0 %v46
  %224 = vmatpush.msra.mxu0 %v43
  %225 = vmatpush.msra.mxu0 %v40
  %226 = vmatpush.msra.mxu0 %v37
  %227 = vmatmul.f32.gmra.mxu0 %v33
  %v228 = vpop.f32.mrf.mxu0
  %v229 = vadd.f32 %v111, %v228
  %230 = vmatmul.f32.gmra.mxu0 %v34
  %v231 = vpop.f32.mrf.mxu0
  %v232 = vadd.f32 %v111, %v231
  %233 = vdwg.mxu0
  %234 = vmatpush.msra.mxu0 0.0
  %235 = vmatpush.msra.mxu0 0.0
  %236 = vmatpush.msra.mxu0 0.0
  %237 = vmatpush.msra.mxu0 0.0
  %238 = vmatpush.msra.mxu0 0.0
  %239 = vmatpush.msra.mxu0 0.0
  %240 = vmatpush.msra.mxu0 0.0
  %241 = vmatpush.msra.mxu0 0.0
  %242 = vmatpush.msra.mxu0 %v106
  %243 = vmatpush.msra.mxu0 %v103
  %244 = vmatpush.msra.mxu0 %v100
  %245 = vmatpush.msra.mxu0 %v97
  %246 = vmatpush.msra.mxu0 %v94
  %247 = vmatpush.msra.mxu0 %v91
  %248 = vmatpush.msra.mxu0 %v88
  %249 = vmatpush.msra.mxu0 %v85
  %250 = vmatmul.f32.gmra.mxu0 %v115
  %v251 = vpop.f32.mrf.mxu0
  %v252 = vadd.f32 %v229, %v251
  %253 = vmatmul.f32.gmra.mxu0 %v117
  %v254 = vpop.f32.mrf.mxu0
  %v255 = vadd.f32 %v232, %v254
  %256 = vdwg.mxu0
  %v257 = vtanh.pop %v160
  %v258 = vtanh.pop %v206
  %v259 = vtanh.pop %v252
  %v260 = vtanh.pop %v163
  %v261 = vtanh.pop %v209
  %v262 = vtanh.pop %v255
  %267 = vrot.lane.b32.xlu0 %v257, 44
  %v268 = vpop.permute.xlu0 %267
  %269 = vrot.lane.b32.xlu0 %v258, 44
  %v270 = vpop.permute.xlu0 %269
  %271 = vrot.lane.b32.xlu0 %v260, 44
  %v272 = vpop.permute.xlu0 %271
  %273 = vrot.lane.b32.xlu0 %v261, 44
  %v274 = vpop.permute.xlu0 %273
  %vm275 = vcmask 359424
  %v276 = vsel %vm275, %v268, %v270
  %v277 = vsel %vm275, %v272, %v274
  %v280 = vadd.f32 %v257, %v276
  %v281 = vadd.f32 %v260, %v277
  %282 = vrot.lane.b32.xlu0 %v258, 88
  %v283 = vpop.permute.xlu0 %282
  %284 = vrot.lane.b32.xlu0 %v261, 88
  %v285 = vpop.permute.xlu0 %284
  %v288 = vadd.f32 %v280, %v283
  %v289 = vadd.f32 %v281, %v285
  %292 = vrot.lane.b32.xlu0 %v258, 4
  %v293 = vpop.permute.xlu0 %292
  %294 = vrot.lane.b32.xlu0 %v259, 4
  %v295 = vpop.permute.xlu0 %294
  %296 = vrot.lane.b32.xlu0 %v261, 4
  %v297 = vpop.permute.xlu0 %296
  %298 = vrot.lane.b32.xlu0 %v262, 4
  %v299 = vpop.permute.xlu0 %298
  %vm300 = vcmask 31744
  %v301 = vsel %vm300, %v293, %v295
  %v302 = vsel %vm300, %v297, %v299
  %v305 = vadd.f32 %v288, %v301
  %v306 = vadd.f32 %v289, %v302
  %v307 = vmul.f32 %v305, 0.25
  %v308 = vmul.f32 %v306, 0.25
  %vm309 = vcmask 687104
  %310 = vst.msk [vmem:[%s3] sm:$0xff] %vm309, %v307
  %vm311 = vcmask 685056
  %312 = vst.msk [vmem:[%s3 + $0x8] sm:$0x3f] %vm311, %v308
  %s313 = scalar_lea.vmem %s0, 16
  %v314 = vld [vmem:[%s313] sm:$0xff]
  %v315 = vld [vmem:[%s313 + $0x8] sm:$0xff]
  %v318 = vrot.slane %v314, 1
  %v319 = vrot.slane %v315, 1
  %v320 = vsel %vm18, %v318, %v319
  %321 = vrot.lane.b32.xlu0 %v320, 64
  %v322 = vpop.permute.xlu0 %321
  %323 = vrot.lane.b32.xlu0 %v319, 64
  %v324 = vpop.permute.xlu0 %323
  %v327 = vrot.slane %v314, 2
  %v328 = vrot.slane %v315, 2
  %v329 = vsel %vm28, %v327, %v328
  %v330 = vsel %vm32, %v314, %v322
  %v331 = vsel %vm32, %v315, %v324
  %v332 = vld [vmem:[%s1] sm:$0xff]
  %v333 = vld [vmem:[%s1 + $0x8] sm:$0xff]
  %v334 = vld [vmem:[%s1 + $0x10] sm:$0xff]
  %v335 = vld [vmem:[%s1 + $0x18] sm:$0xff]
  %v336 = vld [vmem:[%s1 + $0x20] sm:$0xff]
  %v337 = vld [vmem:[%s1 + $0x28] sm:$0xff]
  %v338 = vld [vmem:[%s1 + $0x30] sm:$0xff]
  %v339 = vld [vmem:[%s1 + $0x38] sm:$0xff]
  %v340 = vld [vmem:[%s1 + $0x40] sm:$0xff]
  %v341 = vld [vmem:[%s1 + $0x48] sm:$0xff]
  %v342 = vld [vmem:[%s1 + $0x50] sm:$0xff]
  %v343 = vld [vmem:[%s1 + $0x58] sm:$0xff]
  %v344 = vld [vmem:[%s1 + $0x60] sm:$0xff]
  %v345 = vld [vmem:[%s1 + $0x68] sm:$0xff]
  %v346 = vld [vmem:[%s1 + $0x70] sm:$0xff]
  %v347 = vld [vmem:[%s1 + $0x78] sm:$0xff]
  %v348 = vld [vmem:[%s1 + $0x80] sm:$0xff]
  %v349 = vld [vmem:[%s1 + $0x88] sm:$0xff]
  %v350 = vld [vmem:[%s1 + $0x90] sm:$0xff]
  %v351 = vld [vmem:[%s1 + $0x98] sm:$0xff]
  %v352 = vld [vmem:[%s1 + $0xa0] sm:$0xff]
  %v353 = vld [vmem:[%s1 + $0xa8] sm:$0xff]
  %v354 = vld [vmem:[%s1 + $0xb0] sm:$0xff]
  %v355 = vld [vmem:[%s1 + $0xb8] sm:$0xff]
  %v356 = vld [vmem:[%s1 + $0xc0] sm:$0xff]
  %v357 = vld [vmem:[%s1 + $0xc8] sm:$0xff]
  %v358 = vld [vmem:[%s1 + $0xd0] sm:$0xff]
  %v359 = vld [vmem:[%s1 + $0xd8] sm:$0xff]
  %v360 = vld [vmem:[%s1 + $0xe0] sm:$0xff]
  %v361 = vld [vmem:[%s1 + $0xe8] sm:$0xff]
  %v362 = vld [vmem:[%s1 + $0xf0] sm:$0xff]
  %v363 = vld [vmem:[%s1 + $0xf8] sm:$0xff]
  %v364 = vld [vmem:[%s1 + $0x100] sm:$0xff]
  %v365 = vld [vmem:[%s1 + $0x108] sm:$0xff]
  %v366 = vld [vmem:[%s1 + $0x110] sm:$0xff]
  %v367 = vld [vmem:[%s1 + $0x118] sm:$0xff]
  %v368 = vld [vmem:[%s1 + $0x120] sm:$0xff]
  %v369 = vld [vmem:[%s1 + $0x128] sm:$0xff]
  %v370 = vld [vmem:[%s1 + $0x130] sm:$0xff]
  %v371 = vld [vmem:[%s1 + $0x138] sm:$0xff]
  %v372 = vld [vmem:[%s1 + $0x140] sm:$0xff]
  %v373 = vld [vmem:[%s1 + $0x148] sm:$0xff]
  %v374 = vld [vmem:[%s1 + $0x150] sm:$0xff]
  %v375 = vld [vmem:[%s1 + $0x158] sm:$0xff]
  %v376 = vld [vmem:[%s1 + $0x160] sm:$0xff]
  %v377 = vld [vmem:[%s1 + $0x168] sm:$0xff]
  %v378 = vld [vmem:[%s1 + $0x170] sm:$0xff]
  %v379 = vld [vmem:[%s1 + $0x178] sm:$0xff]
  %v380 = vld [vmem:[%s1 + $0x180] sm:$0xff]
  %v381 = vld [vmem:[%s1 + $0x188] sm:$0xff]
  %v382 = vld [vmem:[%s1 + $0x190] sm:$0xff]
  %v383 = vld [vmem:[%s1 + $0x198] sm:$0xff]
  %v384 = vld [vmem:[%s1 + $0x1a0] sm:$0xff]
  %v385 = vld [vmem:[%s1 + $0x1a8] sm:$0xff]
  %v386 = vld [vmem:[%s1 + $0x1b0] sm:$0xff]
  %v387 = vld [vmem:[%s1 + $0x1b8] sm:$0xff]
  %v388 = vld [vmem:[%s1 + $0x1c0] sm:$0xff]
  %v389 = vld [vmem:[%s1 + $0x1c8] sm:$0xff]
  %v390 = vld [vmem:[%s1 + $0x1d0] sm:$0xff]
  %v391 = vld [vmem:[%s1 + $0x1d8] sm:$0xff]
  %v392 = vld [vmem:[%s1 + $0x1e0] sm:$0xff]
  %v393 = vld [vmem:[%s1 + $0x1e8] sm:$0xff]
  %v394 = vld [vmem:[%s1 + $0x1f0] sm:$0xff]
  %v395 = vld [vmem:[%s1 + $0x1f8] sm:$0xff]
  %v396 = vld [vmem:[%s1 + $0x200] sm:$0xff]
  %v397 = vld [vmem:[%s1 + $0x208] sm:$0xff]
  %v398 = vld [vmem:[%s1 + $0x210] sm:$0xff]
  %v399 = vld [vmem:[%s1 + $0x218] sm:$0xff]
  %v400 = vld [vmem:[%s1 + $0x220] sm:$0xff]
  %v401 = vld [vmem:[%s1 + $0x228] sm:$0xff]
  %v402 = vld [vmem:[%s1 + $0x230] sm:$0xff]
  %v403 = vld [vmem:[%s1 + $0x238] sm:$0xff]
  %v404 = vld [vmem:[%s2] sm:$0x7]
  %v406 = vperm.slane %v404, 0
  %v407 = vperm.slane %v404, 1
  %v408 = vperm.slane %v404, 2
  %v412 = vsel %vm32, %v329, 0
  %v414 = vsel %vm32, %v328, 0
  %416 = vmatpush.msra.mxu0 %v377
  %417 = vmatpush.msra.mxu0 %v374
  %418 = vmatpush.msra.mxu0 %v371
  %419 = vmatpush.msra.mxu0 %v368
  %420 = vmatpush.msra.mxu0 %v365
  %421 = vmatpush.msra.mxu0 %v362
  %422 = vmatpush.msra.mxu0 %v359
  %423 = vmatpush.msra.mxu0 %v356
  %424 = vmatpush.msra.mxu0 %v353
  %425 = vmatpush.msra.mxu0 %v350
  %426 = vmatpush.msra.mxu0 %v347
  %427 = vmatpush.msra.mxu0 %v344
  %428 = vmatpush.msra.mxu0 %v341
  %429 = vmatpush.msra.mxu0 %v338
  %430 = vmatpush.msra.mxu0 %v335
  %431 = vmatpush.msra.mxu0 %v332
  %432 = vmatmul.f32.gmra.mxu0 %v330
  %v433 = vpop.f32.mrf.mxu0
  %v434 = vadd.f32 %v406, %v433
  %435 = vmatmul.f32.gmra.mxu0 %v331
  %v436 = vpop.f32.mrf.mxu0
  %v437 = vadd.f32 %v406, %v436
  %438 = vdwg.mxu0
  %439 = vmatpush.msra.mxu0 0.0
  %440 = vmatpush.msra.mxu0 0.0
  %441 = vmatpush.msra.mxu0 0.0
  %442 = vmatpush.msra.mxu0 0.0
  %443 = vmatpush.msra.mxu0 0.0
  %444 = vmatpush.msra.mxu0 0.0
  %445 = vmatpush.msra.mxu0 0.0
  %446 = vmatpush.msra.mxu0 0.0
  %447 = vmatpush.msra.mxu0 %v401
  %448 = vmatpush.msra.mxu0 %v398
  %449 = vmatpush.msra.mxu0 %v395
  %450 = vmatpush.msra.mxu0 %v392
  %451 = vmatpush.msra.mxu0 %v389
  %452 = vmatpush.msra.mxu0 %v386
  %453 = vmatpush.msra.mxu0 %v383
  %454 = vmatpush.msra.mxu0 %v380
  %455 = vmatmul.f32.gmra.mxu0 %v412
  %v456 = vpop.f32.mrf.mxu0
  %v457 = vadd.f32 %v434, %v456
  %458 = vmatmul.f32.gmra.mxu0 %v414
  %v459 = vpop.f32.mrf.mxu0
  %v460 = vadd.f32 %v437, %v459
  %461 = vdwg.mxu0
  %462 = vmatpush.msra.mxu0 %v378
  %463 = vmatpush.msra.mxu0 %v375
  %464 = vmatpush.msra.mxu0 %v372
  %465 = vmatpush.msra.mxu0 %v369
  %466 = vmatpush.msra.mxu0 %v366
  %467 = vmatpush.msra.mxu0 %v363
  %468 = vmatpush.msra.mxu0 %v360
  %469 = vmatpush.msra.mxu0 %v357
  %470 = vmatpush.msra.mxu0 %v354
  %471 = vmatpush.msra.mxu0 %v351
  %472 = vmatpush.msra.mxu0 %v348
  %473 = vmatpush.msra.mxu0 %v345
  %474 = vmatpush.msra.mxu0 %v342
  %475 = vmatpush.msra.mxu0 %v339
  %476 = vmatpush.msra.mxu0 %v336
  %477 = vmatpush.msra.mxu0 %v333
  %478 = vmatmul.f32.gmra.mxu0 %v330
  %v479 = vpop.f32.mrf.mxu0
  %v480 = vadd.f32 %v407, %v479
  %481 = vmatmul.f32.gmra.mxu0 %v331
  %v482 = vpop.f32.mrf.mxu0
  %v483 = vadd.f32 %v407, %v482
  %484 = vdwg.mxu0
  %485 = vmatpush.msra.mxu0 0.0
  %486 = vmatpush.msra.mxu0 0.0
  %487 = vmatpush.msra.mxu0 0.0
  %488 = vmatpush.msra.mxu0 0.0
  %489 = vmatpush.msra.mxu0 0.0
  %490 = vmatpush.msra.mxu0 0.0
  %491 = vmatpush.msra.mxu0 0.0
  %492 = vmatpush.msra.mxu0 0.0
  %493 = vmatpush.msra.mxu0 %v402
  %494 = vmatpush.msra.mxu0 %v399
  %495 = vmatpush.msra.mxu0 %v396
  %496 = vmatpush.msra.mxu0 %v393
  %497 = vmatpush.msra.mxu0 %v390
  %498 = vmatpush.msra.mxu0 %v387
  %499 = vmatpush.msra.mxu0 %v384
  %500 = vmatpush.msra.mxu0 %v381
  %501 = vmatmul.f32.gmra.mxu0 %v412
  %v502 = vpop.f32.mrf.mxu0
  %v503 = vadd.f32 %v480, %v502
  %504 = vmatmul.f32.gmra.mxu0 %v414
  %v505 = vpop.f32.mrf.mxu0
  %v506 = vadd.f32 %v483, %v505
  %507 = vdwg.mxu0
  %508 = vmatpush.msra.mxu0 %v379
  %509 = vmatpush.msra.mxu0 %v376
  %510 = vmatpush.msra.mxu0 %v373
  %511 = vmatpush.msra.mxu0 %v370
  %512 = vmatpush.msra.mxu0 %v367
  %513 = vmatpush.msra.mxu0 %v364
  %514 = vmatpush.msra.mxu0 %v361
  %515 = vmatpush.msra.mxu0 %v358
  %516 = vmatpush.msra.mxu0 %v355
  %517 = vmatpush.msra.mxu0 %v352
  %518 = vmatpush.msra.mxu0 %v349
  %519 = vmatpush.msra.mxu0 %v346
  %520 = vmatpush.msra.mxu0 %v343
  %521 = vmatpush.msra.mxu0 %v340
  %522 = vmatpush.msra.mxu0 %v337
  %523 = vmatpush.msra.mxu0 %v334
  %524 = vmatmul.f32.gmra.mxu0 %v330
  %v525 = vpop.f32.mrf.mxu0
  %v526 = vadd.f32 %v408, %v525
  %527 = vmatmul.f32.gmra.mxu0 %v331
  %v528 = vpop.f32.mrf.mxu0
  %v529 = vadd.f32 %v408, %v528
  %530 = vdwg.mxu0
  %531 = vmatpush.msra.mxu0 0.0
  %532 = vmatpush.msra.mxu0 0.0
  %533 = vmatpush.msra.mxu0 0.0
  %534 = vmatpush.msra.mxu0 0.0
  %535 = vmatpush.msra.mxu0 0.0
  %536 = vmatpush.msra.mxu0 0.0
  %537 = vmatpush.msra.mxu0 0.0
  %538 = vmatpush.msra.mxu0 0.0
  %539 = vmatpush.msra.mxu0 %v403
  %540 = vmatpush.msra.mxu0 %v400
  %541 = vmatpush.msra.mxu0 %v397
  %542 = vmatpush.msra.mxu0 %v394
  %543 = vmatpush.msra.mxu0 %v391
  %544 = vmatpush.msra.mxu0 %v388
  %545 = vmatpush.msra.mxu0 %v385
  %546 = vmatpush.msra.mxu0 %v382
  %547 = vmatmul.f32.gmra.mxu0 %v412
  %v548 = vpop.f32.mrf.mxu0
  %v549 = vadd.f32 %v526, %v548
  %550 = vmatmul.f32.gmra.mxu0 %v414
  %v551 = vpop.f32.mrf.mxu0
  %v552 = vadd.f32 %v529, %v551
  %553 = vdwg.mxu0
  %v554 = vtanh.pop %v457
  %v555 = vtanh.pop %v503
  %v556 = vtanh.pop %v549
  %v557 = vtanh.pop %v460
  %v558 = vtanh.pop %v506
  %v559 = vtanh.pop %v552
  %564 = vrot.lane.b32.xlu0 %v554, 44
  %v565 = vpop.permute.xlu0 %564
  %566 = vrot.lane.b32.xlu0 %v555, 44
  %v567 = vpop.permute.xlu0 %566
  %568 = vrot.lane.b32.xlu0 %v557, 44
  %v569 = vpop.permute.xlu0 %568
  %570 = vrot.lane.b32.xlu0 %v558, 44
  %v571 = vpop.permute.xlu0 %570
  %v572 = vsel %vm275, %v565, %v567
  %v573 = vsel %vm275, %v569, %v571
  %v576 = vadd.f32 %v554, %v572
  %v577 = vadd.f32 %v557, %v573
  %578 = vrot.lane.b32.xlu0 %v555, 88
  %v579 = vpop.permute.xlu0 %578
  %580 = vrot.lane.b32.xlu0 %v558, 88
  %v581 = vpop.permute.xlu0 %580
  %v584 = vadd.f32 %v576, %v579
  %v585 = vadd.f32 %v577, %v581
  %588 = vrot.lane.b32.xlu0 %v555, 4
  %v589 = vpop.permute.xlu0 %588
  %590 = vrot.lane.b32.xlu0 %v556, 4
  %v591 = vpop.permute.xlu0 %590
  %592 = vrot.lane.b32.xlu0 %v558, 4
  %v593 = vpop.permute.xlu0 %592
  %594 = vrot.lane.b32.xlu0 %v559, 4
  %v595 = vpop.permute.xlu0 %594
  %v596 = vsel %vm300, %v589, %v591
  %v597 = vsel %vm300, %v593, %v595
  %v600 = vadd.f32 %v584, %v596
  %v601 = vadd.f32 %v585, %v597
  %v602 = vmul.f32 %v600, 0.25
  %v603 = vmul.f32 %v601, 0.25
  %s604 = scalar_lea.vmem %s3, 16
  %605 = vst.msk [vmem:[%s604] sm:$0xff] %vm309, %v602
  %606 = vst.msk [vmem:[%s604 + $0x8] sm:$0x3f] %vm311, %v603
  %s607 = scalar_lea.vmem %s0, 32
  %v608 = vld [vmem:[%s607] sm:$0xff]
  %v609 = vld [vmem:[%s607 + $0x8] sm:$0xff]
  %v612 = vrot.slane %v608, 1
  %v613 = vrot.slane %v609, 1
  %v614 = vsel %vm18, %v612, %v613
  %615 = vrot.lane.b32.xlu0 %v614, 64
  %v616 = vpop.permute.xlu0 %615
  %617 = vrot.lane.b32.xlu0 %v613, 64
  %v618 = vpop.permute.xlu0 %617
  %v621 = vrot.slane %v608, 2
  %v622 = vrot.slane %v609, 2
  %v623 = vsel %vm28, %v621, %v622
  %v624 = vsel %vm32, %v608, %v616
  %v625 = vsel %vm32, %v609, %v618
  %v626 = vld [vmem:[%s1] sm:$0xff]
  %v627 = vld [vmem:[%s1 + $0x8] sm:$0xff]
  %v628 = vld [vmem:[%s1 + $0x10] sm:$0xff]
  %v629 = vld [vmem:[%s1 + $0x18] sm:$0xff]
  %v630 = vld [vmem:[%s1 + $0x20] sm:$0xff]
  %v631 = vld [vmem:[%s1 + $0x28] sm:$0xff]
  %v632 = vld [vmem:[%s1 + $0x30] sm:$0xff]
  %v633 = vld [vmem:[%s1 + $0x38] sm:$0xff]
  %v634 = vld [vmem:[%s1 + $0x40] sm:$0xff]
  %v635 = vld [vmem:[%s1 + $0x48] sm:$0xff]
  %v636 = vld [vmem:[%s1 + $0x50] sm:$0xff]
  %v637 = vld [vmem:[%s1 + $0x58] sm:$0xff]
  %v638 = vld [vmem:[%s1 + $0x60] sm:$0xff]
  %v639 = vld [vmem:[%s1 + $0x68] sm:$0xff]
  %v640 = vld [vmem:[%s1 + $0x70] sm:$0xff]
  %v641 = vld [vmem:[%s1 + $0x78] sm:$0xff]
  %v642 = vld [vmem:[%s1 + $0x80] sm:$0xff]
  %v643 = vld [vmem:[%s1 + $0x88] sm:$0xff]
  %v644 = vld [vmem:[%s1 + $0x90] sm:$0xff]
  %v645 = vld [vmem:[%s1 + $0x98] sm:$0xff]
  %v646 = vld [vmem:[%s1 + $0xa0] sm:$0xff]
  %v647 = vld [vmem:[%s1 + $0xa8] sm:$0xff]
  %v648 = vld [vmem:[%s1 + $0xb0] sm:$0xff]
  %v649 = vld [vmem:[%s1 + $0xb8] sm:$0xff]
  %v650 = vld [vmem:[%s1 + $0xc0] sm:$0xff]
  %v651 = vld [vmem:[%s1 + $0xc8] sm:$0xff]
  %v652 = vld [vmem:[%s1 + $0xd0] sm:$0xff]
  %v653 = vld [vmem:[%s1 + $0xd8] sm:$0xff]
  %v654 = vld [vmem:[%s1 + $0xe0] sm:$0xff]
  %v655 = vld [vmem:[%s1 + $0xe8] sm:$0xff]
  %v656 = vld [vmem:[%s1 + $0xf0] sm:$0xff]
  %v657 = vld [vmem:[%s1 + $0xf8] sm:$0xff]
  %v658 = vld [vmem:[%s1 + $0x100] sm:$0xff]
  %v659 = vld [vmem:[%s1 + $0x108] sm:$0xff]
  %v660 = vld [vmem:[%s1 + $0x110] sm:$0xff]
  %v661 = vld [vmem:[%s1 + $0x118] sm:$0xff]
  %v662 = vld [vmem:[%s1 + $0x120] sm:$0xff]
  %v663 = vld [vmem:[%s1 + $0x128] sm:$0xff]
  %v664 = vld [vmem:[%s1 + $0x130] sm:$0xff]
  %v665 = vld [vmem:[%s1 + $0x138] sm:$0xff]
  %v666 = vld [vmem:[%s1 + $0x140] sm:$0xff]
  %v667 = vld [vmem:[%s1 + $0x148] sm:$0xff]
  %v668 = vld [vmem:[%s1 + $0x150] sm:$0xff]
  %v669 = vld [vmem:[%s1 + $0x158] sm:$0xff]
  %v670 = vld [vmem:[%s1 + $0x160] sm:$0xff]
  %v671 = vld [vmem:[%s1 + $0x168] sm:$0xff]
  %v672 = vld [vmem:[%s1 + $0x170] sm:$0xff]
  %v673 = vld [vmem:[%s1 + $0x178] sm:$0xff]
  %v674 = vld [vmem:[%s1 + $0x180] sm:$0xff]
  %v675 = vld [vmem:[%s1 + $0x188] sm:$0xff]
  %v676 = vld [vmem:[%s1 + $0x190] sm:$0xff]
  %v677 = vld [vmem:[%s1 + $0x198] sm:$0xff]
  %v678 = vld [vmem:[%s1 + $0x1a0] sm:$0xff]
  %v679 = vld [vmem:[%s1 + $0x1a8] sm:$0xff]
  %v680 = vld [vmem:[%s1 + $0x1b0] sm:$0xff]
  %v681 = vld [vmem:[%s1 + $0x1b8] sm:$0xff]
  %v682 = vld [vmem:[%s1 + $0x1c0] sm:$0xff]
  %v683 = vld [vmem:[%s1 + $0x1c8] sm:$0xff]
  %v684 = vld [vmem:[%s1 + $0x1d0] sm:$0xff]
  %v685 = vld [vmem:[%s1 + $0x1d8] sm:$0xff]
  %v686 = vld [vmem:[%s1 + $0x1e0] sm:$0xff]
  %v687 = vld [vmem:[%s1 + $0x1e8] sm:$0xff]
  %v688 = vld [vmem:[%s1 + $0x1f0] sm:$0xff]
  %v689 = vld [vmem:[%s1 + $0x1f8] sm:$0xff]
  %v690 = vld [vmem:[%s1 + $0x200] sm:$0xff]
  %v691 = vld [vmem:[%s1 + $0x208] sm:$0xff]
  %v692 = vld [vmem:[%s1 + $0x210] sm:$0xff]
  %v693 = vld [vmem:[%s1 + $0x218] sm:$0xff]
  %v694 = vld [vmem:[%s1 + $0x220] sm:$0xff]
  %v695 = vld [vmem:[%s1 + $0x228] sm:$0xff]
  %v696 = vld [vmem:[%s1 + $0x230] sm:$0xff]
  %v697 = vld [vmem:[%s1 + $0x238] sm:$0xff]
  %v698 = vld [vmem:[%s2] sm:$0x7]
  %v700 = vperm.slane %v698, 0
  %v701 = vperm.slane %v698, 1
  %v702 = vperm.slane %v698, 2
  %v706 = vsel %vm32, %v623, 0
  %v708 = vsel %vm32, %v622, 0
  %710 = vmatpush.msra.mxu0 %v671
  %711 = vmatpush.msra.mxu0 %v668
  %712 = vmatpush.msra.mxu0 %v665
  %713 = vmatpush.msra.mxu0 %v662
  %714 = vmatpush.msra.mxu0 %v659
  %715 = vmatpush.msra.mxu0 %v656
  %716 = vmatpush.msra.mxu0 %v653
  %717 = vmatpush.msra.mxu0 %v650
  %718 = vmatpush.msra.mxu0 %v647
  %719 = vmatpush.msra.mxu0 %v644
  %720 = vmatpush.msra.mxu0 %v641
  %721 = vmatpush.msra.mxu0 %v638
  %722 = vmatpush.msra.mxu0 %v635
  %723 = vmatpush.msra.mxu0 %v632
  %724 = vmatpush.msra.mxu0 %v629
  %725 = vmatpush.msra.mxu0 %v626
  %726 = vmatmul.f32.gmra.mxu0 %v624
  %v727 = vpop.f32.mrf.mxu0
  %v728 = vadd.f32 %v700, %v727
  %729 = vmatmul.f32.gmra.mxu0 %v625
  %v730 = vpop.f32.mrf.mxu0
  %v731 = vadd.f32 %v700, %v730
  %732 = vdwg.mxu0
  %733 = vmatpush.msra.mxu0 0.0
  %734 = vmatpush.msra.mxu0 0.0
  %735 = vmatpush.msra.mxu0 0.0
  %736 = vmatpush.msra.mxu0 0.0
  %737 = vmatpush.msra.mxu0 0.0
  %738 = vmatpush.msra.mxu0 0.0
  %739 = vmatpush.msra.mxu0 0.0
  %740 = vmatpush.msra.mxu0 0.0
  %741 = vmatpush.msra.mxu0 %v695
  %742 = vmatpush.msra.mxu0 %v692
  %743 = vmatpush.msra.mxu0 %v689
  %744 = vmatpush.msra.mxu0 %v686
  %745 = vmatpush.msra.mxu0 %v683
  %746 = vmatpush.msra.mxu0 %v680
  %747 = vmatpush.msra.mxu0 %v677
  %748 = vmatpush.msra.mxu0 %v674
  %749 = vmatmul.f32.gmra.mxu0 %v706
  %v750 = vpop.f32.mrf.mxu0
  %v751 = vadd.f32 %v728, %v750
  %752 = vmatmul.f32.gmra.mxu0 %v708
  %v753 = vpop.f32.mrf.mxu0
  %v754 = vadd.f32 %v731, %v753
  %755 = vdwg.mxu0
  %756 = vmatpush.msra.mxu0 %v672
  %757 = vmatpush.msra.mxu0 %v669
  %758 = vmatpush.msra.mxu0 %v666
  %759 = vmatpush.msra.mxu0 %v663
  %760 = vmatpush.msra.mxu0 %v660
  %761 = vmatpush.msra.mxu0 %v657
  %762 = vmatpush.msra.mxu0 %v654
  %763 = vmatpush.msra.mxu0 %v651
  %764 = vmatpush.msra.mxu0 %v648
  %765 = vmatpush.msra.mxu0 %v645
  %766 = vmatpush.msra.mxu0 %v642
  %767 = vmatpush.msra.mxu0 %v639
  %768 = vmatpush.msra.mxu0 %v636
  %769 = vmatpush.msra.mxu0 %v633
  %770 = vmatpush.msra.mxu0 %v630
  %771 = vmatpush.msra.mxu0 %v627
  %772 = vmatmul.f32.gmra.mxu0 %v624
  %v773 = vpop.f32.mrf.mxu0
  %v774 = vadd.f32 %v701, %v773
  %775 = vmatmul.f32.gmra.mxu0 %v625
  %v776 = vpop.f32.mrf.mxu0
  %v777 = vadd.f32 %v701, %v776
  %778 = vdwg.mxu0
  %779 = vmatpush.msra.mxu0 0.0
  %780 = vmatpush.msra.mxu0 0.0
  %781 = vmatpush.msra.mxu0 0.0
  %782 = vmatpush.msra.mxu0 0.0
  %783 = vmatpush.msra.mxu0 0.0
  %784 = vmatpush.msra.mxu0 0.0
  %785 = vmatpush.msra.mxu0 0.0
  %786 = vmatpush.msra.mxu0 0.0
  %787 = vmatpush.msra.mxu0 %v696
  %788 = vmatpush.msra.mxu0 %v693
  %789 = vmatpush.msra.mxu0 %v690
  %790 = vmatpush.msra.mxu0 %v687
  %791 = vmatpush.msra.mxu0 %v684
  %792 = vmatpush.msra.mxu0 %v681
  %793 = vmatpush.msra.mxu0 %v678
  %794 = vmatpush.msra.mxu0 %v675
  %795 = vmatmul.f32.gmra.mxu0 %v706
  %v796 = vpop.f32.mrf.mxu0
  %v797 = vadd.f32 %v774, %v796
  %798 = vmatmul.f32.gmra.mxu0 %v708
  %v799 = vpop.f32.mrf.mxu0
  %v800 = vadd.f32 %v777, %v799
  %801 = vdwg.mxu0
  %802 = vmatpush.msra.mxu0 %v673
  %803 = vmatpush.msra.mxu0 %v670
  %804 = vmatpush.msra.mxu0 %v667
  %805 = vmatpush.msra.mxu0 %v664
  %806 = vmatpush.msra.mxu0 %v661
  %807 = vmatpush.msra.mxu0 %v658
  %808 = vmatpush.msra.mxu0 %v655
  %809 = vmatpush.msra.mxu0 %v652
  %810 = vmatpush.msra.mxu0 %v649
  %811 = vmatpush.msra.mxu0 %v646
  %812 = vmatpush.msra.mxu0 %v643
  %813 = vmatpush.msra.mxu0 %v640
  %814 = vmatpush.msra.mxu0 %v637
  %815 = vmatpush.msra.mxu0 %v634
  %816 = vmatpush.msra.mxu0 %v631
  %817 = vmatpush.msra.mxu0 %v628
  %818 = vmatmul.f32.gmra.mxu0 %v624
  %v819 = vpop.f32.mrf.mxu0
  %v820 = vadd.f32 %v702, %v819
  %821 = vmatmul.f32.gmra.mxu0 %v625
  %v822 = vpop.f32.mrf.mxu0
  %v823 = vadd.f32 %v702, %v822
  %824 = vdwg.mxu0
  %825 = vmatpush.msra.mxu0 0.0
  %826 = vmatpush.msra.mxu0 0.0
  %827 = vmatpush.msra.mxu0 0.0
  %828 = vmatpush.msra.mxu0 0.0
  %829 = vmatpush.msra.mxu0 0.0
  %830 = vmatpush.msra.mxu0 0.0
  %831 = vmatpush.msra.mxu0 0.0
  %832 = vmatpush.msra.mxu0 0.0
  %833 = vmatpush.msra.mxu0 %v697
  %834 = vmatpush.msra.mxu0 %v694
  %835 = vmatpush.msra.mxu0 %v691
  %836 = vmatpush.msra.mxu0 %v688
  %837 = vmatpush.msra.mxu0 %v685
  %838 = vmatpush.msra.mxu0 %v682
  %839 = vmatpush.msra.mxu0 %v679
  %840 = vmatpush.msra.mxu0 %v676
  %841 = vmatmul.f32.gmra.mxu0 %v706
  %v842 = vpop.f32.mrf.mxu0
  %v843 = vadd.f32 %v820, %v842
  %844 = vmatmul.f32.gmra.mxu0 %v708
  %v845 = vpop.f32.mrf.mxu0
  %v846 = vadd.f32 %v823, %v845
  %847 = vdwg.mxu0
  %v848 = vtanh.pop %v751
  %v849 = vtanh.pop %v797
  %v850 = vtanh.pop %v843
  %v851 = vtanh.pop %v754
  %v852 = vtanh.pop %v800
  %v853 = vtanh.pop %v846
  %858 = vrot.lane.b32.xlu0 %v848, 44
  %v859 = vpop.permute.xlu0 %858
  %860 = vrot.lane.b32.xlu0 %v849, 44
  %v861 = vpop.permute.xlu0 %860
  %862 = vrot.lane.b32.xlu0 %v851, 44
  %v863 = vpop.permute.xlu0 %862
  %864 = vrot.lane.b32.xlu0 %v852, 44
  %v865 = vpop.permute.xlu0 %864
  %v866 = vsel %vm275, %v859, %v861
  %v867 = vsel %vm275, %v863, %v865
  %v870 = vadd.f32 %v848, %v866
  %v871 = vadd.f32 %v851, %v867
  %872 = vrot.lane.b32.xlu0 %v849, 88
  %v873 = vpop.permute.xlu0 %872
  %874 = vrot.lane.b32.xlu0 %v852, 88
  %v875 = vpop.permute.xlu0 %874
  %v878 = vadd.f32 %v870, %v873
  %v879 = vadd.f32 %v871, %v875
  %882 = vrot.lane.b32.xlu0 %v849, 4
  %v883 = vpop.permute.xlu0 %882
  %884 = vrot.lane.b32.xlu0 %v850, 4
  %v885 = vpop.permute.xlu0 %884
  %886 = vrot.lane.b32.xlu0 %v852, 4
  %v887 = vpop.permute.xlu0 %886
  %888 = vrot.lane.b32.xlu0 %v853, 4
  %v889 = vpop.permute.xlu0 %888
  %v890 = vsel %vm300, %v883, %v885
  %v891 = vsel %vm300, %v887, %v889
  %v894 = vadd.f32 %v878, %v890
  %v895 = vadd.f32 %v879, %v891
  %v896 = vmul.f32 %v894, 0.25
  %v897 = vmul.f32 %v895, 0.25
  %s898 = scalar_lea.vmem %s3, 32
  %899 = vst.msk [vmem:[%s898] sm:$0xff] %vm309, %v896
  %900 = vst.msk [vmem:[%s898 + $0x8] sm:$0x3f] %vm311, %v897
  %s901 = scalar_lea.vmem %s0, 48
  %v902 = vld [vmem:[%s901] sm:$0xff]
  %v903 = vld [vmem:[%s901 + $0x8] sm:$0xff]
  %v906 = vrot.slane %v902, 1
  %v907 = vrot.slane %v903, 1
  %v908 = vsel %vm18, %v906, %v907
  %909 = vrot.lane.b32.xlu0 %v908, 64
  %v910 = vpop.permute.xlu0 %909
  %911 = vrot.lane.b32.xlu0 %v907, 64
  %v912 = vpop.permute.xlu0 %911
  %v915 = vrot.slane %v902, 2
  %v916 = vrot.slane %v903, 2
  %v917 = vsel %vm28, %v915, %v916
  %v918 = vsel %vm32, %v902, %v910
  %v919 = vsel %vm32, %v903, %v912
  %v920 = vld [vmem:[%s1] sm:$0xff]
  %v921 = vld [vmem:[%s1 + $0x8] sm:$0xff]
  %v922 = vld [vmem:[%s1 + $0x10] sm:$0xff]
  %v923 = vld [vmem:[%s1 + $0x18] sm:$0xff]
  %v924 = vld [vmem:[%s1 + $0x20] sm:$0xff]
  %v925 = vld [vmem:[%s1 + $0x28] sm:$0xff]
  %v926 = vld [vmem:[%s1 + $0x30] sm:$0xff]
  %v927 = vld [vmem:[%s1 + $0x38] sm:$0xff]
  %v928 = vld [vmem:[%s1 + $0x40] sm:$0xff]
  %v929 = vld [vmem:[%s1 + $0x48] sm:$0xff]
  %v930 = vld [vmem:[%s1 + $0x50] sm:$0xff]
  %v931 = vld [vmem:[%s1 + $0x58] sm:$0xff]
  %v932 = vld [vmem:[%s1 + $0x60] sm:$0xff]
  %v933 = vld [vmem:[%s1 + $0x68] sm:$0xff]
  %v934 = vld [vmem:[%s1 + $0x70] sm:$0xff]
  %v935 = vld [vmem:[%s1 + $0x78] sm:$0xff]
  %v936 = vld [vmem:[%s1 + $0x80] sm:$0xff]
  %v937 = vld [vmem:[%s1 + $0x88] sm:$0xff]
  %v938 = vld [vmem:[%s1 + $0x90] sm:$0xff]
  %v939 = vld [vmem:[%s1 + $0x98] sm:$0xff]
  %v940 = vld [vmem:[%s1 + $0xa0] sm:$0xff]
  %v941 = vld [vmem:[%s1 + $0xa8] sm:$0xff]
  %v942 = vld [vmem:[%s1 + $0xb0] sm:$0xff]
  %v943 = vld [vmem:[%s1 + $0xb8] sm:$0xff]
  %v944 = vld [vmem:[%s1 + $0xc0] sm:$0xff]
  %v945 = vld [vmem:[%s1 + $0xc8] sm:$0xff]
  %v946 = vld [vmem:[%s1 + $0xd0] sm:$0xff]
  %v947 = vld [vmem:[%s1 + $0xd8] sm:$0xff]
  %v948 = vld [vmem:[%s1 + $0xe0] sm:$0xff]
  %v949 = vld [vmem:[%s1 + $0xe8] sm:$0xff]
  %v950 = vld [vmem:[%s1 + $0xf0] sm:$0xff]
  %v951 = vld [vmem:[%s1 + $0xf8] sm:$0xff]
  %v952 = vld [vmem:[%s1 + $0x100] sm:$0xff]
  %v953 = vld [vmem:[%s1 + $0x108] sm:$0xff]
  %v954 = vld [vmem:[%s1 + $0x110] sm:$0xff]
  %v955 = vld [vmem:[%s1 + $0x118] sm:$0xff]
  %v956 = vld [vmem:[%s1 + $0x120] sm:$0xff]
  %v957 = vld [vmem:[%s1 + $0x128] sm:$0xff]
  %v958 = vld [vmem:[%s1 + $0x130] sm:$0xff]
  %v959 = vld [vmem:[%s1 + $0x138] sm:$0xff]
  %v960 = vld [vmem:[%s1 + $0x140] sm:$0xff]
  %v961 = vld [vmem:[%s1 + $0x148] sm:$0xff]
  %v962 = vld [vmem:[%s1 + $0x150] sm:$0xff]
  %v963 = vld [vmem:[%s1 + $0x158] sm:$0xff]
  %v964 = vld [vmem:[%s1 + $0x160] sm:$0xff]
  %v965 = vld [vmem:[%s1 + $0x168] sm:$0xff]
  %v966 = vld [vmem:[%s1 + $0x170] sm:$0xff]
  %v967 = vld [vmem:[%s1 + $0x178] sm:$0xff]
  %v968 = vld [vmem:[%s1 + $0x180] sm:$0xff]
  %v969 = vld [vmem:[%s1 + $0x188] sm:$0xff]
  %v970 = vld [vmem:[%s1 + $0x190] sm:$0xff]
  %v971 = vld [vmem:[%s1 + $0x198] sm:$0xff]
  %v972 = vld [vmem:[%s1 + $0x1a0] sm:$0xff]
  %v973 = vld [vmem:[%s1 + $0x1a8] sm:$0xff]
  %v974 = vld [vmem:[%s1 + $0x1b0] sm:$0xff]
  %v975 = vld [vmem:[%s1 + $0x1b8] sm:$0xff]
  %v976 = vld [vmem:[%s1 + $0x1c0] sm:$0xff]
  %v977 = vld [vmem:[%s1 + $0x1c8] sm:$0xff]
  %v978 = vld [vmem:[%s1 + $0x1d0] sm:$0xff]
  %v979 = vld [vmem:[%s1 + $0x1d8] sm:$0xff]
  %v980 = vld [vmem:[%s1 + $0x1e0] sm:$0xff]
  %v981 = vld [vmem:[%s1 + $0x1e8] sm:$0xff]
  %v982 = vld [vmem:[%s1 + $0x1f0] sm:$0xff]
  %v983 = vld [vmem:[%s1 + $0x1f8] sm:$0xff]
  %v984 = vld [vmem:[%s1 + $0x200] sm:$0xff]
  %v985 = vld [vmem:[%s1 + $0x208] sm:$0xff]
  %v986 = vld [vmem:[%s1 + $0x210] sm:$0xff]
  %v987 = vld [vmem:[%s1 + $0x218] sm:$0xff]
  %v988 = vld [vmem:[%s1 + $0x220] sm:$0xff]
  %v989 = vld [vmem:[%s1 + $0x228] sm:$0xff]
  %v990 = vld [vmem:[%s1 + $0x230] sm:$0xff]
  %v991 = vld [vmem:[%s1 + $0x238] sm:$0xff]
  %v992 = vld [vmem:[%s2] sm:$0x7]
  %v994 = vperm.slane %v992, 0
  %v995 = vperm.slane %v992, 1
  %v996 = vperm.slane %v992, 2
  %v1000 = vsel %vm32, %v917, 0
  %v1002 = vsel %vm32, %v916, 0
  %1004 = vmatpush.msra.mxu0 %v965
  %1005 = vmatpush.msra.mxu0 %v962
  %1006 = vmatpush.msra.mxu0 %v959
  %1007 = vmatpush.msra.mxu0 %v956
  %1008 = vmatpush.msra.mxu0 %v953
  %1009 = vmatpush.msra.mxu0 %v950
  %1010 = vmatpush.msra.mxu0 %v947
  %1011 = vmatpush.msra.mxu0 %v944
  %1012 = vmatpush.msra.mxu0 %v941
  %1013 = vmatpush.msra.mxu0 %v938
  %1014 = vmatpush.msra.mxu0 %v935
  %1015 = vmatpush.msra.mxu0 %v932
  %1016 = vmatpush.msra.mxu0 %v929
  %1017 = vmatpush.msra.mxu0 %v926
  %1018 = vmatpush.msra.mxu0 %v923
  %1019 = vmatpush.msra.mxu0 %v920
  %1020 = vmatmul.f32.gmra.mxu0 %v918
  %v1021 = vpop.f32.mrf.mxu0
  %v1022 = vadd.f32 %v994, %v1021
  %1023 = vmatmul.f32.gmra.mxu0 %v919
  %v1024 = vpop.f32.mrf.mxu0
  %v1025 = vadd.f32 %v994, %v1024
  %1026 = vdwg.mxu0
  %1027 = vmatpush.msra.mxu0 0.0
  %1028 = vmatpush.msra.mxu0 0.0
  %1029 = vmatpush.msra.mxu0 0.0
  %1030 = vmatpush.msra.mxu0 0.0
  %1031 = vmatpush.msra.mxu0 0.0
  %1032 = vmatpush.msra.mxu0 0.0
  %1033 = vmatpush.msra.mxu0 0.0
  %1034 = vmatpush.msra.mxu0 0.0
  %1035 = vmatpush.msra.mxu0 %v989
  %1036 = vmatpush.msra.mxu0 %v986
  %1037 = vmatpush.msra.mxu0 %v983
  %1038 = vmatpush.msra.mxu0 %v980
  %1039 = vmatpush.msra.mxu0 %v977
  %1040 = vmatpush.msra.mxu0 %v974
  %1041 = vmatpush.msra.mxu0 %v971
  %1042 = vmatpush.msra.mxu0 %v968
  %1043 = vmatmul.f32.gmra.mxu0 %v1000
  %v1044 = vpop.f32.mrf.mxu0
  %v1045 = vadd.f32 %v1022, %v1044
  %1046 = vmatmul.f32.gmra.mxu0 %v1002
  %v1047 = vpop.f32.mrf.mxu0
  %v1048 = vadd.f32 %v1025, %v1047
  %1049 = vdwg.mxu0
  %1050 = vmatpush.msra.mxu0 %v966
  %1051 = vmatpush.msra.mxu0 %v963
  %1052 = vmatpush.msra.mxu0 %v960
  %1053 = vmatpush.msra.mxu0 %v957
  %1054 = vmatpush.msra.mxu0 %v954
  %1055 = vmatpush.msra.mxu0 %v951
  %1056 = vmatpush.msra.mxu0 %v948
  %1057 = vmatpush.msra.mxu0 %v945
  %1058 = vmatpush.msra.mxu0 %v942
  %1059 = vmatpush.msra.mxu0 %v939
  %1060 = vmatpush.msra.mxu0 %v936
  %1061 = vmatpush.msra.mxu0 %v933
  %1062 = vmatpush.msra.mxu0 %v930
  %1063 = vmatpush.msra.mxu0 %v927
  %1064 = vmatpush.msra.mxu0 %v924
  %1065 = vmatpush.msra.mxu0 %v921
  %1066 = vmatmul.f32.gmra.mxu0 %v918
  %v1067 = vpop.f32.mrf.mxu0
  %v1068 = vadd.f32 %v995, %v1067
  %1069 = vmatmul.f32.gmra.mxu0 %v919
  %v1070 = vpop.f32.mrf.mxu0
  %v1071 = vadd.f32 %v995, %v1070
  %1072 = vdwg.mxu0
  %1073 = vmatpush.msra.mxu0 0.0
  %1074 = vmatpush.msra.mxu0 0.0
  %1075 = vmatpush.msra.mxu0 0.0
  %1076 = vmatpush.msra.mxu0 0.0
  %1077 = vmatpush.msra.mxu0 0.0
  %1078 = vmatpush.msra.mxu0 0.0
  %1079 = vmatpush.msra.mxu0 0.0
  %1080 = vmatpush.msra.mxu0 0.0
  %1081 = vmatpush.msra.mxu0 %v990
  %1082 = vmatpush.msra.mxu0 %v987
  %1083 = vmatpush.msra.mxu0 %v984
  %1084 = vmatpush.msra.mxu0 %v981
  %1085 = vmatpush.msra.mxu0 %v978
  %1086 = vmatpush.msra.mxu0 %v975
  %1087 = vmatpush.msra.mxu0 %v972
  %1088 = vmatpush.msra.mxu0 %v969
  %1089 = vmatmul.f32.gmra.mxu0 %v1000
  %v1090 = vpop.f32.mrf.mxu0
  %v1091 = vadd.f32 %v1068, %v1090
  %1092 = vmatmul.f32.gmra.mxu0 %v1002
  %v1093 = vpop.f32.mrf.mxu0
  %v1094 = vadd.f32 %v1071, %v1093
  %1095 = vdwg.mxu0
  %1096 = vmatpush.msra.mxu0 %v967
  %1097 = vmatpush.msra.mxu0 %v964
  %1098 = vmatpush.msra.mxu0 %v961
  %1099 = vmatpush.msra.mxu0 %v958
  %1100 = vmatpush.msra.mxu0 %v955
  %1101 = vmatpush.msra.mxu0 %v952
  %1102 = vmatpush.msra.mxu0 %v949
  %1103 = vmatpush.msra.mxu0 %v946
  %1104 = vmatpush.msra.mxu0 %v943
  %1105 = vmatpush.msra.mxu0 %v940
  %1106 = vmatpush.msra.mxu0 %v937
  %1107 = vmatpush.msra.mxu0 %v934
  %1108 = vmatpush.msra.mxu0 %v931
  %1109 = vmatpush.msra.mxu0 %v928
  %1110 = vmatpush.msra.mxu0 %v925
  %1111 = vmatpush.msra.mxu0 %v922
  %1112 = vmatmul.f32.gmra.mxu0 %v918
  %v1113 = vpop.f32.mrf.mxu0
  %v1114 = vadd.f32 %v996, %v1113
  %1115 = vmatmul.f32.gmra.mxu0 %v919
  %v1116 = vpop.f32.mrf.mxu0
  %v1117 = vadd.f32 %v996, %v1116
  %1118 = vdwg.mxu0
  %1119 = vmatpush.msra.mxu0 0.0
  %1120 = vmatpush.msra.mxu0 0.0
  %1121 = vmatpush.msra.mxu0 0.0
  %1122 = vmatpush.msra.mxu0 0.0
  %1123 = vmatpush.msra.mxu0 0.0
  %1124 = vmatpush.msra.mxu0 0.0
  %1125 = vmatpush.msra.mxu0 0.0
  %1126 = vmatpush.msra.mxu0 0.0
  %1127 = vmatpush.msra.mxu0 %v991
  %1128 = vmatpush.msra.mxu0 %v988
  %1129 = vmatpush.msra.mxu0 %v985
  %1130 = vmatpush.msra.mxu0 %v982
  %1131 = vmatpush.msra.mxu0 %v979
  %1132 = vmatpush.msra.mxu0 %v976
  %1133 = vmatpush.msra.mxu0 %v973
  %1134 = vmatpush.msra.mxu0 %v970
  %1135 = vmatmul.f32.gmra.mxu0 %v1000
  %v1136 = vpop.f32.mrf.mxu0
  %v1137 = vadd.f32 %v1114, %v1136
  %1138 = vmatmul.f32.gmra.mxu0 %v1002
  %v1139 = vpop.f32.mrf.mxu0
  %v1140 = vadd.f32 %v1117, %v1139
  %1141 = vdwg.mxu0
  %v1142 = vtanh.pop %v1045
  %v1143 = vtanh.pop %v1091
  %v1144 = vtanh.pop %v1137
  %v1145 = vtanh.pop %v1048
  %v1146 = vtanh.pop %v1094
  %v1147 = vtanh.pop %v1140
  %1152 = vrot.lane.b32.xlu0 %v1142, 44
  %v1153 = vpop.permute.xlu0 %1152
  %1154 = vrot.lane.b32.xlu0 %v1143, 44
  %v1155 = vpop.permute.xlu0 %1154
  %1156 = vrot.lane.b32.xlu0 %v1145, 44
  %v1157 = vpop.permute.xlu0 %1156
  %1158 = vrot.lane.b32.xlu0 %v1146, 44
  %v1159 = vpop.permute.xlu0 %1158
  %v1160 = vsel %vm275, %v1153, %v1155
  %v1161 = vsel %vm275, %v1157, %v1159
  %v1164 = vadd.f32 %v1142, %v1160
  %v1165 = vadd.f32 %v1145, %v1161
  %1166 = vrot.lane.b32.xlu0 %v1143, 88
  %v1167 = vpop.permute.xlu0 %1166
  %1168 = vrot.lane.b32.xlu0 %v1146, 88
  %v1169 = vpop.permute.xlu0 %1168
  %v1172 = vadd.f32 %v1164, %v1167
  %v1173 = vadd.f32 %v1165, %v1169
  %1176 = vrot.lane.b32.xlu0 %v1143, 4
  %v1177 = vpop.permute.xlu0 %1176
  %1178 = vrot.lane.b32.xlu0 %v1144, 4
  %v1179 = vpop.permute.xlu0 %1178
  %1180 = vrot.lane.b32.xlu0 %v1146, 4
  %v1181 = vpop.permute.xlu0 %1180
  %1182 = vrot.lane.b32.xlu0 %v1147, 4
  %v1183 = vpop.permute.xlu0 %1182
  %v1184 = vsel %vm300, %v1177, %v1179
  %v1185 = vsel %vm300, %v1181, %v1183
  %v1188 = vadd.f32 %v1172, %v1184
  %v1189 = vadd.f32 %v1173, %v1185
  %v1190 = vmul.f32 %v1188, 0.25
  %v1191 = vmul.f32 %v1189, 0.25
  %s1192 = scalar_lea.vmem %s3, 48
  %1193 = vst.msk [vmem:[%s1192] sm:$0xff] %vm309, %v1190
  %1194 = vst.msk [vmem:[%s1192 + $0x8] sm:$0x3f] %vm311, %v1191
  %s1195 = scalar_lea.vmem %s0, 64
  %v1196 = vld [vmem:[%s1195] sm:$0xff]
  %v1197 = vld [vmem:[%s1195 + $0x8] sm:$0xff]
  %v1200 = vrot.slane %v1196, 1
  %v1201 = vrot.slane %v1197, 1
  %v1202 = vsel %vm18, %v1200, %v1201
  %1203 = vrot.lane.b32.xlu0 %v1202, 64
  %v1204 = vpop.permute.xlu0 %1203
  %1205 = vrot.lane.b32.xlu0 %v1201, 64
  %v1206 = vpop.permute.xlu0 %1205
  %v1209 = vrot.slane %v1196, 2
  %v1210 = vrot.slane %v1197, 2
  %v1211 = vsel %vm28, %v1209, %v1210
  %v1212 = vsel %vm32, %v1196, %v1204
  %v1213 = vsel %vm32, %v1197, %v1206
  %v1214 = vld [vmem:[%s1] sm:$0xff]
  %v1215 = vld [vmem:[%s1 + $0x8] sm:$0xff]
  %v1216 = vld [vmem:[%s1 + $0x10] sm:$0xff]
  %v1217 = vld [vmem:[%s1 + $0x18] sm:$0xff]
  %v1218 = vld [vmem:[%s1 + $0x20] sm:$0xff]
  %v1219 = vld [vmem:[%s1 + $0x28] sm:$0xff]
  %v1220 = vld [vmem:[%s1 + $0x30] sm:$0xff]
  %v1221 = vld [vmem:[%s1 + $0x38] sm:$0xff]
  %v1222 = vld [vmem:[%s1 + $0x40] sm:$0xff]
  %v1223 = vld [vmem:[%s1 + $0x48] sm:$0xff]
  %v1224 = vld [vmem:[%s1 + $0x50] sm:$0xff]
  %v1225 = vld [vmem:[%s1 + $0x58] sm:$0xff]
  %v1226 = vld [vmem:[%s1 + $0x60] sm:$0xff]
  %v1227 = vld [vmem:[%s1 + $0x68] sm:$0xff]
  %v1228 = vld [vmem:[%s1 + $0x70] sm:$0xff]
  %v1229 = vld [vmem:[%s1 + $0x78] sm:$0xff]
  %v1230 = vld [vmem:[%s1 + $0x80] sm:$0xff]
  %v1231 = vld [vmem:[%s1 + $0x88] sm:$0xff]
  %v1232 = vld [vmem:[%s1 + $0x90] sm:$0xff]
  %v1233 = vld [vmem:[%s1 + $0x98] sm:$0xff]
  %v1234 = vld [vmem:[%s1 + $0xa0] sm:$0xff]
  %v1235 = vld [vmem:[%s1 + $0xa8] sm:$0xff]
  %v1236 = vld [vmem:[%s1 + $0xb0] sm:$0xff]
  %v1237 = vld [vmem:[%s1 + $0xb8] sm:$0xff]
  %v1238 = vld [vmem:[%s1 + $0xc0] sm:$0xff]
  %v1239 = vld [vmem:[%s1 + $0xc8] sm:$0xff]
  %v1240 = vld [vmem:[%s1 + $0xd0] sm:$0xff]
  %v1241 = vld [vmem:[%s1 + $0xd8] sm:$0xff]
  %v1242 = vld [vmem:[%s1 + $0xe0] sm:$0xff]
  %v1243 = vld [vmem:[%s1 + $0xe8] sm:$0xff]
  %v1244 = vld [vmem:[%s1 + $0xf0] sm:$0xff]
  %v1245 = vld [vmem:[%s1 + $0xf8] sm:$0xff]
  %v1246 = vld [vmem:[%s1 + $0x100] sm:$0xff]
  %v1247 = vld [vmem:[%s1 + $0x108] sm:$0xff]
  %v1248 = vld [vmem:[%s1 + $0x110] sm:$0xff]
  %v1249 = vld [vmem:[%s1 + $0x118] sm:$0xff]
  %v1250 = vld [vmem:[%s1 + $0x120] sm:$0xff]
  %v1251 = vld [vmem:[%s1 + $0x128] sm:$0xff]
  %v1252 = vld [vmem:[%s1 + $0x130] sm:$0xff]
  %v1253 = vld [vmem:[%s1 + $0x138] sm:$0xff]
  %v1254 = vld [vmem:[%s1 + $0x140] sm:$0xff]
  %v1255 = vld [vmem:[%s1 + $0x148] sm:$0xff]
  %v1256 = vld [vmem:[%s1 + $0x150] sm:$0xff]
  %v1257 = vld [vmem:[%s1 + $0x158] sm:$0xff]
  %v1258 = vld [vmem:[%s1 + $0x160] sm:$0xff]
  %v1259 = vld [vmem:[%s1 + $0x168] sm:$0xff]
  %v1260 = vld [vmem:[%s1 + $0x170] sm:$0xff]
  %v1261 = vld [vmem:[%s1 + $0x178] sm:$0xff]
  %v1262 = vld [vmem:[%s1 + $0x180] sm:$0xff]
  %v1263 = vld [vmem:[%s1 + $0x188] sm:$0xff]
  %v1264 = vld [vmem:[%s1 + $0x190] sm:$0xff]
  %v1265 = vld [vmem:[%s1 + $0x198] sm:$0xff]
  %v1266 = vld [vmem:[%s1 + $0x1a0] sm:$0xff]
  %v1267 = vld [vmem:[%s1 + $0x1a8] sm:$0xff]
  %v1268 = vld [vmem:[%s1 + $0x1b0] sm:$0xff]
  %v1269 = vld [vmem:[%s1 + $0x1b8] sm:$0xff]
  %v1270 = vld [vmem:[%s1 + $0x1c0] sm:$0xff]
  %v1271 = vld [vmem:[%s1 + $0x1c8] sm:$0xff]
  %v1272 = vld [vmem:[%s1 + $0x1d0] sm:$0xff]
  %v1273 = vld [vmem:[%s1 + $0x1d8] sm:$0xff]
  %v1274 = vld [vmem:[%s1 + $0x1e0] sm:$0xff]
  %v1275 = vld [vmem:[%s1 + $0x1e8] sm:$0xff]
  %v1276 = vld [vmem:[%s1 + $0x1f0] sm:$0xff]
  %v1277 = vld [vmem:[%s1 + $0x1f8] sm:$0xff]
  %v1278 = vld [vmem:[%s1 + $0x200] sm:$0xff]
  %v1279 = vld [vmem:[%s1 + $0x208] sm:$0xff]
  %v1280 = vld [vmem:[%s1 + $0x210] sm:$0xff]
  %v1281 = vld [vmem:[%s1 + $0x218] sm:$0xff]
  %v1282 = vld [vmem:[%s1 + $0x220] sm:$0xff]
  %v1283 = vld [vmem:[%s1 + $0x228] sm:$0xff]
  %v1284 = vld [vmem:[%s1 + $0x230] sm:$0xff]
  %v1285 = vld [vmem:[%s1 + $0x238] sm:$0xff]
  %v1286 = vld [vmem:[%s2] sm:$0x7]
  %v1288 = vperm.slane %v1286, 0
  %v1289 = vperm.slane %v1286, 1
  %v1290 = vperm.slane %v1286, 2
  %v1294 = vsel %vm32, %v1211, 0
  %v1296 = vsel %vm32, %v1210, 0
  %1298 = vmatpush.msra.mxu0 %v1259
  %1299 = vmatpush.msra.mxu0 %v1256
  %1300 = vmatpush.msra.mxu0 %v1253
  %1301 = vmatpush.msra.mxu0 %v1250
  %1302 = vmatpush.msra.mxu0 %v1247
  %1303 = vmatpush.msra.mxu0 %v1244
  %1304 = vmatpush.msra.mxu0 %v1241
  %1305 = vmatpush.msra.mxu0 %v1238
  %1306 = vmatpush.msra.mxu0 %v1235
  %1307 = vmatpush.msra.mxu0 %v1232
  %1308 = vmatpush.msra.mxu0 %v1229
  %1309 = vmatpush.msra.mxu0 %v1226
  %1310 = vmatpush.msra.mxu0 %v1223
  %1311 = vmatpush.msra.mxu0 %v1220
  %1312 = vmatpush.msra.mxu0 %v1217
  %1313 = vmatpush.msra.mxu0 %v1214
  %1314 = vmatmul.f32.gmra.mxu0 %v1212
  %v1315 = vpop.f32.mrf.mxu0
  %v1316 = vadd.f32 %v1288, %v1315
  %1317 = vmatmul.f32.gmra.mxu0 %v1213
  %v1318 = vpop.f32.mrf.mxu0
  %v1319 = vadd.f32 %v1288, %v1318
  %1320 = vdwg.mxu0
  %1321 = vmatpush.msra.mxu0 0.0
  %1322 = vmatpush.msra.mxu0 0.0
  %1323 = vmatpush.msra.mxu0 0.0
  %1324 = vmatpush.msra.mxu0 0.0
  %1325 = vmatpush.msra.mxu0 0.0
  %1326 = vmatpush.msra.mxu0 0.0
  %1327 = vmatpush.msra.mxu0 0.0
  %1328 = vmatpush.msra.mxu0 0.0
  %1329 = vmatpush.msra.mxu0 %v1283
  %1330 = vmatpush.msra.mxu0 %v1280
  %1331 = vmatpush.msra.mxu0 %v1277
  %1332 = vmatpush.msra.mxu0 %v1274
  %1333 = vmatpush.msra.mxu0 %v1271
  %1334 = vmatpush.msra.mxu0 %v1268
  %1335 = vmatpush.msra.mxu0 %v1265
  %1336 = vmatpush.msra.mxu0 %v1262
  %1337 = vmatmul.f32.gmra.mxu0 %v1294
  %v1338 = vpop.f32.mrf.mxu0
  %v1339 = vadd.f32 %v1316, %v1338
  %1340 = vmatmul.f32.gmra.mxu0 %v1296
  %v1341 = vpop.f32.mrf.mxu0
  %v1342 = vadd.f32 %v1319, %v1341
  %1343 = vdwg.mxu0
  %1344 = vmatpush.msra.mxu0 %v1260
  %1345 = vmatpush.msra.mxu0 %v1257
  %1346 = vmatpush.msra.mxu0 %v1254
  %1347 = vmatpush.msra.mxu0 %v1251
  %1348 = vmatpush.msra.mxu0 %v1248
  %1349 = vmatpush.msra.mxu0 %v1245
  %1350 = vmatpush.msra.mxu0 %v1242
  %1351 = vmatpush.msra.mxu0 %v1239
  %1352 = vmatpush.msra.mxu0 %v1236
  %1353 = vmatpush.msra.mxu0 %v1233
  %1354 = vmatpush.msra.mxu0 %v1230
  %1355 = vmatpush.msra.mxu0 %v1227
  %1356 = vmatpush.msra.mxu0 %v1224
  %1357 = vmatpush.msra.mxu0 %v1221
  %1358 = vmatpush.msra.mxu0 %v1218
  %1359 = vmatpush.msra.mxu0 %v1215
  %1360 = vmatmul.f32.gmra.mxu0 %v1212
  %v1361 = vpop.f32.mrf.mxu0
  %v1362 = vadd.f32 %v1289, %v1361
  %1363 = vmatmul.f32.gmra.mxu0 %v1213
  %v1364 = vpop.f32.mrf.mxu0
  %v1365 = vadd.f32 %v1289, %v1364
  %1366 = vdwg.mxu0
  %1367 = vmatpush.msra.mxu0 0.0
  %1368 = vmatpush.msra.mxu0 0.0
  %1369 = vmatpush.msra.mxu0 0.0
  %1370 = vmatpush.msra.mxu0 0.0
  %1371 = vmatpush.msra.mxu0 0.0
  %1372 = vmatpush.msra.mxu0 0.0
  %1373 = vmatpush.msra.mxu0 0.0
  %1374 = vmatpush.msra.mxu0 0.0
  %1375 = vmatpush.msra.mxu0 %v1284
  %1376 = vmatpush.msra.mxu0 %v1281
  %1377 = vmatpush.msra.mxu0 %v1278
  %1378 = vmatpush.msra.mxu0 %v1275
  %1379 = vmatpush.msra.mxu0 %v1272
  %1380 = vmatpush.msra.mxu0 %v1269
  %1381 = vmatpush.msra.mxu0 %v1266
  %1382 = vmatpush.msra.mxu0 %v1263
  %1383 = vmatmul.f32.gmra.mxu0 %v1294
  %v1384 = vpop.f32.mrf.mxu0
  %v1385 = vadd.f32 %v1362, %v1384
  %1386 = vmatmul.f32.gmra.mxu0 %v1296
  %v1387 = vpop.f32.mrf.mxu0
  %v1388 = vadd.f32 %v1365, %v1387
  %1389 = vdwg.mxu0
  %1390 = vmatpush.msra.mxu0 %v1261
  %1391 = vmatpush.msra.mxu0 %v1258
  %1392 = vmatpush.msra.mxu0 %v1255
  %1393 = vmatpush.msra.mxu0 %v1252
  %1394 = vmatpush.msra.mxu0 %v1249
  %1395 = vmatpush.msra.mxu0 %v1246
  %1396 = vmatpush.msra.mxu0 %v1243
  %1397 = vmatpush.msra.mxu0 %v1240
  %1398 = vmatpush.msra.mxu0 %v1237
  %1399 = vmatpush.msra.mxu0 %v1234
  %1400 = vmatpush.msra.mxu0 %v1231
  %1401 = vmatpush.msra.mxu0 %v1228
  %1402 = vmatpush.msra.mxu0 %v1225
  %1403 = vmatpush.msra.mxu0 %v1222
  %1404 = vmatpush.msra.mxu0 %v1219
  %1405 = vmatpush.msra.mxu0 %v1216
  %1406 = vmatmul.f32.gmra.mxu0 %v1212
  %v1407 = vpop.f32.mrf.mxu0
  %v1408 = vadd.f32 %v1290, %v1407
  %1409 = vmatmul.f32.gmra.mxu0 %v1213
  %v1410 = vpop.f32.mrf.mxu0
  %v1411 = vadd.f32 %v1290, %v1410
  %1412 = vdwg.mxu0
  %1413 = vmatpush.msra.mxu0 0.0
  %1414 = vmatpush.msra.mxu0 0.0
  %1415 = vmatpush.msra.mxu0 0.0
  %1416 = vmatpush.msra.mxu0 0.0
  %1417 = vmatpush.msra.mxu0 0.0
  %1418 = vmatpush.msra.mxu0 0.0
  %1419 = vmatpush.msra.mxu0 0.0
  %1420 = vmatpush.msra.mxu0 0.0
  %1421 = vmatpush.msra.mxu0 %v1285
  %1422 = vmatpush.msra.mxu0 %v1282
  %1423 = vmatpush.msra.mxu0 %v1279
  %1424 = vmatpush.msra.mxu0 %v1276
  %1425 = vmatpush.msra.mxu0 %v1273
  %1426 = vmatpush.msra.mxu0 %v1270
  %1427 = vmatpush.msra.mxu0 %v1267
  %1428 = vmatpush.msra.mxu0 %v1264
  %1429 = vmatmul.f32.gmra.mxu0 %v1294
  %v1430 = vpop.f32.mrf.mxu0
  %v1431 = vadd.f32 %v1408, %v1430
  %1432 = vmatmul.f32.gmra.mxu0 %v1296
  %v1433 = vpop.f32.mrf.mxu0
  %v1434 = vadd.f32 %v1411, %v1433
  %1435 = vdwg.mxu0
  %v1436 = vtanh.pop %v1339
  %v1437 = vtanh.pop %v1385
  %v1438 = vtanh.pop %v1431
  %v1439 = vtanh.pop %v1342
  %v1440 = vtanh.pop %v1388
  %v1441 = vtanh.pop %v1434
  %1446 = vrot.lane.b32.xlu0 %v1436, 44
  %v1447 = vpop.permute.xlu0 %1446
  %1448 = vrot.lane.b32.xlu0 %v1437, 44
  %v1449 = vpop.permute.xlu0 %1448
  %1450 = vrot.lane.b32.xlu0 %v1439, 44
  %v1451 = vpop.permute.xlu0 %1450
  %1452 = vrot.lane.b32.xlu0 %v1440, 44
  %v1453 = vpop.permute.xlu0 %1452
  %v1454 = vsel %vm275, %v1447, %v1449
  %v1455 = vsel %vm275, %v1451, %v1453
  %v1458 = vadd.f32 %v1436, %v1454
  %v1459 = vadd.f32 %v1439, %v1455
  %1460 = vrot.lane.b32.xlu0 %v1437, 88
  %v1461 = vpop.permute.xlu0 %1460
  %1462 = vrot.lane.b32.xlu0 %v1440, 88
  %v1463 = vpop.permute.xlu0 %1462
  %v1466 = vadd.f32 %v1458, %v1461
  %v1467 = vadd.f32 %v1459, %v1463
  %1470 = vrot.lane.b32.xlu0 %v1437, 4
  %v1471 = vpop.permute.xlu0 %1470
  %1472 = vrot.lane.b32.xlu0 %v1438, 4
  %v1473 = vpop.permute.xlu0 %1472
  %1474 = vrot.lane.b32.xlu0 %v1440, 4
  %v1475 = vpop.permute.xlu0 %1474
  %1476 = vrot.lane.b32.xlu0 %v1441, 4
  %v1477 = vpop.permute.xlu0 %1476
  %v1478 = vsel %vm300, %v1471, %v1473
  %v1479 = vsel %vm300, %v1475, %v1477
  %v1482 = vadd.f32 %v1466, %v1478
  %v1483 = vadd.f32 %v1467, %v1479
  %v1484 = vmul.f32 %v1482, 0.25
  %v1485 = vmul.f32 %v1483, 0.25
  %s1486 = scalar_lea.vmem %s3, 64
  %1487 = vst.msk [vmem:[%s1486] sm:$0xff] %vm309, %v1484
  %1488 = vst.msk [vmem:[%s1486 + $0x8] sm:$0x3f] %vm311, %v1485
  %s1489 = scalar_lea.vmem %s0, 80
  %v1490 = vld [vmem:[%s1489] sm:$0xff]
  %v1491 = vld [vmem:[%s1489 + $0x8] sm:$0xff]
  %v1494 = vrot.slane %v1490, 1
  %v1495 = vrot.slane %v1491, 1
  %v1496 = vsel %vm18, %v1494, %v1495
  %1497 = vrot.lane.b32.xlu0 %v1496, 64
  %v1498 = vpop.permute.xlu0 %1497
  %1499 = vrot.lane.b32.xlu0 %v1495, 64
  %v1500 = vpop.permute.xlu0 %1499
  %v1503 = vrot.slane %v1490, 2
  %v1504 = vrot.slane %v1491, 2
  %v1505 = vsel %vm28, %v1503, %v1504
  %v1506 = vsel %vm32, %v1490, %v1498
  %v1507 = vsel %vm32, %v1491, %v1500
  %v1508 = vld [vmem:[%s1] sm:$0xff]
  %v1509 = vld [vmem:[%s1 + $0x8] sm:$0xff]
  %v1510 = vld [vmem:[%s1 + $0x10] sm:$0xff]
  %v1511 = vld [vmem:[%s1 + $0x18] sm:$0xff]
  %v1512 = vld [vmem:[%s1 + $0x20] sm:$0xff]
  %v1513 = vld [vmem:[%s1 + $0x28] sm:$0xff]
  %v1514 = vld [vmem:[%s1 + $0x30] sm:$0xff]
  %v1515 = vld [vmem:[%s1 + $0x38] sm:$0xff]
  %v1516 = vld [vmem:[%s1 + $0x40] sm:$0xff]
  %v1517 = vld [vmem:[%s1 + $0x48] sm:$0xff]
  %v1518 = vld [vmem:[%s1 + $0x50] sm:$0xff]
  %v1519 = vld [vmem:[%s1 + $0x58] sm:$0xff]
  %v1520 = vld [vmem:[%s1 + $0x60] sm:$0xff]
  %v1521 = vld [vmem:[%s1 + $0x68] sm:$0xff]
  %v1522 = vld [vmem:[%s1 + $0x70] sm:$0xff]
  %v1523 = vld [vmem:[%s1 + $0x78] sm:$0xff]
  %v1524 = vld [vmem:[%s1 + $0x80] sm:$0xff]
  %v1525 = vld [vmem:[%s1 + $0x88] sm:$0xff]
  %v1526 = vld [vmem:[%s1 + $0x90] sm:$0xff]
  %v1527 = vld [vmem:[%s1 + $0x98] sm:$0xff]
  %v1528 = vld [vmem:[%s1 + $0xa0] sm:$0xff]
  %v1529 = vld [vmem:[%s1 + $0xa8] sm:$0xff]
  %v1530 = vld [vmem:[%s1 + $0xb0] sm:$0xff]
  %v1531 = vld [vmem:[%s1 + $0xb8] sm:$0xff]
  %v1532 = vld [vmem:[%s1 + $0xc0] sm:$0xff]
  %v1533 = vld [vmem:[%s1 + $0xc8] sm:$0xff]
  %v1534 = vld [vmem:[%s1 + $0xd0] sm:$0xff]
  %v1535 = vld [vmem:[%s1 + $0xd8] sm:$0xff]
  %v1536 = vld [vmem:[%s1 + $0xe0] sm:$0xff]
  %v1537 = vld [vmem:[%s1 + $0xe8] sm:$0xff]
  %v1538 = vld [vmem:[%s1 + $0xf0] sm:$0xff]
  %v1539 = vld [vmem:[%s1 + $0xf8] sm:$0xff]
  %v1540 = vld [vmem:[%s1 + $0x100] sm:$0xff]
  %v1541 = vld [vmem:[%s1 + $0x108] sm:$0xff]
  %v1542 = vld [vmem:[%s1 + $0x110] sm:$0xff]
  %v1543 = vld [vmem:[%s1 + $0x118] sm:$0xff]
  %v1544 = vld [vmem:[%s1 + $0x120] sm:$0xff]
  %v1545 = vld [vmem:[%s1 + $0x128] sm:$0xff]
  %v1546 = vld [vmem:[%s1 + $0x130] sm:$0xff]
  %v1547 = vld [vmem:[%s1 + $0x138] sm:$0xff]
  %v1548 = vld [vmem:[%s1 + $0x140] sm:$0xff]
  %v1549 = vld [vmem:[%s1 + $0x148] sm:$0xff]
  %v1550 = vld [vmem:[%s1 + $0x150] sm:$0xff]
  %v1551 = vld [vmem:[%s1 + $0x158] sm:$0xff]
  %v1552 = vld [vmem:[%s1 + $0x160] sm:$0xff]
  %v1553 = vld [vmem:[%s1 + $0x168] sm:$0xff]
  %v1554 = vld [vmem:[%s1 + $0x170] sm:$0xff]
  %v1555 = vld [vmem:[%s1 + $0x178] sm:$0xff]
  %v1556 = vld [vmem:[%s1 + $0x180] sm:$0xff]
  %v1557 = vld [vmem:[%s1 + $0x188] sm:$0xff]
  %v1558 = vld [vmem:[%s1 + $0x190] sm:$0xff]
  %v1559 = vld [vmem:[%s1 + $0x198] sm:$0xff]
  %v1560 = vld [vmem:[%s1 + $0x1a0] sm:$0xff]
  %v1561 = vld [vmem:[%s1 + $0x1a8] sm:$0xff]
  %v1562 = vld [vmem:[%s1 + $0x1b0] sm:$0xff]
  %v1563 = vld [vmem:[%s1 + $0x1b8] sm:$0xff]
  %v1564 = vld [vmem:[%s1 + $0x1c0] sm:$0xff]
  %v1565 = vld [vmem:[%s1 + $0x1c8] sm:$0xff]
  %v1566 = vld [vmem:[%s1 + $0x1d0] sm:$0xff]
  %v1567 = vld [vmem:[%s1 + $0x1d8] sm:$0xff]
  %v1568 = vld [vmem:[%s1 + $0x1e0] sm:$0xff]
  %v1569 = vld [vmem:[%s1 + $0x1e8] sm:$0xff]
  %v1570 = vld [vmem:[%s1 + $0x1f0] sm:$0xff]
  %v1571 = vld [vmem:[%s1 + $0x1f8] sm:$0xff]
  %v1572 = vld [vmem:[%s1 + $0x200] sm:$0xff]
  %v1573 = vld [vmem:[%s1 + $0x208] sm:$0xff]
  %v1574 = vld [vmem:[%s1 + $0x210] sm:$0xff]
  %v1575 = vld [vmem:[%s1 + $0x218] sm:$0xff]
  %v1576 = vld [vmem:[%s1 + $0x220] sm:$0xff]
  %v1577 = vld [vmem:[%s1 + $0x228] sm:$0xff]
  %v1578 = vld [vmem:[%s1 + $0x230] sm:$0xff]
  %v1579 = vld [vmem:[%s1 + $0x238] sm:$0xff]
  %v1580 = vld [vmem:[%s2] sm:$0x7]
  %v1582 = vperm.slane %v1580, 0
  %v1583 = vperm.slane %v1580, 1
  %v1584 = vperm.slane %v1580, 2
  %v1588 = vsel %vm32, %v1505, 0
  %v1590 = vsel %vm32, %v1504, 0
  %1592 = vmatpush.msra.mxu0 %v1553
  %1593 = vmatpush.msra.mxu0 %v1550
  %1594 = vmatpush.msra.mxu0 %v1547
  %1595 = vmatpush.msra.mxu0 %v1544
  %1596 = vmatpush.msra.mxu0 %v1541
  %1597 = vmatpush.msra.mxu0 %v1538
  %1598 = vmatpush.msra.mxu0 %v1535
  %1599 = vmatpush.msra.mxu0 %v1532
  %1600 = vmatpush.msra.mxu0 %v1529
  %1601 = vmatpush.msra.mxu0 %v1526
  %1602 = vmatpush.msra.mxu0 %v1523
  %1603 = vmatpush.msra.mxu0 %v1520
  %1604 = vmatpush.msra.mxu0 %v1517
  %1605 = vmatpush.msra.mxu0 %v1514
  %1606 = vmatpush.msra.mxu0 %v1511
  %1607 = vmatpush.msra.mxu0 %v1508
  %1608 = vmatmul.f32.gmra.mxu0 %v1506
  %v1609 = vpop.f32.mrf.mxu0
  %v1610 = vadd.f32 %v1582, %v1609
  %1611 = vmatmul.f32.gmra.mxu0 %v1507
  %v1612 = vpop.f32.mrf.mxu0
  %v1613 = vadd.f32 %v1582, %v1612
  %1614 = vdwg.mxu0
  %1615 = vmatpush.msra.mxu0 0.0
  %1616 = vmatpush.msra.mxu0 0.0
  %1617 = vmatpush.msra.mxu0 0.0
  %1618 = vmatpush.msra.mxu0 0.0
  %1619 = vmatpush.msra.mxu0 0.0
  %1620 = vmatpush.msra.mxu0 0.0
  %1621 = vmatpush.msra.mxu0 0.0
  %1622 = vmatpush.msra.mxu0 0.0
  %1623 = vmatpush.msra.mxu0 %v1577
  %1624 = vmatpush.msra.mxu0 %v1574
  %1625 = vmatpush.msra.mxu0 %v1571
  %1626 = vmatpush.msra.mxu0 %v1568
  %1627 = vmatpush.msra.mxu0 %v1565
  %1628 = vmatpush.msra.mxu0 %v1562
  %1629 = vmatpush.msra.mxu0 %v1559
  %1630 = vmatpush.msra.mxu0 %v1556
  %1631 = vmatmul.f32.gmra.mxu0 %v1588
  %v1632 = vpop.f32.mrf.mxu0
  %v1633 = vadd.f32 %v1610, %v1632
  %1634 = vmatmul.f32.gmra.mxu0 %v1590
  %v1635 = vpop.f32.mrf.mxu0
  %v1636 = vadd.f32 %v1613, %v1635
  %1637 = vdwg.mxu0
  %1638 = vmatpush.msra.mxu0 %v1554
  %1639 = vmatpush.msra.mxu0 %v1551
  %1640 = vmatpush.msra.mxu0 %v1548
  %1641 = vmatpush.msra.mxu0 %v1545
  %1642 = vmatpush.msra.mxu0 %v1542
  %1643 = vmatpush.msra.mxu0 %v1539
  %1644 = vmatpush.msra.mxu0 %v1536
  %1645 = vmatpush.msra.mxu0 %v1533
  %1646 = vmatpush.msra.mxu0 %v1530
  %1647 = vmatpush.msra.mxu0 %v1527
  %1648 = vmatpush.msra.mxu0 %v1524
  %1649 = vmatpush.msra.mxu0 %v1521
  %1650 = vmatpush.msra.mxu0 %v1518
  %1651 = vmatpush.msra.mxu0 %v1515
  %1652 = vmatpush.msra.mxu0 %v1512
  %1653 = vmatpush.msra.mxu0 %v1509
  %1654 = vmatmul.f32.gmra.mxu0 %v1506
  %v1655 = vpop.f32.mrf.mxu0
  %v1656 = vadd.f32 %v1583, %v1655
  %1657 = vmatmul.f32.gmra.mxu0 %v1507
  %v1658 = vpop.f32.mrf.mxu0
  %v1659 = vadd.f32 %v1583, %v1658
  %1660 = vdwg.mxu0
  %1661 = vmatpush.msra.mxu0 0.0
  %1662 = vmatpush.msra.mxu0 0.0
  %1663 = vmatpush.msra.mxu0 0.0
  %1664 = vmatpush.msra.mxu0 0.0
  %1665 = vmatpush.msra.mxu0 0.0
  %1666 = vmatpush.msra.mxu0 0.0
  %1667 = vmatpush.msra.mxu0 0.0
  %1668 = vmatpush.msra.mxu0 0.0
  %1669 = vmatpush.msra.mxu0 %v1578
  %1670 = vmatpush.msra.mxu0 %v1575
  %1671 = vmatpush.msra.mxu0 %v1572
  %1672 = vmatpush.msra.mxu0 %v1569
  %1673 = vmatpush.msra.mxu0 %v1566
  %1674 = vmatpush.msra.mxu0 %v1563
  %1675 = vmatpush.msra.mxu0 %v1560
  %1676 = vmatpush.msra.mxu0 %v1557
  %1677 = vmatmul.f32.gmra.mxu0 %v1588
  %v1678 = vpop.f32.mrf.mxu0
  %v1679 = vadd.f32 %v1656, %v1678
  %1680 = vmatmul.f32.gmra.mxu0 %v1590
  %v1681 = vpop.f32.mrf.mxu0
  %v1682 = vadd.f32 %v1659, %v1681
  %1683 = vdwg.mxu0
  %1684 = vmatpush.msra.mxu0 %v1555
  %1685 = vmatpush.msra.mxu0 %v1552
  %1686 = vmatpush.msra.mxu0 %v1549
  %1687 = vmatpush.msra.mxu0 %v1546
  %1688 = vmatpush.msra.mxu0 %v1543
  %1689 = vmatpush.msra.mxu0 %v1540
  %1690 = vmatpush.msra.mxu0 %v1537
  %1691 = vmatpush.msra.mxu0 %v1534
  %1692 = vmatpush.msra.mxu0 %v1531
  %1693 = vmatpush.msra.mxu0 %v1528
  %1694 = vmatpush.msra.mxu0 %v1525
  %1695 = vmatpush.msra.mxu0 %v1522
  %1696 = vmatpush.msra.mxu0 %v1519
  %1697 = vmatpush.msra.mxu0 %v1516
  %1698 = vmatpush.msra.mxu0 %v1513
  %1699 = vmatpush.msra.mxu0 %v1510
  %1700 = vmatmul.f32.gmra.mxu0 %v1506
  %v1701 = vpop.f32.mrf.mxu0
  %v1702 = vadd.f32 %v1584, %v1701
  %1703 = vmatmul.f32.gmra.mxu0 %v1507
  %v1704 = vpop.f32.mrf.mxu0
  %v1705 = vadd.f32 %v1584, %v1704
  %1706 = vdwg.mxu0
  %1707 = vmatpush.msra.mxu0 0.0
  %1708 = vmatpush.msra.mxu0 0.0
  %1709 = vmatpush.msra.mxu0 0.0
  %1710 = vmatpush.msra.mxu0 0.0
  %1711 = vmatpush.msra.mxu0 0.0
  %1712 = vmatpush.msra.mxu0 0.0
  %1713 = vmatpush.msra.mxu0 0.0
  %1714 = vmatpush.msra.mxu0 0.0
  %1715 = vmatpush.msra.mxu0 %v1579
  %1716 = vmatpush.msra.mxu0 %v1576
  %1717 = vmatpush.msra.mxu0 %v1573
  %1718 = vmatpush.msra.mxu0 %v1570
  %1719 = vmatpush.msra.mxu0 %v1567
  %1720 = vmatpush.msra.mxu0 %v1564
  %1721 = vmatpush.msra.mxu0 %v1561
  %1722 = vmatpush.msra.mxu0 %v1558
  %1723 = vmatmul.f32.gmra.mxu0 %v1588
  %v1724 = vpop.f32.mrf.mxu0
  %v1725 = vadd.f32 %v1702, %v1724
  %1726 = vmatmul.f32.gmra.mxu0 %v1590
  %v1727 = vpop.f32.mrf.mxu0
  %v1728 = vadd.f32 %v1705, %v1727
  %1729 = vdwg.mxu0
  %v1730 = vtanh.pop %v1633
  %v1731 = vtanh.pop %v1679
  %v1732 = vtanh.pop %v1725
  %v1733 = vtanh.pop %v1636
  %v1734 = vtanh.pop %v1682
  %v1735 = vtanh.pop %v1728
  %1740 = vrot.lane.b32.xlu0 %v1730, 44
  %v1741 = vpop.permute.xlu0 %1740
  %1742 = vrot.lane.b32.xlu0 %v1731, 44
  %v1743 = vpop.permute.xlu0 %1742
  %1744 = vrot.lane.b32.xlu0 %v1733, 44
  %v1745 = vpop.permute.xlu0 %1744
  %1746 = vrot.lane.b32.xlu0 %v1734, 44
  %v1747 = vpop.permute.xlu0 %1746
  %v1748 = vsel %vm275, %v1741, %v1743
  %v1749 = vsel %vm275, %v1745, %v1747
  %v1752 = vadd.f32 %v1730, %v1748
  %v1753 = vadd.f32 %v1733, %v1749
  %1754 = vrot.lane.b32.xlu0 %v1731, 88
  %v1755 = vpop.permute.xlu0 %1754
  %1756 = vrot.lane.b32.xlu0 %v1734, 88
  %v1757 = vpop.permute.xlu0 %1756
  %v1760 = vadd.f32 %v1752, %v1755
  %v1761 = vadd.f32 %v1753, %v1757
  %1764 = vrot.lane.b32.xlu0 %v1731, 4
  %v1765 = vpop.permute.xlu0 %1764
  %1766 = vrot.lane.b32.xlu0 %v1732, 4
  %v1767 = vpop.permute.xlu0 %1766
  %1768 = vrot.lane.b32.xlu0 %v1734, 4
  %v1769 = vpop.permute.xlu0 %1768
  %1770 = vrot.lane.b32.xlu0 %v1735, 4
  %v1771 = vpop.permute.xlu0 %1770
  %v1772 = vsel %vm300, %v1765, %v1767
  %v1773 = vsel %vm300, %v1769, %v1771
  %v1776 = vadd.f32 %v1760, %v1772
  %v1777 = vadd.f32 %v1761, %v1773
  %v1778 = vmul.f32 %v1776, 0.25
  %v1779 = vmul.f32 %v1777, 0.25
  %s1780 = scalar_lea.vmem %s3, 80
  %1781 = vst.msk [vmem:[%s1780] sm:$0xff] %vm309, %v1778
  %1782 = vst.msk [vmem:[%s1780 + $0x8] sm:$0x3f] %vm311, %v1779
  %s1783 = scalar_lea.vmem %s0, 96
  %v1784 = vld [vmem:[%s1783] sm:$0xff]
  %v1785 = vld [vmem:[%s1783 + $0x8] sm:$0xff]
  %v1788 = vrot.slane %v1784, 1
  %v1789 = vrot.slane %v1785, 1
  %v1790 = vsel %vm18, %v1788, %v1789
  %1791 = vrot.lane.b32.xlu0 %v1790, 64
  %v1792 = vpop.permute.xlu0 %1791
  %1793 = vrot.lane.b32.xlu0 %v1789, 64
  %v1794 = vpop.permute.xlu0 %1793
  %v1797 = vrot.slane %v1784, 2
  %v1798 = vrot.slane %v1785, 2
  %v1799 = vsel %vm28, %v1797, %v1798
  %v1800 = vsel %vm32, %v1784, %v1792
  %v1801 = vsel %vm32, %v1785, %v1794
  %v1802 = vld [vmem:[%s1] sm:$0xff]
  %v1803 = vld [vmem:[%s1 + $0x8] sm:$0xff]
  %v1804 = vld [vmem:[%s1 + $0x10] sm:$0xff]
  %v1805 = vld [vmem:[%s1 + $0x18] sm:$0xff]
  %v1806 = vld [vmem:[%s1 + $0x20] sm:$0xff]
  %v1807 = vld [vmem:[%s1 + $0x28] sm:$0xff]
  %v1808 = vld [vmem:[%s1 + $0x30] sm:$0xff]
  %v1809 = vld [vmem:[%s1 + $0x38] sm:$0xff]
  %v1810 = vld [vmem:[%s1 + $0x40] sm:$0xff]
  %v1811 = vld [vmem:[%s1 + $0x48] sm:$0xff]
  %v1812 = vld [vmem:[%s1 + $0x50] sm:$0xff]
  %v1813 = vld [vmem:[%s1 + $0x58] sm:$0xff]
  %v1814 = vld [vmem:[%s1 + $0x60] sm:$0xff]
  %v1815 = vld [vmem:[%s1 + $0x68] sm:$0xff]
  %v1816 = vld [vmem:[%s1 + $0x70] sm:$0xff]
  %v1817 = vld [vmem:[%s1 + $0x78] sm:$0xff]
  %v1818 = vld [vmem:[%s1 + $0x80] sm:$0xff]
  %v1819 = vld [vmem:[%s1 + $0x88] sm:$0xff]
  %v1820 = vld [vmem:[%s1 + $0x90] sm:$0xff]
  %v1821 = vld [vmem:[%s1 + $0x98] sm:$0xff]
  %v1822 = vld [vmem:[%s1 + $0xa0] sm:$0xff]
  %v1823 = vld [vmem:[%s1 + $0xa8] sm:$0xff]
  %v1824 = vld [vmem:[%s1 + $0xb0] sm:$0xff]
  %v1825 = vld [vmem:[%s1 + $0xb8] sm:$0xff]
  %v1826 = vld [vmem:[%s1 + $0xc0] sm:$0xff]
  %v1827 = vld [vmem:[%s1 + $0xc8] sm:$0xff]
  %v1828 = vld [vmem:[%s1 + $0xd0] sm:$0xff]
  %v1829 = vld [vmem:[%s1 + $0xd8] sm:$0xff]
  %v1830 = vld [vmem:[%s1 + $0xe0] sm:$0xff]
  %v1831 = vld [vmem:[%s1 + $0xe8] sm:$0xff]
  %v1832 = vld [vmem:[%s1 + $0xf0] sm:$0xff]
  %v1833 = vld [vmem:[%s1 + $0xf8] sm:$0xff]
  %v1834 = vld [vmem:[%s1 + $0x100] sm:$0xff]
  %v1835 = vld [vmem:[%s1 + $0x108] sm:$0xff]
  %v1836 = vld [vmem:[%s1 + $0x110] sm:$0xff]
  %v1837 = vld [vmem:[%s1 + $0x118] sm:$0xff]
  %v1838 = vld [vmem:[%s1 + $0x120] sm:$0xff]
  %v1839 = vld [vmem:[%s1 + $0x128] sm:$0xff]
  %v1840 = vld [vmem:[%s1 + $0x130] sm:$0xff]
  %v1841 = vld [vmem:[%s1 + $0x138] sm:$0xff]
  %v1842 = vld [vmem:[%s1 + $0x140] sm:$0xff]
  %v1843 = vld [vmem:[%s1 + $0x148] sm:$0xff]
  %v1844 = vld [vmem:[%s1 + $0x150] sm:$0xff]
  %v1845 = vld [vmem:[%s1 + $0x158] sm:$0xff]
  %v1846 = vld [vmem:[%s1 + $0x160] sm:$0xff]
  %v1847 = vld [vmem:[%s1 + $0x168] sm:$0xff]
  %v1848 = vld [vmem:[%s1 + $0x170] sm:$0xff]
  %v1849 = vld [vmem:[%s1 + $0x178] sm:$0xff]
  %v1850 = vld [vmem:[%s1 + $0x180] sm:$0xff]
  %v1851 = vld [vmem:[%s1 + $0x188] sm:$0xff]
  %v1852 = vld [vmem:[%s1 + $0x190] sm:$0xff]
  %v1853 = vld [vmem:[%s1 + $0x198] sm:$0xff]
  %v1854 = vld [vmem:[%s1 + $0x1a0] sm:$0xff]
  %v1855 = vld [vmem:[%s1 + $0x1a8] sm:$0xff]
  %v1856 = vld [vmem:[%s1 + $0x1b0] sm:$0xff]
  %v1857 = vld [vmem:[%s1 + $0x1b8] sm:$0xff]
  %v1858 = vld [vmem:[%s1 + $0x1c0] sm:$0xff]
  %v1859 = vld [vmem:[%s1 + $0x1c8] sm:$0xff]
  %v1860 = vld [vmem:[%s1 + $0x1d0] sm:$0xff]
  %v1861 = vld [vmem:[%s1 + $0x1d8] sm:$0xff]
  %v1862 = vld [vmem:[%s1 + $0x1e0] sm:$0xff]
  %v1863 = vld [vmem:[%s1 + $0x1e8] sm:$0xff]
  %v1864 = vld [vmem:[%s1 + $0x1f0] sm:$0xff]
  %v1865 = vld [vmem:[%s1 + $0x1f8] sm:$0xff]
  %v1866 = vld [vmem:[%s1 + $0x200] sm:$0xff]
  %v1867 = vld [vmem:[%s1 + $0x208] sm:$0xff]
  %v1868 = vld [vmem:[%s1 + $0x210] sm:$0xff]
  %v1869 = vld [vmem:[%s1 + $0x218] sm:$0xff]
  %v1870 = vld [vmem:[%s1 + $0x220] sm:$0xff]
  %v1871 = vld [vmem:[%s1 + $0x228] sm:$0xff]
  %v1872 = vld [vmem:[%s1 + $0x230] sm:$0xff]
  %v1873 = vld [vmem:[%s1 + $0x238] sm:$0xff]
  %v1874 = vld [vmem:[%s2] sm:$0x7]
  %v1876 = vperm.slane %v1874, 0
  %v1877 = vperm.slane %v1874, 1
  %v1878 = vperm.slane %v1874, 2
  %v1882 = vsel %vm32, %v1799, 0
  %v1884 = vsel %vm32, %v1798, 0
  %1886 = vmatpush.msra.mxu0 %v1847
  %1887 = vmatpush.msra.mxu0 %v1844
  %1888 = vmatpush.msra.mxu0 %v1841
  %1889 = vmatpush.msra.mxu0 %v1838
  %1890 = vmatpush.msra.mxu0 %v1835
  %1891 = vmatpush.msra.mxu0 %v1832
  %1892 = vmatpush.msra.mxu0 %v1829
  %1893 = vmatpush.msra.mxu0 %v1826
  %1894 = vmatpush.msra.mxu0 %v1823
  %1895 = vmatpush.msra.mxu0 %v1820
  %1896 = vmatpush.msra.mxu0 %v1817
  %1897 = vmatpush.msra.mxu0 %v1814
  %1898 = vmatpush.msra.mxu0 %v1811
  %1899 = vmatpush.msra.mxu0 %v1808
  %1900 = vmatpush.msra.mxu0 %v1805
  %1901 = vmatpush.msra.mxu0 %v1802
  %1902 = vmatmul.f32.gmra.mxu0 %v1800
  %v1903 = vpop.f32.mrf.mxu0
  %v1904 = vadd.f32 %v1876, %v1903
  %1905 = vmatmul.f32.gmra.mxu0 %v1801
  %v1906 = vpop.f32.mrf.mxu0
  %v1907 = vadd.f32 %v1876, %v1906
  %1908 = vdwg.mxu0
  %1909 = vmatpush.msra.mxu0 0.0
  %1910 = vmatpush.msra.mxu0 0.0
  %1911 = vmatpush.msra.mxu0 0.0
  %1912 = vmatpush.msra.mxu0 0.0
  %1913 = vmatpush.msra.mxu0 0.0
  %1914 = vmatpush.msra.mxu0 0.0
  %1915 = vmatpush.msra.mxu0 0.0
  %1916 = vmatpush.msra.mxu0 0.0
  %1917 = vmatpush.msra.mxu0 %v1871
  %1918 = vmatpush.msra.mxu0 %v1868
  %1919 = vmatpush.msra.mxu0 %v1865
  %1920 = vmatpush.msra.mxu0 %v1862
  %1921 = vmatpush.msra.mxu0 %v1859
  %1922 = vmatpush.msra.mxu0 %v1856
  %1923 = vmatpush.msra.mxu0 %v1853
  %1924 = vmatpush.msra.mxu0 %v1850
  %1925 = vmatmul.f32.gmra.mxu0 %v1882
  %v1926 = vpop.f32.mrf.mxu0
  %v1927 = vadd.f32 %v1904, %v1926
  %1928 = vmatmul.f32.gmra.mxu0 %v1884
  %v1929 = vpop.f32.mrf.mxu0
  %v1930 = vadd.f32 %v1907, %v1929
  %1931 = vdwg.mxu0
  %1932 = vmatpush.msra.mxu0 %v1848
  %1933 = vmatpush.msra.mxu0 %v1845
  %1934 = vmatpush.msra.mxu0 %v1842
  %1935 = vmatpush.msra.mxu0 %v1839
  %1936 = vmatpush.msra.mxu0 %v1836
  %1937 = vmatpush.msra.mxu0 %v1833
  %1938 = vmatpush.msra.mxu0 %v1830
  %1939 = vmatpush.msra.mxu0 %v1827
  %1940 = vmatpush.msra.mxu0 %v1824
  %1941 = vmatpush.msra.mxu0 %v1821
  %1942 = vmatpush.msra.mxu0 %v1818
  %1943 = vmatpush.msra.mxu0 %v1815
  %1944 = vmatpush.msra.mxu0 %v1812
  %1945 = vmatpush.msra.mxu0 %v1809
  %1946 = vmatpush.msra.mxu0 %v1806
  %1947 = vmatpush.msra.mxu0 %v1803
  %1948 = vmatmul.f32.gmra.mxu0 %v1800
  %v1949 = vpop.f32.mrf.mxu0
  %v1950 = vadd.f32 %v1877, %v1949
  %1951 = vmatmul.f32.gmra.mxu0 %v1801
  %v1952 = vpop.f32.mrf.mxu0
  %v1953 = vadd.f32 %v1877, %v1952
  %1954 = vdwg.mxu0
  %1955 = vmatpush.msra.mxu0 0.0
  %1956 = vmatpush.msra.mxu0 0.0
  %1957 = vmatpush.msra.mxu0 0.0
  %1958 = vmatpush.msra.mxu0 0.0
  %1959 = vmatpush.msra.mxu0 0.0
  %1960 = vmatpush.msra.mxu0 0.0
  %1961 = vmatpush.msra.mxu0 0.0
  %1962 = vmatpush.msra.mxu0 0.0
  %1963 = vmatpush.msra.mxu0 %v1872
  %1964 = vmatpush.msra.mxu0 %v1869
  %1965 = vmatpush.msra.mxu0 %v1866
  %1966 = vmatpush.msra.mxu0 %v1863
  %1967 = vmatpush.msra.mxu0 %v1860
  %1968 = vmatpush.msra.mxu0 %v1857
  %1969 = vmatpush.msra.mxu0 %v1854
  %1970 = vmatpush.msra.mxu0 %v1851
  %1971 = vmatmul.f32.gmra.mxu0 %v1882
  %v1972 = vpop.f32.mrf.mxu0
  %v1973 = vadd.f32 %v1950, %v1972
  %1974 = vmatmul.f32.gmra.mxu0 %v1884
  %v1975 = vpop.f32.mrf.mxu0
  %v1976 = vadd.f32 %v1953, %v1975
  %1977 = vdwg.mxu0
  %1978 = vmatpush.msra.mxu0 %v1849
  %1979 = vmatpush.msra.mxu0 %v1846
  %1980 = vmatpush.msra.mxu0 %v1843
  %1981 = vmatpush.msra.mxu0 %v1840
  %1982 = vmatpush.msra.mxu0 %v1837
  %1983 = vmatpush.msra.mxu0 %v1834
  %1984 = vmatpush.msra.mxu0 %v1831
  %1985 = vmatpush.msra.mxu0 %v1828
  %1986 = vmatpush.msra.mxu0 %v1825
  %1987 = vmatpush.msra.mxu0 %v1822
  %1988 = vmatpush.msra.mxu0 %v1819
  %1989 = vmatpush.msra.mxu0 %v1816
  %1990 = vmatpush.msra.mxu0 %v1813
  %1991 = vmatpush.msra.mxu0 %v1810
  %1992 = vmatpush.msra.mxu0 %v1807
  %1993 = vmatpush.msra.mxu0 %v1804
  %1994 = vmatmul.f32.gmra.mxu0 %v1800
  %v1995 = vpop.f32.mrf.mxu0
  %v1996 = vadd.f32 %v1878, %v1995
  %1997 = vmatmul.f32.gmra.mxu0 %v1801
  %v1998 = vpop.f32.mrf.mxu0
  %v1999 = vadd.f32 %v1878, %v1998
  %2000 = vdwg.mxu0
  %2001 = vmatpush.msra.mxu0 0.0
  %2002 = vmatpush.msra.mxu0 0.0
  %2003 = vmatpush.msra.mxu0 0.0
  %2004 = vmatpush.msra.mxu0 0.0
  %2005 = vmatpush.msra.mxu0 0.0
  %2006 = vmatpush.msra.mxu0 0.0
  %2007 = vmatpush.msra.mxu0 0.0
  %2008 = vmatpush.msra.mxu0 0.0
  %2009 = vmatpush.msra.mxu0 %v1873
  %2010 = vmatpush.msra.mxu0 %v1870
  %2011 = vmatpush.msra.mxu0 %v1867
  %2012 = vmatpush.msra.mxu0 %v1864
  %2013 = vmatpush.msra.mxu0 %v1861
  %2014 = vmatpush.msra.mxu0 %v1858
  %2015 = vmatpush.msra.mxu0 %v1855
  %2016 = vmatpush.msra.mxu0 %v1852
  %2017 = vmatmul.f32.gmra.mxu0 %v1882
  %v2018 = vpop.f32.mrf.mxu0
  %v2019 = vadd.f32 %v1996, %v2018
  %2020 = vmatmul.f32.gmra.mxu0 %v1884
  %v2021 = vpop.f32.mrf.mxu0
  %v2022 = vadd.f32 %v1999, %v2021
  %2023 = vdwg.mxu0
  %v2024 = vtanh.pop %v1927
  %v2025 = vtanh.pop %v1973
  %v2026 = vtanh.pop %v2019
  %v2027 = vtanh.pop %v1930
  %v2028 = vtanh.pop %v1976
  %v2029 = vtanh.pop %v2022
  %2034 = vrot.lane.b32.xlu0 %v2024, 44
  %v2035 = vpop.permute.xlu0 %2034
  %2036 = vrot.lane.b32.xlu0 %v2025, 44
  %v2037 = vpop.permute.xlu0 %2036
  %2038 = vrot.lane.b32.xlu0 %v2027, 44
  %v2039 = vpop.permute.xlu0 %2038
  %2040 = vrot.lane.b32.xlu0 %v2028, 44
  %v2041 = vpop.permute.xlu0 %2040
  %v2042 = vsel %vm275, %v2035, %v2037
  %v2043 = vsel %vm275, %v2039, %v2041
  %v2046 = vadd.f32 %v2024, %v2042
  %v2047 = vadd.f32 %v2027, %v2043
  %2048 = vrot.lane.b32.xlu0 %v2025, 88
  %v2049 = vpop.permute.xlu0 %2048
  %2050 = vrot.lane.b32.xlu0 %v2028, 88
  %v2051 = vpop.permute.xlu0 %2050
  %v2054 = vadd.f32 %v2046, %v2049
  %v2055 = vadd.f32 %v2047, %v2051
  %2058 = vrot.lane.b32.xlu0 %v2025, 4
  %v2059 = vpop.permute.xlu0 %2058
  %2060 = vrot.lane.b32.xlu0 %v2026, 4
  %v2061 = vpop.permute.xlu0 %2060
  %2062 = vrot.lane.b32.xlu0 %v2028, 4
  %v2063 = vpop.permute.xlu0 %2062
  %2064 = vrot.lane.b32.xlu0 %v2029, 4
  %v2065 = vpop.permute.xlu0 %2064
  %v2066 = vsel %vm300, %v2059, %v2061
  %v2067 = vsel %vm300, %v2063, %v2065
  %v2070 = vadd.f32 %v2054, %v2066
  %v2071 = vadd.f32 %v2055, %v2067
  %v2072 = vmul.f32 %v2070, 0.25
  %v2073 = vmul.f32 %v2071, 0.25
  %s2074 = scalar_lea.vmem %s3, 96
  %2075 = vst.msk [vmem:[%s2074] sm:$0xff] %vm309, %v2072
  %2076 = vst.msk [vmem:[%s2074 + $0x8] sm:$0x3f] %vm311, %v2073
  %s2077 = scalar_lea.vmem %s0, 112
  %v2078 = vld [vmem:[%s2077] sm:$0xff]
  %v2079 = vld [vmem:[%s2077 + $0x8] sm:$0xff]
  %v2082 = vrot.slane %v2078, 1
  %v2083 = vrot.slane %v2079, 1
  %v2084 = vsel %vm18, %v2082, %v2083
  %2085 = vrot.lane.b32.xlu0 %v2084, 64
  %v2086 = vpop.permute.xlu0 %2085
  %2087 = vrot.lane.b32.xlu0 %v2083, 64
  %v2088 = vpop.permute.xlu0 %2087
  %v2091 = vrot.slane %v2078, 2
  %v2092 = vrot.slane %v2079, 2
  %v2093 = vsel %vm28, %v2091, %v2092
  %v2094 = vsel %vm32, %v2078, %v2086
  %v2095 = vsel %vm32, %v2079, %v2088
  %v2096 = vld [vmem:[%s1] sm:$0xff]
  %v2097 = vld [vmem:[%s1 + $0x8] sm:$0xff]
  %v2098 = vld [vmem:[%s1 + $0x10] sm:$0xff]
  %v2099 = vld [vmem:[%s1 + $0x18] sm:$0xff]
  %v2100 = vld [vmem:[%s1 + $0x20] sm:$0xff]
  %v2101 = vld [vmem:[%s1 + $0x28] sm:$0xff]
  %v2102 = vld [vmem:[%s1 + $0x30] sm:$0xff]
  %v2103 = vld [vmem:[%s1 + $0x38] sm:$0xff]
  %v2104 = vld [vmem:[%s1 + $0x40] sm:$0xff]
  %v2105 = vld [vmem:[%s1 + $0x48] sm:$0xff]
  %v2106 = vld [vmem:[%s1 + $0x50] sm:$0xff]
  %v2107 = vld [vmem:[%s1 + $0x58] sm:$0xff]
  %v2108 = vld [vmem:[%s1 + $0x60] sm:$0xff]
  %v2109 = vld [vmem:[%s1 + $0x68] sm:$0xff]
  %v2110 = vld [vmem:[%s1 + $0x70] sm:$0xff]
  %v2111 = vld [vmem:[%s1 + $0x78] sm:$0xff]
  %v2112 = vld [vmem:[%s1 + $0x80] sm:$0xff]
  %v2113 = vld [vmem:[%s1 + $0x88] sm:$0xff]
  %v2114 = vld [vmem:[%s1 + $0x90] sm:$0xff]
  %v2115 = vld [vmem:[%s1 + $0x98] sm:$0xff]
  %v2116 = vld [vmem:[%s1 + $0xa0] sm:$0xff]
  %v2117 = vld [vmem:[%s1 + $0xa8] sm:$0xff]
  %v2118 = vld [vmem:[%s1 + $0xb0] sm:$0xff]
  %v2119 = vld [vmem:[%s1 + $0xb8] sm:$0xff]
  %v2120 = vld [vmem:[%s1 + $0xc0] sm:$0xff]
  %v2121 = vld [vmem:[%s1 + $0xc8] sm:$0xff]
  %v2122 = vld [vmem:[%s1 + $0xd0] sm:$0xff]
  %v2123 = vld [vmem:[%s1 + $0xd8] sm:$0xff]
  %v2124 = vld [vmem:[%s1 + $0xe0] sm:$0xff]
  %v2125 = vld [vmem:[%s1 + $0xe8] sm:$0xff]
  %v2126 = vld [vmem:[%s1 + $0xf0] sm:$0xff]
  %v2127 = vld [vmem:[%s1 + $0xf8] sm:$0xff]
  %v2128 = vld [vmem:[%s1 + $0x100] sm:$0xff]
  %v2129 = vld [vmem:[%s1 + $0x108] sm:$0xff]
  %v2130 = vld [vmem:[%s1 + $0x110] sm:$0xff]
  %v2131 = vld [vmem:[%s1 + $0x118] sm:$0xff]
  %v2132 = vld [vmem:[%s1 + $0x120] sm:$0xff]
  %v2133 = vld [vmem:[%s1 + $0x128] sm:$0xff]
  %v2134 = vld [vmem:[%s1 + $0x130] sm:$0xff]
  %v2135 = vld [vmem:[%s1 + $0x138] sm:$0xff]
  %v2136 = vld [vmem:[%s1 + $0x140] sm:$0xff]
  %v2137 = vld [vmem:[%s1 + $0x148] sm:$0xff]
  %v2138 = vld [vmem:[%s1 + $0x150] sm:$0xff]
  %v2139 = vld [vmem:[%s1 + $0x158] sm:$0xff]
  %v2140 = vld [vmem:[%s1 + $0x160] sm:$0xff]
  %v2141 = vld [vmem:[%s1 + $0x168] sm:$0xff]
  %v2142 = vld [vmem:[%s1 + $0x170] sm:$0xff]
  %v2143 = vld [vmem:[%s1 + $0x178] sm:$0xff]
  %v2144 = vld [vmem:[%s1 + $0x180] sm:$0xff]
  %v2145 = vld [vmem:[%s1 + $0x188] sm:$0xff]
  %v2146 = vld [vmem:[%s1 + $0x190] sm:$0xff]
  %v2147 = vld [vmem:[%s1 + $0x198] sm:$0xff]
  %v2148 = vld [vmem:[%s1 + $0x1a0] sm:$0xff]
  %v2149 = vld [vmem:[%s1 + $0x1a8] sm:$0xff]
  %v2150 = vld [vmem:[%s1 + $0x1b0] sm:$0xff]
  %v2151 = vld [vmem:[%s1 + $0x1b8] sm:$0xff]
  %v2152 = vld [vmem:[%s1 + $0x1c0] sm:$0xff]
  %v2153 = vld [vmem:[%s1 + $0x1c8] sm:$0xff]
  %v2154 = vld [vmem:[%s1 + $0x1d0] sm:$0xff]
  %v2155 = vld [vmem:[%s1 + $0x1d8] sm:$0xff]
  %v2156 = vld [vmem:[%s1 + $0x1e0] sm:$0xff]
  %v2157 = vld [vmem:[%s1 + $0x1e8] sm:$0xff]
  %v2158 = vld [vmem:[%s1 + $0x1f0] sm:$0xff]
  %v2159 = vld [vmem:[%s1 + $0x1f8] sm:$0xff]
  %v2160 = vld [vmem:[%s1 + $0x200] sm:$0xff]
  %v2161 = vld [vmem:[%s1 + $0x208] sm:$0xff]
  %v2162 = vld [vmem:[%s1 + $0x210] sm:$0xff]
  %v2163 = vld [vmem:[%s1 + $0x218] sm:$0xff]
  %v2164 = vld [vmem:[%s1 + $0x220] sm:$0xff]
  %v2165 = vld [vmem:[%s1 + $0x228] sm:$0xff]
  %v2166 = vld [vmem:[%s1 + $0x230] sm:$0xff]
  %v2167 = vld [vmem:[%s1 + $0x238] sm:$0xff]
  %v2168 = vld [vmem:[%s2] sm:$0x7]
  %v2170 = vperm.slane %v2168, 0
  %v2171 = vperm.slane %v2168, 1
  %v2172 = vperm.slane %v2168, 2
  %v2176 = vsel %vm32, %v2093, 0
  %v2178 = vsel %vm32, %v2092, 0
  %2180 = vmatpush.msra.mxu0 %v2141
  %2181 = vmatpush.msra.mxu0 %v2138
  %2182 = vmatpush.msra.mxu0 %v2135
  %2183 = vmatpush.msra.mxu0 %v2132
  %2184 = vmatpush.msra.mxu0 %v2129
  %2185 = vmatpush.msra.mxu0 %v2126
  %2186 = vmatpush.msra.mxu0 %v2123
  %2187 = vmatpush.msra.mxu0 %v2120
  %2188 = vmatpush.msra.mxu0 %v2117
  %2189 = vmatpush.msra.mxu0 %v2114
  %2190 = vmatpush.msra.mxu0 %v2111
  %2191 = vmatpush.msra.mxu0 %v2108
  %2192 = vmatpush.msra.mxu0 %v2105
  %2193 = vmatpush.msra.mxu0 %v2102
  %2194 = vmatpush.msra.mxu0 %v2099
  %2195 = vmatpush.msra.mxu0 %v2096
  %2196 = vmatmul.f32.gmra.mxu0 %v2094
  %v2197 = vpop.f32.mrf.mxu0
  %v2198 = vadd.f32 %v2170, %v2197
  %2199 = vmatmul.f32.gmra.mxu0 %v2095
  %v2200 = vpop.f32.mrf.mxu0
  %v2201 = vadd.f32 %v2170, %v2200
  %2202 = vdwg.mxu0
  %2203 = vmatpush.msra.mxu0 0.0
  %2204 = vmatpush.msra.mxu0 0.0
  %2205 = vmatpush.msra.mxu0 0.0
  %2206 = vmatpush.msra.mxu0 0.0
  %2207 = vmatpush.msra.mxu0 0.0
  %2208 = vmatpush.msra.mxu0 0.0
  %2209 = vmatpush.msra.mxu0 0.0
  %2210 = vmatpush.msra.mxu0 0.0
  %2211 = vmatpush.msra.mxu0 %v2165
  %2212 = vmatpush.msra.mxu0 %v2162
  %2213 = vmatpush.msra.mxu0 %v2159
  %2214 = vmatpush.msra.mxu0 %v2156
  %2215 = vmatpush.msra.mxu0 %v2153
  %2216 = vmatpush.msra.mxu0 %v2150
  %2217 = vmatpush.msra.mxu0 %v2147
  %2218 = vmatpush.msra.mxu0 %v2144
  %2219 = vmatmul.f32.gmra.mxu0 %v2176
  %v2220 = vpop.f32.mrf.mxu0
  %v2221 = vadd.f32 %v2198, %v2220
  %2222 = vmatmul.f32.gmra.mxu0 %v2178
  %v2223 = vpop.f32.mrf.mxu0
  %v2224 = vadd.f32 %v2201, %v2223
  %2225 = vdwg.mxu0
  %2226 = vmatpush.msra.mxu0 %v2142
  %2227 = vmatpush.msra.mxu0 %v2139
  %2228 = vmatpush.msra.mxu0 %v2136
  %2229 = vmatpush.msra.mxu0 %v2133
  %2230 = vmatpush.msra.mxu0 %v2130
  %2231 = vmatpush.msra.mxu0 %v2127
  %2232 = vmatpush.msra.mxu0 %v2124
  %2233 = vmatpush.msra.mxu0 %v2121
  %2234 = vmatpush.msra.mxu0 %v2118
  %2235 = vmatpush.msra.mxu0 %v2115
  %2236 = vmatpush.msra.mxu0 %v2112
  %2237 = vmatpush.msra.mxu0 %v2109
  %2238 = vmatpush.msra.mxu0 %v2106
  %2239 = vmatpush.msra.mxu0 %v2103
  %2240 = vmatpush.msra.mxu0 %v2100
  %2241 = vmatpush.msra.mxu0 %v2097
  %2242 = vmatmul.f32.gmra.mxu0 %v2094
  %v2243 = vpop.f32.mrf.mxu0
  %v2244 = vadd.f32 %v2171, %v2243
  %2245 = vmatmul.f32.gmra.mxu0 %v2095
  %v2246 = vpop.f32.mrf.mxu0
  %v2247 = vadd.f32 %v2171, %v2246
  %2248 = vdwg.mxu0
  %2249 = vmatpush.msra.mxu0 0.0
  %2250 = vmatpush.msra.mxu0 0.0
  %2251 = vmatpush.msra.mxu0 0.0
  %2252 = vmatpush.msra.mxu0 0.0
  %2253 = vmatpush.msra.mxu0 0.0
  %2254 = vmatpush.msra.mxu0 0.0
  %2255 = vmatpush.msra.mxu0 0.0
  %2256 = vmatpush.msra.mxu0 0.0
  %2257 = vmatpush.msra.mxu0 %v2166
  %2258 = vmatpush.msra.mxu0 %v2163
  %2259 = vmatpush.msra.mxu0 %v2160
  %2260 = vmatpush.msra.mxu0 %v2157
  %2261 = vmatpush.msra.mxu0 %v2154
  %2262 = vmatpush.msra.mxu0 %v2151
  %2263 = vmatpush.msra.mxu0 %v2148
  %2264 = vmatpush.msra.mxu0 %v2145
  %2265 = vmatmul.f32.gmra.mxu0 %v2176
  %v2266 = vpop.f32.mrf.mxu0
  %v2267 = vadd.f32 %v2244, %v2266
  %2268 = vmatmul.f32.gmra.mxu0 %v2178
  %v2269 = vpop.f32.mrf.mxu0
  %v2270 = vadd.f32 %v2247, %v2269
  %2271 = vdwg.mxu0
  %2272 = vmatpush.msra.mxu0 %v2143
  %2273 = vmatpush.msra.mxu0 %v2140
  %2274 = vmatpush.msra.mxu0 %v2137
  %2275 = vmatpush.msra.mxu0 %v2134
  %2276 = vmatpush.msra.mxu0 %v2131
  %2277 = vmatpush.msra.mxu0 %v2128
  %2278 = vmatpush.msra.mxu0 %v2125
  %2279 = vmatpush.msra.mxu0 %v2122
  %2280 = vmatpush.msra.mxu0 %v2119
  %2281 = vmatpush.msra.mxu0 %v2116
  %2282 = vmatpush.msra.mxu0 %v2113
  %2283 = vmatpush.msra.mxu0 %v2110
  %2284 = vmatpush.msra.mxu0 %v2107
  %2285 = vmatpush.msra.mxu0 %v2104
  %2286 = vmatpush.msra.mxu0 %v2101
  %2287 = vmatpush.msra.mxu0 %v2098
  %2288 = vmatmul.f32.gmra.mxu0 %v2094
  %v2289 = vpop.f32.mrf.mxu0
  %v2290 = vadd.f32 %v2172, %v2289
  %2291 = vmatmul.f32.gmra.mxu0 %v2095
  %v2292 = vpop.f32.mrf.mxu0
  %v2293 = vadd.f32 %v2172, %v2292
  %2294 = vdwg.mxu0
  %2295 = vmatpush.msra.mxu0 0.0
  %2296 = vmatpush.msra.mxu0 0.0
  %2297 = vmatpush.msra.mxu0 0.0
  %2298 = vmatpush.msra.mxu0 0.0
  %2299 = vmatpush.msra.mxu0 0.0
  %2300 = vmatpush.msra.mxu0 0.0
  %2301 = vmatpush.msra.mxu0 0.0
  %2302 = vmatpush.msra.mxu0 0.0
  %2303 = vmatpush.msra.mxu0 %v2167
  %2304 = vmatpush.msra.mxu0 %v2164
  %2305 = vmatpush.msra.mxu0 %v2161
  %2306 = vmatpush.msra.mxu0 %v2158
  %2307 = vmatpush.msra.mxu0 %v2155
  %2308 = vmatpush.msra.mxu0 %v2152
  %2309 = vmatpush.msra.mxu0 %v2149
  %2310 = vmatpush.msra.mxu0 %v2146
  %2311 = vmatmul.f32.gmra.mxu0 %v2176
  %v2312 = vpop.f32.mrf.mxu0
  %v2313 = vadd.f32 %v2290, %v2312
  %2314 = vmatmul.f32.gmra.mxu0 %v2178
  %v2315 = vpop.f32.mrf.mxu0
  %v2316 = vadd.f32 %v2293, %v2315
  %2317 = vdwg.mxu0
  %v2318 = vtanh.pop %v2221
  %v2319 = vtanh.pop %v2267
  %v2320 = vtanh.pop %v2313
  %v2321 = vtanh.pop %v2224
  %v2322 = vtanh.pop %v2270
  %v2323 = vtanh.pop %v2316
  %2328 = vrot.lane.b32.xlu0 %v2318, 44
  %v2329 = vpop.permute.xlu0 %2328
  %2330 = vrot.lane.b32.xlu0 %v2319, 44
  %v2331 = vpop.permute.xlu0 %2330
  %2332 = vrot.lane.b32.xlu0 %v2321, 44
  %v2333 = vpop.permute.xlu0 %2332
  %2334 = vrot.lane.b32.xlu0 %v2322, 44
  %v2335 = vpop.permute.xlu0 %2334
  %v2336 = vsel %vm275, %v2329, %v2331
  %v2337 = vsel %vm275, %v2333, %v2335
  %v2340 = vadd.f32 %v2318, %v2336
  %v2341 = vadd.f32 %v2321, %v2337
  %2342 = vrot.lane.b32.xlu0 %v2319, 88
  %v2343 = vpop.permute.xlu0 %2342
  %2344 = vrot.lane.b32.xlu0 %v2322, 88
  %v2345 = vpop.permute.xlu0 %2344
  %v2348 = vadd.f32 %v2340, %v2343
  %v2349 = vadd.f32 %v2341, %v2345
  %2352 = vrot.lane.b32.xlu0 %v2319, 4
  %v2353 = vpop.permute.xlu0 %2352
  %2354 = vrot.lane.b32.xlu0 %v2320, 4
  %v2355 = vpop.permute.xlu0 %2354
  %2356 = vrot.lane.b32.xlu0 %v2322, 4
  %v2357 = vpop.permute.xlu0 %2356
  %2358 = vrot.lane.b32.xlu0 %v2323, 4
  %v2359 = vpop.permute.xlu0 %2358
  %v2360 = vsel %vm300, %v2353, %v2355
  %v2361 = vsel %vm300, %v2357, %v2359
  %v2364 = vadd.f32 %v2348, %v2360
  %v2365 = vadd.f32 %v2349, %v2361
  %v2366 = vmul.f32 %v2364, 0.25
  %v2367 = vmul.f32 %v2365, 0.25
  %s2368 = scalar_lea.vmem %s3, 112
  %2369 = vst.msk [vmem:[%s2368] sm:$0xff] %vm309, %v2366
  %2370 = vst.msk [vmem:[%s2368 + $0x8] sm:$0x3f] %vm311, %v2367
  // Predicated region
  $region14: #{lenet5_forward.3} parent=0 // pred_check
    _
  $region15: #{lenet5_forward.3} parent=0 // pred_check_branch
    %2372 = sbr.rel (0) target = $region17
  $region16: #{lenet5_forward.3} parent=0 // pred_region
    _
  $region17: #{lenet5_forward.3} parent=0 // pred_fallthru
    _
  // Predicated region
  $region18: #{lenet5_forward.3} parent=0 // pred_check
    _
  $region19: #{lenet5_forward.3} parent=0 // pred_check_branch
    %2374 = sbr.rel (0) target = $region21
  $region20: #{lenet5_forward.3} parent=0 // pred_region
    _
  $region21: #{lenet5_forward.3} parent=0 // pred_fallthru
    _

// kernel: tile.18
$region0: #{tile.18}
  #allocation0 [shape = 's32[1]{0}', space=sflag, size = 0x4, scoped, tag = 'scoped memory for tile.18']
  %s0 = inlined_call_operand.vmem [shape: f32[16], index: 0, kind: input, shape index: {}]
  %s1 = inlined_call_operand.vmem [shape: f32[20,16], index: 1, kind: output, shape index: {}]
  // Predicated region
  $region2: #{tile.18} parent=0 // pred_check
    _
  $region3: #{tile.18} parent=0 // pred_check_branch
    %3 = sbr.rel (0) target = $region5
  $region4: #{tile.18} parent=0 // pred_region
    _
  $region5: #{tile.18} parent=0 // pred_fallthru
    _
  %v4 = vld [vmem:[%s0] ss:$0 sm:$0xff]
  %5 = vst [vmem:[%s1] sm:$0xff] %v4
  %s6 = scalar_lea.vmem %s1, 8
  %7 = vst [vmem:[%s6] sm:$0xff] %v4
  %s8 = scalar_lea.vmem %s1, 16
  %9 = vst [vmem:[%s8] sm:$0xff] %v4

// kernel: tile.19
$region0: #{tile.19}
  %s0 = inlined_call_operand.vmem [shape: f32[20,16], index: 0, kind: input, shape index: {}]
  %s1 = inlined_call_operand.vmem [shape: f32[1,320], index: 1, kind: output, shape index: {}]
  $region1: #{tile.19} parent=0
    #allocation0 [shape = 'u8[12288]{0}', space=vmem, size = 0x3000, scoped, tag = 'scoped mem for output reshape']
    %v2 = vld [vmem:[%s0] ss:$8 sm:$0x7]
    %vm3 = vcmask 130048
    %4 = vst.msk [vmem:[#allocation0] ss:$8 sm:$0x7] %vm3, %v2
    %s5 = scalar_lea.vmem %s0, 7
    %s6 = smov 3
    %v7 = vld [vmem:[%s5] ss:$8 sm:%s6]
    %8 = vrot.lane.b32.xlu0 %v7, 112
    %v9 = vpop.permute.xlu0 %8
    %vm10 = vcmask 1048448
    %11 = vst.msk [vmem:[#allocation0] ss:$8 sm:$0x3] %vm10, %v9
    %s12 = scalar_lea.vmem %s0, 6
    %s13 = smov 3
    %v14 = vld [vmem:[%s12] ss:$8 sm:%s13]
    %15 = vrot.lane.b32.xlu0 %v14, 96
    %v16 = vpop.permute.xlu0 %15
    %vm17 = vcmask 917248
    %18 = vst.msk [vmem:[#allocation0] ss:$8 sm:$0x3] %vm17, %v16
    %s19 = scalar_lea.vmem %s0, 5
    %s20 = smov 3
    %v21 = vld [vmem:[%s19] ss:$8 sm:%s20]
    %22 = vrot.lane.b32.xlu0 %v21, 80
    %v23 = vpop.permute.xlu0 %22
    %vm24 = vcmask 786048
    %25 = vst.msk [vmem:[#allocation0] ss:$8 sm:$0x3] %vm24, %v23
    %s26 = scalar_lea.vmem %s0, 4
    %s27 = smov 3
    %v28 = vld [vmem:[%s26] ss:$8 sm:%s27]
    %29 = vrot.lane.b32.xlu0 %v28, 64
    %v30 = vpop.permute.xlu0 %29
    %vm31 = vcmask 654848
    %32 = vst.msk [vmem:[#allocation0] ss:$8 sm:$0x3] %vm31, %v30
    %s33 = scalar_lea.vmem %s0, 3
    %v34 = vld [vmem:[%s33] ss:$8 sm:$0x7]
    %35 = vrot.lane.b32.xlu0 %v34, 48
    %v36 = vpop.permute.xlu0 %35
    %vm37 = vcmask 523648
    %38 = vst.msk [vmem:[#allocation0] ss:$8 sm:$0x7] %vm37, %v36
    %s39 = scalar_lea.vmem %s0, 2
    %v40 = vld [vmem:[%s39] ss:$8 sm:$0x7]
    %41 = vrot.lane.b32.xlu0 %v40, 32
    %v42 = vpop.permute.xlu0 %41
    %vm43 = vcmask 392448
    %44 = vst.msk [vmem:[#allocation0] ss:$8 sm:$0x7] %vm43, %v42
    %s45 = scalar_lea.vmem %s0, 1
    %v46 = vld [vmem:[%s45] ss:$8 sm:$0x7]
    %47 = vrot.lane.b32.xlu0 %v46, 16
    %v48 = vpop.permute.xlu0 %47
    %vm49 = vcmask 261248
    %50 = vst.msk [vmem:[#allocation0] ss:$8 sm:$0x7] %vm49, %v48
    %s52 = ssub.s32 2, 1
    %v53 = vld [vmem:[#allocation0] sm:%s52]
    %s55 = ssub.s32 2, 1
    %56 = vst [vmem:[%s1] sm:%s55] %v53
    %s57 = scalar_lea.vmem [#allocation0], 8
    %v58 = vld [vmem:[%s57] sm:%s52]
    %s60 = ssub.s32 2, 1
    %s61 = scalar_lea.vmem %s1, 1
    %62 = vst [vmem:[%s61] sm:%s60] %v58
    %s63 = scalar_lea.vmem [#allocation0], 16
    %v64 = vld [vmem:[%s63] sm:%s52]
    %s66 = ssub.s32 2, 1
    %s67 = scalar_lea.vmem %s1, 2
    %68 = vst [vmem:[%s67] sm:%s66] %v64

// kernel: lenet5_forward.5
$region0: #{lenet5_forward.5}
  #allocation0 [shape = 'u32[]', space=smem, size = 0x4, offset = 0x4, fixed_abs, tag = 'smem constant byte address 0x4 - core index']
  #allocation1 [shape = 'u32[72,128]{1,0:T(1,128)}', space=vmem, size = 0x9000, scoped, tag = 'internal scratch']
  %s0 = inlined_call_operand.vmem [shape: f32[8,400], index: 0, kind: input, shape index: {}]
  %s1 = inlined_call_operand.vmem [shape: f32[400,128], index: 1, kind: input, shape index: {}]
  %s2 = inlined_call_operand.vmem [shape: f32[1,128], index: 2, kind: input, shape index: {}]
  %s3 = inlined_call_operand.vmem [shape: f32[128,128], index: 3, kind: input, shape index: {}]
  %s4 = inlined_call_operand.vmem [shape: f32[1,128], index: 4, kind: input, shape index: {}]
  %s5 = inlined_call_operand.vmem [shape: f32[128,10], index: 5, kind: input, shape index: {}]
  %s6 = inlined_call_operand.vmem [shape: f32[1,10], index: 6, kind: input, shape index: {}]
  %s7 = inlined_call_operand.vmem [shape: f32[8,10], index: 7, kind: output, shape index: {}]
  %s8 = sld [smem:[#allocation0]]
  $region38: #{lenet5_forward.5} parent=0
    _
  %s10 = ssub.s32 1, %s8
  %s11 = scalar_select 0, %s10, %s8
  // Predicated region
  $region2: #{lenet5_forward.5} parent=0 // pred_check
    _
  $region3: #{lenet5_forward.5} parent=0 // pred_check_branch
    %13 = sbr.rel (0) target = $region5
  $region4: #{lenet5_forward.5} parent=0 // pred_region
    _
  $region5: #{lenet5_forward.5} parent=0 // pred_fallthru
    _
  // Predicated region
  $region6: #{lenet5_forward.5} parent=0 // pred_check
    _
  $region7: #{lenet5_forward.5} parent=0 // pred_check_branch
    %15 = sbr.rel (0) target = $region9
  $region8: #{lenet5_forward.5} parent=0 // pred_region
    _
  $region9: #{lenet5_forward.5} parent=0 // pred_fallthru
    _
  // Predicated region
  $region10: #{lenet5_forward.5} parent=0 // pred_check
    _
  $region11: #{lenet5_forward.5} parent=0 // pred_check_branch
    %17 = sbr.rel (0) target = $region13
  $region12: #{lenet5_forward.5} parent=0 // pred_region
    _
  $region13: #{lenet5_forward.5} parent=0 // pred_fallthru
    _
  // Predicated region
  $region14: #{lenet5_forward.5} parent=0 // pred_check
    _
  $region15: #{lenet5_forward.5} parent=0 // pred_check_branch
    %19 = sbr.rel (0) target = $region17
  $region16: #{lenet5_forward.5} parent=0 // pred_region
    _
  $region17: #{lenet5_forward.5} parent=0 // pred_fallthru
    _
  // Predicated region
  $region18: #{lenet5_forward.5} parent=0 // pred_check
    _
  $region19: #{lenet5_forward.5} parent=0 // pred_check_branch
    %21 = sbr.rel (0) target = $region21
  $region20: #{lenet5_forward.5} parent=0 // pred_region
    _
  $region21: #{lenet5_forward.5} parent=0 // pred_fallthru
    _
  // Predicated region
  $region22: #{lenet5_forward.5} parent=0 // pred_check
    _
  $region23: #{lenet5_forward.5} parent=0 // pred_check_branch
    %23 = sbr.rel (0) target = $region25
  $region24: #{lenet5_forward.5} parent=0 // pred_region
    _
  $region25: #{lenet5_forward.5} parent=0 // pred_fallthru
    _
  // Predicated region
  $region26: #{lenet5_forward.5} parent=0 // pred_check
    _
  $region27: #{lenet5_forward.5} parent=0 // pred_check_branch
    %25 = sbr.rel (0) target = $region29
  $region28: #{lenet5_forward.5} parent=0 // pred_region
    _
  $region29: #{lenet5_forward.5} parent=0 // pred_fallthru
    _
  %v26 = vld [vmem:[%s0] sm:$0xff]
  %v27 = vld [vmem:[%s0 + $0x8] sm:$0xff]
  %v28 = vld [vmem:[%s0 + $0x10] sm:$0xff]
  %v29 = vld [vmem:[%s0 + $0x18] sm:$0xff]
  %v30 = vld [vmem:[%s1] sm:$0xff]
  %v31 = vld [vmem:[%s1 + $0x8] sm:$0xff]
  %v32 = vld [vmem:[%s1 + $0x10] sm:$0xff]
  %v33 = vld [vmem:[%s1 + $0x18] sm:$0xff]
  %v34 = vld [vmem:[%s1 + $0x20] sm:$0xff]
  %v35 = vld [vmem:[%s1 + $0x28] sm:$0xff]
  %v36 = vld [vmem:[%s1 + $0x30] sm:$0xff]
  %v37 = vld [vmem:[%s1 + $0x38] sm:$0xff]
  %v38 = vld [vmem:[%s1 + $0x40] sm:$0xff]
  %v39 = vld [vmem:[%s1 + $0x48] sm:$0xff]
  %v40 = vld [vmem:[%s1 + $0x50] sm:$0xff]
  %v41 = vld [vmem:[%s1 + $0x58] sm:$0xff]
  %v42 = vld [vmem:[%s1 + $0x60] sm:$0xff]
  %v43 = vld [vmem:[%s1 + $0x68] sm:$0xff]
  %v44 = vld [vmem:[%s1 + $0x70] sm:$0xff]
  %v45 = vld [vmem:[%s1 + $0x78] sm:$0xff]
  %v46 = vld [vmem:[%s1 + $0x80] sm:$0xff]
  %v47 = vld [vmem:[%s1 + $0x88] sm:$0xff]
  %v48 = vld [vmem:[%s1 + $0x90] sm:$0xff]
  %v49 = vld [vmem:[%s1 + $0x98] sm:$0xff]
  %v50 = vld [vmem:[%s1 + $0xa0] sm:$0xff]
  %v51 = vld [vmem:[%s1 + $0xa8] sm:$0xff]
  %v52 = vld [vmem:[%s1 + $0xb0] sm:$0xff]
  %v53 = vld [vmem:[%s1 + $0xb8] sm:$0xff]
  %v54 = vld [vmem:[%s1 + $0xc0] sm:$0xff]
  %v55 = vld [vmem:[%s1 + $0xc8] sm:$0xff]
  %v56 = vld [vmem:[%s1 + $0xd0] sm:$0xff]
  %v57 = vld [vmem:[%s1 + $0xd8] sm:$0xff]
  %v58 = vld [vmem:[%s1 + $0xe0] sm:$0xff]
  %v59 = vld [vmem:[%s1 + $0xe8] sm:$0xff]
  %v60 = vld [vmem:[%s1 + $0xf0] sm:$0xff]
  %v61 = vld [vmem:[%s1 + $0xf8] sm:$0xff]
  %v62 = vld [vmem:[%s1 + $0x100] sm:$0xff]
  %v63 = vld [vmem:[%s1 + $0x108] sm:$0xff]
  %v64 = vld [vmem:[%s1 + $0x110] sm:$0xff]
  %v65 = vld [vmem:[%s1 + $0x118] sm:$0xff]
  %v66 = vld [vmem:[%s1 + $0x120] sm:$0xff]
  %v67 = vld [vmem:[%s1 + $0x128] sm:$0xff]
  %v68 = vld [vmem:[%s1 + $0x130] sm:$0xff]
  %v69 = vld [vmem:[%s1 + $0x138] sm:$0xff]
  %v70 = vld [vmem:[%s1 + $0x140] sm:$0xff]
  %v71 = vld [vmem:[%s1 + $0x148] sm:$0xff]
  %v72 = vld [vmem:[%s1 + $0x150] sm:$0xff]
  %v73 = vld [vmem:[%s1 + $0x158] sm:$0xff]
  %v74 = vld [vmem:[%s1 + $0x160] sm:$0xff]
  %v75 = vld [vmem:[%s1 + $0x168] sm:$0xff]
  %v76 = vld [vmem:[%s1 + $0x170] sm:$0xff]
  %v77 = vld [vmem:[%s1 + $0x178] sm:$0xff]
  %v78 = vld [vmem:[%s1 + $0x180] sm:$0xff]
  %v79 = vld [vmem:[%s1 + $0x188] sm:$0xff]
  %v80 = vld [vmem:[%s2] sm:$0x1]
  %v82 = vperm.slane %v80, 0
  %vm84 = vcmask 130048
  %v86 = vsel %vm84, %v29, 0
  %88 = vmatpush.msra.mxu0 %v45
  %89 = vmatpush.msra.mxu0 %v44
  %90 = vmatpush.msra.mxu0 %v43
  %91 = vmatpush.msra.mxu0 %v42
  %92 = vmatpush.msra.mxu0 %v41
  %93 = vmatpush.msra.mxu0 %v40
  %94 = vmatpush.msra.mxu0 %v39
  %95 = vmatpush.msra.mxu0 %v38
  %96 = vmatpush.msra.mxu0 %v37
  %97 = vmatpush.msra.mxu0 %v36
  %98 = vmatpush.msra.mxu0 %v35
  %99 = vmatpush.msra.mxu0 %v34
  %100 = vmatpush.msra.mxu0 %v33
  %101 = vmatpush.msra.mxu0 %v32
  %102 = vmatpush.msra.mxu0 %v31
  %103 = vmatpush.msra.mxu0 %v30
  %104 = vmatmul.f32.gmra.mxu0 %v26
  %v105 = vpop.f32.mrf.mxu0
  %v106 = vadd.f32 %v82, %v105
  %107 = vdwg.mxu0
  %108 = vmatpush.msra.mxu0 %v61
  %109 = vmatpush.msra.mxu0 %v60
  %110 = vmatpush.msra.mxu0 %v59
  %111 = vmatpush.msra.mxu0 %v58
  %112 = vmatpush.msra.mxu0 %v57
  %113 = vmatpush.msra.mxu0 %v56
  %114 = vmatpush.msra.mxu0 %v55
  %115 = vmatpush.msra.mxu0 %v54
  %116 = vmatpush.msra.mxu0 %v53
  %117 = vmatpush.msra.mxu0 %v52
  %118 = vmatpush.msra.mxu0 %v51
  %119 = vmatpush.msra.mxu0 %v50
  %120 = vmatpush.msra.mxu0 %v49
  %121 = vmatpush.msra.mxu0 %v48
  %122 = vmatpush.msra.mxu0 %v47
  %123 = vmatpush.msra.mxu0 %v46
  %124 = vmatmul.f32.gmra.mxu0 %v27
  %v125 = vpop.f32.mrf.mxu0
  %v126 = vadd.f32 %v106, %v125
  %127 = vdwg.mxu0
  %128 = vmatpush.msra.mxu0 %v77
  %129 = vmatpush.msra.mxu0 %v76
  %130 = vmatpush.msra.mxu0 %v75
  %131 = vmatpush.msra.mxu0 %v74
  %132 = vmatpush.msra.mxu0 %v73
  %133 = vmatpush.msra.mxu0 %v72
  %134 = vmatpush.msra.mxu0 %v71
  %135 = vmatpush.msra.mxu0 %v70
  %136 = vmatpush.msra.mxu0 %v69
  %137 = vmatpush.msra.mxu0 %v68
  %138 = vmatpush.msra.mxu0 %v67
  %139 = vmatpush.msra.mxu0 %v66
  %140 = vmatpush.msra.mxu0 %v65
  %141 = vmatpush.msra.mxu0 %v64
  %142 = vmatpush.msra.mxu0 %v63
  %143 = vmatpush.msra.mxu0 %v62
  %144 = vmatmul.f32.gmra.mxu0 %v28
  %v145 = vpop.f32.mrf.mxu0
  %v146 = vadd.f32 %v126, %v145
  %147 = vdwg.mxu0
  %148 = vmatpush.msra.mxu0 0.0
  %149 = vmatpush.msra.mxu0 0.0
  %150 = vmatpush.msra.mxu0 0.0
  %151 = vmatpush.msra.mxu0 0.0
  %152 = vmatpush.msra.mxu0 0.0
  %153 = vmatpush.msra.mxu0 0.0
  %154 = vmatpush.msra.mxu0 0.0
  %155 = vmatpush.msra.mxu0 0.0
  %156 = vmatpush.msra.mxu0 0.0
  %157 = vmatpush.msra.mxu0 0.0
  %158 = vmatpush.msra.mxu0 0.0
  %159 = vmatpush.msra.mxu0 0.0
  %160 = vmatpush.msra.mxu0 0.0
  %161 = vmatpush.msra.mxu0 0.0
  %162 = vmatpush.msra.mxu0 %v79
  %163 = vmatpush.msra.mxu0 %v78
  %164 = vmatmul.f32.gmra.mxu0 %v86
  %v165 = vpop.f32.mrf.mxu0
  %v166 = vadd.f32 %v146, %v165
  %167 = vdwg.mxu0
  %v168 = vtanh.pop %v166
  %v169 = vld [vmem:[%s3] sm:$0xff]
  %v170 = vld [vmem:[%s3 + $0x8] sm:$0xff]
  %v171 = vld [vmem:[%s3 + $0x10] sm:$0xff]
  %v172 = vld [vmem:[%s3 + $0x18] sm:$0xff]
  %v173 = vld [vmem:[%s3 + $0x20] sm:$0xff]
  %v174 = vld [vmem:[%s3 + $0x28] sm:$0xff]
  %v175 = vld [vmem:[%s3 + $0x30] sm:$0xff]
  %v176 = vld [vmem:[%s3 + $0x38] sm:$0xff]
  %v177 = vld [vmem:[%s3 + $0x40] sm:$0xff]
  %v178 = vld [vmem:[%s3 + $0x48] sm:$0xff]
  %v179 = vld [vmem:[%s3 + $0x50] sm:$0xff]
  %v180 = vld [vmem:[%s3 + $0x58] sm:$0xff]
  %v181 = vld [vmem:[%s3 + $0x60] sm:$0xff]
  %v182 = vld [vmem:[%s3 + $0x68] sm:$0xff]
  %v183 = vld [vmem:[%s3 + $0x70] sm:$0xff]
  %v184 = vld [vmem:[%s3 + $0x78] sm:$0xff]
  %v185 = vld [vmem:[%s4] sm:$0x1]
  %v187 = vperm.slane %v185, 0
  %189 = vmatpush.msra.mxu0 %v184
  %190 = vmatpush.msra.mxu0 %v183
  %191 = vmatpush.msra.mxu0 %v182
  %192 = vmatpush.msra.mxu0 %v181
  %193 = vmatpush.msra.mxu0 %v180
  %194 = vmatpush.msra.mxu0 %v179
  %195 = vmatpush.msra.mxu0 %v178
  %196 = vmatpush.msra.mxu0 %v177
  %197 = vmatpush.msra.mxu0 %v176
  %198 = vmatpush.msra.mxu0 %v175
  %199 = vmatpush.msra.mxu0 %v174
  %200 = vmatpush.msra.mxu0 %v173
  %201 = vmatpush.msra.mxu0 %v172
  %202 = vmatpush.msra.mxu0 %v171
  %203 = vmatpush.msra.mxu0 %v170
  %204 = vmatpush.msra.mxu0 %v169
  %205 = vmatmul.f32.gmra.mxu0 %v168
  %v206 = vpop.f32.mrf.mxu0
  %v207 = vadd.f32 %v187, %v206
  %208 = vdwg.mxu0
  %v209 = vtanh.pop %v207
  %v210 = vld [vmem:[%s5] sm:$0xff]
  %v211 = vld [vmem:[%s5 + $0x8] sm:$0xff]
  %v212 = vld [vmem:[%s5 + $0x10] sm:$0xff]
  %v213 = vld [vmem:[%s5 + $0x18] sm:$0xff]
  %v214 = vld [vmem:[%s5 + $0x20] sm:$0xff]
  %v215 = vld [vmem:[%s5 + $0x28] sm:$0xff]
  %v216 = vld [vmem:[%s5 + $0x30] sm:$0xff]
  %v217 = vld [vmem:[%s5 + $0x38] sm:$0xff]
  %v218 = vld [vmem:[%s5 + $0x40] sm:$0xff]
  %v219 = vld [vmem:[%s5 + $0x48] sm:$0xff]
  %v220 = vld [vmem:[%s5 + $0x50] sm:$0xff]
  %v221 = vld [vmem:[%s5 + $0x58] sm:$0xff]
  %v222 = vld [vmem:[%s5 + $0x60] sm:$0xff]
  %v223 = vld [vmem:[%s5 + $0x68] sm:$0xff]
  %v224 = vld [vmem:[%s5 + $0x70] sm:$0xff]
  %v225 = vld [vmem:[%s5 + $0x78] sm:$0xff]
  %v226 = vld [vmem:[%s6] sm:$0x1]
  %v228 = vperm.slane %v226, 0
  %230 = vmatpush.msra.mxu0 %v225
  %231 = vmatpush.msra.mxu0 %v224
  %232 = vmatpush.msra.mxu0 %v223
  %233 = vmatpush.msra.mxu0 %v222
  %234 = vmatpush.msra.mxu0 %v221
  %235 = vmatpush.msra.mxu0 %v220
  %236 = vmatpush.msra.mxu0 %v219
  %237 = vmatpush.msra.mxu0 %v218
  %238 = vmatpush.msra.mxu0 %v217
  %239 = vmatpush.msra.mxu0 %v216
  %240 = vmatpush.msra.mxu0 %v215
  %241 = vmatpush.msra.mxu0 %v214
  %242 = vmatpush.msra.mxu0 %v213
  %243 = vmatpush.msra.mxu0 %v212
  %244 = vmatpush.msra.mxu0 %v211
  %245 = vmatpush.msra.mxu0 %v210
  %246 = vmatmul.f32.gmra.mxu0 %v209
  %v247 = vpop.f32.mrf.mxu0
  %v248 = vadd.f32 %v228, %v247
  %249 = vdwg.mxu0
  %vm250 = vcmask 80896
  %v251 = vsel %vm250, %v248, -inf
  %252 = vmax.xlane.f32.xlu0 %v251
  %v253 = vpop.xlane.xlu0 %252
  %v254 = vsub.f32 %v248, %v253
  %v255 = vmul.f32 %v254, 1.442695
  %v256 = vpow.pop %v255
  %v257 = vsel %vm250, %v256, 0.0
  %258 = vadd.xlane.f32.xlu0 %v257
  %v259 = vpop.xlane.xlu0 %258
  %v260 = vrcp.pop %v259
  %v261 = vmul.f32 %v259, %v260
  %v262 = vsub.f32 2.0, %v261
  %v263 = vmul.f32 %v260, %v262
  %v264 = vmul.f32 %v256, %v263
  %265 = vst.msk [vmem:[%s7] sm:$0xff] %vm250, %v264
  // Predicated region
  $region30: #{lenet5_forward.5} parent=0 // pred_check
    _
  $region31: #{lenet5_forward.5} parent=0 // pred_check_branch
    %267 = sbr.rel (0) target = $region33
  $region32: #{lenet5_forward.5} parent=0 // pred_region
    _
  $region33: #{lenet5_forward.5} parent=0 // pred_fallthru
    _
  // Predicated region
  $region34: #{lenet5_forward.5} parent=0 // pred_check
    _
  $region35: #{lenet5_forward.5} parent=0 // pred_check_branch
    %269 = sbr.rel (0) target = $region37
  $region36: #{lenet5_forward.5} parent=0 // pred_region
    _
  $region37: #{lenet5_forward.5} parent=0 // pred_fallthru
    _

// kernel: lenet5_forward.4
$region0: #{lenet5_forward.4}
  #allocation0 [shape = 'u32[]', space=smem, size = 0x4, offset = 0x4, fixed_abs, tag = 'smem constant byte address 0x4 - core index']
  #allocation1 [shape = 'u32[72,128]{1,0:T(1,128)}', space=vmem, size = 0x9000, scoped, tag = 'internal scratch']
  %s0 = inlined_call_operand.vmem [shape: f32[8,7,168], index: 0, kind: input, shape index: {}]
  %s1 = inlined_call_operand.vmem [shape: f32[504,320], index: 1, kind: input, shape index: {}]
  %s2 = inlined_call_operand.vmem [shape: f32[1,320], index: 2, kind: input, shape index: {}]
  %s3 = inlined_call_operand.vmem [shape: f32[8,5,80], index: 3, kind: output, shape index: {}]
  %s4 = sld [smem:[#allocation0]]
  $region22: #{lenet5_forward.4} parent=0
    _
  %s6 = ssub.s32 1, %s4
  %s7 = scalar_select 0, %s6, %s4
  // Predicated region
  $region2: #{lenet5_forward.4} parent=0 // pred_check
    _
  $region3: #{lenet5_forward.4} parent=0 // pred_check_branch
    %9 = sbr.rel (0) target = $region5
  $region4: #{lenet5_forward.4} parent=0 // pred_region
    _
  $region5: #{lenet5_forward.4} parent=0 // pred_fallthru
    _
  // Predicated region
  $region6: #{lenet5_forward.4} parent=0 // pred_check
    _
  $region7: #{lenet5_forward.4} parent=0 // pred_check_branch
    %11 = sbr.rel (0) target = $region9
  $region8: #{lenet5_forward.4} parent=0 // pred_region
    _
  $region9: #{lenet5_forward.4} parent=0 // pred_fallthru
    _
  // Predicated region
  $region10: #{lenet5_forward.4} parent=0 // pred_check
    _
  $region11: #{lenet5_forward.4} parent=0 // pred_check_branch
    %13 = sbr.rel (0) target = $region13
  $region12: #{lenet5_forward.4} parent=0 // pred_region
    _
  $region13: #{lenet5_forward.4} parent=0 // pred_fallthru
    _
  %v14 = vld [vmem:[%s0] sm:$0x7f]
  %v15 = vld [vmem:[%s0 + $0x8] sm:$0x7f]
  %v18 = vrot.slane %v14, 1
  %v19 = vrot.slane %v15, 1
  %20 = vrot.lane.b32.xlu0 %v18, 40
  %v21 = vpop.permute.xlu0 %20
  %22 = vrot.lane.b32.xlu0 %v19, 40
  %v23 = vpop.permute.xlu0 %22
  %vm24 = vcmask 326656
  %v25 = vsel %vm24, %v21, %v23
  %v28 = vrot.slane %v14, 2
  %v29 = vrot.slane %v15, 2
  %30 = vrot.lane.b32.xlu0 %v28, 80
  %v31 = vpop.permute.xlu0 %30
  %32 = vrot.lane.b32.xlu0 %v29, 80
  %v33 = vpop.permute.xlu0 %32
  %vm34 = vcmask 654336
  %v35 = vsel %vm34, %v31, %v33
  %v37 = vsel %vm24, %v15, %v21
  %v38 = vsel %vm34, %v25, %v31
  %v39 = vld [vmem:[%s1] sm:$0xff]
  %v40 = vld [vmem:[%s1 + $0x8] sm:$0xff]
  %v41 = vld [vmem:[%s1 + $0x10] sm:$0xff]
  %v42 = vld [vmem:[%s1 + $0x18] sm:$0xff]
  %v43 = vld [vmem:[%s1 + $0x20] sm:$0xff]
  %v44 = vld [vmem:[%s1 + $0x28] sm:$0xff]
  %v45 = vld [vmem:[%s1 + $0x30] sm:$0xff]
  %v46 = vld [vmem:[%s1 + $0x38] sm:$0xff]
  %v47 = vld [vmem:[%s1 + $0x40] sm:$0xff]
  %v48 = vld [vmem:[%s1 + $0x48] sm:$0xff]
  %v49 = vld [vmem:[%s1 + $0x50] sm:$0xff]
  %v50 = vld [vmem:[%s1 + $0x58] sm:$0xff]
  %v51 = vld [vmem:[%s1 + $0x60] sm:$0xff]
  %v52 = vld [vmem:[%s1 + $0x68] sm:$0xff]
  %v53 = vld [vmem:[%s1 + $0x70] sm:$0xff]
  %v54 = vld [vmem:[%s1 + $0x78] sm:$0xff]
  %v55 = vld [vmem:[%s1 + $0x80] sm:$0xff]
  %v56 = vld [vmem:[%s1 + $0x88] sm:$0xff]
  %v57 = vld [vmem:[%s1 + $0x90] sm:$0xff]
  %v58 = vld [vmem:[%s1 + $0x98] sm:$0xff]
  %v59 = vld [vmem:[%s1 + $0xa0] sm:$0xff]
  %v60 = vld [vmem:[%s1 + $0xa8] sm:$0xff]
  %v61 = vld [vmem:[%s1 + $0xb0] sm:$0xff]
  %v62 = vld [vmem:[%s1 + $0xb8] sm:$0xff]
  %v63 = vld [vmem:[%s1 + $0xc0] sm:$0xff]
  %v64 = vld [vmem:[%s1 + $0xc8] sm:$0xff]
  %v65 = vld [vmem:[%s1 + $0xd0] sm:$0xff]
  %v66 = vld [vmem:[%s1 + $0xd8] sm:$0xff]
  %v67 = vld [vmem:[%s1 + $0xe0] sm:$0xff]
  %v68 = vld [vmem:[%s1 + $0xe8] sm:$0xff]
  %v69 = vld [vmem:[%s1 + $0xf0] sm:$0xff]
  %v70 = vld [vmem:[%s1 + $0xf8] sm:$0xff]
  %v71 = vld [vmem:[%s1 + $0x100] sm:$0xff]
  %v72 = vld [vmem:[%s1 + $0x108] sm:$0xff]
  %v73 = vld [vmem:[%s1 + $0x110] sm:$0xff]
  %v74 = vld [vmem:[%s1 + $0x118] sm:$0xff]
  %v75 = vld [vmem:[%s1 + $0x120] sm:$0xff]
  %v76 = vld [vmem:[%s1 + $0x128] sm:$0xff]
  %v77 = vld [vmem:[%s1 + $0x130] sm:$0xff]
  %v78 = vld [vmem:[%s1 + $0x138] sm:$0xff]
  %v79 = vld [vmem:[%s1 + $0x140] sm:$0xff]
  %v80 = vld [vmem:[%s1 + $0x148] sm:$0xff]
  %v81 = vld [vmem:[%s1 + $0x150] sm:$0xff]
  %v82 = vld [vmem:[%s1 + $0x158] sm:$0xff]
  %v83 = vld [vmem:[%s1 + $0x160] sm:$0xff]
  %v84 = vld [vmem:[%s1 + $0x168] sm:$0xff]
  %v85 = vld [vmem:[%s1 + $0x170] sm:$0xff]
  %v86 = vld [vmem:[%s1 + $0x178] sm:$0xff]
  %v87 = vld [vmem:[%s1 + $0x180] sm:$0xff]
  %v88 = vld [vmem:[%s1 + $0x188] sm:$0xff]
  %v89 = vld [vmem:[%s1 + $0x190] sm:$0xff]
  %v90 = vld [vmem:[%s1 + $0x198] sm:$0xff]
  %v91 = vld [vmem:[%s1 + $0x1a0] sm:$0xff]
  %v92 = vld [vmem:[%s1 + $0x1a8] sm:$0xff]
  %v93 = vld [vmem:[%s1 + $0x1b0] sm:$0xff]
  %v94 = vld [vmem:[%s1 + $0x1b8] sm:$0xff]
  %v95 = vld [vmem:[%s1 + $0x1c0] sm:$0xff]
  %v96 = vld [vmem:[%s1 + $0x1c8] sm:$0xff]
  %v97 = vld [vmem:[%s1 + $0x1d0] sm:$0xff]
  %v98 = vld [vmem:[%s1 + $0x1d8] sm:$0xff]
  %v99 = vld [vmem:[%s1 + $0x1e0] sm:$0xff]
  %v100 = vld [vmem:[%s1 + $0x1e8] sm:$0xff]
  %v101 = vld [vmem:[%s1 + $0x1f0] sm:$0xff]
  %v102 = vld [vmem:[%s1 + $0x1f8] sm:$0xff]
  %v103 = vld [vmem:[%s1 + $0x200] sm:$0xff]
  %v104 = vld [vmem:[%s1 + $0x208] sm:$0xff]
  %v105 = vld [vmem:[%s1 + $0x210] sm:$0xff]
  %v106 = vld [vmem:[%s1 + $0x218] sm:$0xff]
  %v107 = vld [vmem:[%s1 + $0x220] sm:$0xff]
  %v108 = vld [vmem:[%s1 + $0x228] sm:$0xff]
  %v109 = vld [vmem:[%s1 + $0x230] sm:$0xff]
  %v110 = vld [vmem:[%s1 + $0x238] sm:$0xff]
  %v111 = vld [vmem:[%s1 + $0x240] sm:$0xff]
  %v112 = vld [vmem:[%s1 + $0x248] sm:$0xff]
  %v113 = vld [vmem:[%s1 + $0x250] sm:$0xff]
  %v114 = vld [vmem:[%s1 + $0x258] sm:$0xff]
  %v115 = vld [vmem:[%s1 + $0x260] sm:$0xff]
  %v116 = vld [vmem:[%s1 + $0x268] sm:$0xff]
  %v117 = vld [vmem:[%s1 + $0x270] sm:$0xff]
  %v118 = vld [vmem:[%s1 + $0x278] sm:$0xff]
  %v119 = vld [vmem:[%s1 + $0x280] sm:$0xff]
  %v120 = vld [vmem:[%s1 + $0x288] sm:$0xff]
  %v121 = vld [vmem:[%s1 + $0x290] sm:$0xff]
  %v122 = vld [vmem:[%s1 + $0x298] sm:$0xff]
  %v123 = vld [vmem:[%s1 + $0x2a0] sm:$0xff]
  %v124 = vld [vmem:[%s1 + $0x2a8] sm:$0xff]
  %v125 = vld [vmem:[%s1 + $0x2b0] sm:$0xff]
  %v126 = vld [vmem:[%s1 + $0x2b8] sm:$0xff]
  %v127 = vld [vmem:[%s1 + $0x2c0] sm:$0xff]
  %v128 = vld [vmem:[%s1 + $0x2c8] sm:$0xff]
  %v129 = vld [vmem:[%s1 + $0x2d0] sm:$0xff]
  %v130 = vld [vmem:[%s1 + $0x2d8] sm:$0xff]
  %v131 = vld [vmem:[%s1 + $0x2e0] sm:$0xff]
  %v132 = vld [vmem:[%s1 + $0x2e8] sm:$0xff]
  %v133 = vld [vmem:[%s1 + $0x2f0] sm:$0xff]
  %v134 = vld [vmem:[%s1 + $0x2f8] sm:$0xff]
  %v135 = vld [vmem:[%s1 + $0x300] sm:$0xff]
  %v136 = vld [vmem:[%s1 + $0x308] sm:$0xff]
  %v137 = vld [vmem:[%s1 + $0x310] sm:$0xff]
  %v138 = vld [vmem:[%s1 + $0x318] sm:$0xff]
  %v139 = vld [vmem:[%s1 + $0x320] sm:$0xff]
  %v140 = vld [vmem:[%s1 + $0x328] sm:$0xff]
  %v141 = vld [vmem:[%s1 + $0x330] sm:$0xff]
  %v142 = vld [vmem:[%s1 + $0x338] sm:$0xff]
  %v143 = vld [vmem:[%s1 + $0x340] sm:$0xff]
  %v144 = vld [vmem:[%s1 + $0x348] sm:$0xff]
  %v145 = vld [vmem:[%s1 + $0x350] sm:$0xff]
  %v146 = vld [vmem:[%s1 + $0x358] sm:$0xff]
  %v147 = vld [vmem:[%s1 + $0x360] sm:$0xff]
  %v148 = vld [vmem:[%s1 + $0x368] sm:$0xff]
  %v149 = vld [vmem:[%s1 + $0x370] sm:$0xff]
  %v150 = vld [vmem:[%s1 + $0x378] sm:$0xff]
  %v151 = vld [vmem:[%s1 + $0x380] sm:$0xff]
  %v152 = vld [vmem:[%s1 + $0x388] sm:$0xff]
  %v153 = vld [vmem:[%s1 + $0x390] sm:$0xff]
  %v154 = vld [vmem:[%s1 + $0x398] sm:$0xff]
  %v155 = vld [vmem:[%s1 + $0x3a0] sm:$0xff]
  %v156 = vld [vmem:[%s1 + $0x3a8] sm:$0xff]
  %v157 = vld [vmem:[%s1 + $0x3b0] sm:$0xff]
  %v158 = vld [vmem:[%s1 + $0x3b8] sm:$0xff]
  %v159 = vld [vmem:[%s1 + $0x3c0] sm:$0xff]
  %v160 = vld [vmem:[%s1 + $0x3c8] sm:$0xff]
  %v161 = vld [vmem:[%s1 + $0x3d0] sm:$0xff]
  %v162 = vld [vmem:[%s1 + $0x3d8] sm:$0xff]
  %v163 = vld [vmem:[%s1 + $0x3e0] sm:$0xff]
  %v164 = vld [vmem:[%s1 + $0x3e8] sm:$0xff]
  %v165 = vld [vmem:[%s1 + $0x3f0] sm:$0xff]
  %v166 = vld [vmem:[%s1 + $0x3f8] sm:$0xff]
  %v167 = vld [vmem:[%s1 + $0x400] sm:$0xff]
  %v168 = vld [vmem:[%s1 + $0x408] sm:$0xff]
  %v169 = vld [vmem:[%s1 + $0x410] sm:$0xff]
  %v170 = vld [vmem:[%s1 + $0x418] sm:$0xff]
  %v171 = vld [vmem:[%s1 + $0x420] sm:$0xff]
  %v172 = vld [vmem:[%s1 + $0x428] sm:$0xff]
  %v173 = vld [vmem:[%s1 + $0x430] sm:$0xff]
  %v174 = vld [vmem:[%s1 + $0x438] sm:$0xff]
  %v175 = vld [vmem:[%s1 + $0x440] sm:$0xff]
  %v176 = vld [vmem:[%s1 + $0x448] sm:$0xff]
  %v177 = vld [vmem:[%s1 + $0x450] sm:$0xff]
  %v178 = vld [vmem:[%s1 + $0x458] sm:$0xff]
  %v179 = vld [vmem:[%s1 + $0x460] sm:$0xff]
  %v180 = vld [vmem:[%s1 + $0x468] sm:$0xff]
  %v181 = vld [vmem:[%s1 + $0x470] sm:$0xff]
  %v182 = vld [vmem:[%s1 + $0x478] sm:$0xff]
  %v183 = vld [vmem:[%s1 + $0x480] sm:$0xff]
  %v184 = vld [vmem:[%s1 + $0x488] sm:$0xff]
  %v185 = vld [vmem:[%s1 + $0x490] sm:$0xff]
  %v186 = vld [vmem:[%s1 + $0x498] sm:$0xff]
  %v187 = vld [vmem:[%s1 + $0x4a0] sm:$0xff]
  %v188 = vld [vmem:[%s1 + $0x4a8] sm:$0xff]
  %v189 = vld [vmem:[%s1 + $0x4b0] sm:$0xff]
  %v190 = vld [vmem:[%s1 + $0x4b8] sm:$0xff]
  %v191 = vld [vmem:[%s1 + $0x4c0] sm:$0xff]
  %v192 = vld [vmem:[%s1 + $0x4c8] sm:$0xff]
  %v193 = vld [vmem:[%s1 + $0x4d0] sm:$0xff]
  %v194 = vld [vmem:[%s1 + $0x4d8] sm:$0xff]
  %v195 = vld [vmem:[%s1 + $0x4e0] sm:$0xff]
  %v196 = vld [vmem:[%s1 + $0x4e8] sm:$0xff]
  %v197 = vld [vmem:[%s1 + $0x4f0] sm:$0xff]
  %v198 = vld [vmem:[%s1 + $0x4f8] sm:$0xff]
  %v199 = vld [vmem:[%s1 + $0x500] sm:$0xff]
  %v200 = vld [vmem:[%s1 + $0x508] sm:$0xff]
  %v201 = vld [vmem:[%s1 + $0x510] sm:$0xff]
  %v202 = vld [vmem:[%s1 + $0x518] sm:$0xff]
  %v203 = vld [vmem:[%s1 + $0x520] sm:$0xff]
  %v204 = vld [vmem:[%s1 + $0x528] sm:$0xff]
  %v205 = vld [vmem:[%s1 + $0x530] sm:$0xff]
  %v206 = vld [vmem:[%s1 + $0x538] sm:$0xff]
  %v207 = vld [vmem:[%s1 + $0x540] sm:$0xff]
  %v208 = vld [vmem:[%s1 + $0x548] sm:$0xff]
  %v209 = vld [vmem:[%s1 + $0x550] sm:$0xff]
  %v210 = vld [vmem:[%s1 + $0x558] sm:$0xff]
  %v211 = vld [vmem:[%s1 + $0x560] sm:$0xff]
  %v212 = vld [vmem:[%s1 + $0x568] sm:$0xff]
  %v213 = vld [vmem:[%s1 + $0x570] sm:$0xff]
  %v214 = vld [vmem:[%s1 + $0x578] sm:$0xff]
  %v215 = vld [vmem:[%s1 + $0x580] sm:$0xff]
  %v216 = vld [vmem:[%s1 + $0x588] sm:$0xff]
  %v217 = vld [vmem:[%s1 + $0x590] sm:$0xff]
  %v218 = vld [vmem:[%s1 + $0x598] sm:$0xff]
  %v219 = vld [vmem:[%s1 + $0x5a0] sm:$0xff]
  %v220 = vld [vmem:[%s1 + $0x5a8] sm:$0xff]
  %v221 = vld [vmem:[%s1 + $0x5b0] sm:$0xff]
  %v222 = vld [vmem:[%s1 + $0x5b8] sm:$0xff]
  %v223 = vld [vmem:[%s1 + $0x5c0] sm:$0xff]
  %v224 = vld [vmem:[%s1 + $0x5c8] sm:$0xff]
  %v225 = vld [vmem:[%s1 + $0x5d0] sm:$0xff]
  %v226 = vld [vmem:[%s1 + $0x5d8] sm:$0xff]
  %v227 = vld [vmem:[%s1 + $0x5e0] sm:$0xff]
  %v228 = vld [vmem:[%s2] sm:$0x7]
  %v230 = vperm.slane %v228, 0
  %v231 = vperm.slane %v228, 1
  %v232 = vperm.slane %v228, 2
  %vm236 = vcmask 982016
  %v237 = vsel %vm236, %v35, 0
  %239 = vmatpush.msra.mxu0 %v84
  %240 = vmatpush.msra.mxu0 %v81
  %241 = vmatpush.msra.mxu0 %v78
  %242 = vmatpush.msra.mxu0 %v75
  %243 = vmatpush.msra.mxu0 %v72
  %244 = vmatpush.msra.mxu0 %v69
  %245 = vmatpush.msra.mxu0 %v66
  %246 = vmatpush.msra.mxu0 %v63
  %247 = vmatpush.msra.mxu0 %v60
  %248 = vmatpush.msra.mxu0 %v57
  %249 = vmatpush.msra.mxu0 %v54
  %250 = vmatpush.msra.mxu0 %v51
  %251 = vmatpush.msra.mxu0 %v48
  %252 = vmatpush.msra.mxu0 %v45
  %253 = vmatpush.msra.mxu0 %v42
  %254 = vmatpush.msra.mxu0 %v39
  %255 = vmatmul.f32.gmra.mxu0 %v14
  %v256 = vpop.f32.mrf.mxu0
  %v257 = vadd.f32 %v230, %v256
  %258 = vdwg.mxu0
  %259 = vmatpush.msra.mxu0 %v132
  %260 = vmatpush.msra.mxu0 %v129
  %261 = vmatpush.msra.mxu0 %v126
  %262 = vmatpush.msra.mxu0 %v123
  %263 = vmatpush.msra.mxu0 %v120
  %264 = vmatpush.msra.mxu0 %v117
  %265 = vmatpush.msra.mxu0 %v114
  %266 = vmatpush.msra.mxu0 %v111
  %267 = vmatpush.msra.mxu0 %v108
  %268 = vmatpush.msra.mxu0 %v105
  %269 = vmatpush.msra.mxu0 %v102
  %270 = vmatpush.msra.mxu0 %v99
  %271 = vmatpush.msra.mxu0 %v96
  %272 = vmatpush.msra.mxu0 %v93
  %273 = vmatpush.msra.mxu0 %v90
  %274 = vmatpush.msra.mxu0 %v87
  %275 = vmatmul.f32.gmra.mxu0 %v37
  %v276 = vpop.f32.mrf.mxu0
  %v277 = vadd.f32 %v257, %v276
  %278 = vdwg.mxu0
  %279 = vmatpush.msra.mxu0 %v180
  %280 = vmatpush.msra.mxu0 %v177
  %281 = vmatpush.msra.mxu0 %v174
  %282 = vmatpush.msra.mxu0 %v171
  %283 = vmatpush.msra.mxu0 %v168
  %284 = vmatpush.msra.mxu0 %v165
  %285 = vmatpush.msra.mxu0 %v162
  %286 = vmatpush.msra.mxu0 %v159
  %287 = vmatpush.msra.mxu0 %v156
  %288 = vmatpush.msra.mxu0 %v153
  %289 = vmatpush.msra.mxu0 %v150
  %290 = vmatpush.msra.mxu0 %v147
  %291 = vmatpush.msra.mxu0 %v144
  %292 = vmatpush.msra.mxu0 %v141
  %293 = vmatpush.msra.mxu0 %v138
  %294 = vmatpush.msra.mxu0 %v135
  %295 = vmatmul.f32.gmra.mxu0 %v38
  %v296 = vpop.f32.mrf.mxu0
  %v297 = vadd.f32 %v277, %v296
  %298 = vdwg.mxu0
  %299 = vmatpush.msra.mxu0 0.0
  %300 = vmatpush.msra.mxu0 %v225
  %301 = vmatpush.msra.mxu0 %v222
  %302 = vmatpush.msra.mxu0 %v219
  %303 = vmatpush.msra.mxu0 %v216
  %304 = vmatpush.msra.mxu0 %v213
  %305 = vmatpush.msra.mxu0 %v210
  %306 = vmatpush.msra.mxu0 %v207
  %307 = vmatpush.msra.mxu0 %v204
  %308 = vmatpush.msra.mxu0 %v201
  %309 = vmatpush.msra.mxu0 %v198
  %310 = vmatpush.msra.mxu0 %v195
  %311 = vmatpush.msra.mxu0 %v192
  %312 = vmatpush.msra.mxu0 %v189
  %313 = vmatpush.msra.mxu0 %v186
  %314 = vmatpush.msra.mxu0 %v183
  %315 = vmatmul.f32.gmra.mxu0 %v237
  %v316 = vpop.f32.mrf.mxu0
  %v317 = vadd.f32 %v297, %v316
  %318 = vdwg.mxu0
  %319 = vmatpush.msra.mxu0 %v85
  %320 = vmatpush.msra.mxu0 %v82
  %321 = vmatpush.msra.mxu0 %v79
  %322 = vmatpush.msra.mxu0 %v76
  %323 = vmatpush.msra.mxu0 %v73
  %324 = vmatpush.msra.mxu0 %v70
  %325 = vmatpush.msra.mxu0 %v67
  %326 = vmatpush.msra.mxu0 %v64
  %327 = vmatpush.msra.mxu0 %v61
  %328 = vmatpush.msra.mxu0 %v58
  %329 = vmatpush.msra.mxu0 %v55
  %330 = vmatpush.msra.mxu0 %v52
  %331 = vmatpush.msra.mxu0 %v49
  %332 = vmatpush.msra.mxu0 %v46
  %333 = vmatpush.msra.mxu0 %v43
  %334 = vmatpush.msra.mxu0 %v40
  %335 = vmatmul.f32.gmra.mxu0 %v14
  %v336 = vpop.f32.mrf.mxu0
  %v337 = vadd.f32 %v231, %v336
  %338 = vdwg.mxu0
  %339 = vmatpush.msra.mxu0 %v133
  %340 = vmatpush.msra.mxu0 %v130
  %341 = vmatpush.msra.mxu0 %v127
  %342 = vmatpush.msra.mxu0 %v124
  %343 = vmatpush.msra.mxu0 %v121
  %344 = vmatpush.msra.mxu0 %v118
  %345 = vmatpush.msra.mxu0 %v115
  %346 = vmatpush.msra.mxu0 %v112
  %347 = vmatpush.msra.mxu0 %v109
  %348 = vmatpush.msra.mxu0 %v106
  %349 = vmatpush.msra.mxu0 %v103
  %350 = vmatpush.msra.mxu0 %v100
  %351 = vmatpush.msra.mxu0 %v97
  %352 = vmatpush.msra.mxu0 %v94
  %353 = vmatpush.msra.mxu0 %v91
  %354 = vmatpush.msra.mxu0 %v88
  %355 = vmatmul.f32.gmra.mxu0 %v37
  %v356 = vpop.f32.mrf.mxu0
  %v357 = vadd.f32 %v337, %v356
  %358 = vdwg.mxu0
  %359 = vmatpush.msra.mxu0 %v181
  %360 = vmatpush.msra.mxu0 %v178
  %361 = vmatpush.msra.mxu0 %v175
  %362 = vmatpush.msra.mxu0 %v172
  %363 = vmatpush.msra.mxu0 %v169
  %364 = vmatpush.msra.mxu0 %v166
  %365 = vmatpush.msra.mxu0 %v163
  %366 = vmatpush.msra.mxu0 %v160
  %367 = vmatpush.msra.mxu0 %v157
  %368 = vmatpush.msra.mxu0 %v154
  %369 = vmatpush.msra.mxu0 %v151
  %370 = vmatpush.msra.mxu0 %v148
  %371 = vmatpush.msra.mxu0 %v145
  %372 = vmatpush.msra.mxu0 %v142
  %373 = vmatpush.msra.mxu0 %v139
  %374 = vmatpush.msra.mxu0 %v136
  %375 = vmatmul.f32.gmra.mxu0 %v38
  %v376 = vpop.f32.mrf.mxu0
  %v377 = vadd.f32 %v357, %v376
  %378 = vdwg.mxu0
  %379 = vmatpush.msra.mxu0 0.0
  %380 = vmatpush.msra.mxu0 %v226
  %381 = vmatpush.msra.mxu0 %v223
  %382 = vmatpush.msra.mxu0 %v220
  %383 = vmatpush.msra.mxu0 %v217
  %384 = vmatpush.msra.mxu0 %v214
  %385 = vmatpush.msra.mxu0 %v211
  %386 = vmatpush.msra.mxu0 %v208
  %387 = vmatpush.msra.mxu0 %v205
  %388 = vmatpush.msra.mxu0 %v202
  %389 = vmatpush.msra.mxu0 %v199
  %390 = vmatpush.msra.mxu0 %v196
  %391 = vmatpush.msra.mxu0 %v193
  %392 = vmatpush.msra.mxu0 %v190
  %393 = vmatpush.msra.mxu0 %v187
  %394 = vmatpush.msra.mxu0 %v184
  %395 = vmatmul.f32.gmra.mxu0 %v237
  %v396 = vpop.f32.mrf.mxu0
  %v397 = vadd.f32 %v377, %v396
  %398 = vdwg.mxu0
  %399 = vmatpush.msra.mxu0 %v86
  %400 = vmatpush.msra.mxu0 %v83
  %401 = vmatpush.msra.mxu0 %v80
  %402 = vmatpush.msra.mxu0 %v77
  %403 = vmatpush.msra.mxu0 %v74
  %404 = vmatpush.msra.mxu0 %v71
  %405 = vmatpush.msra.mxu0 %v68
  %406 = vmatpush.msra.mxu0 %v65
  %407 = vmatpush.msra.mxu0 %v62
  %408 = vmatpush.msra.mxu0 %v59
  %409 = vmatpush.msra.mxu0 %v56
  %410 = vmatpush.msra.mxu0 %v53
  %411 = vmatpush.msra.mxu0 %v50
  %412 = vmatpush.msra.mxu0 %v47
  %413 = vmatpush.msra.mxu0 %v44
  %414 = vmatpush.msra.mxu0 %v41
  %415 = vmatmul.f32.gmra.mxu0 %v14
  %v416 = vpop.f32.mrf.mxu0
  %v417 = vadd.f32 %v232, %v416
  %418 = vdwg.mxu0
  %419 = vmatpush.msra.mxu0 %v134
  %420 = vmatpush.msra.mxu0 %v131
  %421 = vmatpush.msra.mxu0 %v128
  %422 = vmatpush.msra.mxu0 %v125
  %423 = vmatpush.msra.mxu0 %v122
  %424 = vmatpush.msra.mxu0 %v119
  %425 = vmatpush.msra.mxu0 %v116
  %426 = vmatpush.msra.mxu0 %v113
  %427 = vmatpush.msra.mxu0 %v110
  %428 = vmatpush.msra.mxu0 %v107
  %429 = vmatpush.msra.mxu0 %v104
  %430 = vmatpush.msra.mxu0 %v101
  %431 = vmatpush.msra.mxu0 %v98
  %432 = vmatpush.msra.mxu0 %v95
  %433 = vmatpush.msra.mxu0 %v92
  %434 = vmatpush.msra.mxu0 %v89
  %435 = vmatmul.f32.gmra.mxu0 %v37
  %v436 = vpop.f32.mrf.mxu0
  %v437 = vadd.f32 %v417, %v436
  %438 = vdwg.mxu0
  %439 = vmatpush.msra.mxu0 %v182
  %440 = vmatpush.msra.mxu0 %v179
  %441 = vmatpush.msra.mxu0 %v176
  %442 = vmatpush.msra.mxu0 %v173
  %443 = vmatpush.msra.mxu0 %v170
  %444 = vmatpush.msra.mxu0 %v167
  %445 = vmatpush.msra.mxu0 %v164
  %446 = vmatpush.msra.mxu0 %v161
  %447 = vmatpush.msra.mxu0 %v158
  %448 = vmatpush.msra.mxu0 %v155
  %449 = vmatpush.msra.mxu0 %v152
  %450 = vmatpush.msra.mxu0 %v149
  %451 = vmatpush.msra.mxu0 %v146
  %452 = vmatpush.msra.mxu0 %v143
  %453 = vmatpush.msra.mxu0 %v140
  %454 = vmatpush.msra.mxu0 %v137
  %455 = vmatmul.f32.gmra.mxu0 %v38
  %v456 = vpop.f32.mrf.mxu0
  %v457 = vadd.f32 %v437, %v456
  %458 = vdwg.mxu0
  %459 = vmatpush.msra.mxu0 0.0
  %460 = vmatpush.msra.mxu0 %v227
  %461 = vmatpush.msra.mxu0 %v224
  %462 = vmatpush.msra.mxu0 %v221
  %463 = vmatpush.msra.mxu0 %v218
  %464 = vmatpush.msra.mxu0 %v215
  %465 = vmatpush.msra.mxu0 %v212
  %466 = vmatpush.msra.mxu0 %v209
  %467 = vmatpush.msra.mxu0 %v206
  %468 = vmatpush.msra.mxu0 %v203
  %469 = vmatpush.msra.mxu0 %v200
  %470 = vmatpush.msra.mxu0 %v197
  %471 = vmatpush.msra.mxu0 %v194
  %472 = vmatpush.msra.mxu0 %v191
  %473 = vmatpush.msra.mxu0 %v188
  %474 = vmatpush.msra.mxu0 %v185
  %475 = vmatmul.f32.gmra.mxu0 %v237
  %v476 = vpop.f32.mrf.mxu0
  %v477 = vadd.f32 %v457, %v476
  %478 = vdwg.mxu0
  %v479 = vtanh.pop %v317
  %v480 = vtanh.pop %v397
  %v481 = vtanh.pop %v477
  %484 = vrot.lane.b32.xlu0 %v479, 48
  %v485 = vpop.permute.xlu0 %484
  %486 = vrot.lane.b32.xlu0 %v480, 48
  %v487 = vpop.permute.xlu0 %486
  %vm488 = vcmask 392192
  %v489 = vsel %vm488, %v485, %v487
  %v491 = vadd.f32 %v479, %v489
  %492 = vrot.lane.b32.xlu0 %v480, 96
  %v493 = vpop.permute.xlu0 %492
  %v495 = vadd.f32 %v491, %v493
  %497 = vrot.lane.b32.xlu0 %v480, 16
  %v498 = vpop.permute.xlu0 %497
  %499 = vrot.lane.b32.xlu0 %v481, 16
  %v500 = vpop.permute.xlu0 %499
  %vm501 = vcmask 130048
  %v502 = vsel %vm501, %v498, %v500
  %v504 = vadd.f32 %v495, %v502
  %v505 = vmul.f32 %v504, 0.25
  %vm506 = vcmask 651264
  %507 = vst.msk [vmem:[%s3] sm:$0x1f] %vm506, %v505
  %s508 = scalar_lea.vmem %s0, 16
  %v509 = vld [vmem:[%s508] sm:$0x7f]
  %v510 = vld [vmem:[%s508 + $0x8] sm:$0x7f]
  %v513 = vrot.slane %v509, 1
  %v514 = vrot.slane %v510, 1
  %515 = vrot.lane.b32.xlu0 %v513, 40
  %v516 = vpop.permute.xlu0 %515
  %517 = vrot.lane.b32.xlu0 %v514, 40
  %v518 = vpop.permute.xlu0 %517
  %v519 = vsel %vm24, %v516, %v518
  %v522 = vrot.slane %v509, 2
  %v523 = vrot.slane %v510, 2
  %524 = vrot.lane.b32.xlu0 %v522, 80
  %v525 = vpop.permute.xlu0 %524
  %526 = vrot.lane.b32.xlu0 %v523, 80
  %v527 = vpop.permute.xlu0 %526
  %v528 = vsel %vm34, %v525, %v527
  %v530 = vsel %vm24, %v510, %v516
  %v531 = vsel %vm34, %v519, %v525
  %v532 = vld [vmem:[%s1] sm:$0xff]
  %v533 = vld [vmem:[%s1 + $0x8] sm:$0xff]
  %v534 = vld [vmem:[%s1 + $0x10] sm:$0xff]
  %v535 = vld [vmem:[%s1 + $0x18] sm:$0xff]
  %v536 = vld [vmem:[%s1 + $0x20] sm:$0xff]
  %v537 = vld [vmem:[%s1 + $0x28] sm:$0xff]
  %v538 = vld [vmem:[%s1 + $0x30] sm:$0xff]
  %v539 = vld [vmem:[%s1 + $0x38] sm:$0xff]
  %v540 = vld [vmem:[%s1 + $0x40] sm:$0xff]
  %v541 = vld [vmem:[%s1 + $0x48] sm:$0xff]
  %v542 = vld [vmem:[%s1 + $0x50] sm:$0xff]
  %v543 = vld [vmem:[%s1 + $0x58] sm:$0xff]
  %v544 = vld [vmem:[%s1 + $0x60] sm:$0xff]
  %v545 = vld [vmem:[%s1 + $0x68] sm:$0xff]
  %v546 = vld [vmem:[%s1 + $0x70] sm:$0xff]
  %v547 = vld [vmem:[%s1 + $0x78] sm:$0xff]
  %v548 = vld [vmem:[%s1 + $0x80] sm:$0xff]
  %v549 = vld [vmem:[%s1 + $0x88] sm:$0xff]
  %v550 = vld [vmem:[%s1 + $0x90] sm:$0xff]
  %v551 = vld [vmem:[%s1 + $0x98] sm:$0xff]
  %v552 = vld [vmem:[%s1 + $0xa0] sm:$0xff]
  %v553 = vld [vmem:[%s1 + $0xa8] sm:$0xff]
  %v554 = vld [vmem:[%s1 + $0xb0] sm:$0xff]
  %v555 = vld [vmem:[%s1 + $0xb8] sm:$0xff]
  %v556 = vld [vmem:[%s1 + $0xc0] sm:$0xff]
  %v557 = vld [vmem:[%s1 + $0xc8] sm:$0xff]
  %v558 = vld [vmem:[%s1 + $0xd0] sm:$0xff]
  %v559 = vld [vmem:[%s1 + $0xd8] sm:$0xff]
  %v560 = vld [vmem:[%s1 + $0xe0] sm:$0xff]
  %v561 = vld [vmem:[%s1 + $0xe8] sm:$0xff]
  %v562 = vld [vmem:[%s1 + $0xf0] sm:$0xff]
  %v563 = vld [vmem:[%s1 + $0xf8] sm:$0xff]
  %v564 = vld [vmem:[%s1 + $0x100] sm:$0xff]
  %v565 = vld [vmem:[%s1 + $0x108] sm:$0xff]
  %v566 = vld [vmem:[%s1 + $0x110] sm:$0xff]
  %v567 = vld [vmem:[%s1 + $0x118] sm:$0xff]
  %v568 = vld [vmem:[%s1 + $0x120] sm:$0xff]
  %v569 = vld [vmem:[%s1 + $0x128] sm:$0xff]
  %v570 = vld [vmem:[%s1 + $0x130] sm:$0xff]
  %v571 = vld [vmem:[%s1 + $0x138] sm:$0xff]
  %v572 = vld [vmem:[%s1 + $0x140] sm:$0xff]
  %v573 = vld [vmem:[%s1 + $0x148] sm:$0xff]
  %v574 = vld [vmem:[%s1 + $0x150] sm:$0xff]
  %v575 = vld [vmem:[%s1 + $0x158] sm:$0xff]
  %v576 = vld [vmem:[%s1 + $0x160] sm:$0xff]
  %v577 = vld [vmem:[%s1 + $0x168] sm:$0xff]
  %v578 = vld [vmem:[%s1 + $0x170] sm:$0xff]
  %v579 = vld [vmem:[%s1 + $0x178] sm:$0xff]
  %v580 = vld [vmem:[%s1 + $0x180] sm:$0xff]
  %v581 = vld [vmem:[%s1 + $0x188] sm:$0xff]
  %v582 = vld [vmem:[%s1 + $0x190] sm:$0xff]
  %v583 = vld [vmem:[%s1 + $0x198] sm:$0xff]
  %v584 = vld [vmem:[%s1 + $0x1a0] sm:$0xff]
  %v585 = vld [vmem:[%s1 + $0x1a8] sm:$0xff]
  %v586 = vld [vmem:[%s1 + $0x1b0] sm:$0xff]
  %v587 = vld [vmem:[%s1 + $0x1b8] sm:$0xff]
  %v588 = vld [vmem:[%s1 + $0x1c0] sm:$0xff]
  %v589 = vld [vmem:[%s1 + $0x1c8] sm:$0xff]
  %v590 = vld [vmem:[%s1 + $0x1d0] sm:$0xff]
  %v591 = vld [vmem:[%s1 + $0x1d8] sm:$0xff]
  %v592 = vld [vmem:[%s1 + $0x1e0] sm:$0xff]
  %v593 = vld [vmem:[%s1 + $0x1e8] sm:$0xff]
  %v594 = vld [vmem:[%s1 + $0x1f0] sm:$0xff]
  %v595 = vld [vmem:[%s1 + $0x1f8] sm:$0xff]
  %v596 = vld [vmem:[%s1 + $0x200] sm:$0xff]
  %v597 = vld [vmem:[%s1 + $0x208] sm:$0xff]
  %v598 = vld [vmem:[%s1 + $0x210] sm:$0xff]
  %v599 = vld [vmem:[%s1 + $0x218] sm:$0xff]
  %v600 = vld [vmem:[%s1 + $0x220] sm:$0xff]
  %v601 = vld [vmem:[%s1 + $0x228] sm:$0xff]
  %v602 = vld [vmem:[%s1 + $0x230] sm:$0xff]
  %v603 = vld [vmem:[%s1 + $0x238] sm:$0xff]
  %v604 = vld [vmem:[%s1 + $0x240] sm:$0xff]
  %v605 = vld [vmem:[%s1 + $0x248] sm:$0xff]
  %v606 = vld [vmem:[%s1 + $0x250] sm:$0xff]
  %v607 = vld [vmem:[%s1 + $0x258] sm:$0xff]
  %v608 = vld [vmem:[%s1 + $0x260] sm:$0xff]
  %v609 = vld [vmem:[%s1 + $0x268] sm:$0xff]
  %v610 = vld [vmem:[%s1 + $0x270] sm:$0xff]
  %v611 = vld [vmem:[%s1 + $0x278] sm:$0xff]
  %v612 = vld [vmem:[%s1 + $0x280] sm:$0xff]
  %v613 = vld [vmem:[%s1 + $0x288] sm:$0xff]
  %v614 = vld [vmem:[%s1 + $0x290] sm:$0xff]
  %v615 = vld [vmem:[%s1 + $0x298] sm:$0xff]
  %v616 = vld [vmem:[%s1 + $0x2a0] sm:$0xff]
  %v617 = vld [vmem:[%s1 + $0x2a8] sm:$0xff]
  %v618 = vld [vmem:[%s1 + $0x2b0] sm:$0xff]
  %v619 = vld [vmem:[%s1 + $0x2b8] sm:$0xff]
  %v620 = vld [vmem:[%s1 + $0x2c0] sm:$0xff]
  %v621 = vld [vmem:[%s1 + $0x2c8] sm:$0xff]
  %v622 = vld [vmem:[%s1 + $0x2d0] sm:$0xff]
  %v623 = vld [vmem:[%s1 + $0x2d8] sm:$0xff]
  %v624 = vld [vmem:[%s1 + $0x2e0] sm:$0xff]
  %v625 = vld [vmem:[%s1 + $0x2e8] sm:$0xff]
  %v626 = vld [vmem:[%s1 + $0x2f0] sm:$0xff]
  %v627 = vld [vmem:[%s1 + $0x2f8] sm:$0xff]
  %v628 = vld [vmem:[%s1 + $0x300] sm:$0xff]
  %v629 = vld [vmem:[%s1 + $0x308] sm:$0xff]
  %v630 = vld [vmem:[%s1 + $0x310] sm:$0xff]
  %v631 = vld [vmem:[%s1 + $0x318] sm:$0xff]
  %v632 = vld [vmem:[%s1 + $0x320] sm:$0xff]
  %v633 = vld [vmem:[%s1 + $0x328] sm:$0xff]
  %v634 = vld [vmem:[%s1 + $0x330] sm:$0xff]
  %v635 = vld [vmem:[%s1 + $0x338] sm:$0xff]
  %v636 = vld [vmem:[%s1 + $0x340] sm:$0xff]
  %v637 = vld [vmem:[%s1 + $0x348] sm:$0xff]
  %v638 = vld [vmem:[%s1 + $0x350] sm:$0xff]
  %v639 = vld [vmem:[%s1 + $0x358] sm:$0xff]
  %v640 = vld [vmem:[%s1 + $0x360] sm:$0xff]
  %v641 = vld [vmem:[%s1 + $0x368] sm:$0xff]
  %v642 = vld [vmem:[%s1 + $0x370] sm:$0xff]
  %v643 = vld [vmem:[%s1 + $0x378] sm:$0xff]
  %v644 = vld [vmem:[%s1 + $0x380] sm:$0xff]
  %v645 = vld [vmem:[%s1 + $0x388] sm:$0xff]
  %v646 = vld [vmem:[%s1 + $0x390] sm:$0xff]
  %v647 = vld [vmem:[%s1 + $0x398] sm:$0xff]
  %v648 = vld [vmem:[%s1 + $0x3a0] sm:$0xff]
  %v649 = vld [vmem:[%s1 + $0x3a8] sm:$0xff]
  %v650 = vld [vmem:[%s1 + $0x3b0] sm:$0xff]
  %v651 = vld [vmem:[%s1 + $0x3b8] sm:$0xff]
  %v652 = vld [vmem:[%s1 + $0x3c0] sm:$0xff]
  %v653 = vld [vmem:[%s1 + $0x3c8] sm:$0xff]
  %v654 = vld [vmem:[%s1 + $0x3d0] sm:$0xff]
  %v655 = vld [vmem:[%s1 + $0x3d8] sm:$0xff]
  %v656 = vld [vmem:[%s1 + $0x3e0] sm:$0xff]
  %v657 = vld [vmem:[%s1 + $0x3e8] sm:$0xff]
  %v658 = vld [vmem:[%s1 + $0x3f0] sm:$0xff]
  %v659 = vld [vmem:[%s1 + $0x3f8] sm:$0xff]
  %v660 = vld [vmem:[%s1 + $0x400] sm:$0xff]
  %v661 = vld [vmem:[%s1 + $0x408] sm:$0xff]
  %v662 = vld [vmem:[%s1 + $0x410] sm:$0xff]
  %v663 = vld [vmem:[%s1 + $0x418] sm:$0xff]
  %v664 = vld [vmem:[%s1 + $0x420] sm:$0xff]
  %v665 = vld [vmem:[%s1 + $0x428] sm:$0xff]
  %v666 = vld [vmem:[%s1 + $0x430] sm:$0xff]
  %v667 = vld [vmem:[%s1 + $0x438] sm:$0xff]
  %v668 = vld [vmem:[%s1 + $0x440] sm:$0xff]
  %v669 = vld [vmem:[%s1 + $0x448] sm:$0xff]
  %v670 = vld [vmem:[%s1 + $0x450] sm:$0xff]
  %v671 = vld [vmem:[%s1 + $0x458] sm:$0xff]
  %v672 = vld [vmem:[%s1 + $0x460] sm:$0xff]
  %v673 = vld [vmem:[%s1 + $0x468] sm:$0xff]
  %v674 = vld [vmem:[%s1 + $0x470] sm:$0xff]
  %v675 = vld [vmem:[%s1 + $0x478] sm:$0xff]
  %v676 = vld [vmem:[%s1 + $0x480] sm:$0xff]
  %v677 = vld [vmem:[%s1 + $0x488] sm:$0xff]
  %v678 = vld [vmem:[%s1 + $0x490] sm:$0xff]
  %v679 = vld [vmem:[%s1 + $0x498] sm:$0xff]
  %v680 = vld [vmem:[%s1 + $0x4a0] sm:$0xff]
  %v681 = vld [vmem:[%s1 + $0x4a8] sm:$0xff]
  %v682 = vld [vmem:[%s1 + $0x4b0] sm:$0xff]
  %v683 = vld [vmem:[%s1 + $0x4b8] sm:$0xff]
  %v684 = vld [vmem:[%s1 + $0x4c0] sm:$0xff]
  %v685 = vld [vmem:[%s1 + $0x4c8] sm:$0xff]
  %v686 = vld [vmem:[%s1 + $0x4d0] sm:$0xff]
  %v687 = vld [vmem:[%s1 + $0x4d8] sm:$0xff]
  %v688 = vld [vmem:[%s1 + $0x4e0] sm:$0xff]
  %v689 = vld [vmem:[%s1 + $0x4e8] sm:$0xff]
  %v690 = vld [vmem:[%s1 + $0x4f0] sm:$0xff]
  %v691 = vld [vmem:[%s1 + $0x4f8] sm:$0xff]
  %v692 = vld [vmem:[%s1 + $0x500] sm:$0xff]
  %v693 = vld [vmem:[%s1 + $0x508] sm:$0xff]
  %v694 = vld [vmem:[%s1 + $0x510] sm:$0xff]
  %v695 = vld [vmem:[%s1 + $0x518] sm:$0xff]
  %v696 = vld [vmem:[%s1 + $0x520] sm:$0xff]
  %v697 = vld [vmem:[%s1 + $0x528] sm:$0xff]
  %v698 = vld [vmem:[%s1 + $0x530] sm:$0xff]
  %v699 = vld [vmem:[%s1 + $0x538] sm:$0xff]
  %v700 = vld [vmem:[%s1 + $0x540] sm:$0xff]
  %v701 = vld [vmem:[%s1 + $0x548] sm:$0xff]
  %v702 = vld [vmem:[%s1 + $0x550] sm:$0xff]
  %v703 = vld [vmem:[%s1 + $0x558] sm:$0xff]
  %v704 = vld [vmem:[%s1 + $0x560] sm:$0xff]
  %v705 = vld [vmem:[%s1 + $0x568] sm:$0xff]
  %v706 = vld [vmem:[%s1 + $0x570] sm:$0xff]
  %v707 = vld [vmem:[%s1 + $0x578] sm:$0xff]
  %v708 = vld [vmem:[%s1 + $0x580] sm:$0xff]
  %v709 = vld [vmem:[%s1 + $0x588] sm:$0xff]
  %v710 = vld [vmem:[%s1 + $0x590] sm:$0xff]
  %v711 = vld [vmem:[%s1 + $0x598] sm:$0xff]
  %v712 = vld [vmem:[%s1 + $0x5a0] sm:$0xff]
  %v713 = vld [vmem:[%s1 + $0x5a8] sm:$0xff]
  %v714 = vld [vmem:[%s1 + $0x5b0] sm:$0xff]
  %v715 = vld [vmem:[%s1 + $0x5b8] sm:$0xff]
  %v716 = vld [vmem:[%s1 + $0x5c0] sm:$0xff]
  %v717 = vld [vmem:[%s1 + $0x5c8] sm:$0xff]
  %v718 = vld [vmem:[%s1 + $0x5d0] sm:$0xff]
  %v719 = vld [vmem:[%s1 + $0x5d8] sm:$0xff]
  %v720 = vld [vmem:[%s1 + $0x5e0] sm:$0xff]
  %v721 = vld [vmem:[%s2] sm:$0x7]
  %v723 = vperm.slane %v721, 0
  %v724 = vperm.slane %v721, 1
  %v725 = vperm.slane %v721, 2
  %v729 = vsel %vm236, %v528, 0
  %731 = vmatpush.msra.mxu0 %v577
  %732 = vmatpush.msra.mxu0 %v574
  %733 = vmatpush.msra.mxu0 %v571
  %734 = vmatpush.msra.mxu0 %v568
  %735 = vmatpush.msra.mxu0 %v565
  %736 = vmatpush.msra.mxu0 %v562
  %737 = vmatpush.msra.mxu0 %v559
  %738 = vmatpush.msra.mxu0 %v556
  %739 = vmatpush.msra.mxu0 %v553
  %740 = vmatpush.msra.mxu0 %v550
  %741 = vmatpush.msra.mxu0 %v547
  %742 = vmatpush.msra.mxu0 %v544
  %743 = vmatpush.msra.mxu0 %v541
  %744 = vmatpush.msra.mxu0 %v538
  %745 = vmatpush.msra.mxu0 %v535
  %746 = vmatpush.msra.mxu0 %v532
  %747 = vmatmul.f32.gmra.mxu0 %v509
  %v748 = vpop.f32.mrf.mxu0
  %v749 = vadd.f32 %v723, %v748
  %750 = vdwg.mxu0
  %751 = vmatpush.msra.mxu0 %v625
  %752 = vmatpush.msra.mxu0 %v622
  %753 = vmatpush.msra.mxu0 %v619
  %754 = vmatpush.msra.mxu0 %v616
  %755 = vmatpush.msra.mxu0 %v613
  %756 = vmatpush.msra.mxu0 %v610
  %757 = vmatpush.msra.mxu0 %v607
  %758 = vmatpush.msra.mxu0 %v604
  %759 = vmatpush.msra.mxu0 %v601
  %760 = vmatpush.msra.mxu0 %v598
  %761 = vmatpush.msra.mxu0 %v595
  %762 = vmatpush.msra.mxu0 %v592
  %763 = vmatpush.msra.mxu0 %v589
  %764 = vmatpush.msra.mxu0 %v586
  %765 = vmatpush.msra.mxu0 %v583
  %766 = vmatpush.msra.mxu0 %v580
  %767 = vmatmul.f32.gmra.mxu0 %v530
  %v768 = vpop.f32.mrf.mxu0
  %v769 = vadd.f32 %v749, %v768
  %770 = vdwg.mxu0
  %771 = vmatpush.msra.mxu0 %v673
  %772 = vmatpush.msra.mxu0 %v670
  %773 = vmatpush.msra.mxu0 %v667
  %774 = vmatpush.msra.mxu0 %v664
  %775 = vmatpush.msra.mxu0 %v661
  %776 = vmatpush.msra.mxu0 %v658
  %777 = vmatpush.msra.mxu0 %v655
  %778 = vmatpush.msra.mxu0 %v652
  %779 = vmatpush.msra.mxu0 %v649
  %780 = vmatpush.msra.mxu0 %v646
  %781 = vmatpush.msra.mxu0 %v643
  %782 = vmatpush.msra.mxu0 %v640
  %783 = vmatpush.msra.mxu0 %v637
  %784 = vmatpush.msra.mxu0 %v634
  %785 = vmatpush.msra.mxu0 %v631
  %786 = vmatpush.msra.mxu0 %v628
  %787 = vmatmul.f32.gmra.mxu0 %v531
  %v788 = vpop.f32.mrf.mxu0
  %v789 = vadd.f32 %v769, %v788
  %790 = vdwg.mxu0
  %791 = vmatpush.msra.mxu0 0.0
  %792 = vmatpush.msra.mxu0 %v718
  %793 = vmatpush.msra.mxu0 %v715
  %794 = vmatpush.msra.mxu0 %v712
  %795 = vmatpush.msra.mxu0 %v709
  %796 = vmatpush.msra.mxu0 %v706
  %797 = vmatpush.msra.mxu0 %v703
  %798 = vmatpush.msra.mxu0 %v700
  %799 = vmatpush.msra.mxu0 %v697
  %800 = vmatpush.msra.mxu0 %v694
  %801 = vmatpush.msra.mxu0 %v691
  %802 = vmatpush.msra.mxu0 %v688
  %803 = vmatpush.msra.mxu0 %v685
  %804 = vmatpush.msra.mxu0 %v682
  %805 = vmatpush.msra.mxu0 %v679
  %806 = vmatpush.msra.mxu0 %v676
  %807 = vmatmul.f32.gmra.mxu0 %v729
  %v808 = vpop.f32.mrf.mxu0
  %v809 = vadd.f32 %v789, %v808
  %810 = vdwg.mxu0
  %811 = vmatpush.msra.mxu0 %v578
  %812 = vmatpush.msra.mxu0 %v575
  %813 = vmatpush.msra.mxu0 %v572
  %814 = vmatpush.msra.mxu0 %v569
  %815 = vmatpush.msra.mxu0 %v566
  %816 = vmatpush.msra.mxu0 %v563
  %817 = vmatpush.msra.mxu0 %v560
  %818 = vmatpush.msra.mxu0 %v557
  %819 = vmatpush.msra.mxu0 %v554
  %820 = vmatpush.msra.mxu0 %v551
  %821 = vmatpush.msra.mxu0 %v548
  %822 = vmatpush.msra.mxu0 %v545
  %823 = vmatpush.msra.mxu0 %v542
  %824 = vmatpush.msra.mxu0 %v539
  %825 = vmatpush.msra.mxu0 %v536
  %826 = vmatpush.msra.mxu0 %v533
  %827 = vmatmul.f32.gmra.mxu0 %v509
  %v828 = vpop.f32.mrf.mxu0
  %v829 = vadd.f32 %v724, %v828
  %830 = vdwg.mxu0
  %831 = vmatpush.msra.mxu0 %v626
  %832 = vmatpush.msra.mxu0 %v623
  %833 = vmatpush.msra.mxu0 %v620
  %834 = vmatpush.msra.mxu0 %v617
  %835 = vmatpush.msra.mxu0 %v614
  %836 = vmatpush.msra.mxu0 %v611
  %837 = vmatpush.msra.mxu0 %v608
  %838 = vmatpush.msra.mxu0 %v605
  %839 = vmatpush.msra.mxu0 %v602
  %840 = vmatpush.msra.mxu0 %v599
  %841 = vmatpush.msra.mxu0 %v596
  %842 = vmatpush.msra.mxu0 %v593
  %843 = vmatpush.msra.mxu0 %v590
  %844 = vmatpush.msra.mxu0 %v587
  %845 = vmatpush.msra.mxu0 %v584
  %846 = vmatpush.msra.mxu0 %v581
  %847 = vmatmul.f32.gmra.mxu0 %v530
  %v848 = vpop.f32.mrf.mxu0
  %v849 = vadd.f32 %v829, %v848
  %850 = vdwg.mxu0
  %851 = vmatpush.msra.mxu0 %v674
  %852 = vmatpush.msra.mxu0 %v671
  %853 = vmatpush.msra.mxu0 %v668
  %854 = vmatpush.msra.mxu0 %v665
  %855 = vmatpush.msra.mxu0 %v662
  %856 = vmatpush.msra.mxu0 %v659
  %857 = vmatpush.msra.mxu0 %v656
  %858 = vmatpush.msra.mxu0 %v653
  %859 = vmatpush.msra.mxu0 %v650
  %860 = vmatpush.msra.mxu0 %v647
  %861 = vmatpush.msra.mxu0 %v644
  %862 = vmatpush.msra.mxu0 %v641
  %863 = vmatpush.msra.mxu0 %v638
  %864 = vmatpush.msra.mxu0 %v635
  %865 = vmatpush.msra.mxu0 %v632
  %866 = vmatpush.msra.mxu0 %v629
  %867 = vmatmul.f32.gmra.mxu0 %v531
  %v868 = vpop.f32.mrf.mxu0
  %v869 = vadd.f32 %v849, %v868
  %870 = vdwg.mxu0
  %871 = vmatpush.msra.mxu0 0.0
  %872 = vmatpush.msra.mxu0 %v719
  %873 = vmatpush.msra.mxu0 %v716
  %874 = vmatpush.msra.mxu0 %v713
  %875 = vmatpush.msra.mxu0 %v710
  %876 = vmatpush.msra.mxu0 %v707
  %877 = vmatpush.msra.mxu0 %v704
  %878 = vmatpush.msra.mxu0 %v701
  %879 = vmatpush.msra.mxu0 %v698
  %880 = vmatpush.msra.mxu0 %v695
  %881 = vmatpush.msra.mxu0 %v692
  %882 = vmatpush.msra.mxu0 %v689
  %883 = vmatpush.msra.mxu0 %v686
  %884 = vmatpush.msra.mxu0 %v683
  %885 = vmatpush.msra.mxu0 %v680
  %886 = vmatpush.msra.mxu0 %v677
  %887 = vmatmul.f32.gmra.mxu0 %v729
  %v888 = vpop.f32.mrf.mxu0
  %v889 = vadd.f32 %v869, %v888
  %890 = vdwg.mxu0
  %891 = vmatpush.msra.mxu0 %v579
  %892 = vmatpush.msra.mxu0 %v576
  %893 = vmatpush.msra.mxu0 %v573
  %894 = vmatpush.msra.mxu0 %v570
  %895 = vmatpush.msra.mxu0 %v567
  %896 = vmatpush.msra.mxu0 %v564
  %897 = vmatpush.msra.mxu0 %v561
  %898 = vmatpush.msra.mxu0 %v558
  %899 = vmatpush.msra.mxu0 %v555
  %900 = vmatpush.msra.mxu0 %v552
  %901 = vmatpush.msra.mxu0 %v549
  %902 = vmatpush.msra.mxu0 %v546
  %903 = vmatpush.msra.mxu0 %v543
  %904 = vmatpush.msra.mxu0 %v540
  %905 = vmatpush.msra.mxu0 %v537
  %906 = vmatpush.msra.mxu0 %v534
  %907 = vmatmul.f32.gmra.mxu0 %v509
  %v908 = vpop.f32.mrf.mxu0
  %v909 = vadd.f32 %v725, %v908
  %910 = vdwg.mxu0
  %911 = vmatpush.msra.mxu0 %v627
  %912 = vmatpush.msra.mxu0 %v624
  %913 = vmatpush.msra.mxu0 %v621
  %914 = vmatpush.msra.mxu0 %v618
  %915 = vmatpush.msra.mxu0 %v615
  %916 = vmatpush.msra.mxu0 %v612
  %917 = vmatpush.msra.mxu0 %v609
  %918 = vmatpush.msra.mxu0 %v606
  %919 = vmatpush.msra.mxu0 %v603
  %920 = vmatpush.msra.mxu0 %v600
  %921 = vmatpush.msra.mxu0 %v597
  %922 = vmatpush.msra.mxu0 %v594
  %923 = vmatpush.msra.mxu0 %v591
  %924 = vmatpush.msra.mxu0 %v588
  %925 = vmatpush.msra.mxu0 %v585
  %926 = vmatpush.msra.mxu0 %v582
  %927 = vmatmul.f32.gmra.mxu0 %v530
  %v928 = vpop.f32.mrf.mxu0
  %v929 = vadd.f32 %v909, %v928
  %930 = vdwg.mxu0
  %931 = vmatpush.msra.mxu0 %v675
  %932 = vmatpush.msra.mxu0 %v672
  %933 = vmatpush.msra.mxu0 %v669
  %934 = vmatpush.msra.mxu0 %v666
  %935 = vmatpush.msra.mxu0 %v663
  %936 = vmatpush.msra.mxu0 %v660
  %937 = vmatpush.msra.mxu0 %v657
  %938 = vmatpush.msra.mxu0 %v654
  %939 = vmatpush.msra.mxu0 %v651
  %940 = vmatpush.msra.mxu0 %v648
  %941 = vmatpush.msra.mxu0 %v645
  %942 = vmatpush.msra.mxu0 %v642
  %943 = vmatpush.msra.mxu0 %v639
  %944 = vmatpush.msra.mxu0 %v636
  %945 = vmatpush.msra.mxu0 %v633
  %946 = vmatpush.msra.mxu0 %v630
  %947 = vmatmul.f32.gmra.mxu0 %v531
  %v948 = vpop.f32.mrf.mxu0
  %v949 = vadd.f32 %v929, %v948
  %950 = vdwg.mxu0
  %951 = vmatpush.msra.mxu0 0.0
  %952 = vmatpush.msra.mxu0 %v720
  %953 = vmatpush.msra.mxu0 %v717
  %954 = vmatpush.msra.mxu0 %v714
  %955 = vmatpush.msra.mxu0 %v711
  %956 = vmatpush.msra.mxu0 %v708
  %957 = vmatpush.msra.mxu0 %v705
  %958 = vmatpush.msra.mxu0 %v702
  %959 = vmatpush.msra.mxu0 %v699
  %960 = vmatpush.msra.mxu0 %v696
  %961 = vmatpush.msra.mxu0 %v693
  %962 = vmatpush.msra.mxu0 %v690
  %963 = vmatpush.msra.mxu0 %v687
  %964 = vmatpush.msra.mxu0 %v684
  %965 = vmatpush.msra.mxu0 %v681
  %966 = vmatpush.msra.mxu0 %v678
  %967 = vmatmul.f32.gmra.mxu0 %v729
  %v968 = vpop.f32.mrf.mxu0
  %v969 = vadd.f32 %v949, %v968
  %970 = vdwg.mxu0
  %v971 = vtanh.pop %v809
  %v972 = vtanh.pop %v889
  %v973 = vtanh.pop %v969
  %976 = vrot.lane.b32.xlu0 %v971, 48
  %v977 = vpop.permute.xlu0 %976
  %978 = vrot.lane.b32.xlu0 %v972, 48
  %v979 = vpop.permute.xlu0 %978
  %v980 = vsel %vm488, %v977, %v979
  %v982 = vadd.f32 %v971, %v980
  %983 = vrot.lane.b32.xlu0 %v972, 96
  %v984 = vpop.permute.xlu0 %983
  %v986 = vadd.f32 %v982, %v984
  %988 = vrot.lane.b32.xlu0 %v972, 16
  %v989 = vpop.permute.xlu0 %988
  %990 = vrot.lane.b32.xlu0 %v973, 16
  %v991 = vpop.permute.xlu0 %990
  %v992 = vsel %vm501, %v989, %v991
  %v994 = vadd.f32 %v986, %v992
  %v995 = vmul.f32 %v994, 0.25
  %s996 = scalar_lea.vmem %s3, 8
  %997 = vst.msk [vmem:[%s996] sm:$0x1f] %vm506, %v995
  %s998 = scalar_lea.vmem %s0, 32
  %v999 = vld [vmem:[%s998] sm:$0x7f]
  %v1000 = vld [vmem:[%s998 + $0x8] sm:$0x7f]
  %v1003 = vrot.slane %v999, 1
  %v1004 = vrot.slane %v1000, 1
  %1005 = vrot.lane.b32.xlu0 %v1003, 40
  %v1006 = vpop.permute.xlu0 %1005
  %1007 = vrot.lane.b32.xlu0 %v1004, 40
  %v1008 = vpop.permute.xlu0 %1007
  %v1009 = vsel %vm24, %v1006, %v1008
  %v1012 = vrot.slane %v999, 2
  %v1013 = vrot.slane %v1000, 2
  %1014 = vrot.lane.b32.xlu0 %v1012, 80
  %v1015 = vpop.permute.xlu0 %1014
  %1016 = vrot.lane.b32.xlu0 %v1013, 80
  %v1017 = vpop.permute.xlu0 %1016
  %v1018 = vsel %vm34, %v1015, %v1017
  %v1020 = vsel %vm24, %v1000, %v1006
  %v1021 = vsel %vm34, %v1009, %v1015
  %v1022 = vld [vmem:[%s1] sm:$0xff]
  %v1023 = vld [vmem:[%s1 + $0x8] sm:$0xff]
  %v1024 = vld [vmem:[%s1 + $0x10] sm:$0xff]
  %v1025 = vld [vmem:[%s1 + $0x18] sm:$0xff]
  %v1026 = vld [vmem:[%s1 + $0x20] sm:$0xff]
  %v1027 = vld [vmem:[%s1 + $0x28] sm:$0xff]
  %v1028 = vld [vmem:[%s1 + $0x30] sm:$0xff]
  %v1029 = vld [vmem:[%s1 + $0x38] sm:$0xff]
  %v1030 = vld [vmem:[%s1 + $0x40] sm:$0xff]
  %v1031 = vld [vmem:[%s1 + $0x48] sm:$0xff]
  %v1032 = vld [vmem:[%s1 + $0x50] sm:$0xff]
  %v1033 = vld [vmem:[%s1 + $0x58] sm:$0xff]
  %v1034 = vld [vmem:[%s1 + $0x60] sm:$0xff]
  %v1035 = vld [vmem:[%s1 + $0x68] sm:$0xff]
  %v1036 = vld [vmem:[%s1 + $0x70] sm:$0xff]
  %v1037 = vld [vmem:[%s1 + $0x78] sm:$0xff]
  %v1038 = vld [vmem:[%s1 + $0x80] sm:$0xff]
  %v1039 = vld [vmem:[%s1 + $0x88] sm:$0xff]
  %v1040 = vld [vmem:[%s1 + $0x90] sm:$0xff]
  %v1041 = vld [vmem:[%s1 + $0x98] sm:$0xff]
  %v1042 = vld [vmem:[%s1 + $0xa0] sm:$0xff]
  %v1043 = vld [vmem:[%s1 + $0xa8] sm:$0xff]
  %v1044 = vld [vmem:[%s1 + $0xb0] sm:$0xff]
  %v1045 = vld [vmem:[%s1 + $0xb8] sm:$0xff]
  %v1046 = vld [vmem:[%s1 + $0xc0] sm:$0xff]
  %v1047 = vld [vmem:[%s1 + $0xc8] sm:$0xff]
  %v1048 = vld [vmem:[%s1 + $0xd0] sm:$0xff]
  %v1049 = vld [vmem:[%s1 + $0xd8] sm:$0xff]
  %v1050 = vld [vmem:[%s1 + $0xe0] sm:$0xff]
  %v1051 = vld [vmem:[%s1 + $0xe8] sm:$0xff]
  %v1052 = vld [vmem:[%s1 + $0xf0] sm:$0xff]
  %v1053 = vld [vmem:[%s1 + $0xf8] sm:$0xff]
  %v1054 = vld [vmem:[%s1 + $0x100] sm:$0xff]
  %v1055 = vld [vmem:[%s1 + $0x108] sm:$0xff]
  %v1056 = vld [vmem:[%s1 + $0x110] sm:$0xff]
  %v1057 = vld [vmem:[%s1 + $0x118] sm:$0xff]
  %v1058 = vld [vmem:[%s1 + $0x120] sm:$0xff]
  %v1059 = vld [vmem:[%s1 + $0x128] sm:$0xff]
  %v1060 = vld [vmem:[%s1 + $0x130] sm:$0xff]
  %v1061 = vld [vmem:[%s1 + $0x138] sm:$0xff]
  %v1062 = vld [vmem:[%s1 + $0x140] sm:$0xff]
  %v1063 = vld [vmem:[%s1 + $0x148] sm:$0xff]
  %v1064 = vld [vmem:[%s1 + $0x150] sm:$0xff]
  %v1065 = vld [vmem:[%s1 + $0x158] sm:$0xff]
  %v1066 = vld [vmem:[%s1 + $0x160] sm:$0xff]
  %v1067 = vld [vmem:[%s1 + $0x168] sm:$0xff]
  %v1068 = vld [vmem:[%s1 + $0x170] sm:$0xff]
  %v1069 = vld [vmem:[%s1 + $0x178] sm:$0xff]
  %v1070 = vld [vmem:[%s1 + $0x180] sm:$0xff]
  %v1071 = vld [vmem:[%s1 + $0x188] sm:$0xff]
  %v1072 = vld [vmem:[%s1 + $0x190] sm:$0xff]
  %v1073 = vld [vmem:[%s1 + $0x198] sm:$0xff]
  %v1074 = vld [vmem:[%s1 + $0x1a0] sm:$0xff]
  %v1075 = vld [vmem:[%s1 + $0x1a8] sm:$0xff]
  %v1076 = vld [vmem:[%s1 + $0x1b0] sm:$0xff]
  %v1077 = vld [vmem:[%s1 + $0x1b8] sm:$0xff]
  %v1078 = vld [vmem:[%s1 + $0x1c0] sm:$0xff]
  %v1079 = vld [vmem:[%s1 + $0x1c8] sm:$0xff]
  %v1080 = vld [vmem:[%s1 + $0x1d0] sm:$0xff]
  %v1081 = vld [vmem:[%s1 + $0x1d8] sm:$0xff]
  %v1082 = vld [vmem:[%s1 + $0x1e0] sm:$0xff]
  %v1083 = vld [vmem:[%s1 + $0x1e8] sm:$0xff]
  %v1084 = vld [vmem:[%s1 + $0x1f0] sm:$0xff]
  %v1085 = vld [vmem:[%s1 + $0x1f8] sm:$0xff]
  %v1086 = vld [vmem:[%s1 + $0x200] sm:$0xff]
  %v1087 = vld [vmem:[%s1 + $0x208] sm:$0xff]
  %v1088 = vld [vmem:[%s1 + $0x210] sm:$0xff]
  %v1089 = vld [vmem:[%s1 + $0x218] sm:$0xff]
  %v1090 = vld [vmem:[%s1 + $0x220] sm:$0xff]
  %v1091 = vld [vmem:[%s1 + $0x228] sm:$0xff]
  %v1092 = vld [vmem:[%s1 + $0x230] sm:$0xff]
  %v1093 = vld [vmem:[%s1 + $0x238] sm:$0xff]
  %v1094 = vld [vmem:[%s1 + $0x240] sm:$0xff]
  %v1095 = vld [vmem:[%s1 + $0x248] sm:$0xff]
  %v1096 = vld [vmem:[%s1 + $0x250] sm:$0xff]
  %v1097 = vld [vmem:[%s1 + $0x258] sm:$0xff]
  %v1098 = vld [vmem:[%s1 + $0x260] sm:$0xff]
  %v1099 = vld [vmem:[%s1 + $0x268] sm:$0xff]
  %v1100 = vld [vmem:[%s1 + $0x270] sm:$0xff]
  %v1101 = vld [vmem:[%s1 + $0x278] sm:$0xff]
  %v1102 = vld [vmem:[%s1 + $0x280] sm:$0xff]
  %v1103 = vld [vmem:[%s1 + $0x288] sm:$0xff]
  %v1104 = vld [vmem:[%s1 + $0x290] sm:$0xff]
  %v1105 = vld [vmem:[%s1 + $0x298] sm:$0xff]
  %v1106 = vld [vmem:[%s1 + $0x2a0] sm:$0xff]
  %v1107 = vld [vmem:[%s1 + $0x2a8] sm:$0xff]
  %v1108 = vld [vmem:[%s1 + $0x2b0] sm:$0xff]
  %v1109 = vld [vmem:[%s1 + $0x2b8] sm:$0xff]
  %v1110 = vld [vmem:[%s1 + $0x2c0] sm:$0xff]
  %v1111 = vld [vmem:[%s1 + $0x2c8] sm:$0xff]
  %v1112 = vld [vmem:[%s1 + $0x2d0] sm:$0xff]
  %v1113 = vld [vmem:[%s1 + $0x2d8] sm:$0xff]
  %v1114 = vld [vmem:[%s1 + $0x2e0] sm:$0xff]
  %v1115 = vld [vmem:[%s1 + $0x2e8] sm:$0xff]
  %v1116 = vld [vmem:[%s1 + $0x2f0] sm:$0xff]
  %v1117 = vld [vmem:[%s1 + $0x2f8] sm:$0xff]
  %v1118 = vld [vmem:[%s1 + $0x300] sm:$0xff]
  %v1119 = vld [vmem:[%s1 + $0x308] sm:$0xff]
  %v1120 = vld [vmem:[%s1 + $0x310] sm:$0xff]
  %v1121 = vld [vmem:[%s1 + $0x318] sm:$0xff]
  %v1122 = vld [vmem:[%s1 + $0x320] sm:$0xff]
  %v1123 = vld [vmem:[%s1 + $0x328] sm:$0xff]
  %v1124 = vld [vmem:[%s1 + $0x330] sm:$0xff]
  %v1125 = vld [vmem:[%s1 + $0x338] sm:$0xff]
  %v1126 = vld [vmem:[%s1 + $0x340] sm:$0xff]
  %v1127 = vld [vmem:[%s1 + $0x348] sm:$0xff]
  %v1128 = vld [vmem:[%s1 + $0x350] sm:$0xff]
  %v1129 = vld [vmem:[%s1 + $0x358] sm:$0xff]
  %v1130 = vld [vmem:[%s1 + $0x360] sm:$0xff]
  %v1131 = vld [vmem:[%s1 + $0x368] sm:$0xff]
  %v1132 = vld [vmem:[%s1 + $0x370] sm:$0xff]
  %v1133 = vld [vmem:[%s1 + $0x378] sm:$0xff]
  %v1134 = vld [vmem:[%s1 + $0x380] sm:$0xff]
  %v1135 = vld [vmem:[%s1 + $0x388] sm:$0xff]
  %v1136 = vld [vmem:[%s1 + $0x390] sm:$0xff]
  %v1137 = vld [vmem:[%s1 + $0x398] sm:$0xff]
  %v1138 = vld [vmem:[%s1 + $0x3a0] sm:$0xff]
  %v1139 = vld [vmem:[%s1 + $0x3a8] sm:$0xff]
  %v1140 = vld [vmem:[%s1 + $0x3b0] sm:$0xff]
  %v1141 = vld [vmem:[%s1 + $0x3b8] sm:$0xff]
  %v1142 = vld [vmem:[%s1 + $0x3c0] sm:$0xff]
  %v1143 = vld [vmem:[%s1 + $0x3c8] sm:$0xff]
  %v1144 = vld [vmem:[%s1 + $0x3d0] sm:$0xff]
  %v1145 = vld [vmem:[%s1 + $0x3d8] sm:$0xff]
  %v1146 = vld [vmem:[%s1 + $0x3e0] sm:$0xff]
  %v1147 = vld [vmem:[%s1 + $0x3e8] sm:$0xff]
  %v1148 = vld [vmem:[%s1 + $0x3f0] sm:$0xff]
  %v1149 = vld [vmem:[%s1 + $0x3f8] sm:$0xff]
  %v1150 = vld [vmem:[%s1 + $0x400] sm:$0xff]
  %v1151 = vld [vmem:[%s1 + $0x408] sm:$0xff]
  %v1152 = vld [vmem:[%s1 + $0x410] sm:$0xff]
  %v1153 = vld [vmem:[%s1 + $0x418] sm:$0xff]
  %v1154 = vld [vmem:[%s1 + $0x420] sm:$0xff]
  %v1155 = vld [vmem:[%s1 + $0x428] sm:$0xff]
  %v1156 = vld [vmem:[%s1 + $0x430] sm:$0xff]
  %v1157 = vld [vmem:[%s1 + $0x438] sm:$0xff]
  %v1158 = vld [vmem:[%s1 + $0x440] sm:$0xff]
  %v1159 = vld [vmem:[%s1 + $0x448] sm:$0xff]
  %v1160 = vld [vmem:[%s1 + $0x450] sm:$0xff]
  %v1161 = vld [vmem:[%s1 + $0x458] sm:$0xff]
  %v1162 = vld [vmem:[%s1 + $0x460] sm:$0xff]
  %v1163 = vld [vmem:[%s1 + $0x468] sm:$0xff]
  %v1164 = vld [vmem:[%s1 + $0x470] sm:$0xff]
  %v1165 = vld [vmem:[%s1 + $0x478] sm:$0xff]
  %v1166 = vld [vmem:[%s1 + $0x480] sm:$0xff]
  %v1167 = vld [vmem:[%s1 + $0x488] sm:$0xff]
  %v1168 = vld [vmem:[%s1 + $0x490] sm:$0xff]
  %v1169 = vld [vmem:[%s1 + $0x498] sm:$0xff]
  %v1170 = vld [vmem:[%s1 + $0x4a0] sm:$0xff]
  %v1171 = vld [vmem:[%s1 + $0x4a8] sm:$0xff]
  %v1172 = vld [vmem:[%s1 + $0x4b0] sm:$0xff]
  %v1173 = vld [vmem:[%s1 + $0x4b8] sm:$0xff]
  %v1174 = vld [vmem:[%s1 + $0x4c0] sm:$0xff]
  %v1175 = vld [vmem:[%s1 + $0x4c8] sm:$0xff]
  %v1176 = vld [vmem:[%s1 + $0x4d0] sm:$0xff]
  %v1177 = vld [vmem:[%s1 + $0x4d8] sm:$0xff]
  %v1178 = vld [vmem:[%s1 + $0x4e0] sm:$0xff]
  %v1179 = vld [vmem:[%s1 + $0x4e8] sm:$0xff]
  %v1180 = vld [vmem:[%s1 + $0x4f0] sm:$0xff]
  %v1181 = vld [vmem:[%s1 + $0x4f8] sm:$0xff]
  %v1182 = vld [vmem:[%s1 + $0x500] sm:$0xff]
  %v1183 = vld [vmem:[%s1 + $0x508] sm:$0xff]
  %v1184 = vld [vmem:[%s1 + $0x510] sm:$0xff]
  %v1185 = vld [vmem:[%s1 + $0x518] sm:$0xff]
  %v1186 = vld [vmem:[%s1 + $0x520] sm:$0xff]
  %v1187 = vld [vmem:[%s1 + $0x528] sm:$0xff]
  %v1188 = vld [vmem:[%s1 + $0x530] sm:$0xff]
  %v1189 = vld [vmem:[%s1 + $0x538] sm:$0xff]
  %v1190 = vld [vmem:[%s1 + $0x540] sm:$0xff]
  %v1191 = vld [vmem:[%s1 + $0x548] sm:$0xff]
  %v1192 = vld [vmem:[%s1 + $0x550] sm:$0xff]
  %v1193 = vld [vmem:[%s1 + $0x558] sm:$0xff]
  %v1194 = vld [vmem:[%s1 + $0x560] sm:$0xff]
  %v1195 = vld [vmem:[%s1 + $0x568] sm:$0xff]
  %v1196 = vld [vmem:[%s1 + $0x570] sm:$0xff]
  %v1197 = vld [vmem:[%s1 + $0x578] sm:$0xff]
  %v1198 = vld [vmem:[%s1 + $0x580] sm:$0xff]
  %v1199 = vld [vmem:[%s1 + $0x588] sm:$0xff]
  %v1200 = vld [vmem:[%s1 + $0x590] sm:$0xff]
  %v1201 = vld [vmem:[%s1 + $0x598] sm:$0xff]
  %v1202 = vld [vmem:[%s1 + $0x5a0] sm:$0xff]
  %v1203 = vld [vmem:[%s1 + $0x5a8] sm:$0xff]
  %v1204 = vld [vmem:[%s1 + $0x5b0] sm:$0xff]
  %v1205 = vld [vmem:[%s1 + $0x5b8] sm:$0xff]
  %v1206 = vld [vmem:[%s1 + $0x5c0] sm:$0xff]
  %v1207 = vld [vmem:[%s1 + $0x5c8] sm:$0xff]
  %v1208 = vld [vmem:[%s1 + $0x5d0] sm:$0xff]
  %v1209 = vld [vmem:[%s1 + $0x5d8] sm:$0xff]
  %v1210 = vld [vmem:[%s1 + $0x5e0] sm:$0xff]
  %v1211 = vld [vmem:[%s2] sm:$0x7]
  %v1213 = vperm.slane %v1211, 0
  %v1214 = vperm.slane %v1211, 1
  %v1215 = vperm.slane %v1211, 2
  %v1219 = vsel %vm236, %v1018, 0
  %1221 = vmatpush.msra.mxu0 %v1067
  %1222 = vmatpush.msra.mxu0 %v1064
  %1223 = vmatpush.msra.mxu0 %v1061
  %1224 = vmatpush.msra.mxu0 %v1058
  %1225 = vmatpush.msra.mxu0 %v1055
  %1226 = vmatpush.msra.mxu0 %v1052
  %1227 = vmatpush.msra.mxu0 %v1049
  %1228 = vmatpush.msra.mxu0 %v1046
  %1229 = vmatpush.msra.mxu0 %v1043
  %1230 = vmatpush.msra.mxu0 %v1040
  %1231 = vmatpush.msra.mxu0 %v1037
  %1232 = vmatpush.msra.mxu0 %v1034
  %1233 = vmatpush.msra.mxu0 %v1031
  %1234 = vmatpush.msra.mxu0 %v1028
  %1235 = vmatpush.msra.mxu0 %v1025
  %1236 = vmatpush.msra.mxu0 %v1022
  %1237 = vmatmul.f32.gmra.mxu0 %v999
  %v1238 = vpop.f32.mrf.mxu0
  %v1239 = vadd.f32 %v1213, %v1238
  %1240 = vdwg.mxu0
  %1241 = vmatpush.msra.mxu0 %v1115
  %1242 = vmatpush.msra.mxu0 %v1112
  %1243 = vmatpush.msra.mxu0 %v1109
  %1244 = vmatpush.msra.mxu0 %v1106
  %1245 = vmatpush.msra.mxu0 %v1103
  %1246 = vmatpush.msra.mxu0 %v1100
  %1247 = vmatpush.msra.mxu0 %v1097
  %1248 = vmatpush.msra.mxu0 %v1094
  %1249 = vmatpush.msra.mxu0 %v1091
  %1250 = vmatpush.msra.mxu0 %v1088
  %1251 = vmatpush.msra.mxu0 %v1085
  %1252 = vmatpush.msra.mxu0 %v1082
  %1253 = vmatpush.msra.mxu0 %v1079
  %1254 = vmatpush.msra.mxu0 %v1076
  %1255 = vmatpush.msra.mxu0 %v1073
  %1256 = vmatpush.msra.mxu0 %v1070
  %1257 = vmatmul.f32.gmra.mxu0 %v1020
  %v1258 = vpop.f32.mrf.mxu0
  %v1259 = vadd.f32 %v1239, %v1258
  %1260 = vdwg.mxu0
  %1261 = vmatpush.msra.mxu0 %v1163
  %1262 = vmatpush.msra.mxu0 %v1160
  %1263 = vmatpush.msra.mxu0 %v1157
  %1264 = vmatpush.msra.mxu0 %v1154
  %1265 = vmatpush.msra.mxu0 %v1151
  %1266 = vmatpush.msra.mxu0 %v1148
  %1267 = vmatpush.msra.mxu0 %v1145
  %1268 = vmatpush.msra.mxu0 %v1142
  %1269 = vmatpush.msra.mxu0 %v1139
  %1270 = vmatpush.msra.mxu0 %v1136
  %1271 = vmatpush.msra.mxu0 %v1133
  %1272 = vmatpush.msra.mxu0 %v1130
  %1273 = vmatpush.msra.mxu0 %v1127
  %1274 = vmatpush.msra.mxu0 %v1124
  %1275 = vmatpush.msra.mxu0 %v1121
  %1276 = vmatpush.msra.mxu0 %v1118
  %1277 = vmatmul.f32.gmra.mxu0 %v1021
  %v1278 = vpop.f32.mrf.mxu0
  %v1279 = vadd.f32 %v1259, %v1278
  %1280 = vdwg.mxu0
  %1281 = vmatpush.msra.mxu0 0.0
  %1282 = vmatpush.msra.mxu0 %v1208
  %1283 = vmatpush.msra.mxu0 %v1205
  %1284 = vmatpush.msra.mxu0 %v1202
  %1285 = vmatpush.msra.mxu0 %v1199
  %1286 = vmatpush.msra.mxu0 %v1196
  %1287 = vmatpush.msra.mxu0 %v1193
  %1288 = vmatpush.msra.mxu0 %v1190
  %1289 = vmatpush.msra.mxu0 %v1187
  %1290 = vmatpush.msra.mxu0 %v1184
  %1291 = vmatpush.msra.mxu0 %v1181
  %1292 = vmatpush.msra.mxu0 %v1178
  %1293 = vmatpush.msra.mxu0 %v1175
  %1294 = vmatpush.msra.mxu0 %v1172
  %1295 = vmatpush.msra.mxu0 %v1169
  %1296 = vmatpush.msra.mxu0 %v1166
  %1297 = vmatmul.f32.gmra.mxu0 %v1219
  %v1298 = vpop.f32.mrf.mxu0
  %v1299 = vadd.f32 %v1279, %v1298
  %1300 = vdwg.mxu0
  %1301 = vmatpush.msra.mxu0 %v1068
  %1302 = vmatpush.msra.mxu0 %v1065
  %1303 = vmatpush.msra.mxu0 %v1062
  %1304 = vmatpush.msra.mxu0 %v1059
  %1305 = vmatpush.msra.mxu0 %v1056
  %1306 = vmatpush.msra.mxu0 %v1053
  %1307 = vmatpush.msra.mxu0 %v1050
  %1308 = vmatpush.msra.mxu0 %v1047
  %1309 = vmatpush.msra.mxu0 %v1044
  %1310 = vmatpush.msra.mxu0 %v1041
  %1311 = vmatpush.msra.mxu0 %v1038
  %1312 = vmatpush.msra.mxu0 %v1035
  %1313 = vmatpush.msra.mxu0 %v1032
  %1314 = vmatpush.msra.mxu0 %v1029
  %1315 = vmatpush.msra.mxu0 %v1026
  %1316 = vmatpush.msra.mxu0 %v1023
  %1317 = vmatmul.f32.gmra.mxu0 %v999
  %v1318 = vpop.f32.mrf.mxu0
  %v1319 = vadd.f32 %v1214, %v1318
  %1320 = vdwg.mxu0
  %1321 = vmatpush.msra.mxu0 %v1116
  %1322 = vmatpush.msra.mxu0 %v1113
  %1323 = vmatpush.msra.mxu0 %v1110
  %1324 = vmatpush.msra.mxu0 %v1107
  %1325 = vmatpush.msra.mxu0 %v1104
  %1326 = vmatpush.msra.mxu0 %v1101
  %1327 = vmatpush.msra.mxu0 %v1098
  %1328 = vmatpush.msra.mxu0 %v1095
  %1329 = vmatpush.msra.mxu0 %v1092
  %1330 = vmatpush.msra.mxu0 %v1089
  %1331 = vmatpush.msra.mxu0 %v1086
  %1332 = vmatpush.msra.mxu0 %v1083
  %1333 = vmatpush.msra.mxu0 %v1080
  %1334 = vmatpush.msra.mxu0 %v1077
  %1335 = vmatpush.msra.mxu0 %v1074
  %1336 = vmatpush.msra.mxu0 %v1071
  %1337 = vmatmul.f32.gmra.mxu0 %v1020
  %v1338 = vpop.f32.mrf.mxu0
  %v1339 = vadd.f32 %v1319, %v1338
  %1340 = vdwg.mxu0
  %1341 = vmatpush.msra.mxu0 %v1164
  %1342 = vmatpush.msra.mxu0 %v1161
  %1343 = vmatpush.msra.mxu0 %v1158
  %1344 = vmatpush.msra.mxu0 %v1155
  %1345 = vmatpush.msra.mxu0 %v1152
  %1346 = vmatpush.msra.mxu0 %v1149
  %1347 = vmatpush.msra.mxu0 %v1146
  %1348 = vmatpush.msra.mxu0 %v1143
  %1349 = vmatpush.msra.mxu0 %v1140
  %1350 = vmatpush.msra.mxu0 %v1137
  %1351 = vmatpush.msra.mxu0 %v1134
  %1352 = vmatpush.msra.mxu0 %v1131
  %1353 = vmatpush.msra.mxu0 %v1128
  %1354 = vmatpush.msra.mxu0 %v1125
  %1355 = vmatpush.msra.mxu0 %v1122
  %1356 = vmatpush.msra.mxu0 %v1119
  %1357 = vmatmul.f32.gmra.mxu0 %v1021
  %v1358 = vpop.f32.mrf.mxu0
  %v1359 = vadd.f32 %v1339, %v1358
  %1360 = vdwg.mxu0
  %1361 = vmatpush.msra.mxu0 0.0
  %1362 = vmatpush.msra.mxu0 %v1209
  %1363 = vmatpush.msra.mxu0 %v1206
  %1364 = vmatpush.msra.mxu0 %v1203
  %1365 = vmatpush.msra.mxu0 %v1200
  %1366 = vmatpush.msra.mxu0 %v1197
  %1367 = vmatpush.msra.mxu0 %v1194
  %1368 = vmatpush.msra.mxu0 %v1191
  %1369 = vmatpush.msra.mxu0 %v1188
  %1370 = vmatpush.msra.mxu0 %v1185
  %1371 = vmatpush.msra.mxu0 %v1182
  %1372 = vmatpush.msra.mxu0 %v1179
  %1373 = vmatpush.msra.mxu0 %v1176
  %1374 = vmatpush.msra.mxu0 %v1173
  %1375 = vmatpush.msra.mxu0 %v1170
  %1376 = vmatpush.msra.mxu0 %v1167
  %1377 = vmatmul.f32.gmra.mxu0 %v1219
  %v1378 = vpop.f32.mrf.mxu0
  %v1379 = vadd.f32 %v1359, %v1378
  %1380 = vdwg.mxu0
  %1381 = vmatpush.msra.mxu0 %v1069
  %1382 = vmatpush.msra.mxu0 %v1066
  %1383 = vmatpush.msra.mxu0 %v1063
  %1384 = vmatpush.msra.mxu0 %v1060
  %1385 = vmatpush.msra.mxu0 %v1057
  %1386 = vmatpush.msra.mxu0 %v1054
  %1387 = vmatpush.msra.mxu0 %v1051
  %1388 = vmatpush.msra.mxu0 %v1048
  %1389 = vmatpush.msra.mxu0 %v1045
  %1390 = vmatpush.msra.mxu0 %v1042
  %1391 = vmatpush.msra.mxu0 %v1039
  %1392 = vmatpush.msra.mxu0 %v1036
  %1393 = vmatpush.msra.mxu0 %v1033
  %1394 = vmatpush.msra.mxu0 %v1030
  %1395 = vmatpush.msra.mxu0 %v1027
  %1396 = vmatpush.msra.mxu0 %v1024
  %1397 = vmatmul.f32.gmra.mxu0 %v999
  %v1398 = vpop.f32.mrf.mxu0
  %v1399 = vadd.f32 %v1215, %v1398
  %1400 = vdwg.mxu0
  %1401 = vmatpush.msra.mxu0 %v1117
  %1402 = vmatpush.msra.mxu0 %v1114
  %1403 = vmatpush.msra.mxu0 %v1111
  %1404 = vmatpush.msra.mxu0 %v1108
  %1405 = vmatpush.msra.mxu0 %v1105
  %1406 = vmatpush.msra.mxu0 %v1102
  %1407 = vmatpush.msra.mxu0 %v1099
  %1408 = vmatpush.msra.mxu0 %v1096
  %1409 = vmatpush.msra.mxu0 %v1093
  %1410 = vmatpush.msra.mxu0 %v1090
  %1411 = vmatpush.msra.mxu0 %v1087
  %1412 = vmatpush.msra.mxu0 %v1084
  %1413 = vmatpush.msra.mxu0 %v1081
  %1414 = vmatpush.msra.mxu0 %v1078
  %1415 = vmatpush.msra.mxu0 %v1075
  %1416 = vmatpush.msra.mxu0 %v1072
  %1417 = vmatmul.f32.gmra.mxu0 %v1020
  %v1418 = vpop.f32.mrf.mxu0
  %v1419 = vadd.f32 %v1399, %v1418
  %1420 = vdwg.mxu0
  %1421 = vmatpush.msra.mxu0 %v1165
  %1422 = vmatpush.msra.mxu0 %v1162
  %1423 = vmatpush.msra.mxu0 %v1159
  %1424 = vmatpush.msra.mxu0 %v1156
  %1425 = vmatpush.msra.mxu0 %v1153
  %1426 = vmatpush.msra.mxu0 %v1150
  %1427 = vmatpush.msra.mxu0 %v1147
  %1428 = vmatpush.msra.mxu0 %v1144
  %1429 = vmatpush.msra.mxu0 %v1141
  %1430 = vmatpush.msra.mxu0 %v1138
  %1431 = vmatpush.msra.mxu0 %v1135
  %1432 = vmatpush.msra.mxu0 %v1132
  %1433 = vmatpush.msra.mxu0 %v1129
  %1434 = vmatpush.msra.mxu0 %v1126
  %1435 = vmatpush.msra.mxu0 %v1123
  %1436 = vmatpush.msra.mxu0 %v1120
  %1437 = vmatmul.f32.gmra.mxu0 %v1021
  %v1438 = vpop.f32.mrf.mxu0
  %v1439 = vadd.f32 %v1419, %v1438
  %1440 = vdwg.mxu0
  %1441 = vmatpush.msra.mxu0 0.0
  %1442 = vmatpush.msra.mxu0 %v1210
  %1443 = vmatpush.msra.mxu0 %v1207
  %1444 = vmatpush.msra.mxu0 %v1204
  %1445 = vmatpush.msra.mxu0 %v1201
  %1446 = vmatpush.msra.mxu0 %v1198
  %1447 = vmatpush.msra.mxu0 %v1195
  %1448 = vmatpush.msra.mxu0 %v1192
  %1449 = vmatpush.msra.mxu0 %v1189
  %1450 = vmatpush.msra.mxu0 %v1186
  %1451 = vmatpush.msra.mxu0 %v1183
  %1452 = vmatpush.msra.mxu0 %v1180
  %1453 = vmatpush.msra.mxu0 %v1177
  %1454 = vmatpush.msra.mxu0 %v1174
  %1455 = vmatpush.msra.mxu0 %v1171
  %1456 = vmatpush.msra.mxu0 %v1168
  %1457 = vmatmul.f32.gmra.mxu0 %v1219
  %v1458 = vpop.f32.mrf.mxu0
  %v1459 = vadd.f32 %v1439, %v1458
  %1460 = vdwg.mxu0
  %v1461 = vtanh.pop %v1299
  %v1462 = vtanh.pop %v1379
  %v1463 = vtanh.pop %v1459
  %1466 = vrot.lane.b32.xlu0 %v1461, 48
  %v1467 = vpop.permute.xlu0 %1466
  %1468 = vrot.lane.b32.xlu0 %v1462, 48
  %v1469 = vpop.permute.xlu0 %1468
  %v1470 = vsel %vm488, %v1467, %v1469
  %v1472 = vadd.f32 %v1461, %v1470
  %1473 = vrot.lane.b32.xlu0 %v1462, 96
  %v1474 = vpop.permute.xlu0 %1473
  %v1476 = vadd.f32 %v1472, %v1474
  %1478 = vrot.lane.b32.xlu0 %v1462, 16
  %v1479 = vpop.permute.xlu0 %1478
  %1480 = vrot.lane.b32.xlu0 %v1463, 16
  %v1481 = vpop.permute.xlu0 %1480
  %v1482 = vsel %vm501, %v1479, %v1481
  %v1484 = vadd.f32 %v1476, %v1482
  %v1485 = vmul.f32 %v1484, 0.25
  %s1486 = scalar_lea.vmem %s3, 16
  %1487 = vst.msk [vmem:[%s1486] sm:$0x1f] %vm506, %v1485
  %s1488 = scalar_lea.vmem %s0, 48
  %v1489 = vld [vmem:[%s1488] sm:$0x7f]
  %v1490 = vld [vmem:[%s1488 + $0x8] sm:$0x7f]
  %v1493 = vrot.slane %v1489, 1
  %v1494 = vrot.slane %v1490, 1
  %1495 = vrot.lane.b32.xlu0 %v1493, 40
  %v1496 = vpop.permute.xlu0 %1495
  %1497 = vrot.lane.b32.xlu0 %v1494, 40
  %v1498 = vpop.permute.xlu0 %1497
  %v1499 = vsel %vm24, %v1496, %v1498
  %v1502 = vrot.slane %v1489, 2
  %v1503 = vrot.slane %v1490, 2
  %1504 = vrot.lane.b32.xlu0 %v1502, 80
  %v1505 = vpop.permute.xlu0 %1504
  %1506 = vrot.lane.b32.xlu0 %v1503, 80
  %v1507 = vpop.permute.xlu0 %1506
  %v1508 = vsel %vm34, %v1505, %v1507
  %v1510 = vsel %vm24, %v1490, %v1496
  %v1511 = vsel %vm34, %v1499, %v1505
  %v1512 = vld [vmem:[%s1] sm:$0xff]
  %v1513 = vld [vmem:[%s1 + $0x8] sm:$0xff]
  %v1514 = vld [vmem:[%s1 + $0x10] sm:$0xff]
  %v1515 = vld [vmem:[%s1 + $0x18] sm:$0xff]
  %v1516 = vld [vmem:[%s1 + $0x20] sm:$0xff]
  %v1517 = vld [vmem:[%s1 + $0x28] sm:$0xff]
  %v1518 = vld [vmem:[%s1 + $0x30] sm:$0xff]
  %v1519 = vld [vmem:[%s1 + $0x38] sm:$0xff]
  %v1520 = vld [vmem:[%s1 + $0x40] sm:$0xff]
  %v1521 = vld [vmem:[%s1 + $0x48] sm:$0xff]
  %v1522 = vld [vmem:[%s1 + $0x50] sm:$0xff]
  %v1523 = vld [vmem:[%s1 + $0x58] sm:$0xff]
  %v1524 = vld [vmem:[%s1 + $0x60] sm:$0xff]
  %v1525 = vld [vmem:[%s1 + $0x68] sm:$0xff]
  %v1526 = vld [vmem:[%s1 + $0x70] sm:$0xff]
  %v1527 = vld [vmem:[%s1 + $0x78] sm:$0xff]
  %v1528 = vld [vmem:[%s1 + $0x80] sm:$0xff]
  %v1529 = vld [vmem:[%s1 + $0x88] sm:$0xff]
  %v1530 = vld [vmem:[%s1 + $0x90] sm:$0xff]
  %v1531 = vld [vmem:[%s1 + $0x98] sm:$0xff]
  %v1532 = vld [vmem:[%s1 + $0xa0] sm:$0xff]
  %v1533 = vld [vmem:[%s1 + $0xa8] sm:$0xff]
  %v1534 = vld [vmem:[%s1 + $0xb0] sm:$0xff]
  %v1535 = vld [vmem:[%s1 + $0xb8] sm:$0xff]
  %v1536 = vld [vmem:[%s1 + $0xc0] sm:$0xff]
  %v1537 = vld [vmem:[%s1 + $0xc8] sm:$0xff]
  %v1538 = vld [vmem:[%s1 + $0xd0] sm:$0xff]
  %v1539 = vld [vmem:[%s1 + $0xd8] sm:$0xff]
  %v1540 = vld [vmem:[%s1 + $0xe0] sm:$0xff]
  %v1541 = vld [vmem:[%s1 + $0xe8] sm:$0xff]
  %v1542 = vld [vmem:[%s1 + $0xf0] sm:$0xff]
  %v1543 = vld [vmem:[%s1 + $0xf8] sm:$0xff]
  %v1544 = vld [vmem:[%s1 + $0x100] sm:$0xff]
  %v1545 = vld [vmem:[%s1 + $0x108] sm:$0xff]
  %v1546 = vld [vmem:[%s1 + $0x110] sm:$0xff]
  %v1547 = vld [vmem:[%s1 + $0x118] sm:$0xff]
  %v1548 = vld [vmem:[%s1 + $0x120] sm:$0xff]
  %v1549 = vld [vmem:[%s1 + $0x128] sm:$0xff]
  %v1550 = vld [vmem:[%s1 + $0x130] sm:$0xff]
  %v1551 = vld [vmem:[%s1 + $0x138] sm:$0xff]
  %v1552 = vld [vmem:[%s1 + $0x140] sm:$0xff]
  %v1553 = vld [vmem:[%s1 + $0x148] sm:$0xff]
  %v1554 = vld [vmem:[%s1 + $0x150] sm:$0xff]
  %v1555 = vld [vmem:[%s1 + $0x158] sm:$0xff]
  %v1556 = vld [vmem:[%s1 + $0x160] sm:$0xff]
  %v1557 = vld [vmem:[%s1 + $0x168] sm:$0xff]
  %v1558 = vld [vmem:[%s1 + $0x170] sm:$0xff]
  %v1559 = vld [vmem:[%s1 + $0x178] sm:$0xff]
  %v1560 = vld [vmem:[%s1 + $0x180] sm:$0xff]
  %v1561 = vld [vmem:[%s1 + $0x188] sm:$0xff]
  %v1562 = vld [vmem:[%s1 + $0x190] sm:$0xff]
  %v1563 = vld [vmem:[%s1 + $0x198] sm:$0xff]
  %v1564 = vld [vmem:[%s1 + $0x1a0] sm:$0xff]
  %v1565 = vld [vmem:[%s1 + $0x1a8] sm:$0xff]
  %v1566 = vld [vmem:[%s1 + $0x1b0] sm:$0xff]
  %v1567 = vld [vmem:[%s1 + $0x1b8] sm:$0xff]
  %v1568 = vld [vmem:[%s1 + $0x1c0] sm:$0xff]
  %v1569 = vld [vmem:[%s1 + $0x1c8] sm:$0xff]
  %v1570 = vld [vmem:[%s1 + $0x1d0] sm:$0xff]
  %v1571 = vld [vmem:[%s1 + $0x1d8] sm:$0xff]
  %v1572 = vld [vmem:[%s1 + $0x1e0] sm:$0xff]
  %v1573 = vld [vmem:[%s1 + $0x1e8] sm:$0xff]
  %v1574 = vld [vmem:[%s1 + $0x1f0] sm:$0xff]
  %v1575 = vld [vmem:[%s1 + $0x1f8] sm:$0xff]
  %v1576 = vld [vmem:[%s1 + $0x200] sm:$0xff]
  %v1577 = vld [vmem:[%s1 + $0x208] sm:$0xff]
  %v1578 = vld [vmem:[%s1 + $0x210] sm:$0xff]
  %v1579 = vld [vmem:[%s1 + $0x218] sm:$0xff]
  %v1580 = vld [vmem:[%s1 + $0x220] sm:$0xff]
  %v1581 = vld [vmem:[%s1 + $0x228] sm:$0xff]
  %v1582 = vld [vmem:[%s1 + $0x230] sm:$0xff]
  %v1583 = vld [vmem:[%s1 + $0x238] sm:$0xff]
  %v1584 = vld [vmem:[%s1 + $0x240] sm:$0xff]
  %v1585 = vld [vmem:[%s1 + $0x248] sm:$0xff]
  %v1586 = vld [vmem:[%s1 + $0x250] sm:$0xff]
  %v1587 = vld [vmem:[%s1 + $0x258] sm:$0xff]
  %v1588 = vld [vmem:[%s1 + $0x260] sm:$0xff]
  %v1589 = vld [vmem:[%s1 + $0x268] sm:$0xff]
  %v1590 = vld [vmem:[%s1 + $0x270] sm:$0xff]
  %v1591 = vld [vmem:[%s1 + $0x278] sm:$0xff]
  %v1592 = vld [vmem:[%s1 + $0x280] sm:$0xff]
  %v1593 = vld [vmem:[%s1 + $0x288] sm:$0xff]
  %v1594 = vld [vmem:[%s1 + $0x290] sm:$0xff]
  %v1595 = vld [vmem:[%s1 + $0x298] sm:$0xff]
  %v1596 = vld [vmem:[%s1 + $0x2a0] sm:$0xff]
  %v1597 = vld [vmem:[%s1 + $0x2a8] sm:$0xff]
  %v1598 = vld [vmem:[%s1 + $0x2b0] sm:$0xff]
  %v1599 = vld [vmem:[%s1 + $0x2b8] sm:$0xff]
  %v1600 = vld [vmem:[%s1 + $0x2c0] sm:$0xff]
  %v1601 = vld [vmem:[%s1 + $0x2c8] sm:$0xff]
  %v1602 = vld [vmem:[%s1 + $0x2d0] sm:$0xff]
  %v1603 = vld [vmem:[%s1 + $0x2d8] sm:$0xff]
  %v1604 = vld [vmem:[%s1 + $0x2e0] sm:$0xff]
  %v1605 = vld [vmem:[%s1 + $0x2e8] sm:$0xff]
  %v1606 = vld [vmem:[%s1 + $0x2f0] sm:$0xff]
  %v1607 = vld [vmem:[%s1 + $0x2f8] sm:$0xff]
  %v1608 = vld [vmem:[%s1 + $0x300] sm:$0xff]
  %v1609 = vld [vmem:[%s1 + $0x308] sm:$0xff]
  %v1610 = vld [vmem:[%s1 + $0x310] sm:$0xff]
  %v1611 = vld [vmem:[%s1 + $0x318] sm:$0xff]
  %v1612 = vld [vmem:[%s1 + $0x320] sm:$0xff]
  %v1613 = vld [vmem:[%s1 + $0x328] sm:$0xff]
  %v1614 = vld [vmem:[%s1 + $0x330] sm:$0xff]
  %v1615 = vld [vmem:[%s1 + $0x338] sm:$0xff]
  %v1616 = vld [vmem:[%s1 + $0x340] sm:$0xff]
  %v1617 = vld [vmem:[%s1 + $0x348] sm:$0xff]
  %v1618 = vld [vmem:[%s1 + $0x350] sm:$0xff]
  %v1619 = vld [vmem:[%s1 + $0x358] sm:$0xff]
  %v1620 = vld [vmem:[%s1 + $0x360] sm:$0xff]
  %v1621 = vld [vmem:[%s1 + $0x368] sm:$0xff]
  %v1622 = vld [vmem:[%s1 + $0x370] sm:$0xff]
  %v1623 = vld [vmem:[%s1 + $0x378] sm:$0xff]
  %v1624 = vld [vmem:[%s1 + $0x380] sm:$0xff]
  %v1625 = vld [vmem:[%s1 + $0x388] sm:$0xff]
  %v1626 = vld [vmem:[%s1 + $0x390] sm:$0xff]
  %v1627 = vld [vmem:[%s1 + $0x398] sm:$0xff]
  %v1628 = vld [vmem:[%s1 + $0x3a0] sm:$0xff]
  %v1629 = vld [vmem:[%s1 + $0x3a8] sm:$0xff]
  %v1630 = vld [vmem:[%s1 + $0x3b0] sm:$0xff]
  %v1631 = vld [vmem:[%s1 + $0x3b8] sm:$0xff]
  %v1632 = vld [vmem:[%s1 + $0x3c0] sm:$0xff]
  %v1633 = vld [vmem:[%s1 + $0x3c8] sm:$0xff]
  %v1634 = vld [vmem:[%s1 + $0x3d0] sm:$0xff]
  %v1635 = vld [vmem:[%s1 + $0x3d8] sm:$0xff]
  %v1636 = vld [vmem:[%s1 + $0x3e0] sm:$0xff]
  %v1637 = vld [vmem:[%s1 + $0x3e8] sm:$0xff]
  %v1638 = vld [vmem:[%s1 + $0x3f0] sm:$0xff]
  %v1639 = vld [vmem:[%s1 + $0x3f8] sm:$0xff]
  %v1640 = vld [vmem:[%s1 + $0x400] sm:$0xff]
  %v1641 = vld [vmem:[%s1 + $0x408] sm:$0xff]
  %v1642 = vld [vmem:[%s1 + $0x410] sm:$0xff]
  %v1643 = vld [vmem:[%s1 + $0x418] sm:$0xff]
  %v1644 = vld [vmem:[%s1 + $0x420] sm:$0xff]
  %v1645 = vld [vmem:[%s1 + $0x428] sm:$0xff]
  %v1646 = vld [vmem:[%s1 + $0x430] sm:$0xff]
  %v1647 = vld [vmem:[%s1 + $0x438] sm:$0xff]
  %v1648 = vld [vmem:[%s1 + $0x440] sm:$0xff]
  %v1649 = vld [vmem:[%s1 + $0x448] sm:$0xff]
  %v1650 = vld [vmem:[%s1 + $0x450] sm:$0xff]
  %v1651 = vld [vmem:[%s1 + $0x458] sm:$0xff]
  %v1652 = vld [vmem:[%s1 + $0x460] sm:$0xff]
  %v1653 = vld [vmem:[%s1 + $0x468] sm:$0xff]
  %v1654 = vld [vmem:[%s1 + $0x470] sm:$0xff]
  %v1655 = vld [vmem:[%s1 + $0x478] sm:$0xff]
  %v1656 = vld [vmem:[%s1 + $0x480] sm:$0xff]
  %v1657 = vld [vmem:[%s1 + $0x488] sm:$0xff]
  %v1658 = vld [vmem:[%s1 + $0x490] sm:$0xff]
  %v1659 = vld [vmem:[%s1 + $0x498] sm:$0xff]
  %v1660 = vld [vmem:[%s1 + $0x4a0] sm:$0xff]
  %v1661 = vld [vmem:[%s1 + $0x4a8] sm:$0xff]
  %v1662 = vld [vmem:[%s1 + $0x4b0] sm:$0xff]
  %v1663 = vld [vmem:[%s1 + $0x4b8] sm:$0xff]
  %v1664 = vld [vmem:[%s1 + $0x4c0] sm:$0xff]
  %v1665 = vld [vmem:[%s1 + $0x4c8] sm:$0xff]
  %v1666 = vld [vmem:[%s1 + $0x4d0] sm:$0xff]
  %v1667 = vld [vmem:[%s1 + $0x4d8] sm:$0xff]
  %v1668 = vld [vmem:[%s1 + $0x4e0] sm:$0xff]
  %v1669 = vld [vmem:[%s1 + $0x4e8] sm:$0xff]
  %v1670 = vld [vmem:[%s1 + $0x4f0] sm:$0xff]
  %v1671 = vld [vmem:[%s1 + $0x4f8] sm:$0xff]
  %v1672 = vld [vmem:[%s1 + $0x500] sm:$0xff]
  %v1673 = vld [vmem:[%s1 + $0x508] sm:$0xff]
  %v1674 = vld [vmem:[%s1 + $0x510] sm:$0xff]
  %v1675 = vld [vmem:[%s1 + $0x518] sm:$0xff]
  %v1676 = vld [vmem:[%s1 + $0x520] sm:$0xff]
  %v1677 = vld [vmem:[%s1 + $0x528] sm:$0xff]
  %v1678 = vld [vmem:[%s1 + $0x530] sm:$0xff]
  %v1679 = vld [vmem:[%s1 + $0x538] sm:$0xff]
  %v1680 = vld [vmem:[%s1 + $0x540] sm:$0xff]
  %v1681 = vld [vmem:[%s1 + $0x548] sm:$0xff]
  %v1682 = vld [vmem:[%s1 + $0x550] sm:$0xff]
  %v1683 = vld [vmem:[%s1 + $0x558] sm:$0xff]
  %v1684 = vld [vmem:[%s1 + $0x560] sm:$0xff]
  %v1685 = vld [vmem:[%s1 + $0x568] sm:$0xff]
  %v1686 = vld [vmem:[%s1 + $0x570] sm:$0xff]
  %v1687 = vld [vmem:[%s1 + $0x578] sm:$0xff]
  %v1688 = vld [vmem:[%s1 + $0x580] sm:$0xff]
  %v1689 = vld [vmem:[%s1 + $0x588] sm:$0xff]
  %v1690 = vld [vmem:[%s1 + $0x590] sm:$0xff]
  %v1691 = vld [vmem:[%s1 + $0x598] sm:$0xff]
  %v1692 = vld [vmem:[%s1 + $0x5a0] sm:$0xff]
  %v1693 = vld [vmem:[%s1 + $0x5a8] sm:$0xff]
  %v1694 = vld [vmem:[%s1 + $0x5b0] sm:$0xff]
  %v1695 = vld [vmem:[%s1 + $0x5b8] sm:$0xff]
  %v1696 = vld [vmem:[%s1 + $0x5c0] sm:$0xff]
  %v1697 = vld [vmem:[%s1 + $0x5c8] sm:$0xff]
  %v1698 = vld [vmem:[%s1 + $0x5d0] sm:$0xff]
  %v1699 = vld [vmem:[%s1 + $0x5d8] sm:$0xff]
  %v1700 = vld [vmem:[%s1 + $0x5e0] sm:$0xff]
  %v1701 = vld [vmem:[%s2] sm:$0x7]
  %v1703 = vperm.slane %v1701, 0
  %v1704 = vperm.slane %v1701, 1
  %v1705 = vperm.slane %v1701, 2
  %v1709 = vsel %vm236, %v1508, 0
  %1711 = vmatpush.msra.mxu0 %v1557
  %1712 = vmatpush.msra.mxu0 %v1554
  %1713 = vmatpush.msra.mxu0 %v1551
  %1714 = vmatpush.msra.mxu0 %v1548
  %1715 = vmatpush.msra.mxu0 %v1545
  %1716 = vmatpush.msra.mxu0 %v1542
  %1717 = vmatpush.msra.mxu0 %v1539
  %1718 = vmatpush.msra.mxu0 %v1536
  %1719 = vmatpush.msra.mxu0 %v1533
  %1720 = vmatpush.msra.mxu0 %v1530
  %1721 = vmatpush.msra.mxu0 %v1527
  %1722 = vmatpush.msra.mxu0 %v1524
  %1723 = vmatpush.msra.mxu0 %v1521
  %1724 = vmatpush.msra.mxu0 %v1518
  %1725 = vmatpush.msra.mxu0 %v1515
  %1726 = vmatpush.msra.mxu0 %v1512
  %1727 = vmatmul.f32.gmra.mxu0 %v1489
  %v1728 = vpop.f32.mrf.mxu0
  %v1729 = vadd.f32 %v1703, %v1728
  %1730 = vdwg.mxu0
  %1731 = vmatpush.msra.mxu0 %v1605
  %1732 = vmatpush.msra.mxu0 %v1602
  %1733 = vmatpush.msra.mxu0 %v1599
  %1734 = vmatpush.msra.mxu0 %v1596
  %1735 = vmatpush.msra.mxu0 %v1593
  %1736 = vmatpush.msra.mxu0 %v1590
  %1737 = vmatpush.msra.mxu0 %v1587
  %1738 = vmatpush.msra.mxu0 %v1584
  %1739 = vmatpush.msra.mxu0 %v1581
  %1740 = vmatpush.msra.mxu0 %v1578
  %1741 = vmatpush.msra.mxu0 %v1575
  %1742 = vmatpush.msra.mxu0 %v1572
  %1743 = vmatpush.msra.mxu0 %v1569
  %1744 = vmatpush.msra.mxu0 %v1566
  %1745 = vmatpush.msra.mxu0 %v1563
  %1746 = vmatpush.msra.mxu0 %v1560
  %1747 = vmatmul.f32.gmra.mxu0 %v1510
  %v1748 = vpop.f32.mrf.mxu0
  %v1749 = vadd.f32 %v1729, %v1748
  %1750 = vdwg.mxu0
  %1751 = vmatpush.msra.mxu0 %v1653
  %1752 = vmatpush.msra.mxu0 %v1650
  %1753 = vmatpush.msra.mxu0 %v1647
  %1754 = vmatpush.msra.mxu0 %v1644
  %1755 = vmatpush.msra.mxu0 %v1641
  %1756 = vmatpush.msra.mxu0 %v1638
  %1757 = vmatpush.msra.mxu0 %v1635
  %1758 = vmatpush.msra.mxu0 %v1632
  %1759 = vmatpush.msra.mxu0 %v1629
  %1760 = vmatpush.msra.mxu0 %v1626
  %1761 = vmatpush.msra.mxu0 %v1623
  %1762 = vmatpush.msra.mxu0 %v1620
  %1763 = vmatpush.msra.mxu0 %v1617
  %1764 = vmatpush.msra.mxu0 %v1614
  %1765 = vmatpush.msra.mxu0 %v1611
  %1766 = vmatpush.msra.mxu0 %v1608
  %1767 = vmatmul.f32.gmra.mxu0 %v1511
  %v1768 = vpop.f32.mrf.mxu0
  %v1769 = vadd.f32 %v1749, %v1768
  %1770 = vdwg.mxu0
  %1771 = vmatpush.msra.mxu0 0.0
  %1772 = vmatpush.msra.mxu0 %v1698
  %1773 = vmatpush.msra.mxu0 %v1695
  %1774 = vmatpush.msra.mxu0 %v1692
  %1775 = vmatpush.msra.mxu0 %v1689
  %1776 = vmatpush.msra.mxu0 %v1686
  %1777 = vmatpush.msra.mxu0 %v1683
  %1778 = vmatpush.msra.mxu0 %v1680
  %1779 = vmatpush.msra.mxu0 %v1677
  %1780 = vmatpush.msra.mxu0 %v1674
  %1781 = vmatpush.msra.mxu0 %v1671
  %1782 = vmatpush.msra.mxu0 %v1668
  %1783 = vmatpush.msra.mxu0 %v1665
  %1784 = vmatpush.msra.mxu0 %v1662
  %1785 = vmatpush.msra.mxu0 %v1659
  %1786 = vmatpush.msra.mxu0 %v1656
  %1787 = vmatmul.f32.gmra.mxu0 %v1709
  %v1788 = vpop.f32.mrf.mxu0
  %v1789 = vadd.f32 %v1769, %v1788
  %1790 = vdwg.mxu0
  %1791 = vmatpush.msra.mxu0 %v1558
  %1792 = vmatpush.msra.mxu0 %v1555
  %1793 = vmatpush.msra.mxu0 %v1552
  %1794 = vmatpush.msra.mxu0 %v1549
  %1795 = vmatpush.msra.mxu0 %v1546
  %1796 = vmatpush.msra.mxu0 %v1543
  %1797 = vmatpush.msra.mxu0 %v1540
  %1798 = vmatpush.msra.mxu0 %v1537
  %1799 = vmatpush.msra.mxu0 %v1534
  %1800 = vmatpush.msra.mxu0 %v1531
  %1801 = vmatpush.msra.mxu0 %v1528
  %1802 = vmatpush.msra.mxu0 %v1525
  %1803 = vmatpush.msra.mxu0 %v1522
  %1804 = vmatpush.msra.mxu0 %v1519
  %1805 = vmatpush.msra.mxu0 %v1516
  %1806 = vmatpush.msra.mxu0 %v1513
  %1807 = vmatmul.f32.gmra.mxu0 %v1489
  %v1808 = vpop.f32.mrf.mxu0
  %v1809 = vadd.f32 %v1704, %v1808
  %1810 = vdwg.mxu0
  %1811 = vmatpush.msra.mxu0 %v1606
  %1812 = vmatpush.msra.mxu0 %v1603
  %1813 = vmatpush.msra.mxu0 %v1600
  %1814 = vmatpush.msra.mxu0 %v1597
  %1815 = vmatpush.msra.mxu0 %v1594
  %1816 = vmatpush.msra.mxu0 %v1591
  %1817 = vmatpush.msra.mxu0 %v1588
  %1818 = vmatpush.msra.mxu0 %v1585
  %1819 = vmatpush.msra.mxu0 %v1582
  %1820 = vmatpush.msra.mxu0 %v1579
  %1821 = vmatpush.msra.mxu0 %v1576
  %1822 = vmatpush.msra.mxu0 %v1573
  %1823 = vmatpush.msra.mxu0 %v1570
  %1824 = vmatpush.msra.mxu0 %v1567
  %1825 = vmatpush.msra.mxu0 %v1564
  %1826 = vmatpush.msra.mxu0 %v1561
  %1827 = vmatmul.f32.gmra.mxu0 %v1510
  %v1828 = vpop.f32.mrf.mxu0
  %v1829 = vadd.f32 %v1809, %v1828
  %1830 = vdwg.mxu0
  %1831 = vmatpush.msra.mxu0 %v1654
  %1832 = vmatpush.msra.mxu0 %v1651
  %1833 = vmatpush.msra.mxu0 %v1648
  %1834 = vmatpush.msra.mxu0 %v1645
  %1835 = vmatpush.msra.mxu0 %v1642
  %1836 = vmatpush.msra.mxu0 %v1639
  %1837 = vmatpush.msra.mxu0 %v1636
  %1838 = vmatpush.msra.mxu0 %v1633
  %1839 = vmatpush.msra.mxu0 %v1630
  %1840 = vmatpush.msra.mxu0 %v1627
  %1841 = vmatpush.msra.mxu0 %v1624
  %1842 = vmatpush.msra.mxu0 %v1621
  %1843 = vmatpush.msra.mxu0 %v1618
  %1844 = vmatpush.msra.mxu0 %v1615
  %1845 = vmatpush.msra.mxu0 %v1612
  %1846 = vmatpush.msra.mxu0 %v1609
  %1847 = vmatmul.f32.gmra.mxu0 %v1511
  %v1848 = vpop.f32.mrf.mxu0
  %v1849 = vadd.f32 %v1829, %v1848
  %1850 = vdwg.mxu0
  %1851 = vmatpush.msra.mxu0 0.0
  %1852 = vmatpush.msra.mxu0 %v1699
  %1853 = vmatpush.msra.mxu0 %v1696
  %1854 = vmatpush.msra.mxu0 %v1693
  %1855 = vmatpush.msra.mxu0 %v1690
  %1856 = vmatpush.msra.mxu0 %v1687
  %1857 = vmatpush.msra.mxu0 %v1684
  %1858 = vmatpush.msra.mxu0 %v1681
  %1859 = vmatpush.msra.mxu0 %v1678
  %1860 = vmatpush.msra.mxu0 %v1675
  %1861 = vmatpush.msra.mxu0 %v1672
  %1862 = vmatpush.msra.mxu0 %v1669
  %1863 = vmatpush.msra.mxu0 %v1666
  %1864 = vmatpush.msra.mxu0 %v1663
  %1865 = vmatpush.msra.mxu0 %v1660
  %1866 = vmatpush.msra.mxu0 %v1657
  %1867 = vmatmul.f32.gmra.mxu0 %v1709
  %v1868 = vpop.f32.mrf.mxu0
  %v1869 = vadd.f32 %v1849, %v1868
  %1870 = vdwg.mxu0
  %1871 = vmatpush.msra.mxu0 %v1559
  %1872 = vmatpush.msra.mxu0 %v1556
  %1873 = vmatpush.msra.mxu0 %v1553
  %1874 = vmatpush.msra.mxu0 %v1550
  %1875 = vmatpush.msra.mxu0 %v1547
  %1876 = vmatpush.msra.mxu0 %v1544
  %1877 = vmatpush.msra.mxu0 %v1541
  %1878 = vmatpush.msra.mxu0 %v1538
  %1879 = vmatpush.msra.mxu0 %v1535
  %1880 = vmatpush.msra.mxu0 %v1532
  %1881 = vmatpush.msra.mxu0 %v1529
  %1882 = vmatpush.msra.mxu0 %v1526
  %1883 = vmatpush.msra.mxu0 %v1523
  %1884 = vmatpush.msra.mxu0 %v1520
  %1885 = vmatpush.msra.mxu0 %v1517
  %1886 = vmatpush.msra.mxu0 %v1514
  %1887 = vmatmul.f32.gmra.mxu0 %v1489
  %v1888 = vpop.f32.mrf.mxu0
  %v1889 = vadd.f32 %v1705, %v1888
  %1890 = vdwg.mxu0
  %1891 = vmatpush.msra.mxu0 %v1607
  %1892 = vmatpush.msra.mxu0 %v1604
  %1893 = vmatpush.msra.mxu0 %v1601
  %1894 = vmatpush.msra.mxu0 %v1598
  %1895 = vmatpush.msra.mxu0 %v1595
  %1896 = vmatpush.msra.mxu0 %v1592
  %1897 = vmatpush.msra.mxu0 %v1589
  %1898 = vmatpush.msra.mxu0 %v1586
  %1899 = vmatpush.msra.mxu0 %v1583
  %1900 = vmatpush.msra.mxu0 %v1580
  %1901 = vmatpush.msra.mxu0 %v1577
  %1902 = vmatpush.msra.mxu0 %v1574
  %1903 = vmatpush.msra.mxu0 %v1571
  %1904 = vmatpush.msra.mxu0 %v1568
  %1905 = vmatpush.msra.mxu0 %v1565
  %1906 = vmatpush.msra.mxu0 %v1562
  %1907 = vmatmul.f32.gmra.mxu0 %v1510
  %v1908 = vpop.f32.mrf.mxu0
  %v1909 = vadd.f32 %v1889, %v1908
  %1910 = vdwg.mxu0
  %1911 = vmatpush.msra.mxu0 %v1655
  %1912 = vmatpush.msra.mxu0 %v1652
  %1913 = vmatpush.msra.mxu0 %v1649
  %1914 = vmatpush.msra.mxu0 %v1646
  %1915 = vmatpush.msra.mxu0 %v1643
  %1916 = vmatpush.msra.mxu0 %v1640
  %1917 = vmatpush.msra.mxu0 %v1637
  %1918 = vmatpush.msra.mxu0 %v1634
  %1919 = vmatpush.msra.mxu0 %v1631
  %1920 = vmatpush.msra.mxu0 %v1628
  %1921 = vmatpush.msra.mxu0 %v1625
  %1922 = vmatpush.msra.mxu0 %v1622
  %1923 = vmatpush.msra.mxu0 %v1619
  %1924 = vmatpush.msra.mxu0 %v1616
  %1925 = vmatpush.msra.mxu0 %v1613
  %1926 = vmatpush.msra.mxu0 %v1610
  %1927 = vmatmul.f32.gmra.mxu0 %v1511
  %v1928 = vpop.f32.mrf.mxu0
  %v1929 = vadd.f32 %v1909, %v1928
  %1930 = vdwg.mxu0
  %1931 = vmatpush.msra.mxu0 0.0
  %1932 = vmatpush.msra.mxu0 %v1700
  %1933 = vmatpush.msra.mxu0 %v1697
  %1934 = vmatpush.msra.mxu0 %v1694
  %1935 = vmatpush.msra.mxu0 %v1691
  %1936 = vmatpush.msra.mxu0 %v1688
  %1937 = vmatpush.msra.mxu0 %v1685
  %1938 = vmatpush.msra.mxu0 %v1682
  %1939 = vmatpush.msra.mxu0 %v1679
  %1940 = vmatpush.msra.mxu0 %v1676
  %1941 = vmatpush.msra.mxu0 %v1673
  %1942 = vmatpush.msra.mxu0 %v1670
  %1943 = vmatpush.msra.mxu0 %v1667
  %1944 = vmatpush.msra.mxu0 %v1664
  %1945 = vmatpush.msra.mxu0 %v1661
  %1946 = vmatpush.msra.mxu0 %v1658
  %1947 = vmatmul.f32.gmra.mxu0 %v1709
  %v1948 = vpop.f32.mrf.mxu0
  %v1949 = vadd.f32 %v1929, %v1948
  %1950 = vdwg.mxu0
  %v1951 = vtanh.pop %v1789
  %v1952 = vtanh.pop %v1869
  %v1953 = vtanh.pop %v1949
  %1956 = vrot.lane.b32.xlu0 %v1951, 48
  %v1957 = vpop.permute.xlu0 %1956
  %1958 = vrot.lane.b32.xlu0 %v1952, 48
  %v1959 = vpop.permute.xlu0 %1958
  %v1960 = vsel %vm488, %v1957, %v1959
  %v1962 = vadd.f32 %v1951, %v1960
  %1963 = vrot.lane.b32.xlu0 %v1952, 96
  %v1964 = vpop.permute.xlu0 %1963
  %v1966 = vadd.f32 %v1962, %v1964
  %1968 = vrot.lane.b32.xlu0 %v1952, 16
  %v1969 = vpop.permute.xlu0 %1968
  %1970 = vrot.lane.b32.xlu0 %v1953, 16
  %v1971 = vpop.permute.xlu0 %1970
  %v1972 = vsel %vm501, %v1969, %v1971
  %v1974 = vadd.f32 %v1966, %v1972
  %v1975 = vmul.f32 %v1974, 0.25
  %s1976 = scalar_lea.vmem %s3, 24
  %1977 = vst.msk [vmem:[%s1976] sm:$0x1f] %vm506, %v1975
  %s1978 = scalar_lea.vmem %s0, 64
  %v1979 = vld [vmem:[%s1978] sm:$0x7f]
  %v1980 = vld [vmem:[%s1978 + $0x8] sm:$0x7f]
  %v1983 = vrot.slane %v1979, 1
  %v1984 = vrot.slane %v1980, 1
  %1985 = vrot.lane.b32.xlu0 %v1983, 40
  %v1986 = vpop.permute.xlu0 %1985
  %1987 = vrot.lane.b32.xlu0 %v1984, 40
  %v1988 = vpop.permute.xlu0 %1987
  %v1989 = vsel %vm24, %v1986, %v1988
  %v1992 = vrot.slane %v1979, 2
  %v1993 = vrot.slane %v1980, 2
  %1994 = vrot.lane.b32.xlu0 %v1992, 80
  %v1995 = vpop.permute.xlu0 %1994
  %1996 = vrot.lane.b32.xlu0 %v1993, 80
  %v1997 = vpop.permute.xlu0 %1996
  %v1998 = vsel %vm34, %v1995, %v1997
  %v2000 = vsel %vm24, %v1980, %v1986
  %v2001 = vsel %vm34, %v1989, %v1995
  %v2002 = vld [vmem:[%s1] sm:$0xff]
  %v2003 = vld [vmem:[%s1 + $0x8] sm:$0xff]
  %v2004 = vld [vmem:[%s1 + $0x10] sm:$0xff]
  %v2005 = vld [vmem:[%s1 + $0x18] sm:$0xff]
  %v2006 = vld [vmem:[%s1 + $0x20] sm:$0xff]
  %v2007 = vld [vmem:[%s1 + $0x28] sm:$0xff]
  %v2008 = vld [vmem:[%s1 + $0x30] sm:$0xff]
  %v2009 = vld [vmem:[%s1 + $0x38] sm:$0xff]
  %v2010 = vld [vmem:[%s1 + $0x40] sm:$0xff]
  %v2011 = vld [vmem:[%s1 + $0x48] sm:$0xff]
  %v2012 = vld [vmem:[%s1 + $0x50] sm:$0xff]
  %v2013 = vld [vmem:[%s1 + $0x58] sm:$0xff]
  %v2014 = vld [vmem:[%s1 + $0x60] sm:$0xff]
  %v2015 = vld [vmem:[%s1 + $0x68] sm:$0xff]
  %v2016 = vld [vmem:[%s1 + $0x70] sm:$0xff]
  %v2017 = vld [vmem:[%s1 + $0x78] sm:$0xff]
  %v2018 = vld [vmem:[%s1 + $0x80] sm:$0xff]
  %v2019 = vld [vmem:[%s1 + $0x88] sm:$0xff]
  %v2020 = vld [vmem:[%s1 + $0x90] sm:$0xff]
  %v2021 = vld [vmem:[%s1 + $0x98] sm:$0xff]
  %v2022 = vld [vmem:[%s1 + $0xa0] sm:$0xff]
  %v2023 = vld [vmem:[%s1 + $0xa8] sm:$0xff]
  %v2024 = vld [vmem:[%s1 + $0xb0] sm:$0xff]
  %v2025 = vld [vmem:[%s1 + $0xb8] sm:$0xff]
  %v2026 = vld [vmem:[%s1 + $0xc0] sm:$0xff]
  %v2027 = vld [vmem:[%s1 + $0xc8] sm:$0xff]
  %v2028 = vld [vmem:[%s1 + $0xd0] sm:$0xff]
  %v2029 = vld [vmem:[%s1 + $0xd8] sm:$0xff]
  %v2030 = vld [vmem:[%s1 + $0xe0] sm:$0xff]
  %v2031 = vld [vmem:[%s1 + $0xe8] sm:$0xff]
  %v2032 = vld [vmem:[%s1 + $0xf0] sm:$0xff]
  %v2033 = vld [vmem:[%s1 + $0xf8] sm:$0xff]
  %v2034 = vld [vmem:[%s1 + $0x100] sm:$0xff]
  %v2035 = vld [vmem:[%s1 + $0x108] sm:$0xff]
  %v2036 = vld [vmem:[%s1 + $0x110] sm:$0xff]
  %v2037 = vld [vmem:[%s1 + $0x118] sm:$0xff]
  %v2038 = vld [vmem:[%s1 + $0x120] sm:$0xff]
  %v2039 = vld [vmem:[%s1 + $0x128] sm:$0xff]
  %v2040 = vld [vmem:[%s1 + $0x130] sm:$0xff]
  %v2041 = vld [vmem:[%s1 + $0x138] sm:$0xff]
  %v2042 = vld [vmem:[%s1 + $0x140] sm:$0xff]
  %v2043 = vld [vmem:[%s1 + $0x148] sm:$0xff]
  %v2044 = vld [vmem:[%s1 + $0x150] sm:$0xff]
  %v2045 = vld [vmem:[%s1 + $0x158] sm:$0xff]
  %v2046 = vld [vmem:[%s1 + $0x160] sm:$0xff]
  %v2047 = vld [vmem:[%s1 + $0x168] sm:$0xff]
  %v2048 = vld [vmem:[%s1 + $0x170] sm:$0xff]
  %v2049 = vld [vmem:[%s1 + $0x178] sm:$0xff]
  %v2050 = vld [vmem:[%s1 + $0x180] sm:$0xff]
  %v2051 = vld [vmem:[%s1 + $0x188] sm:$0xff]
  %v2052 = vld [vmem:[%s1 + $0x190] sm:$0xff]
  %v2053 = vld [vmem:[%s1 + $0x198] sm:$0xff]
  %v2054 = vld [vmem:[%s1 + $0x1a0] sm:$0xff]
  %v2055 = vld [vmem:[%s1 + $0x1a8] sm:$0xff]
  %v2056 = vld [vmem:[%s1 + $0x1b0] sm:$0xff]
  %v2057 = vld [vmem:[%s1 + $0x1b8] sm:$0xff]
  %v2058 = vld [vmem:[%s1 + $0x1c0] sm:$0xff]
  %v2059 = vld [vmem:[%s1 + $0x1c8] sm:$0xff]
  %v2060 = vld [vmem:[%s1 + $0x1d0] sm:$0xff]
  %v2061 = vld [vmem:[%s1 + $0x1d8] sm:$0xff]
  %v2062 = vld [vmem:[%s1 + $0x1e0] sm:$0xff]
  %v2063 = vld [vmem:[%s1 + $0x1e8] sm:$0xff]
  %v2064 = vld [vmem:[%s1 + $0x1f0] sm:$0xff]
  %v2065 = vld [vmem:[%s1 + $0x1f8] sm:$0xff]
  %v2066 = vld [vmem:[%s1 + $0x200] sm:$0xff]
  %v2067 = vld [vmem:[%s1 + $0x208] sm:$0xff]
  %v2068 = vld [vmem:[%s1 + $0x210] sm:$0xff]
  %v2069 = vld [vmem:[%s1 + $0x218] sm:$0xff]
  %v2070 = vld [vmem:[%s1 + $0x220] sm:$0xff]
  %v2071 = vld [vmem:[%s1 + $0x228] sm:$0xff]
  %v2072 = vld [vmem:[%s1 + $0x230] sm:$0xff]
  %v2073 = vld [vmem:[%s1 + $0x238] sm:$0xff]
  %v2074 = vld [vmem:[%s1 + $0x240] sm:$0xff]
  %v2075 = vld [vmem:[%s1 + $0x248] sm:$0xff]
  %v2076 = vld [vmem:[%s1 + $0x250] sm:$0xff]
  %v2077 = vld [vmem:[%s1 + $0x258] sm:$0xff]
  %v2078 = vld [vmem:[%s1 + $0x260] sm:$0xff]
  %v2079 = vld [vmem:[%s1 + $0x268] sm:$0xff]
  %v2080 = vld [vmem:[%s1 + $0x270] sm:$0xff]
  %v2081 = vld [vmem:[%s1 + $0x278] sm:$0xff]
  %v2082 = vld [vmem:[%s1 + $0x280] sm:$0xff]
  %v2083 = vld [vmem:[%s1 + $0x288] sm:$0xff]
  %v2084 = vld [vmem:[%s1 + $0x290] sm:$0xff]
  %v2085 = vld [vmem:[%s1 + $0x298] sm:$0xff]
  %v2086 = vld [vmem:[%s1 + $0x2a0] sm:$0xff]
  %v2087 = vld [vmem:[%s1 + $0x2a8] sm:$0xff]
  %v2088 = vld [vmem:[%s1 + $0x2b0] sm:$0xff]
  %v2089 = vld [vmem:[%s1 + $0x2b8] sm:$0xff]
  %v2090 = vld [vmem:[%s1 + $0x2c0] sm:$0xff]
  %v2091 = vld [vmem:[%s1 + $0x2c8] sm:$0xff]
  %v2092 = vld [vmem:[%s1 + $0x2d0] sm:$0xff]
  %v2093 = vld [vmem:[%s1 + $0x2d8] sm:$0xff]
  %v2094 = vld [vmem:[%s1 + $0x2e0] sm:$0xff]
  %v2095 = vld [vmem:[%s1 + $0x2e8] sm:$0xff]
  %v2096 = vld [vmem:[%s1 + $0x2f0] sm:$0xff]
  %v2097 = vld [vmem:[%s1 + $0x2f8] sm:$0xff]
  %v2098 = vld [vmem:[%s1 + $0x300] sm:$0xff]
  %v2099 = vld [vmem:[%s1 + $0x308] sm:$0xff]
  %v2100 = vld [vmem:[%s1 + $0x310] sm:$0xff]
  %v2101 = vld [vmem:[%s1 + $0x318] sm:$0xff]
  %v2102 = vld [vmem:[%s1 + $0x320] sm:$0xff]
  %v2103 = vld [vmem:[%s1 + $0x328] sm:$0xff]
  %v2104 = vld [vmem:[%s1 + $0x330] sm:$0xff]
  %v2105 = vld [vmem:[%s1 + $0x338] sm:$0xff]
  %v2106 = vld [vmem:[%s1 + $0x340] sm:$0xff]
  %v2107 = vld [vmem:[%s1 + $0x348] sm:$0xff]
  %v2108 = vld [vmem:[%s1 + $0x350] sm:$0xff]
  %v2109 = vld [vmem:[%s1 + $0x358] sm:$0xff]
  %v2110 = vld [vmem:[%s1 + $0x360] sm:$0xff]
  %v2111 = vld [vmem:[%s1 + $0x368] sm:$0xff]
  %v2112 = vld [vmem:[%s1 + $0x370] sm:$0xff]
  %v2113 = vld [vmem:[%s1 + $0x378] sm:$0xff]
  %v2114 = vld [vmem:[%s1 + $0x380] sm:$0xff]
  %v2115 = vld [vmem:[%s1 + $0x388] sm:$0xff]
  %v2116 = vld [vmem:[%s1 + $0x390] sm:$0xff]
  %v2117 = vld [vmem:[%s1 + $0x398] sm:$0xff]
  %v2118 = vld [vmem:[%s1 + $0x3a0] sm:$0xff]
  %v2119 = vld [vmem:[%s1 + $0x3a8] sm:$0xff]
  %v2120 = vld [vmem:[%s1 + $0x3b0] sm:$0xff]
  %v2121 = vld [vmem:[%s1 + $0x3b8] sm:$0xff]
  %v2122 = vld [vmem:[%s1 + $0x3c0] sm:$0xff]
  %v2123 = vld [vmem:[%s1 + $0x3c8] sm:$0xff]
  %v2124 = vld [vmem:[%s1 + $0x3d0] sm:$0xff]
  %v2125 = vld [vmem:[%s1 + $0x3d8] sm:$0xff]
  %v2126 = vld [vmem:[%s1 + $0x3e0] sm:$0xff]
  %v2127 = vld [vmem:[%s1 + $0x3e8] sm:$0xff]
  %v2128 = vld [vmem:[%s1 + $0x3f0] sm:$0xff]
  %v2129 = vld [vmem:[%s1 + $0x3f8] sm:$0xff]
  %v2130 = vld [vmem:[%s1 + $0x400] sm:$0xff]
  %v2131 = vld [vmem:[%s1 + $0x408] sm:$0xff]
  %v2132 = vld [vmem:[%s1 + $0x410] sm:$0xff]
  %v2133 = vld [vmem:[%s1 + $0x418] sm:$0xff]
  %v2134 = vld [vmem:[%s1 + $0x420] sm:$0xff]
  %v2135 = vld [vmem:[%s1 + $0x428] sm:$0xff]
  %v2136 = vld [vmem:[%s1 + $0x430] sm:$0xff]
  %v2137 = vld [vmem:[%s1 + $0x438] sm:$0xff]
  %v2138 = vld [vmem:[%s1 + $0x440] sm:$0xff]
  %v2139 = vld [vmem:[%s1 + $0x448] sm:$0xff]
  %v2140 = vld [vmem:[%s1 + $0x450] sm:$0xff]
  %v2141 = vld [vmem:[%s1 + $0x458] sm:$0xff]
  %v2142 = vld [vmem:[%s1 + $0x460] sm:$0xff]
  %v2143 = vld [vmem:[%s1 + $0x468] sm:$0xff]
  %v2144 = vld [vmem:[%s1 + $0x470] sm:$0xff]
  %v2145 = vld [vmem:[%s1 + $0x478] sm:$0xff]
  %v2146 = vld [vmem:[%s1 + $0x480] sm:$0xff]
  %v2147 = vld [vmem:[%s1 + $0x488] sm:$0xff]
  %v2148 = vld [vmem:[%s1 + $0x490] sm:$0xff]
  %v2149 = vld [vmem:[%s1 + $0x498] sm:$0xff]
  %v2150 = vld [vmem:[%s1 + $0x4a0] sm:$0xff]
  %v2151 = vld [vmem:[%s1 + $0x4a8] sm:$0xff]
  %v2152 = vld [vmem:[%s1 + $0x4b0] sm:$0xff]
  %v2153 = vld [vmem:[%s1 + $0x4b8] sm:$0xff]
  %v2154 = vld [vmem:[%s1 + $0x4c0] sm:$0xff]
  %v2155 = vld [vmem:[%s1 + $0x4c8] sm:$0xff]
  %v2156 = vld [vmem:[%s1 + $0x4d0] sm:$0xff]
  %v2157 = vld [vmem:[%s1 + $0x4d8] sm:$0xff]
  %v2158 = vld [vmem:[%s1 + $0x4e0] sm:$0xff]
  %v2159 = vld [vmem:[%s1 + $0x4e8] sm:$0xff]
  %v2160 = vld [vmem:[%s1 + $0x4f0] sm:$0xff]
  %v2161 = vld [vmem:[%s1 + $0x4f8] sm:$0xff]
  %v2162 = vld [vmem:[%s1 + $0x500] sm:$0xff]
  %v2163 = vld [vmem:[%s1 + $0x508] sm:$0xff]
  %v2164 = vld [vmem:[%s1 + $0x510] sm:$0xff]
  %v2165 = vld [vmem:[%s1 + $0x518] sm:$0xff]
  %v2166 = vld [vmem:[%s1 + $0x520] sm:$0xff]
  %v2167 = vld [vmem:[%s1 + $0x528] sm:$0xff]
  %v2168 = vld [vmem:[%s1 + $0x530] sm:$0xff]
  %v2169 = vld [vmem:[%s1 + $0x538] sm:$0xff]
  %v2170 = vld [vmem:[%s1 + $0x540] sm:$0xff]
  %v2171 = vld [vmem:[%s1 + $0x548] sm:$0xff]
  %v2172 = vld [vmem:[%s1 + $0x550] sm:$0xff]
  %v2173 = vld [vmem:[%s1 + $0x558] sm:$0xff]
  %v2174 = vld [vmem:[%s1 + $0x560] sm:$0xff]
  %v2175 = vld [vmem:[%s1 + $0x568] sm:$0xff]
  %v2176 = vld [vmem:[%s1 + $0x570] sm:$0xff]
  %v2177 = vld [vmem:[%s1 + $0x578] sm:$0xff]
  %v2178 = vld [vmem:[%s1 + $0x580] sm:$0xff]
  %v2179 = vld [vmem:[%s1 + $0x588] sm:$0xff]
  %v2180 = vld [vmem:[%s1 + $0x590] sm:$0xff]
  %v2181 = vld [vmem:[%s1 + $0x598] sm:$0xff]
  %v2182 = vld [vmem:[%s1 + $0x5a0] sm:$0xff]
  %v2183 = vld [vmem:[%s1 + $0x5a8] sm:$0xff]
  %v2184 = vld [vmem:[%s1 + $0x5b0] sm:$0xff]
  %v2185 = vld [vmem:[%s1 + $0x5b8] sm:$0xff]
  %v2186 = vld [vmem:[%s1 + $0x5c0] sm:$0xff]
  %v2187 = vld [vmem:[%s1 + $0x5c8] sm:$0xff]
  %v2188 = vld [vmem:[%s1 + $0x5d0] sm:$0xff]
  %v2189 = vld [vmem:[%s1 + $0x5d8] sm:$0xff]
  %v2190 = vld [vmem:[%s1 + $0x5e0] sm:$0xff]
  %v2191 = vld [vmem:[%s2] sm:$0x7]
  %v2193 = vperm.slane %v2191, 0
  %v2194 = vperm.slane %v2191, 1
  %v2195 = vperm.slane %v2191, 2
  %v2199 = vsel %vm236, %v1998, 0
  %2201 = vmatpush.msra.mxu0 %v2047
  %2202 = vmatpush.msra.mxu0 %v2044
  %2203 = vmatpush.msra.mxu0 %v2041
  %2204 = vmatpush.msra.mxu0 %v2038
  %2205 = vmatpush.msra.mxu0 %v2035
  %2206 = vmatpush.msra.mxu0 %v2032
  %2207 = vmatpush.msra.mxu0 %v2029
  %2208 = vmatpush.msra.mxu0 %v2026
  %2209 = vmatpush.msra.mxu0 %v2023
  %2210 = vmatpush.msra.mxu0 %v2020
  %2211 = vmatpush.msra.mxu0 %v2017
  %2212 = vmatpush.msra.mxu0 %v2014
  %2213 = vmatpush.msra.mxu0 %v2011
  %2214 = vmatpush.msra.mxu0 %v2008
  %2215 = vmatpush.msra.mxu0 %v2005
  %2216 = vmatpush.msra.mxu0 %v2002
  %2217 = vmatmul.f32.gmra.mxu0 %v1979
  %v2218 = vpop.f32.mrf.mxu0
  %v2219 = vadd.f32 %v2193, %v2218
  %2220 = vdwg.mxu0
  %2221 = vmatpush.msra.mxu0 %v2095
  %2222 = vmatpush.msra.mxu0 %v2092
  %2223 = vmatpush.msra.mxu0 %v2089
  %2224 = vmatpush.msra.mxu0 %v2086
  %2225 = vmatpush.msra.mxu0 %v2083
  %2226 = vmatpush.msra.mxu0 %v2080
  %2227 = vmatpush.msra.mxu0 %v2077
  %2228 = vmatpush.msra.mxu0 %v2074
  %2229 = vmatpush.msra.mxu0 %v2071
  %2230 = vmatpush.msra.mxu0 %v2068
  %2231 = vmatpush.msra.mxu0 %v2065
  %2232 = vmatpush.msra.mxu0 %v2062
  %2233 = vmatpush.msra.mxu0 %v2059
  %2234 = vmatpush.msra.mxu0 %v2056
  %2235 = vmatpush.msra.mxu0 %v2053
  %2236 = vmatpush.msra.mxu0 %v2050
  %2237 = vmatmul.f32.gmra.mxu0 %v2000
  %v2238 = vpop.f32.mrf.mxu0
  %v2239 = vadd.f32 %v2219, %v2238
  %2240 = vdwg.mxu0
  %2241 = vmatpush.msra.mxu0 %v2143
  %2242 = vmatpush.msra.mxu0 %v2140
  %2243 = vmatpush.msra.mxu0 %v2137
  %2244 = vmatpush.msra.mxu0 %v2134
  %2245 = vmatpush.msra.mxu0 %v2131
  %2246 = vmatpush.msra.mxu0 %v2128
  %2247 = vmatpush.msra.mxu0 %v2125
  %2248 = vmatpush.msra.mxu0 %v2122
  %2249 = vmatpush.msra.mxu0 %v2119
  %2250 = vmatpush.msra.mxu0 %v2116
  %2251 = vmatpush.msra.mxu0 %v2113
  %2252 = vmatpush.msra.mxu0 %v2110
  %2253 = vmatpush.msra.mxu0 %v2107
  %2254 = vmatpush.msra.mxu0 %v2104
  %2255 = vmatpush.msra.mxu0 %v2101
  %2256 = vmatpush.msra.mxu0 %v2098
  %2257 = vmatmul.f32.gmra.mxu0 %v2001
  %v2258 = vpop.f32.mrf.mxu0
  %v2259 = vadd.f32 %v2239, %v2258
  %2260 = vdwg.mxu0
  %2261 = vmatpush.msra.mxu0 0.0
  %2262 = vmatpush.msra.mxu0 %v2188
  %2263 = vmatpush.msra.mxu0 %v2185
  %2264 = vmatpush.msra.mxu0 %v2182
  %2265 = vmatpush.msra.mxu0 %v2179
  %2266 = vmatpush.msra.mxu0 %v2176
  %2267 = vmatpush.msra.mxu0 %v2173
  %2268 = vmatpush.msra.mxu0 %v2170
  %2269 = vmatpush.msra.mxu0 %v2167
  %2270 = vmatpush.msra.mxu0 %v2164
  %2271 = vmatpush.msra.mxu0 %v2161
  %2272 = vmatpush.msra.mxu0 %v2158
  %2273 = vmatpush.msra.mxu0 %v2155
  %2274 = vmatpush.msra.mxu0 %v2152
  %2275 = vmatpush.msra.mxu0 %v2149
  %2276 = vmatpush.msra.mxu0 %v2146
  %2277 = vmatmul.f32.gmra.mxu0 %v2199
  %v2278 = vpop.f32.mrf.mxu0
  %v2279 = vadd.f32 %v2259, %v2278
  %2280 = vdwg.mxu0
  %2281 = vmatpush.msra.mxu0 %v2048
  %2282 = vmatpush.msra.mxu0 %v2045
  %2283 = vmatpush.msra.mxu0 %v2042
  %2284 = vmatpush.msra.mxu0 %v2039
  %2285 = vmatpush.msra.mxu0 %v2036
  %2286 = vmatpush.msra.mxu0 %v2033
  %2287 = vmatpush.msra.mxu0 %v2030
  %2288 = vmatpush.msra.mxu0 %v2027
  %2289 = vmatpush.msra.mxu0 %v2024
  %2290 = vmatpush.msra.mxu0 %v2021
  %2291 = vmatpush.msra.mxu0 %v2018
  %2292 = vmatpush.msra.mxu0 %v2015
  %2293 = vmatpush.msra.mxu0 %v2012
  %2294 = vmatpush.msra.mxu0 %v2009
  %2295 = vmatpush.msra.mxu0 %v2006
  %2296 = vmatpush.msra.mxu0 %v2003
  %2297 = vmatmul.f32.gmra.mxu0 %v1979
  %v2298 = vpop.f32.mrf.mxu0
  %v2299 = vadd.f32 %v2194, %v2298
  %2300 = vdwg.mxu0
  %2301 = vmatpush.msra.mxu0 %v2096
  %2302 = vmatpush.msra.mxu0 %v2093
  %2303 = vmatpush.msra.mxu0 %v2090
  %2304 = vmatpush.msra.mxu0 %v2087
  %2305 = vmatpush.msra.mxu0 %v2084
  %2306 = vmatpush.msra.mxu0 %v2081
  %2307 = vmatpush.msra.mxu0 %v2078
  %2308 = vmatpush.msra.mxu0 %v2075
  %2309 = vmatpush.msra.mxu0 %v2072
  %2310 = vmatpush.msra.mxu0 %v2069
  %2311 = vmatpush.msra.mxu0 %v2066
  %2312 = vmatpush.msra.mxu0 %v2063
  %2313 = vmatpush.msra.mxu0 %v2060
  %2314 = vmatpush.msra.mxu0 %v2057
  %2315 = vmatpush.msra.mxu0 %v2054
  %2316 = vmatpush.msra.mxu0 %v2051
  %2317 = vmatmul.f32.gmra.mxu0 %v2000
  %v2318 = vpop.f32.mrf.mxu0
  %v2319 = vadd.f32 %v2299, %v2318
  %2320 = vdwg.mxu0
  %2321 = vmatpush.msra.mxu0 %v2144
  %2322 = vmatpush.msra.mxu0 %v2141
  %2323 = vmatpush.msra.mxu0 %v2138
  %2324 = vmatpush.msra.mxu0 %v2135
  %2325 = vmatpush.msra.mxu0 %v2132
  %2326 = vmatpush.msra.mxu0 %v2129
  %2327 = vmatpush.msra.mxu0 %v2126
  %2328 = vmatpush.msra.mxu0 %v2123
  %2329 = vmatpush.msra.mxu0 %v2120
  %2330 = vmatpush.msra.mxu0 %v2117
  %2331 = vmatpush.msra.mxu0 %v2114
  %2332 = vmatpush.msra.mxu0 %v2111
  %2333 = vmatpush.msra.mxu0 %v2108
  %2334 = vmatpush.msra.mxu0 %v2105
  %2335 = vmatpush.msra.mxu0 %v2102
  %2336 = vmatpush.msra.mxu0 %v2099
  %2337 = vmatmul.f32.gmra.mxu0 %v2001
  %v2338 = vpop.f32.mrf.mxu0
  %v2339 = vadd.f32 %v2319, %v2338
  %2340 = vdwg.mxu0
  %2341 = vmatpush.msra.mxu0 0.0
  %2342 = vmatpush.msra.mxu0 %v2189
  %2343 = vmatpush.msra.mxu0 %v2186
  %2344 = vmatpush.msra.mxu0 %v2183
  %2345 = vmatpush.msra.mxu0 %v2180
  %2346 = vmatpush.msra.mxu0 %v2177
  %2347 = vmatpush.msra.mxu0 %v2174
  %2348 = vmatpush.msra.mxu0 %v2171
  %2349 = vmatpush.msra.mxu0 %v2168
  %2350 = vmatpush.msra.mxu0 %v2165
  %2351 = vmatpush.msra.mxu0 %v2162
  %2352 = vmatpush.msra.mxu0 %v2159
  %2353 = vmatpush.msra.mxu0 %v2156
  %2354 = vmatpush.msra.mxu0 %v2153
  %2355 = vmatpush.msra.mxu0 %v2150
  %2356 = vmatpush.msra.mxu0 %v2147
  %2357 = vmatmul.f32.gmra.mxu0 %v2199
  %v2358 = vpop.f32.mrf.mxu0
  %v2359 = vadd.f32 %v2339, %v2358
  %2360 = vdwg.mxu0
  %2361 = vmatpush.msra.mxu0 %v2049
  %2362 = vmatpush.msra.mxu0 %v2046
  %2363 = vmatpush.msra.mxu0 %v2043
  %2364 = vmatpush.msra.mxu0 %v2040
  %2365 = vmatpush.msra.mxu0 %v2037
  %2366 = vmatpush.msra.mxu0 %v2034
  %2367 = vmatpush.msra.mxu0 %v2031
  %2368 = vmatpush.msra.mxu0 %v2028
  %2369 = vmatpush.msra.mxu0 %v2025
  %2370 = vmatpush.msra.mxu0 %v2022
  %2371 = vmatpush.msra.mxu0 %v2019
  %2372 = vmatpush.msra.mxu0 %v2016
  %2373 = vmatpush.msra.mxu0 %v2013
  %2374 = vmatpush.msra.mxu0 %v2010
  %2375 = vmatpush.msra.mxu0 %v2007
  %2376 = vmatpush.msra.mxu0 %v2004
  %2377 = vmatmul.f32.gmra.mxu0 %v1979
  %v2378 = vpop.f32.mrf.mxu0
  %v2379 = vadd.f32 %v2195, %v2378
  %2380 = vdwg.mxu0
  %2381 = vmatpush.msra.mxu0 %v2097
  %2382 = vmatpush.msra.mxu0 %v2094
  %2383 = vmatpush.msra.mxu0 %v2091
  %2384 = vmatpush.msra.mxu0 %v2088
  %2385 = vmatpush.msra.mxu0 %v2085
  %2386 = vmatpush.msra.mxu0 %v2082
  %2387 = vmatpush.msra.mxu0 %v2079
  %2388 = vmatpush.msra.mxu0 %v2076
  %2389 = vmatpush.msra.mxu0 %v2073
  %2390 = vmatpush.msra.mxu0 %v2070
  %2391 = vmatpush.msra.mxu0 %v2067
  %2392 = vmatpush.msra.mxu0 %v2064
  %2393 = vmatpush.msra.mxu0 %v2061
  %2394 = vmatpush.msra.mxu0 %v2058
  %2395 = vmatpush.msra.mxu0 %v2055
  %2396 = vmatpush.msra.mxu0 %v2052
  %2397 = vmatmul.f32.gmra.mxu0 %v2000
  %v2398 = vpop.f32.mrf.mxu0
  %v2399 = vadd.f32 %v2379, %v2398
  %2400 = vdwg.mxu0
  %2401 = vmatpush.msra.mxu0 %v2145
  %2402 = vmatpush.msra.mxu0 %v2142
  %2403 = vmatpush.msra.mxu0 %v2139
  %2404 = vmatpush.msra.mxu0 %v2136
  %2405 = vmatpush.msra.mxu0 %v2133
  %2406 = vmatpush.msra.mxu0 %v2130
  %2407 = vmatpush.msra.mxu0 %v2127
  %2408 = vmatpush.msra.mxu0 %v2124
  %2409 = vmatpush.msra.mxu0 %v2121
  %2410 = vmatpush.msra.mxu0 %v2118
  %2411 = vmatpush.msra.mxu0 %v2115
  %2412 = vmatpush.msra.mxu0 %v2112
  %2413 = vmatpush.msra.mxu0 %v2109
  %2414 = vmatpush.msra.mxu0 %v2106
  %2415 = vmatpush.msra.mxu0 %v2103
  %2416 = vmatpush.msra.mxu0 %v2100
  %2417 = vmatmul.f32.gmra.mxu0 %v2001
  %v2418 = vpop.f32.mrf.mxu0
  %v2419 = vadd.f32 %v2399, %v2418
  %2420 = vdwg.mxu0
  %2421 = vmatpush.msra.mxu0 0.0
  %2422 = vmatpush.msra.mxu0 %v2190
  %2423 = vmatpush.msra.mxu0 %v2187
  %2424 = vmatpush.msra.mxu0 %v2184
  %2425 = vmatpush.msra.mxu0 %v2181
  %2426 = vmatpush.msra.mxu0 %v2178
  %2427 = vmatpush.msra.mxu0 %v2175
  %2428 = vmatpush.msra.mxu0 %v2172
  %2429 = vmatpush.msra.mxu0 %v2169
  %2430 = vmatpush.msra.mxu0 %v2166
  %2431 = vmatpush.msra.mxu0 %v2163
  %2432 = vmatpush.msra.mxu0 %v2160
  %2433 = vmatpush.msra.mxu0 %v2157
  %2434 = vmatpush.msra.mxu0 %v2154
  %2435 = vmatpush.msra.mxu0 %v2151
  %2436 = vmatpush.msra.mxu0 %v2148
  %2437 = vmatmul.f32.gmra.mxu0 %v2199
  %v2438 = vpop.f32.mrf.mxu0
  %v2439 = vadd.f32 %v2419, %v2438
  %2440 = vdwg.mxu0
  %v2441 = vtanh.pop %v2279
  %v2442 = vtanh.pop %v2359
  %v2443 = vtanh.pop %v2439
  %2446 = vrot.lane.b32.xlu0 %v2441, 48
  %v2447 = vpop.permute.xlu0 %2446
  %2448 = vrot.lane.b32.xlu0 %v2442, 48
  %v2449 = vpop.permute.xlu0 %2448
  %v2450 = vsel %vm488, %v2447, %v2449
  %v2452 = vadd.f32 %v2441, %v2450
  %2453 = vrot.lane.b32.xlu0 %v2442, 96
  %v2454 = vpop.permute.xlu0 %2453
  %v2456 = vadd.f32 %v2452, %v2454
  %2458 = vrot.lane.b32.xlu0 %v2442, 16
  %v2459 = vpop.permute.xlu0 %2458
  %2460 = vrot.lane.b32.xlu0 %v2443, 16
  %v2461 = vpop.permute.xlu0 %2460
  %v2462 = vsel %vm501, %v2459, %v2461
  %v2464 = vadd.f32 %v2456, %v2462
  %v2465 = vmul.f32 %v2464, 0.25
  %s2466 = scalar_lea.vmem %s3, 32
  %2467 = vst.msk [vmem:[%s2466] sm:$0x1f] %vm506, %v2465
  %s2468 = scalar_lea.vmem %s0, 80
  %v2469 = vld [vmem:[%s2468] sm:$0x7f]
  %v2470 = vld [vmem:[%s2468 + $0x8] sm:$0x7f]
  %v2473 = vrot.slane %v2469, 1
  %v2474 = vrot.slane %v2470, 1
  %2475 = vrot.lane.b32.xlu0 %v2473, 40
  %v2476 = vpop.permute.xlu0 %2475
  %2477 = vrot.lane.b32.xlu0 %v2474, 40
  %v2478 = vpop.permute.xlu0 %2477
  %v2479 = vsel %vm24, %v2476, %v2478
  %v2482 = vrot.slane %v2469, 2
  %v2483 = vrot.slane %v2470, 2
  %2484 = vrot.lane.b32.xlu0 %v2482, 80
  %v2485 = vpop.permute.xlu0 %2484
  %2486 = vrot.lane.b32.xlu0 %v2483, 80
  %v2487 = vpop.permute.xlu0 %2486
  %v2488 = vsel %vm34, %v2485, %v2487
  %v2490 = vsel %vm24, %v2470, %v2476
  %v2491 = vsel %vm34, %v2479, %v2485
  %v2492 = vld [vmem:[%s1] sm:$0xff]
  %v2493 = vld [vmem:[%s1 + $0x8] sm:$0xff]
  %v2494 = vld [vmem:[%s1 + $0x10] sm:$0xff]
  %v2495 = vld [vmem:[%s1 + $0x18] sm:$0xff]
  %v2496 = vld [vmem:[%s1 + $0x20] sm:$0xff]
  %v2497 = vld [vmem:[%s1 + $0x28] sm:$0xff]
  %v2498 = vld [vmem:[%s1 + $0x30] sm:$0xff]
  %v2499 = vld [vmem:[%s1 + $0x38] sm:$0xff]
  %v2500 = vld [vmem:[%s1 + $0x40] sm:$0xff]
  %v2501 = vld [vmem:[%s1 + $0x48] sm:$0xff]
  %v2502 = vld [vmem:[%s1 + $0x50] sm:$0xff]
  %v2503 = vld [vmem:[%s1 + $0x58] sm:$0xff]
  %v2504 = vld [vmem:[%s1 + $0x60] sm:$0xff]
  %v2505 = vld [vmem:[%s1 + $0x68] sm:$0xff]
  %v2506 = vld [vmem:[%s1 + $0x70] sm:$0xff]
  %v2507 = vld [vmem:[%s1 + $0x78] sm:$0xff]
  %v2508 = vld [vmem:[%s1 + $0x80] sm:$0xff]
  %v2509 = vld [vmem:[%s1 + $0x88] sm:$0xff]
  %v2510 = vld [vmem:[%s1 + $0x90] sm:$0xff]
  %v2511 = vld [vmem:[%s1 + $0x98] sm:$0xff]
  %v2512 = vld [vmem:[%s1 + $0xa0] sm:$0xff]
  %v2513 = vld [vmem:[%s1 + $0xa8] sm:$0xff]
  %v2514 = vld [vmem:[%s1 + $0xb0] sm:$0xff]
  %v2515 = vld [vmem:[%s1 + $0xb8] sm:$0xff]
  %v2516 = vld [vmem:[%s1 + $0xc0] sm:$0xff]
  %v2517 = vld [vmem:[%s1 + $0xc8] sm:$0xff]
  %v2518 = vld [vmem:[%s1 + $0xd0] sm:$0xff]
  %v2519 = vld [vmem:[%s1 + $0xd8] sm:$0xff]
  %v2520 = vld [vmem:[%s1 + $0xe0] sm:$0xff]
  %v2521 = vld [vmem:[%s1 + $0xe8] sm:$0xff]
  %v2522 = vld [vmem:[%s1 + $0xf0] sm:$0xff]
  %v2523 = vld [vmem:[%s1 + $0xf8] sm:$0xff]
  %v2524 = vld [vmem:[%s1 + $0x100] sm:$0xff]
  %v2525 = vld [vmem:[%s1 + $0x108] sm:$0xff]
  %v2526 = vld [vmem:[%s1 + $0x110] sm:$0xff]
  %v2527 = vld [vmem:[%s1 + $0x118] sm:$0xff]
  %v2528 = vld [vmem:[%s1 + $0x120] sm:$0xff]
  %v2529 = vld [vmem:[%s1 + $0x128] sm:$0xff]
  %v2530 = vld [vmem:[%s1 + $0x130] sm:$0xff]
  %v2531 = vld [vmem:[%s1 + $0x138] sm:$0xff]
  %v2532 = vld [vmem:[%s1 + $0x140] sm:$0xff]
  %v2533 = vld [vmem:[%s1 + $0x148] sm:$0xff]
  %v2534 = vld [vmem:[%s1 + $0x150] sm:$0xff]
  %v2535 = vld [vmem:[%s1 + $0x158] sm:$0xff]
  %v2536 = vld [vmem:[%s1 + $0x160] sm:$0xff]
  %v2537 = vld [vmem:[%s1 + $0x168] sm:$0xff]
  %v2538 = vld [vmem:[%s1 + $0x170] sm:$0xff]
  %v2539 = vld [vmem:[%s1 + $0x178] sm:$0xff]
  %v2540 = vld [vmem:[%s1 + $0x180] sm:$0xff]
  %v2541 = vld [vmem:[%s1 + $0x188] sm:$0xff]
  %v2542 = vld [vmem:[%s1 + $0x190] sm:$0xff]
  %v2543 = vld [vmem:[%s1 + $0x198] sm:$0xff]
  %v2544 = vld [vmem:[%s1 + $0x1a0] sm:$0xff]
  %v2545 = vld [vmem:[%s1 + $0x1a8] sm:$0xff]
  %v2546 = vld [vmem:[%s1 + $0x1b0] sm:$0xff]
  %v2547 = vld [vmem:[%s1 + $0x1b8] sm:$0xff]
  %v2548 = vld [vmem:[%s1 + $0x1c0] sm:$0xff]
  %v2549 = vld [vmem:[%s1 + $0x1c8] sm:$0xff]
  %v2550 = vld [vmem:[%s1 + $0x1d0] sm:$0xff]
  %v2551 = vld [vmem:[%s1 + $0x1d8] sm:$0xff]
  %v2552 = vld [vmem:[%s1 + $0x1e0] sm:$0xff]
  %v2553 = vld [vmem:[%s1 + $0x1e8] sm:$0xff]
  %v2554 = vld [vmem:[%s1 + $0x1f0] sm:$0xff]
  %v2555 = vld [vmem:[%s1 + $0x1f8] sm:$0xff]
  %v2556 = vld [vmem:[%s1 + $0x200] sm:$0xff]
  %v2557 = vld [vmem:[%s1 + $0x208] sm:$0xff]
  %v2558 = vld [vmem:[%s1 + $0x210] sm:$0xff]
  %v2559 = vld [vmem:[%s1 + $0x218] sm:$0xff]
  %v2560 = vld [vmem:[%s1 + $0x220] sm:$0xff]
  %v2561 = vld [vmem:[%s1 + $0x228] sm:$0xff]
  %v2562 = vld [vmem:[%s1 + $0x230] sm:$0xff]
  %v2563 = vld [vmem:[%s1 + $0x238] sm:$0xff]
  %v2564 = vld [vmem:[%s1 + $0x240] sm:$0xff]
  %v2565 = vld [vmem:[%s1 + $0x248] sm:$0xff]
  %v2566 = vld [vmem:[%s1 + $0x250] sm:$0xff]
  %v2567 = vld [vmem:[%s1 + $0x258] sm:$0xff]
  %v2568 = vld [vmem:[%s1 + $0x260] sm:$0xff]
  %v2569 = vld [vmem:[%s1 + $0x268] sm:$0xff]
  %v2570 = vld [vmem:[%s1 + $0x270] sm:$0xff]
  %v2571 = vld [vmem:[%s1 + $0x278] sm:$0xff]
  %v2572 = vld [vmem:[%s1 + $0x280] sm:$0xff]
  %v2573 = vld [vmem:[%s1 + $0x288] sm:$0xff]
  %v2574 = vld [vmem:[%s1 + $0x290] sm:$0xff]
  %v2575 = vld [vmem:[%s1 + $0x298] sm:$0xff]
  %v2576 = vld [vmem:[%s1 + $0x2a0] sm:$0xff]
  %v2577 = vld [vmem:[%s1 + $0x2a8] sm:$0xff]
  %v2578 = vld [vmem:[%s1 + $0x2b0] sm:$0xff]
  %v2579 = vld [vmem:[%s1 + $0x2b8] sm:$0xff]
  %v2580 = vld [vmem:[%s1 + $0x2c0] sm:$0xff]
  %v2581 = vld [vmem:[%s1 + $0x2c8] sm:$0xff]
  %v2582 = vld [vmem:[%s1 + $0x2d0] sm:$0xff]
  %v2583 = vld [vmem:[%s1 + $0x2d8] sm:$0xff]
  %v2584 = vld [vmem:[%s1 + $0x2e0] sm:$0xff]
  %v2585 = vld [vmem:[%s1 + $0x2e8] sm:$0xff]
  %v2586 = vld [vmem:[%s1 + $0x2f0] sm:$0xff]
  %v2587 = vld [vmem:[%s1 + $0x2f8] sm:$0xff]
  %v2588 = vld [vmem:[%s1 + $0x300] sm:$0xff]
  %v2589 = vld [vmem:[%s1 + $0x308] sm:$0xff]
  %v2590 = vld [vmem:[%s1 + $0x310] sm:$0xff]
  %v2591 = vld [vmem:[%s1 + $0x318] sm:$0xff]
  %v2592 = vld [vmem:[%s1 + $0x320] sm:$0xff]
  %v2593 = vld [vmem:[%s1 + $0x328] sm:$0xff]
  %v2594 = vld [vmem:[%s1 + $0x330] sm:$0xff]
  %v2595 = vld [vmem:[%s1 + $0x338] sm:$0xff]
  %v2596 = vld [vmem:[%s1 + $0x340] sm:$0xff]
  %v2597 = vld [vmem:[%s1 + $0x348] sm:$0xff]
  %v2598 = vld [vmem:[%s1 + $0x350] sm:$0xff]
  %v2599 = vld [vmem:[%s1 + $0x358] sm:$0xff]
  %v2600 = vld [vmem:[%s1 + $0x360] sm:$0xff]
  %v2601 = vld [vmem:[%s1 + $0x368] sm:$0xff]
  %v2602 = vld [vmem:[%s1 + $0x370] sm:$0xff]
  %v2603 = vld [vmem:[%s1 + $0x378] sm:$0xff]
  %v2604 = vld [vmem:[%s1 + $0x380] sm:$0xff]
  %v2605 = vld [vmem:[%s1 + $0x388] sm:$0xff]
  %v2606 = vld [vmem:[%s1 + $0x390] sm:$0xff]
  %v2607 = vld [vmem:[%s1 + $0x398] sm:$0xff]
  %v2608 = vld [vmem:[%s1 + $0x3a0] sm:$0xff]
  %v2609 = vld [vmem:[%s1 + $0x3a8] sm:$0xff]
  %v2610 = vld [vmem:[%s1 + $0x3b0] sm:$0xff]
  %v2611 = vld [vmem:[%s1 + $0x3b8] sm:$0xff]
  %v2612 = vld [vmem:[%s1 + $0x3c0] sm:$0xff]
  %v2613 = vld [vmem:[%s1 + $0x3c8] sm:$0xff]
  %v2614 = vld [vmem:[%s1 + $0x3d0] sm:$0xff]
  %v2615 = vld [vmem:[%s1 + $0x3d8] sm:$0xff]
  %v2616 = vld [vmem:[%s1 + $0x3e0] sm:$0xff]
  %v2617 = vld [vmem:[%s1 + $0x3e8] sm:$0xff]
  %v2618 = vld [vmem:[%s1 + $0x3f0] sm:$0xff]
  %v2619 = vld [vmem:[%s1 + $0x3f8] sm:$0xff]
  %v2620 = vld [vmem:[%s1 + $0x400] sm:$0xff]
  %v2621 = vld [vmem:[%s1 + $0x408] sm:$0xff]
  %v2622 = vld [vmem:[%s1 + $0x410] sm:$0xff]
  %v2623 = vld [vmem:[%s1 + $0x418] sm:$0xff]
  %v2624 = vld [vmem:[%s1 + $0x420] sm:$0xff]
  %v2625 = vld [vmem:[%s1 + $0x428] sm:$0xff]
  %v2626 = vld [vmem:[%s1 + $0x430] sm:$0xff]
  %v2627 = vld [vmem:[%s1 + $0x438] sm:$0xff]
  %v2628 = vld [vmem:[%s1 + $0x440] sm:$0xff]
  %v2629 = vld [vmem:[%s1 + $0x448] sm:$0xff]
  %v2630 = vld [vmem:[%s1 + $0x450] sm:$0xff]
  %v2631 = vld [vmem:[%s1 + $0x458] sm:$0xff]
  %v2632 = vld [vmem:[%s1 + $0x460] sm:$0xff]
  %v2633 = vld [vmem:[%s1 + $0x468] sm:$0xff]
  %v2634 = vld [vmem:[%s1 + $0x470] sm:$0xff]
  %v2635 = vld [vmem:[%s1 + $0x478] sm:$0xff]
  %v2636 = vld [vmem:[%s1 + $0x480] sm:$0xff]
  %v2637 = vld [vmem:[%s1 + $0x488] sm:$0xff]
  %v2638 = vld [vmem:[%s1 + $0x490] sm:$0xff]
  %v2639 = vld [vmem:[%s1 + $0x498] sm:$0xff]
  %v2640 = vld [vmem:[%s1 + $0x4a0] sm:$0xff]
  %v2641 = vld [vmem:[%s1 + $0x4a8] sm:$0xff]
  %v2642 = vld [vmem:[%s1 + $0x4b0] sm:$0xff]
  %v2643 = vld [vmem:[%s1 + $0x4b8] sm:$0xff]
  %v2644 = vld [vmem:[%s1 + $0x4c0] sm:$0xff]
  %v2645 = vld [vmem:[%s1 + $0x4c8] sm:$0xff]
  %v2646 = vld [vmem:[%s1 + $0x4d0] sm:$0xff]
  %v2647 = vld [vmem:[%s1 + $0x4d8] sm:$0xff]
  %v2648 = vld [vmem:[%s1 + $0x4e0] sm:$0xff]
  %v2649 = vld [vmem:[%s1 + $0x4e8] sm:$0xff]
  %v2650 = vld [vmem:[%s1 + $0x4f0] sm:$0xff]
  %v2651 = vld [vmem:[%s1 + $0x4f8] sm:$0xff]
  %v2652 = vld [vmem:[%s1 + $0x500] sm:$0xff]
  %v2653 = vld [vmem:[%s1 + $0x508] sm:$0xff]
  %v2654 = vld [vmem:[%s1 + $0x510] sm:$0xff]
  %v2655 = vld [vmem:[%s1 + $0x518] sm:$0xff]
  %v2656 = vld [vmem:[%s1 + $0x520] sm:$0xff]
  %v2657 = vld [vmem:[%s1 + $0x528] sm:$0xff]
  %v2658 = vld [vmem:[%s1 + $0x530] sm:$0xff]
  %v2659 = vld [vmem:[%s1 + $0x538] sm:$0xff]
  %v2660 = vld [vmem:[%s1 + $0x540] sm:$0xff]
  %v2661 = vld [vmem:[%s1 + $0x548] sm:$0xff]
  %v2662 = vld [vmem:[%s1 + $0x550] sm:$0xff]
  %v2663 = vld [vmem:[%s1 + $0x558] sm:$0xff]
  %v2664 = vld [vmem:[%s1 + $0x560] sm:$0xff]
  %v2665 = vld [vmem:[%s1 + $0x568] sm:$0xff]
  %v2666 = vld [vmem:[%s1 + $0x570] sm:$0xff]
  %v2667 = vld [vmem:[%s1 + $0x578] sm:$0xff]
  %v2668 = vld [vmem:[%s1 + $0x580] sm:$0xff]
  %v2669 = vld [vmem:[%s1 + $0x588] sm:$0xff]
  %v2670 = vld [vmem:[%s1 + $0x590] sm:$0xff]
  %v2671 = vld [vmem:[%s1 + $0x598] sm:$0xff]
  %v2672 = vld [vmem:[%s1 + $0x5a0] sm:$0xff]
  %v2673 = vld [vmem:[%s1 + $0x5a8] sm:$0xff]
  %v2674 = vld [vmem:[%s1 + $0x5b0] sm:$0xff]
  %v2675 = vld [vmem:[%s1 + $0x5b8] sm:$0xff]
  %v2676 = vld [vmem:[%s1 + $0x5c0] sm:$0xff]
  %v2677 = vld [vmem:[%s1 + $0x5c8] sm:$0xff]
  %v2678 = vld [vmem:[%s1 + $0x5d0] sm:$0xff]
  %v2679 = vld [vmem:[%s1 + $0x5d8] sm:$0xff]
  %v2680 = vld [vmem:[%s1 + $0x5e0] sm:$0xff]
  %v2681 = vld [vmem:[%s2] sm:$0x7]
  %v2683 = vperm.slane %v2681, 0
  %v2684 = vperm.slane %v2681, 1
  %v2685 = vperm.slane %v2681, 2
  %v2689 = vsel %vm236, %v2488, 0
  %2691 = vmatpush.msra.mxu0 %v2537
  %2692 = vmatpush.msra.mxu0 %v2534
  %2693 = vmatpush.msra.mxu0 %v2531
  %2694 = vmatpush.msra.mxu0 %v2528
  %2695 = vmatpush.msra.mxu0 %v2525
  %2696 = vmatpush.msra.mxu0 %v2522
  %2697 = vmatpush.msra.mxu0 %v2519
  %2698 = vmatpush.msra.mxu0 %v2516
  %2699 = vmatpush.msra.mxu0 %v2513
  %2700 = vmatpush.msra.mxu0 %v2510
  %2701 = vmatpush.msra.mxu0 %v2507
  %2702 = vmatpush.msra.mxu0 %v2504
  %2703 = vmatpush.msra.mxu0 %v2501
  %2704 = vmatpush.msra.mxu0 %v2498
  %2705 = vmatpush.msra.mxu0 %v2495
  %2706 = vmatpush.msra.mxu0 %v2492
  %2707 = vmatmul.f32.gmra.mxu0 %v2469
  %v2708 = vpop.f32.mrf.mxu0
  %v2709 = vadd.f32 %v2683, %v2708
  %2710 = vdwg.mxu0
  %2711 = vmatpush.msra.mxu0 %v2585
  %2712 = vmatpush.msra.mxu0 %v2582
  %2713 = vmatpush.msra.mxu0 %v2579
  %2714 = vmatpush.msra.mxu0 %v2576
  %2715 = vmatpush.msra.mxu0 %v2573
  %2716 = vmatpush.msra.mxu0 %v2570
  %2717 = vmatpush.msra.mxu0 %v2567
  %2718 = vmatpush.msra.mxu0 %v2564
  %2719 = vmatpush.msra.mxu0 %v2561
  %2720 = vmatpush.msra.mxu0 %v2558
  %2721 = vmatpush.msra.mxu0 %v2555
  %2722 = vmatpush.msra.mxu0 %v2552
  %2723 = vmatpush.msra.mxu0 %v2549
  %2724 = vmatpush.msra.mxu0 %v2546
  %2725 = vmatpush.msra.mxu0 %v2543
  %2726 = vmatpush.msra.mxu0 %v2540
  %2727 = vmatmul.f32.gmra.mxu0 %v2490
  %v2728 = vpop.f32.mrf.mxu0
  %v2729 = vadd.f32 %v2709, %v2728
  %2730 = vdwg.mxu0
  %2731 = vmatpush.msra.mxu0 %v2633
  %2732 = vmatpush.msra.mxu0 %v2630
  %2733 = vmatpush.msra.mxu0 %v2627
  %2734 = vmatpush.msra.mxu0 %v2624
  %2735 = vmatpush.msra.mxu0 %v2621
  %2736 = vmatpush.msra.mxu0 %v2618
  %2737 = vmatpush.msra.mxu0 %v2615
  %2738 = vmatpush.msra.mxu0 %v2612
  %2739 = vmatpush.msra.mxu0 %v2609
  %2740 = vmatpush.msra.mxu0 %v2606
  %2741 = vmatpush.msra.mxu0 %v2603
  %2742 = vmatpush.msra.mxu0 %v2600
  %2743 = vmatpush.msra.mxu0 %v2597
  %2744 = vmatpush.msra.mxu0 %v2594
  %2745 = vmatpush.msra.mxu0 %v2591
  %2746 = vmatpush.msra.mxu0 %v2588
  %2747 = vmatmul.f32.gmra.mxu0 %v2491
  %v2748 = vpop.f32.mrf.mxu0
  %v2749 = vadd.f32 %v2729, %v2748
  %2750 = vdwg.mxu0
  %2751 = vmatpush.msra.mxu0 0.0
  %2752 = vmatpush.msra.mxu0 %v2678
  %2753 = vmatpush.msra.mxu0 %v2675
  %2754 = vmatpush.msra.mxu0 %v2672
  %2755 = vmatpush.msra.mxu0 %v2669
  %2756 = vmatpush.msra.mxu0 %v2666
  %2757 = vmatpush.msra.mxu0 %v2663
  %2758 = vmatpush.msra.mxu0 %v2660
  %2759 = vmatpush.msra.mxu0 %v2657
  %2760 = vmatpush.msra.mxu0 %v2654
  %2761 = vmatpush.msra.mxu0 %v2651
  %2762 = vmatpush.msra.mxu0 %v2648
  %2763 = vmatpush.msra.mxu0 %v2645
  %2764 = vmatpush.msra.mxu0 %v2642
  %2765 = vmatpush.msra.mxu0 %v2639
  %2766 = vmatpush.msra.mxu0 %v2636
  %2767 = vmatmul.f32.gmra.mxu0 %v2689
  %v2768 = vpop.f32.mrf.mxu0
  %v2769 = vadd.f32 %v2749, %v2768
  %2770 = vdwg.mxu0
  %2771 = vmatpush.msra.mxu0 %v2538
  %2772 = vmatpush.msra.mxu0 %v2535
  %2773 = vmatpush.msra.mxu0 %v2532
  %2774 = vmatpush.msra.mxu0 %v2529
  %2775 = vmatpush.msra.mxu0 %v2526
  %2776 = vmatpush.msra.mxu0 %v2523
  %2777 = vmatpush.msra.mxu0 %v2520
  %2778 = vmatpush.msra.mxu0 %v2517
  %2779 = vmatpush.msra.mxu0 %v2514
  %2780 = vmatpush.msra.mxu0 %v2511
  %2781 = vmatpush.msra.mxu0 %v2508
  %2782 = vmatpush.msra.mxu0 %v2505
  %2783 = vmatpush.msra.mxu0 %v2502
  %2784 = vmatpush.msra.mxu0 %v2499
  %2785 = vmatpush.msra.mxu0 %v2496
  %2786 = vmatpush.msra.mxu0 %v2493
  %2787 = vmatmul.f32.gmra.mxu0 %v2469
  %v2788 = vpop.f32.mrf.mxu0
  %v2789 = vadd.f32 %v2684, %v2788
  %2790 = vdwg.mxu0
  %2791 = vmatpush.msra.mxu0 %v2586
  %2792 = vmatpush.msra.mxu0 %v2583
  %2793 = vmatpush.msra.mxu0 %v2580
  %2794 = vmatpush.msra.mxu0 %v2577
  %2795 = vmatpush.msra.mxu0 %v2574
  %2796 = vmatpush.msra.mxu0 %v2571
  %2797 = vmatpush.msra.mxu0 %v2568
  %2798 = vmatpush.msra.mxu0 %v2565
  %2799 = vmatpush.msra.mxu0 %v2562
  %2800 = vmatpush.msra.mxu0 %v2559
  %2801 = vmatpush.msra.mxu0 %v2556
  %2802 = vmatpush.msra.mxu0 %v2553
  %2803 = vmatpush.msra.mxu0 %v2550
  %2804 = vmatpush.msra.mxu0 %v2547
  %2805 = vmatpush.msra.mxu0 %v2544
  %2806 = vmatpush.msra.mxu0 %v2541
  %2807 = vmatmul.f32.gmra.mxu0 %v2490
  %v2808 = vpop.f32.mrf.mxu0
  %v2809 = vadd.f32 %v2789, %v2808
  %2810 = vdwg.mxu0
  %2811 = vmatpush.msra.mxu0 %v2634
  %2812 = vmatpush.msra.mxu0 %v2631
  %2813 = vmatpush.msra.mxu0 %v2628
  %2814 = vmatpush.msra.mxu0 %v2625
  %2815 = vmatpush.msra.mxu0 %v2622
  %2816 = vmatpush.msra.mxu0 %v2619
  %2817 = vmatpush.msra.mxu0 %v2616
  %2818 = vmatpush.msra.mxu0 %v2613
  %2819 = vmatpush.msra.mxu0 %v2610
  %2820 = vmatpush.msra.mxu0 %v2607
  %2821 = vmatpush.msra.mxu0 %v2604
  %2822 = vmatpush.msra.mxu0 %v2601
  %2823 = vmatpush.msra.mxu0 %v2598
  %2824 = vmatpush.msra.mxu0 %v2595
  %2825 = vmatpush.msra.mxu0 %v2592
  %2826 = vmatpush.msra.mxu0 %v2589
  %2827 = vmatmul.f32.gmra.mxu0 %v2491
  %v2828 = vpop.f32.mrf.mxu0
  %v2829 = vadd.f32 %v2809, %v2828
  %2830 = vdwg.mxu0
  %2831 = vmatpush.msra.mxu0 0.0
  %2832 = vmatpush.msra.mxu0 %v2679
  %2833 = vmatpush.msra.mxu0 %v2676
  %2834 = vmatpush.msra.mxu0 %v2673
  %2835 = vmatpush.msra.mxu0 %v2670
  %2836 = vmatpush.msra.mxu0 %v2667
  %2837 = vmatpush.msra.mxu0 %v2664
  %2838 = vmatpush.msra.mxu0 %v2661
  %2839 = vmatpush.msra.mxu0 %v2658
  %2840 = vmatpush.msra.mxu0 %v2655
  %2841 = vmatpush.msra.mxu0 %v2652
  %2842 = vmatpush.msra.mxu0 %v2649
  %2843 = vmatpush.msra.mxu0 %v2646
  %2844 = vmatpush.msra.mxu0 %v2643
  %2845 = vmatpush.msra.mxu0 %v2640
  %2846 = vmatpush.msra.mxu0 %v2637
  %2847 = vmatmul.f32.gmra.mxu0 %v2689
  %v2848 = vpop.f32.mrf.mxu0
  %v2849 = vadd.f32 %v2829, %v2848
  %2850 = vdwg.mxu0
  %2851 = vmatpush.msra.mxu0 %v2539
  %2852 = vmatpush.msra.mxu0 %v2536
  %2853 = vmatpush.msra.mxu0 %v2533
  %2854 = vmatpush.msra.mxu0 %v2530
  %2855 = vmatpush.msra.mxu0 %v2527
  %2856 = vmatpush.msra.mxu0 %v2524
  %2857 = vmatpush.msra.mxu0 %v2521
  %2858 = vmatpush.msra.mxu0 %v2518
  %2859 = vmatpush.msra.mxu0 %v2515
  %2860 = vmatpush.msra.mxu0 %v2512
  %2861 = vmatpush.msra.mxu0 %v2509
  %2862 = vmatpush.msra.mxu0 %v2506
  %2863 = vmatpush.msra.mxu0 %v2503
  %2864 = vmatpush.msra.mxu0 %v2500
  %2865 = vmatpush.msra.mxu0 %v2497
  %2866 = vmatpush.msra.mxu0 %v2494
  %2867 = vmatmul.f32.gmra.mxu0 %v2469
  %v2868 = vpop.f32.mrf.mxu0
  %v2869 = vadd.f32 %v2685, %v2868
  %2870 = vdwg.mxu0
  %2871 = vmatpush.msra.mxu0 %v2587
  %2872 = vmatpush.msra.mxu0 %v2584
  %2873 = vmatpush.msra.mxu0 %v2581
  %2874 = vmatpush.msra.mxu0 %v2578
  %2875 = vmatpush.msra.mxu0 %v2575
  %2876 = vmatpush.msra.mxu0 %v2572
  %2877 = vmatpush.msra.mxu0 %v2569
  %2878 = vmatpush.msra.mxu0 %v2566
  %2879 = vmatpush.msra.mxu0 %v2563
  %2880 = vmatpush.msra.mxu0 %v2560
  %2881 = vmatpush.msra.mxu0 %v2557
  %2882 = vmatpush.msra.mxu0 %v2554
  %2883 = vmatpush.msra.mxu0 %v2551
  %2884 = vmatpush.msra.mxu0 %v2548
  %2885 = vmatpush.msra.mxu0 %v2545
  %2886 = vmatpush.msra.mxu0 %v2542
  %2887 = vmatmul.f32.gmra.mxu0 %v2490
  %v2888 = vpop.f32.mrf.mxu0
  %v2889 = vadd.f32 %v2869, %v2888
  %2890 = vdwg.mxu0
  %2891 = vmatpush.msra.mxu0 %v2635
  %2892 = vmatpush.msra.mxu0 %v2632
  %2893 = vmatpush.msra.mxu0 %v2629
  %2894 = vmatpush.msra.mxu0 %v2626
  %2895 = vmatpush.msra.mxu0 %v2623
  %2896 = vmatpush.msra.mxu0 %v2620
  %2897 = vmatpush.msra.mxu0 %v2617
  %2898 = vmatpush.msra.mxu0 %v2614
  %2899 = vmatpush.msra.mxu0 %v2611
  %2900 = vmatpush.msra.mxu0 %v2608
  %2901 = vmatpush.msra.mxu0 %v2605
  %2902 = vmatpush.msra.mxu0 %v2602
  %2903 = vmatpush.msra.mxu0 %v2599
  %2904 = vmatpush.msra.mxu0 %v2596
  %2905 = vmatpush.msra.mxu0 %v2593
  %2906 = vmatpush.msra.mxu0 %v2590
  %2907 = vmatmul.f32.gmra.mxu0 %v2491
  %v2908 = vpop.f32.mrf.mxu0
  %v2909 = vadd.f32 %v2889, %v2908
  %2910 = vdwg.mxu0
  %2911 = vmatpush.msra.mxu0 0.0
  %2912 = vmatpush.msra.mxu0 %v2680
  %2913 = vmatpush.msra.mxu0 %v2677
  %2914 = vmatpush.msra.mxu0 %v2674
  %2915 = vmatpush.msra.mxu0 %v2671
  %2916 = vmatpush.msra.mxu0 %v2668
  %2917 = vmatpush.msra.mxu0 %v2665
  %2918 = vmatpush.msra.mxu0 %v2662
  %2919 = vmatpush.msra.mxu0 %v2659
  %2920 = vmatpush.msra.mxu0 %v2656
  %2921 = vmatpush.msra.mxu0 %v2653
  %2922 = vmatpush.msra.mxu0 %v2650
  %2923 = vmatpush.msra.mxu0 %v2647
  %2924 = vmatpush.msra.mxu0 %v2644
  %2925 = vmatpush.msra.mxu0 %v2641
  %2926 = vmatpush.msra.mxu0 %v2638
  %2927 = vmatmul.f32.gmra.mxu0 %v2689
  %v2928 = vpop.f32.mrf.mxu0
  %v2929 = vadd.f32 %v2909, %v2928
  %2930 = vdwg.mxu0
  %v2931 = vtanh.pop %v2769
  %v2932 = vtanh.pop %v2849
  %v2933 = vtanh.pop %v2929
  %2936 = vrot.lane.b32.xlu0 %v2931, 48
  %v2937 = vpop.permute.xlu0 %2936
  %2938 = vrot.lane.b32.xlu0 %v2932, 48
  %v2939 = vpop.permute.xlu0 %2938
  %v2940 = vsel %vm488, %v2937, %v2939
  %v2942 = vadd.f32 %v2931, %v2940
  %2943 = vrot.lane.b32.xlu0 %v2932, 96
  %v2944 = vpop.permute.xlu0 %2943
  %v2946 = vadd.f32 %v2942, %v2944
  %2948 = vrot.lane.b32.xlu0 %v2932, 16
  %v2949 = vpop.permute.xlu0 %2948
  %2950 = vrot.lane.b32.xlu0 %v2933, 16
  %v2951 = vpop.permute.xlu0 %2950
  %v2952 = vsel %vm501, %v2949, %v2951
  %v2954 = vadd.f32 %v2946, %v2952
  %v2955 = vmul.f32 %v2954, 0.25
  %s2956 = scalar_lea.vmem %s3, 40
  %2957 = vst.msk [vmem:[%s2956] sm:$0x1f] %vm506, %v2955
  %s2958 = scalar_lea.vmem %s0, 96
  %v2959 = vld [vmem:[%s2958] sm:$0x7f]
  %v2960 = vld [vmem:[%s2958 + $0x8] sm:$0x7f]
  %v2963 = vrot.slane %v2959, 1
  %v2964 = vrot.slane %v2960, 1
  %2965 = vrot.lane.b32.xlu0 %v2963, 40
  %v2966 = vpop.permute.xlu0 %2965
  %2967 = vrot.lane.b32.xlu0 %v2964, 40
  %v2968 = vpop.permute.xlu0 %2967
  %v2969 = vsel %vm24, %v2966, %v2968
  %v2972 = vrot.slane %v2959, 2
  %v2973 = vrot.slane %v2960, 2
  %2974 = vrot.lane.b32.xlu0 %v2972, 80
  %v2975 = vpop.permute.xlu0 %2974
  %2976 = vrot.lane.b32.xlu0 %v2973, 80
  %v2977 = vpop.permute.xlu0 %2976
  %v2978 = vsel %vm34, %v2975, %v2977
  %v2980 = vsel %vm24, %v2960, %v2966
  %v2981 = vsel %vm34, %v2969, %v2975
  %v2982 = vld [vmem:[%s1] sm:$0xff]
  %v2983 = vld [vmem:[%s1 + $0x8] sm:$0xff]
  %v2984 = vld [vmem:[%s1 + $0x10] sm:$0xff]
  %v2985 = vld [vmem:[%s1 + $0x18] sm:$0xff]
  %v2986 = vld [vmem:[%s1 + $0x20] sm:$0xff]
  %v2987 = vld [vmem:[%s1 + $0x28] sm:$0xff]
  %v2988 = vld [vmem:[%s1 + $0x30] sm:$0xff]
  %v2989 = vld [vmem:[%s1 + $0x38] sm:$0xff]
  %v2990 = vld [vmem:[%s1 + $0x40] sm:$0xff]
  %v2991 = vld [vmem:[%s1 + $0x48] sm:$0xff]
  %v2992 = vld [vmem:[%s1 + $0x50] sm:$0xff]
  %v2993 = vld [vmem:[%s1 + $0x58] sm:$0xff]
  %v2994 = vld [vmem:[%s1 + $0x60] sm:$0xff]
  %v2995 = vld [vmem:[%s1 + $0x68] sm:$0xff]
  %v2996 = vld [vmem:[%s1 + $0x70] sm:$0xff]
  %v2997 = vld [vmem:[%s1 + $0x78] sm:$0xff]
  %v2998 = vld [vmem:[%s1 + $0x80] sm:$0xff]
  %v2999 = vld [vmem:[%s1 + $0x88] sm:$0xff]
  %v3000 = vld [vmem:[%s1 + $0x90] sm:$0xff]
  %v3001 = vld [vmem:[%s1 + $0x98] sm:$0xff]
  %v3002 = vld [vmem:[%s1 + $0xa0] sm:$0xff]
  %v3003 = vld [vmem:[%s1 + $0xa8] sm:$0xff]
  %v3004 = vld [vmem:[%s1 + $0xb0] sm:$0xff]
  %v3005 = vld [vmem:[%s1 + $0xb8] sm:$0xff]
  %v3006 = vld [vmem:[%s1 + $0xc0] sm:$0xff]
  %v3007 = vld [vmem:[%s1 + $0xc8] sm:$0xff]
  %v3008 = vld [vmem:[%s1 + $0xd0] sm:$0xff]
  %v3009 = vld [vmem:[%s1 + $0xd8] sm:$0xff]
  %v3010 = vld [vmem:[%s1 + $0xe0] sm:$0xff]
  %v3011 = vld [vmem:[%s1 + $0xe8] sm:$0xff]
  %v3012 = vld [vmem:[%s1 + $0xf0] sm:$0xff]
  %v3013 = vld [vmem:[%s1 + $0xf8] sm:$0xff]
  %v3014 = vld [vmem:[%s1 + $0x100] sm:$0xff]
  %v3015 = vld [vmem:[%s1 + $0x108] sm:$0xff]
  %v3016 = vld [vmem:[%s1 + $0x110] sm:$0xff]
  %v3017 = vld [vmem:[%s1 + $0x118] sm:$0xff]
  %v3018 = vld [vmem:[%s1 + $0x120] sm:$0xff]
  %v3019 = vld [vmem:[%s1 + $0x128] sm:$0xff]
  %v3020 = vld [vmem:[%s1 + $0x130] sm:$0xff]
  %v3021 = vld [vmem:[%s1 + $0x138] sm:$0xff]
  %v3022 = vld [vmem:[%s1 + $0x140] sm:$0xff]
  %v3023 = vld [vmem:[%s1 + $0x148] sm:$0xff]
  %v3024 = vld [vmem:[%s1 + $0x150] sm:$0xff]
  %v3025 = vld [vmem:[%s1 + $0x158] sm:$0xff]
  %v3026 = vld [vmem:[%s1 + $0x160] sm:$0xff]
  %v3027 = vld [vmem:[%s1 + $0x168] sm:$0xff]
  %v3028 = vld [vmem:[%s1 + $0x170] sm:$0xff]
  %v3029 = vld [vmem:[%s1 + $0x178] sm:$0xff]
  %v3030 = vld [vmem:[%s1 + $0x180] sm:$0xff]
  %v3031 = vld [vmem:[%s1 + $0x188] sm:$0xff]
  %v3032 = vld [vmem:[%s1 + $0x190] sm:$0xff]
  %v3033 = vld [vmem:[%s1 + $0x198] sm:$0xff]
  %v3034 = vld [vmem:[%s1 + $0x1a0] sm:$0xff]
  %v3035 = vld [vmem:[%s1 + $0x1a8] sm:$0xff]
  %v3036 = vld [vmem:[%s1 + $0x1b0] sm:$0xff]
  %v3037 = vld [vmem:[%s1 + $0x1b8] sm:$0xff]
  %v3038 = vld [vmem:[%s1 + $0x1c0] sm:$0xff]
  %v3039 = vld [vmem:[%s1 + $0x1c8] sm:$0xff]
  %v3040 = vld [vmem:[%s1 + $0x1d0] sm:$0xff]
  %v3041 = vld [vmem:[%s1 + $0x1d8] sm:$0xff]
  %v3042 = vld [vmem:[%s1 + $0x1e0] sm:$0xff]
  %v3043 = vld [vmem:[%s1 + $0x1e8] sm:$0xff]
  %v3044 = vld [vmem:[%s1 + $0x1f0] sm:$0xff]
  %v3045 = vld [vmem:[%s1 + $0x1f8] sm:$0xff]
  %v3046 = vld [vmem:[%s1 + $0x200] sm:$0xff]
  %v3047 = vld [vmem:[%s1 + $0x208] sm:$0xff]
  %v3048 = vld [vmem:[%s1 + $0x210] sm:$0xff]
  %v3049 = vld [vmem:[%s1 + $0x218] sm:$0xff]
  %v3050 = vld [vmem:[%s1 + $0x220] sm:$0xff]
  %v3051 = vld [vmem:[%s1 + $0x228] sm:$0xff]
  %v3052 = vld [vmem:[%s1 + $0x230] sm:$0xff]
  %v3053 = vld [vmem:[%s1 + $0x238] sm:$0xff]
  %v3054 = vld [vmem:[%s1 + $0x240] sm:$0xff]
  %v3055 = vld [vmem:[%s1 + $0x248] sm:$0xff]
  %v3056 = vld [vmem:[%s1 + $0x250] sm:$0xff]
  %v3057 = vld [vmem:[%s1 + $0x258] sm:$0xff]
  %v3058 = vld [vmem:[%s1 + $0x260] sm:$0xff]
  %v3059 = vld [vmem:[%s1 + $0x268] sm:$0xff]
  %v3060 = vld [vmem:[%s1 + $0x270] sm:$0xff]
  %v3061 = vld [vmem:[%s1 + $0x278] sm:$0xff]
  %v3062 = vld [vmem:[%s1 + $0x280] sm:$0xff]
  %v3063 = vld [vmem:[%s1 + $0x288] sm:$0xff]
  %v3064 = vld [vmem:[%s1 + $0x290] sm:$0xff]
  %v3065 = vld [vmem:[%s1 + $0x298] sm:$0xff]
  %v3066 = vld [vmem:[%s1 + $0x2a0] sm:$0xff]
  %v3067 = vld [vmem:[%s1 + $0x2a8] sm:$0xff]
  %v3068 = vld [vmem:[%s1 + $0x2b0] sm:$0xff]
  %v3069 = vld [vmem:[%s1 + $0x2b8] sm:$0xff]
  %v3070 = vld [vmem:[%s1 + $0x2c0] sm:$0xff]
  %v3071 = vld [vmem:[%s1 + $0x2c8] sm:$0xff]
  %v3072 = vld [vmem:[%s1 + $0x2d0] sm:$0xff]
  %v3073 = vld [vmem:[%s1 + $0x2d8] sm:$0xff]
  %v3074 = vld [vmem:[%s1 + $0x2e0] sm:$0xff]
  %v3075 = vld [vmem:[%s1 + $0x2e8] sm:$0xff]
  %v3076 = vld [vmem:[%s1 + $0x2f0] sm:$0xff]
  %v3077 = vld [vmem:[%s1 + $0x2f8] sm:$0xff]
  %v3078 = vld [vmem:[%s1 + $0x300] sm:$0xff]
  %v3079 = vld [vmem:[%s1 + $0x308] sm:$0xff]
  %v3080 = vld [vmem:[%s1 + $0x310] sm:$0xff]
  %v3081 = vld [vmem:[%s1 + $0x318] sm:$0xff]
  %v3082 = vld [vmem:[%s1 + $0x320] sm:$0xff]
  %v3083 = vld [vmem:[%s1 + $0x328] sm:$0xff]
  %v3084 = vld [vmem:[%s1 + $0x330] sm:$0xff]
  %v3085 = vld [vmem:[%s1 + $0x338] sm:$0xff]
  %v3086 = vld [vmem:[%s1 + $0x340] sm:$0xff]
  %v3087 = vld [vmem:[%s1 + $0x348] sm:$0xff]
  %v3088 = vld [vmem:[%s1 + $0x350] sm:$0xff]
  %v3089 = vld [vmem:[%s1 + $0x358] sm:$0xff]
  %v3090 = vld [vmem:[%s1 + $0x360] sm:$0xff]
  %v3091 = vld [vmem:[%s1 + $0x368] sm:$0xff]
  %v3092 = vld [vmem:[%s1 + $0x370] sm:$0xff]
  %v3093 = vld [vmem:[%s1 + $0x378] sm:$0xff]
  %v3094 = vld [vmem:[%s1 + $0x380] sm:$0xff]
  %v3095 = vld [vmem:[%s1 + $0x388] sm:$0xff]
  %v3096 = vld [vmem:[%s1 + $0x390] sm:$0xff]
  %v3097 = vld [vmem:[%s1 + $0x398] sm:$0xff]
  %v3098 = vld [vmem:[%s1 + $0x3a0] sm:$0xff]
  %v3099 = vld [vmem:[%s1 + $0x3a8] sm:$0xff]
  %v3100 = vld [vmem:[%s1 + $0x3b0] sm:$0xff]
  %v3101 = vld [vmem:[%s1 + $0x3b8] sm:$0xff]
  %v3102 = vld [vmem:[%s1 + $0x3c0] sm:$0xff]
  %v3103 = vld [vmem:[%s1 + $0x3c8] sm:$0xff]
  %v3104 = vld [vmem:[%s1 + $0x3d0] sm:$0xff]
  %v3105 = vld [vmem:[%s1 + $0x3d8] sm:$0xff]
  %v3106 = vld [vmem:[%s1 + $0x3e0] sm:$0xff]
  %v3107 = vld [vmem:[%s1 + $0x3e8] sm:$0xff]
  %v3108 = vld [vmem:[%s1 + $0x3f0] sm:$0xff]
  %v3109 = vld [vmem:[%s1 + $0x3f8] sm:$0xff]
  %v3110 = vld [vmem:[%s1 + $0x400] sm:$0xff]
  %v3111 = vld [vmem:[%s1 + $0x408] sm:$0xff]
  %v3112 = vld [vmem:[%s1 + $0x410] sm:$0xff]
  %v3113 = vld [vmem:[%s1 + $0x418] sm:$0xff]
  %v3114 = vld [vmem:[%s1 + $0x420] sm:$0xff]
  %v3115 = vld [vmem:[%s1 + $0x428] sm:$0xff]
  %v3116 = vld [vmem:[%s1 + $0x430] sm:$0xff]
  %v3117 = vld [vmem:[%s1 + $0x438] sm:$0xff]
  %v3118 = vld [vmem:[%s1 + $0x440] sm:$0xff]
  %v3119 = vld [vmem:[%s1 + $0x448] sm:$0xff]
  %v3120 = vld [vmem:[%s1 + $0x450] sm:$0xff]
  %v3121 = vld [vmem:[%s1 + $0x458] sm:$0xff]
  %v3122 = vld [vmem:[%s1 + $0x460] sm:$0xff]
  %v3123 = vld [vmem:[%s1 + $0x468] sm:$0xff]
  %v3124 = vld [vmem:[%s1 + $0x470] sm:$0xff]
  %v3125 = vld [vmem:[%s1 + $0x478] sm:$0xff]
  %v3126 = vld [vmem:[%s1 + $0x480] sm:$0xff]
  %v3127 = vld [vmem:[%s1 + $0x488] sm:$0xff]
  %v3128 = vld [vmem:[%s1 + $0x490] sm:$0xff]
  %v3129 = vld [vmem:[%s1 + $0x498] sm:$0xff]
  %v3130 = vld [vmem:[%s1 + $0x4a0] sm:$0xff]
  %v3131 = vld [vmem:[%s1 + $0x4a8] sm:$0xff]
  %v3132 = vld [vmem:[%s1 + $0x4b0] sm:$0xff]
  %v3133 = vld [vmem:[%s1 + $0x4b8] sm:$0xff]
  %v3134 = vld [vmem:[%s1 + $0x4c0] sm:$0xff]
  %v3135 = vld [vmem:[%s1 + $0x4c8] sm:$0xff]
  %v3136 = vld [vmem:[%s1 + $0x4d0] sm:$0xff]
  %v3137 = vld [vmem:[%s1 + $0x4d8] sm:$0xff]
  %v3138 = vld [vmem:[%s1 + $0x4e0] sm:$0xff]
  %v3139 = vld [vmem:[%s1 + $0x4e8] sm:$0xff]
  %v3140 = vld [vmem:[%s1 + $0x4f0] sm:$0xff]
  %v3141 = vld [vmem:[%s1 + $0x4f8] sm:$0xff]
  %v3142 = vld [vmem:[%s1 + $0x500] sm:$0xff]
  %v3143 = vld [vmem:[%s1 + $0x508] sm:$0xff]
  %v3144 = vld [vmem:[%s1 + $0x510] sm:$0xff]
  %v3145 = vld [vmem:[%s1 + $0x518] sm:$0xff]
  %v3146 = vld [vmem:[%s1 + $0x520] sm:$0xff]
  %v3147 = vld [vmem:[%s1 + $0x528] sm:$0xff]
  %v3148 = vld [vmem:[%s1 + $0x530] sm:$0xff]
  %v3149 = vld [vmem:[%s1 + $0x538] sm:$0xff]
  %v3150 = vld [vmem:[%s1 + $0x540] sm:$0xff]
  %v3151 = vld [vmem:[%s1 + $0x548] sm:$0xff]
  %v3152 = vld [vmem:[%s1 + $0x550] sm:$0xff]
  %v3153 = vld [vmem:[%s1 + $0x558] sm:$0xff]
  %v3154 = vld [vmem:[%s1 + $0x560] sm:$0xff]
  %v3155 = vld [vmem:[%s1 + $0x568] sm:$0xff]
  %v3156 = vld [vmem:[%s1 + $0x570] sm:$0xff]
  %v3157 = vld [vmem:[%s1 + $0x578] sm:$0xff]
  %v3158 = vld [vmem:[%s1 + $0x580] sm:$0xff]
  %v3159 = vld [vmem:[%s1 + $0x588] sm:$0xff]
  %v3160 = vld [vmem:[%s1 + $0x590] sm:$0xff]
  %v3161 = vld [vmem:[%s1 + $0x598] sm:$0xff]
  %v3162 = vld [vmem:[%s1 + $0x5a0] sm:$0xff]
  %v3163 = vld [vmem:[%s1 + $0x5a8] sm:$0xff]
  %v3164 = vld [vmem:[%s1 + $0x5b0] sm:$0xff]
  %v3165 = vld [vmem:[%s1 + $0x5b8] sm:$0xff]
  %v3166 = vld [vmem:[%s1 + $0x5c0] sm:$0xff]
  %v3167 = vld [vmem:[%s1 + $0x5c8] sm:$0xff]
  %v3168 = vld [vmem:[%s1 + $0x5d0] sm:$0xff]
  %v3169 = vld [vmem:[%s1 + $0x5d8] sm:$0xff]
  %v3170 = vld [vmem:[%s1 + $0x5e0] sm:$0xff]
  %v3171 = vld [vmem:[%s2] sm:$0x7]
  %v3173 = vperm.slane %v3171, 0
  %v3174 = vperm.slane %v3171, 1
  %v3175 = vperm.slane %v3171, 2
  %v3179 = vsel %vm236, %v2978, 0
  %3181 = vmatpush.msra.mxu0 %v3027
  %3182 = vmatpush.msra.mxu0 %v3024
  %3183 = vmatpush.msra.mxu0 %v3021
  %3184 = vmatpush.msra.mxu0 %v3018
  %3185 = vmatpush.msra.mxu0 %v3015
  %3186 = vmatpush.msra.mxu0 %v3012
  %3187 = vmatpush.msra.mxu0 %v3009
  %3188 = vmatpush.msra.mxu0 %v3006
  %3189 = vmatpush.msra.mxu0 %v3003
  %3190 = vmatpush.msra.mxu0 %v3000
  %3191 = vmatpush.msra.mxu0 %v2997
  %3192 = vmatpush.msra.mxu0 %v2994
  %3193 = vmatpush.msra.mxu0 %v2991
  %3194 = vmatpush.msra.mxu0 %v2988
  %3195 = vmatpush.msra.mxu0 %v2985
  %3196 = vmatpush.msra.mxu0 %v2982
  %3197 = vmatmul.f32.gmra.mxu0 %v2959
  %v3198 = vpop.f32.mrf.mxu0
  %v3199 = vadd.f32 %v3173, %v3198
  %3200 = vdwg.mxu0
  %3201 = vmatpush.msra.mxu0 %v3075
  %3202 = vmatpush.msra.mxu0 %v3072
  %3203 = vmatpush.msra.mxu0 %v3069
  %3204 = vmatpush.msra.mxu0 %v3066
  %3205 = vmatpush.msra.mxu0 %v3063
  %3206 = vmatpush.msra.mxu0 %v3060
  %3207 = vmatpush.msra.mxu0 %v3057
  %3208 = vmatpush.msra.mxu0 %v3054
  %3209 = vmatpush.msra.mxu0 %v3051
  %3210 = vmatpush.msra.mxu0 %v3048
  %3211 = vmatpush.msra.mxu0 %v3045
  %3212 = vmatpush.msra.mxu0 %v3042
  %3213 = vmatpush.msra.mxu0 %v3039
  %3214 = vmatpush.msra.mxu0 %v3036
  %3215 = vmatpush.msra.mxu0 %v3033
  %3216 = vmatpush.msra.mxu0 %v3030
  %3217 = vmatmul.f32.gmra.mxu0 %v2980
  %v3218 = vpop.f32.mrf.mxu0
  %v3219 = vadd.f32 %v3199, %v3218
  %3220 = vdwg.mxu0
  %3221 = vmatpush.msra.mxu0 %v3123
  %3222 = vmatpush.msra.mxu0 %v3120
  %3223 = vmatpush.msra.mxu0 %v3117
  %3224 = vmatpush.msra.mxu0 %v3114
  %3225 = vmatpush.msra.mxu0 %v3111
  %3226 = vmatpush.msra.mxu0 %v3108
  %3227 = vmatpush.msra.mxu0 %v3105
  %3228 = vmatpush.msra.mxu0 %v3102
  %3229 = vmatpush.msra.mxu0 %v3099
  %3230 = vmatpush.msra.mxu0 %v3096
  %3231 = vmatpush.msra.mxu0 %v3093
  %3232 = vmatpush.msra.mxu0 %v3090
  %3233 = vmatpush.msra.mxu0 %v3087
  %3234 = vmatpush.msra.mxu0 %v3084
  %3235 = vmatpush.msra.mxu0 %v3081
  %3236 = vmatpush.msra.mxu0 %v3078
  %3237 = vmatmul.f32.gmra.mxu0 %v2981
  %v3238 = vpop.f32.mrf.mxu0
  %v3239 = vadd.f32 %v3219, %v3238
  %3240 = vdwg.mxu0
  %3241 = vmatpush.msra.mxu0 0.0
  %3242 = vmatpush.msra.mxu0 %v3168
  %3243 = vmatpush.msra.mxu0 %v3165
  %3244 = vmatpush.msra.mxu0 %v3162
  %3245 = vmatpush.msra.mxu0 %v3159
  %3246 = vmatpush.msra.mxu0 %v3156
  %3247 = vmatpush.msra.mxu0 %v3153
  %3248 = vmatpush.msra.mxu0 %v3150
  %3249 = vmatpush.msra.mxu0 %v3147
  %3250 = vmatpush.msra.mxu0 %v3144
  %3251 = vmatpush.msra.mxu0 %v3141
  %3252 = vmatpush.msra.mxu0 %v3138
  %3253 = vmatpush.msra.mxu0 %v3135
  %3254 = vmatpush.msra.mxu0 %v3132
  %3255 = vmatpush.msra.mxu0 %v3129
  %3256 = vmatpush.msra.mxu0 %v3126
  %3257 = vmatmul.f32.gmra.mxu0 %v3179
  %v3258 = vpop.f32.mrf.mxu0
  %v3259 = vadd.f32 %v3239, %v3258
  %3260 = vdwg.mxu0
  %3261 = vmatpush.msra.mxu0 %v3028
  %3262 = vmatpush.msra.mxu0 %v3025
  %3263 = vmatpush.msra.mxu0 %v3022
  %3264 = vmatpush.msra.mxu0 %v3019
  %3265 = vmatpush.msra.mxu0 %v3016
  %3266 = vmatpush.msra.mxu0 %v3013
  %3267 = vmatpush.msra.mxu0 %v3010
  %3268 = vmatpush.msra.mxu0 %v3007
  %3269 = vmatpush.msra.mxu0 %v3004
  %3270 = vmatpush.msra.mxu0 %v3001
  %3271 = vmatpush.msra.mxu0 %v2998
  %3272 = vmatpush.msra.mxu0 %v2995
  %3273 = vmatpush.msra.mxu0 %v2992
  %3274 = vmatpush.msra.mxu0 %v2989
  %3275 = vmatpush.msra.mxu0 %v2986
  %3276 = vmatpush.msra.mxu0 %v2983
  %3277 = vmatmul.f32.gmra.mxu0 %v2959
  %v3278 = vpop.f32.mrf.mxu0
  %v3279 = vadd.f32 %v3174, %v3278
  %3280 = vdwg.mxu0
  %3281 = vmatpush.msra.mxu0 %v3076
  %3282 = vmatpush.msra.mxu0 %v3073
  %3283 = vmatpush.msra.mxu0 %v3070
  %3284 = vmatpush.msra.mxu0 %v3067
  %3285 = vmatpush.msra.mxu0 %v3064
  %3286 = vmatpush.msra.mxu0 %v3061
  %3287 = vmatpush.msra.mxu0 %v3058
  %3288 = vmatpush.msra.mxu0 %v3055
  %3289 = vmatpush.msra.mxu0 %v3052
  %3290 = vmatpush.msra.mxu0 %v3049
  %3291 = vmatpush.msra.mxu0 %v3046
  %3292 = vmatpush.msra.mxu0 %v3043
  %3293 = vmatpush.msra.mxu0 %v3040
  %3294 = vmatpush.msra.mxu0 %v3037
  %3295 = vmatpush.msra.mxu0 %v3034
  %3296 = vmatpush.msra.mxu0 %v3031
  %3297 = vmatmul.f32.gmra.mxu0 %v2980
  %v3298 = vpop.f32.mrf.mxu0
  %v3299 = vadd.f32 %v3279, %v3298
  %3300 = vdwg.mxu0
  %3301 = vmatpush.msra.mxu0 %v3124
  %3302 = vmatpush.msra.mxu0 %v3121
  %3303 = vmatpush.msra.mxu0 %v3118
  %3304 = vmatpush.msra.mxu0 %v3115
  %3305 = vmatpush.msra.mxu0 %v3112
  %3306 = vmatpush.msra.mxu0 %v3109
  %3307 = vmatpush.msra.mxu0 %v3106
  %3308 = vmatpush.msra.mxu0 %v3103
  %3309 = vmatpush.msra.mxu0 %v3100
  %3310 = vmatpush.msra.mxu0 %v3097
  %3311 = vmatpush.msra.mxu0 %v3094
  %3312 = vmatpush.msra.mxu0 %v3091
  %3313 = vmatpush.msra.mxu0 %v3088
  %3314 = vmatpush.msra.mxu0 %v3085
  %3315 = vmatpush.msra.mxu0 %v3082
  %3316 = vmatpush.msra.mxu0 %v3079
  %3317 = vmatmul.f32.gmra.mxu0 %v2981
  %v3318 = vpop.f32.mrf.mxu0
  %v3319 = vadd.f32 %v3299, %v3318
  %3320 = vdwg.mxu0
  %3321 = vmatpush.msra.mxu0 0.0
  %3322 = vmatpush.msra.mxu0 %v3169
  %3323 = vmatpush.msra.mxu0 %v3166
  %3324 = vmatpush.msra.mxu0 %v3163
  %3325 = vmatpush.msra.mxu0 %v3160
  %3326 = vmatpush.msra.mxu0 %v3157
  %3327 = vmatpush.msra.mxu0 %v3154
  %3328 = vmatpush.msra.mxu0 %v3151
  %3329 = vmatpush.msra.mxu0 %v3148
  %3330 = vmatpush.msra.mxu0 %v3145
  %3331 = vmatpush.msra.mxu0 %v3142
  %3332 = vmatpush.msra.mxu0 %v3139
  %3333 = vmatpush.msra.mxu0 %v3136
  %3334 = vmatpush.msra.mxu0 %v3133
  %3335 = vmatpush.msra.mxu0 %v3130
  %3336 = vmatpush.msra.mxu0 %v3127
  %3337 = vmatmul.f32.gmra.mxu0 %v3179
  %v3338 = vpop.f32.mrf.mxu0
  %v3339 = vadd.f32 %v3319, %v3338
  %3340 = vdwg.mxu0
  %3341 = vmatpush.msra.mxu0 %v3029
  %3342 = vmatpush.msra.mxu0 %v3026
  %3343 = vmatpush.msra.mxu0 %v3023
  %3344 = vmatpush.msra.mxu0 %v3020
  %3345 = vmatpush.msra.mxu0 %v3017
  %3346 = vmatpush.msra.mxu0 %v3014
  %3347 = vmatpush.msra.mxu0 %v3011
  %3348 = vmatpush.msra.mxu0 %v3008
  %3349 = vmatpush.msra.mxu0 %v3005
  %3350 = vmatpush.msra.mxu0 %v3002
  %3351 = vmatpush.msra.mxu0 %v2999
  %3352 = vmatpush.msra.mxu0 %v2996
  %3353 = vmatpush.msra.mxu0 %v2993
  %3354 = vmatpush.msra.mxu0 %v2990
  %3355 = vmatpush.msra.mxu0 %v2987
  %3356 = vmatpush.msra.mxu0 %v2984
  %3357 = vmatmul.f32.gmra.mxu0 %v2959
  %v3358 = vpop.f32.mrf.mxu0
  %v3359 = vadd.f32 %v3175, %v3358
  %3360 = vdwg.mxu0
  %3361 = vmatpush.msra.mxu0 %v3077
  %3362 = vmatpush.msra.mxu0 %v3074
  %3363 = vmatpush.msra.mxu0 %v3071
  %3364 = vmatpush.msra.mxu0 %v3068
  %3365 = vmatpush.msra.mxu0 %v3065
  %3366 = vmatpush.msra.mxu0 %v3062
  %3367 = vmatpush.msra.mxu0 %v3059
  %3368 = vmatpush.msra.mxu0 %v3056
  %3369 = vmatpush.msra.mxu0 %v3053
  %3370 = vmatpush.msra.mxu0 %v3050
  %3371 = vmatpush.msra.mxu0 %v3047
  %3372 = vmatpush.msra.mxu0 %v3044
  %3373 = vmatpush.msra.mxu0 %v3041
  %3374 = vmatpush.msra.mxu0 %v3038
  %3375 = vmatpush.msra.mxu0 %v3035
  %3376 = vmatpush.msra.mxu0 %v3032
  %3377 = vmatmul.f32.gmra.mxu0 %v2980
  %v3378 = vpop.f32.mrf.mxu0
  %v3379 = vadd.f32 %v3359, %v3378
  %3380 = vdwg.mxu0
  %3381 = vmatpush.msra.mxu0 %v3125
  %3382 = vmatpush.msra.mxu0 %v3122
  %3383 = vmatpush.msra.mxu0 %v3119
  %3384 = vmatpush.msra.mxu0 %v3116
  %3385 = vmatpush.msra.mxu0 %v3113
  %3386 = vmatpush.msra.mxu0 %v3110
  %3387 = vmatpush.msra.mxu0 %v3107
  %3388 = vmatpush.msra.mxu0 %v3104
  %3389 = vmatpush.msra.mxu0 %v3101
  %3390 = vmatpush.msra.mxu0 %v3098
  %3391 = vmatpush.msra.mxu0 %v3095
  %3392 = vmatpush.msra.mxu0 %v3092
  %3393 = vmatpush.msra.mxu0 %v3089
  %3394 = vmatpush.msra.mxu0 %v3086
  %3395 = vmatpush.msra.mxu0 %v3083
  %3396 = vmatpush.msra.mxu0 %v3080
  %3397 = vmatmul.f32.gmra.mxu0 %v2981
  %v3398 = vpop.f32.mrf.mxu0
  %v3399 = vadd.f32 %v3379, %v3398
  %3400 = vdwg.mxu0
  %3401 = vmatpush.msra.mxu0 0.0
  %3402 = vmatpush.msra.mxu0 %v3170
  %3403 = vmatpush.msra.mxu0 %v3167
  %3404 = vmatpush.msra.mxu0 %v3164
  %3405 = vmatpush.msra.mxu0 %v3161
  %3406 = vmatpush.msra.mxu0 %v3158
  %3407 = vmatpush.msra.mxu0 %v3155
  %3408 = vmatpush.msra.mxu0 %v3152
  %3409 = vmatpush.msra.mxu0 %v3149
  %3410 = vmatpush.msra.mxu0 %v3146
  %3411 = vmatpush.msra.mxu0 %v3143
  %3412 = vmatpush.msra.mxu0 %v3140
  %3413 = vmatpush.msra.mxu0 %v3137
  %3414 = vmatpush.msra.mxu0 %v3134
  %3415 = vmatpush.msra.mxu0 %v3131
  %3416 = vmatpush.msra.mxu0 %v3128
  %3417 = vmatmul.f32.gmra.mxu0 %v3179
  %v3418 = vpop.f32.mrf.mxu0
  %v3419 = vadd.f32 %v3399, %v3418
  %3420 = vdwg.mxu0
  %v3421 = vtanh.pop %v3259
  %v3422 = vtanh.pop %v3339
  %v3423 = vtanh.pop %v3419
  %3426 = vrot.lane.b32.xlu0 %v3421, 48
  %v3427 = vpop.permute.xlu0 %3426
  %3428 = vrot.lane.b32.xlu0 %v3422, 48
  %v3429 = vpop.permute.xlu0 %3428
  %v3430 = vsel %vm488, %v3427, %v3429
  %v3432 = vadd.f32 %v3421, %v3430
  %3433 = vrot.lane.b32.xlu0 %v3422, 96
  %v3434 = vpop.permute.xlu0 %3433
  %v3436 = vadd.f32 %v3432, %v3434
  %3438 = vrot.lane.b32.xlu0 %v3422, 16
  %v3439 = vpop.permute.xlu0 %3438
  %3440 = vrot.lane.b32.xlu0 %v3423, 16
  %v3441 = vpop.permute.xlu0 %3440
  %v3442 = vsel %vm501, %v3439, %v3441
  %v3444 = vadd.f32 %v3436, %v3442
  %v3445 = vmul.f32 %v3444, 0.25
  %s3446 = scalar_lea.vmem %s3, 48
  %3447 = vst.msk [vmem:[%s3446] sm:$0x1f] %vm506, %v3445
  %s3448 = scalar_lea.vmem %s0, 112
  %v3449 = vld [vmem:[%s3448] sm:$0x7f]
  %v3450 = vld [vmem:[%s3448 + $0x8] sm:$0x7f]
  %v3453 = vrot.slane %v3449, 1
  %v3454 = vrot.slane %v3450, 1
  %3455 = vrot.lane.b32.xlu0 %v3453, 40
  %v3456 = vpop.permute.xlu0 %3455
  %3457 = vrot.lane.b32.xlu0 %v3454, 40
  %v3458 = vpop.permute.xlu0 %3457
  %v3459 = vsel %vm24, %v3456, %v3458
  %v3462 = vrot.slane %v3449, 2
  %v3463 = vrot.slane %v3450, 2
  %3464 = vrot.lane.b32.xlu0 %v3462, 80
  %v3465 = vpop.permute.xlu0 %3464
  %3466 = vrot.lane.b32.xlu0 %v3463, 80
  %v3467 = vpop.permute.xlu0 %3466
  %v3468 = vsel %vm34, %v3465, %v3467
  %v3470 = vsel %vm24, %v3450, %v3456
  %v3471 = vsel %vm34, %v3459, %v3465
  %v3472 = vld [vmem:[%s1] sm:$0xff]
  %v3473 = vld [vmem:[%s1 + $0x8] sm:$0xff]
  %v3474 = vld [vmem:[%s1 + $0x10] sm:$0xff]
  %v3475 = vld [vmem:[%s1 + $0x18] sm:$0xff]
  %v3476 = vld [vmem:[%s1 + $0x20] sm:$0xff]
  %v3477 = vld [vmem:[%s1 + $0x28] sm:$0xff]
  %v3478 = vld [vmem:[%s1 + $0x30] sm:$0xff]
  %v3479 = vld [vmem:[%s1 + $0x38] sm:$0xff]
  %v3480 = vld [vmem:[%s1 + $0x40] sm:$0xff]
  %v3481 = vld [vmem:[%s1 + $0x48] sm:$0xff]
  %v3482 = vld [vmem:[%s1 + $0x50] sm:$0xff]
  %v3483 = vld [vmem:[%s1 + $0x58] sm:$0xff]
  %v3484 = vld [vmem:[%s1 + $0x60] sm:$0xff]
  %v3485 = vld [vmem:[%s1 + $0x68] sm:$0xff]
  %v3486 = vld [vmem:[%s1 + $0x70] sm:$0xff]
  %v3487 = vld [vmem:[%s1 + $0x78] sm:$0xff]
  %v3488 = vld [vmem:[%s1 + $0x80] sm:$0xff]
  %v3489 = vld [vmem:[%s1 + $0x88] sm:$0xff]
  %v3490 = vld [vmem:[%s1 + $0x90] sm:$0xff]
  %v3491 = vld [vmem:[%s1 + $0x98] sm:$0xff]
  %v3492 = vld [vmem:[%s1 + $0xa0] sm:$0xff]
  %v3493 = vld [vmem:[%s1 + $0xa8] sm:$0xff]
  %v3494 = vld [vmem:[%s1 + $0xb0] sm:$0xff]
  %v3495 = vld [vmem:[%s1 + $0xb8] sm:$0xff]
  %v3496 = vld [vmem:[%s1 + $0xc0] sm:$0xff]
  %v3497 = vld [vmem:[%s1 + $0xc8] sm:$0xff]
  %v3498 = vld [vmem:[%s1 + $0xd0] sm:$0xff]
  %v3499 = vld [vmem:[%s1 + $0xd8] sm:$0xff]
  %v3500 = vld [vmem:[%s1 + $0xe0] sm:$0xff]
  %v3501 = vld [vmem:[%s1 + $0xe8] sm:$0xff]
  %v3502 = vld [vmem:[%s1 + $0xf0] sm:$0xff]
  %v3503 = vld [vmem:[%s1 + $0xf8] sm:$0xff]
  %v3504 = vld [vmem:[%s1 + $0x100] sm:$0xff]
  %v3505 = vld [vmem:[%s1 + $0x108] sm:$0xff]
  %v3506 = vld [vmem:[%s1 + $0x110] sm:$0xff]
  %v3507 = vld [vmem:[%s1 + $0x118] sm:$0xff]
  %v3508 = vld [vmem:[%s1 + $0x120] sm:$0xff]
  %v3509 = vld [vmem:[%s1 + $0x128] sm:$0xff]
  %v3510 = vld [vmem:[%s1 + $0x130] sm:$0xff]
  %v3511 = vld [vmem:[%s1 + $0x138] sm:$0xff]
  %v3512 = vld [vmem:[%s1 + $0x140] sm:$0xff]
  %v3513 = vld [vmem:[%s1 + $0x148] sm:$0xff]
  %v3514 = vld [vmem:[%s1 + $0x150] sm:$0xff]
  %v3515 = vld [vmem:[%s1 + $0x158] sm:$0xff]
  %v3516 = vld [vmem:[%s1 + $0x160] sm:$0xff]
  %v3517 = vld [vmem:[%s1 + $0x168] sm:$0xff]
  %v3518 = vld [vmem:[%s1 + $0x170] sm:$0xff]
  %v3519 = vld [vmem:[%s1 + $0x178] sm:$0xff]
  %v3520 = vld [vmem:[%s1 + $0x180] sm:$0xff]
  %v3521 = vld [vmem:[%s1 + $0x188] sm:$0xff]
  %v3522 = vld [vmem:[%s1 + $0x190] sm:$0xff]
  %v3523 = vld [vmem:[%s1 + $0x198] sm:$0xff]
  %v3524 = vld [vmem:[%s1 + $0x1a0] sm:$0xff]
  %v3525 = vld [vmem:[%s1 + $0x1a8] sm:$0xff]
  %v3526 = vld [vmem:[%s1 + $0x1b0] sm:$0xff]
  %v3527 = vld [vmem:[%s1 + $0x1b8] sm:$0xff]
  %v3528 = vld [vmem:[%s1 + $0x1c0] sm:$0xff]
  %v3529 = vld [vmem:[%s1 + $0x1c8] sm:$0xff]
  %v3530 = vld [vmem:[%s1 + $0x1d0] sm:$0xff]
  %v3531 = vld [vmem:[%s1 + $0x1d8] sm:$0xff]
  %v3532 = vld [vmem:[%s1 + $0x1e0] sm:$0xff]
  %v3533 = vld [vmem:[%s1 + $0x1e8] sm:$0xff]
  %v3534 = vld [vmem:[%s1 + $0x1f0] sm:$0xff]
  %v3535 = vld [vmem:[%s1 + $0x1f8] sm:$0xff]
  %v3536 = vld [vmem:[%s1 + $0x200] sm:$0xff]
  %v3537 = vld [vmem:[%s1 + $0x208] sm:$0xff]
  %v3538 = vld [vmem:[%s1 + $0x210] sm:$0xff]
  %v3539 = vld [vmem:[%s1 + $0x218] sm:$0xff]
  %v3540 = vld [vmem:[%s1 + $0x220] sm:$0xff]
  %v3541 = vld [vmem:[%s1 + $0x228] sm:$0xff]
  %v3542 = vld [vmem:[%s1 + $0x230] sm:$0xff]
  %v3543 = vld [vmem:[%s1 + $0x238] sm:$0xff]
  %v3544 = vld [vmem:[%s1 + $0x240] sm:$0xff]
  %v3545 = vld [vmem:[%s1 + $0x248] sm:$0xff]
  %v3546 = vld [vmem:[%s1 + $0x250] sm:$0xff]
  %v3547 = vld [vmem:[%s1 + $0x258] sm:$0xff]
  %v3548 = vld [vmem:[%s1 + $0x260] sm:$0xff]
  %v3549 = vld [vmem:[%s1 + $0x268] sm:$0xff]
  %v3550 = vld [vmem:[%s1 + $0x270] sm:$0xff]
  %v3551 = vld [vmem:[%s1 + $0x278] sm:$0xff]
  %v3552 = vld [vmem:[%s1 + $0x280] sm:$0xff]
  %v3553 = vld [vmem:[%s1 + $0x288] sm:$0xff]
  %v3554 = vld [vmem:[%s1 + $0x290] sm:$0xff]
  %v3555 = vld [vmem:[%s1 + $0x298] sm:$0xff]
  %v3556 = vld [vmem:[%s1 + $0x2a0] sm:$0xff]
  %v3557 = vld [vmem:[%s1 + $0x2a8] sm:$0xff]
  %v3558 = vld [vmem:[%s1 + $0x2b0] sm:$0xff]
  %v3559 = vld [vmem:[%s1 + $0x2b8] sm:$0xff]
  %v3560 = vld [vmem:[%s1 + $0x2c0] sm:$0xff]
  %v3561 = vld [vmem:[%s1 + $0x2c8] sm:$0xff]
  %v3562 = vld [vmem:[%s1 + $0x2d0] sm:$0xff]
  %v3563 = vld [vmem:[%s1 + $0x2d8] sm:$0xff]
  %v3564 = vld [vmem:[%s1 + $0x2e0] sm:$0xff]
  %v3565 = vld [vmem:[%s1 + $0x2e8] sm:$0xff]
  %v3566 = vld [vmem:[%s1 + $0x2f0] sm:$0xff]
  %v3567 = vld [vmem:[%s1 + $0x2f8] sm:$0xff]
  %v3568 = vld [vmem:[%s1 + $0x300] sm:$0xff]
  %v3569 = vld [vmem:[%s1 + $0x308] sm:$0xff]
  %v3570 = vld [vmem:[%s1 + $0x310] sm:$0xff]
  %v3571 = vld [vmem:[%s1 + $0x318] sm:$0xff]
  %v3572 = vld [vmem:[%s1 + $0x320] sm:$0xff]
  %v3573 = vld [vmem:[%s1 + $0x328] sm:$0xff]
  %v3574 = vld [vmem:[%s1 + $0x330] sm:$0xff]
  %v3575 = vld [vmem:[%s1 + $0x338] sm:$0xff]
  %v3576 = vld [vmem:[%s1 + $0x340] sm:$0xff]
  %v3577 = vld [vmem:[%s1 + $0x348] sm:$0xff]
  %v3578 = vld [vmem:[%s1 + $0x350] sm:$0xff]
  %v3579 = vld [vmem:[%s1 + $0x358] sm:$0xff]
  %v3580 = vld [vmem:[%s1 + $0x360] sm:$0xff]
  %v3581 = vld [vmem:[%s1 + $0x368] sm:$0xff]
  %v3582 = vld [vmem:[%s1 + $0x370] sm:$0xff]
  %v3583 = vld [vmem:[%s1 + $0x378] sm:$0xff]
  %v3584 = vld [vmem:[%s1 + $0x380] sm:$0xff]
  %v3585 = vld [vmem:[%s1 + $0x388] sm:$0xff]
  %v3586 = vld [vmem:[%s1 + $0x390] sm:$0xff]
  %v3587 = vld [vmem:[%s1 + $0x398] sm:$0xff]
  %v3588 = vld [vmem:[%s1 + $0x3a0] sm:$0xff]
  %v3589 = vld [vmem:[%s1 + $0x3a8] sm:$0xff]
  %v3590 = vld [vmem:[%s1 + $0x3b0] sm:$0xff]
  %v3591 = vld [vmem:[%s1 + $0x3b8] sm:$0xff]
  %v3592 = vld [vmem:[%s1 + $0x3c0] sm:$0xff]
  %v3593 = vld [vmem:[%s1 + $0x3c8] sm:$0xff]
  %v3594 = vld [vmem:[%s1 + $0x3d0] sm:$0xff]
  %v3595 = vld [vmem:[%s1 + $0x3d8] sm:$0xff]
  %v3596 = vld [vmem:[%s1 + $0x3e0] sm:$0xff]
  %v3597 = vld [vmem:[%s1 + $0x3e8] sm:$0xff]
  %v3598 = vld [vmem:[%s1 + $0x3f0] sm:$0xff]
  %v3599 = vld [vmem:[%s1 + $0x3f8] sm:$0xff]
  %v3600 = vld [vmem:[%s1 + $0x400] sm:$0xff]
  %v3601 = vld [vmem:[%s1 + $0x408] sm:$0xff]
  %v3602 = vld [vmem:[%s1 + $0x410] sm:$0xff]
  %v3603 = vld [vmem:[%s1 + $0x418] sm:$0xff]
  %v3604 = vld [vmem:[%s1 + $0x420] sm:$0xff]
  %v3605 = vld [vmem:[%s1 + $0x428] sm:$0xff]
  %v3606 = vld [vmem:[%s1 + $0x430] sm:$0xff]
  %v3607 = vld [vmem:[%s1 + $0x438] sm:$0xff]
  %v3608 = vld [vmem:[%s1 + $0x440] sm:$0xff]
  %v3609 = vld [vmem:[%s1 + $0x448] sm:$0xff]
  %v3610 = vld [vmem:[%s1 + $0x450] sm:$0xff]
  %v3611 = vld [vmem:[%s1 + $0x458] sm:$0xff]
  %v3612 = vld [vmem:[%s1 + $0x460] sm:$0xff]
  %v3613 = vld [vmem:[%s1 + $0x468] sm:$0xff]
  %v3614 = vld [vmem:[%s1 + $0x470] sm:$0xff]
  %v3615 = vld [vmem:[%s1 + $0x478] sm:$0xff]
  %v3616 = vld [vmem:[%s1 + $0x480] sm:$0xff]
  %v3617 = vld [vmem:[%s1 + $0x488] sm:$0xff]
  %v3618 = vld [vmem:[%s1 + $0x490] sm:$0xff]
  %v3619 = vld [vmem:[%s1 + $0x498] sm:$0xff]
  %v3620 = vld [vmem:[%s1 + $0x4a0] sm:$0xff]
  %v3621 = vld [vmem:[%s1 + $0x4a8] sm:$0xff]
  %v3622 = vld [vmem:[%s1 + $0x4b0] sm:$0xff]
  %v3623 = vld [vmem:[%s1 + $0x4b8] sm:$0xff]
  %v3624 = vld [vmem:[%s1 + $0x4c0] sm:$0xff]
  %v3625 = vld [vmem:[%s1 + $0x4c8] sm:$0xff]
  %v3626 = vld [vmem:[%s1 + $0x4d0] sm:$0xff]
  %v3627 = vld [vmem:[%s1 + $0x4d8] sm:$0xff]
  %v3628 = vld [vmem:[%s1 + $0x4e0] sm:$0xff]
  %v3629 = vld [vmem:[%s1 + $0x4e8] sm:$0xff]
  %v3630 = vld [vmem:[%s1 + $0x4f0] sm:$0xff]
  %v3631 = vld [vmem:[%s1 + $0x4f8] sm:$0xff]
  %v3632 = vld [vmem:[%s1 + $0x500] sm:$0xff]
  %v3633 = vld [vmem:[%s1 + $0x508] sm:$0xff]
  %v3634 = vld [vmem:[%s1 + $0x510] sm:$0xff]
  %v3635 = vld [vmem:[%s1 + $0x518] sm:$0xff]
  %v3636 = vld [vmem:[%s1 + $0x520] sm:$0xff]
  %v3637 = vld [vmem:[%s1 + $0x528] sm:$0xff]
  %v3638 = vld [vmem:[%s1 + $0x530] sm:$0xff]
  %v3639 = vld [vmem:[%s1 + $0x538] sm:$0xff]
  %v3640 = vld [vmem:[%s1 + $0x540] sm:$0xff]
  %v3641 = vld [vmem:[%s1 + $0x548] sm:$0xff]
  %v3642 = vld [vmem:[%s1 + $0x550] sm:$0xff]
  %v3643 = vld [vmem:[%s1 + $0x558] sm:$0xff]
  %v3644 = vld [vmem:[%s1 + $0x560] sm:$0xff]
  %v3645 = vld [vmem:[%s1 + $0x568] sm:$0xff]
  %v3646 = vld [vmem:[%s1 + $0x570] sm:$0xff]
  %v3647 = vld [vmem:[%s1 + $0x578] sm:$0xff]
  %v3648 = vld [vmem:[%s1 + $0x580] sm:$0xff]
  %v3649 = vld [vmem:[%s1 + $0x588] sm:$0xff]
  %v3650 = vld [vmem:[%s1 + $0x590] sm:$0xff]
  %v3651 = vld [vmem:[%s1 + $0x598] sm:$0xff]
  %v3652 = vld [vmem:[%s1 + $0x5a0] sm:$0xff]
  %v3653 = vld [vmem:[%s1 + $0x5a8] sm:$0xff]
  %v3654 = vld [vmem:[%s1 + $0x5b0] sm:$0xff]
  %v3655 = vld [vmem:[%s1 + $0x5b8] sm:$0xff]
  %v3656 = vld [vmem:[%s1 + $0x5c0] sm:$0xff]
  %v3657 = vld [vmem:[%s1 + $0x5c8] sm:$0xff]
  %v3658 = vld [vmem:[%s1 + $0x5d0] sm:$0xff]
  %v3659 = vld [vmem:[%s1 + $0x5d8] sm:$0xff]
  %v3660 = vld [vmem:[%s1 + $0x5e0] sm:$0xff]
  %v3661 = vld [vmem:[%s2] sm:$0x7]
  %v3663 = vperm.slane %v3661, 0
  %v3664 = vperm.slane %v3661, 1
  %v3665 = vperm.slane %v3661, 2
  %v3669 = vsel %vm236, %v3468, 0
  %3671 = vmatpush.msra.mxu0 %v3517
  %3672 = vmatpush.msra.mxu0 %v3514
  %3673 = vmatpush.msra.mxu0 %v3511
  %3674 = vmatpush.msra.mxu0 %v3508
  %3675 = vmatpush.msra.mxu0 %v3505
  %3676 = vmatpush.msra.mxu0 %v3502
  %3677 = vmatpush.msra.mxu0 %v3499
  %3678 = vmatpush.msra.mxu0 %v3496
  %3679 = vmatpush.msra.mxu0 %v3493
  %3680 = vmatpush.msra.mxu0 %v3490
  %3681 = vmatpush.msra.mxu0 %v3487
  %3682 = vmatpush.msra.mxu0 %v3484
  %3683 = vmatpush.msra.mxu0 %v3481
  %3684 = vmatpush.msra.mxu0 %v3478
  %3685 = vmatpush.msra.mxu0 %v3475
  %3686 = vmatpush.msra.mxu0 %v3472
  %3687 = vmatmul.f32.gmra.mxu0 %v3449
  %v3688 = vpop.f32.mrf.mxu0
  %v3689 = vadd.f32 %v3663, %v3688
  %3690 = vdwg.mxu0
  %3691 = vmatpush.msra.mxu0 %v3565
  %3692 = vmatpush.msra.mxu0 %v3562
  %3693 = vmatpush.msra.mxu0 %v3559
  %3694 = vmatpush.msra.mxu0 %v3556
  %3695 = vmatpush.msra.mxu0 %v3553
  %3696 = vmatpush.msra.mxu0 %v3550
  %3697 = vmatpush.msra.mxu0 %v3547
  %3698 = vmatpush.msra.mxu0 %v3544
  %3699 = vmatpush.msra.mxu0 %v3541
  %3700 = vmatpush.msra.mxu0 %v3538
  %3701 = vmatpush.msra.mxu0 %v3535
  %3702 = vmatpush.msra.mxu0 %v3532
  %3703 = vmatpush.msra.mxu0 %v3529
  %3704 = vmatpush.msra.mxu0 %v3526
  %3705 = vmatpush.msra.mxu0 %v3523
  %3706 = vmatpush.msra.mxu0 %v3520
  %3707 = vmatmul.f32.gmra.mxu0 %v3470
  %v3708 = vpop.f32.mrf.mxu0
  %v3709 = vadd.f32 %v3689, %v3708
  %3710 = vdwg.mxu0
  %3711 = vmatpush.msra.mxu0 %v3613
  %3712 = vmatpush.msra.mxu0 %v3610
  %3713 = vmatpush.msra.mxu0 %v3607
  %3714 = vmatpush.msra.mxu0 %v3604
  %3715 = vmatpush.msra.mxu0 %v3601
  %3716 = vmatpush.msra.mxu0 %v3598
  %3717 = vmatpush.msra.mxu0 %v3595
  %3718 = vmatpush.msra.mxu0 %v3592
  %3719 = vmatpush.msra.mxu0 %v3589
  %3720 = vmatpush.msra.mxu0 %v3586
  %3721 = vmatpush.msra.mxu0 %v3583
  %3722 = vmatpush.msra.mxu0 %v3580
  %3723 = vmatpush.msra.mxu0 %v3577
  %3724 = vmatpush.msra.mxu0 %v3574
  %3725 = vmatpush.msra.mxu0 %v3571
  %3726 = vmatpush.msra.mxu0 %v3568
  %3727 = vmatmul.f32.gmra.mxu0 %v3471
  %v3728 = vpop.f32.mrf.mxu0
  %v3729 = vadd.f32 %v3709, %v3728
  %3730 = vdwg.mxu0
  %3731 = vmatpush.msra.mxu0 0.0
  %3732 = vmatpush.msra.mxu0 %v3658
  %3733 = vmatpush.msra.mxu0 %v3655
  %3734 = vmatpush.msra.mxu0 %v3652
  %3735 = vmatpush.msra.mxu0 %v3649
  %3736 = vmatpush.msra.mxu0 %v3646
  %3737 = vmatpush.msra.mxu0 %v3643
  %3738 = vmatpush.msra.mxu0 %v3640
  %3739 = vmatpush.msra.mxu0 %v3637
  %3740 = vmatpush.msra.mxu0 %v3634
  %3741 = vmatpush.msra.mxu0 %v3631
  %3742 = vmatpush.msra.mxu0 %v3628
  %3743 = vmatpush.msra.mxu0 %v3625
  %3744 = vmatpush.msra.mxu0 %v3622
  %3745 = vmatpush.msra.mxu0 %v3619
  %3746 = vmatpush.msra.mxu0 %v3616
  %3747 = vmatmul.f32.gmra.mxu0 %v3669
  %v3748 = vpop.f32.mrf.mxu0
  %v3749 = vadd.f32 %v3729, %v3748
  %3750 = vdwg.mxu0
  %3751 = vmatpush.msra.mxu0 %v3518
  %3752 = vmatpush.msra.mxu0 %v3515
  %3753 = vmatpush.msra.mxu0 %v3512
  %3754 = vmatpush.msra.mxu0 %v3509
  %3755 = vmatpush.msra.mxu0 %v3506
  %3756 = vmatpush.msra.mxu0 %v3503
  %3757 = vmatpush.msra.mxu0 %v3500
  %3758 = vmatpush.msra.mxu0 %v3497
  %3759 = vmatpush.msra.mxu0 %v3494
  %3760 = vmatpush.msra.mxu0 %v3491
  %3761 = vmatpush.msra.mxu0 %v3488
  %3762 = vmatpush.msra.mxu0 %v3485
  %3763 = vmatpush.msra.mxu0 %v3482
  %3764 = vmatpush.msra.mxu0 %v3479
  %3765 = vmatpush.msra.mxu0 %v3476
  %3766 = vmatpush.msra.mxu0 %v3473
  %3767 = vmatmul.f32.gmra.mxu0 %v3449
  %v3768 = vpop.f32.mrf.mxu0
  %v3769 = vadd.f32 %v3664, %v3768
  %3770 = vdwg.mxu0
  %3771 = vmatpush.msra.mxu0 %v3566
  %3772 = vmatpush.msra.mxu0 %v3563
  %3773 = vmatpush.msra.mxu0 %v3560
  %3774 = vmatpush.msra.mxu0 %v3557
  %3775 = vmatpush.msra.mxu0 %v3554
  %3776 = vmatpush.msra.mxu0 %v3551
  %3777 = vmatpush.msra.mxu0 %v3548
  %3778 = vmatpush.msra.mxu0 %v3545
  %3779 = vmatpush.msra.mxu0 %v3542
  %3780 = vmatpush.msra.mxu0 %v3539
  %3781 = vmatpush.msra.mxu0 %v3536
  %3782 = vmatpush.msra.mxu0 %v3533
  %3783 = vmatpush.msra.mxu0 %v3530
  %3784 = vmatpush.msra.mxu0 %v3527
  %3785 = vmatpush.msra.mxu0 %v3524
  %3786 = vmatpush.msra.mxu0 %v3521
  %3787 = vmatmul.f32.gmra.mxu0 %v3470
  %v3788 = vpop.f32.mrf.mxu0
  %v3789 = vadd.f32 %v3769, %v3788
  %3790 = vdwg.mxu0
  %3791 = vmatpush.msra.mxu0 %v3614
  %3792 = vmatpush.msra.mxu0 %v3611
  %3793 = vmatpush.msra.mxu0 %v3608
  %3794 = vmatpush.msra.mxu0 %v3605
  %3795 = vmatpush.msra.mxu0 %v3602
  %3796 = vmatpush.msra.mxu0 %v3599
  %3797 = vmatpush.msra.mxu0 %v3596
  %3798 = vmatpush.msra.mxu0 %v3593
  %3799 = vmatpush.msra.mxu0 %v3590
  %3800 = vmatpush.msra.mxu0 %v3587
  %3801 = vmatpush.msra.mxu0 %v3584
  %3802 = vmatpush.msra.mxu0 %v3581
  %3803 = vmatpush.msra.mxu0 %v3578
  %3804 = vmatpush.msra.mxu0 %v3575
  %3805 = vmatpush.msra.mxu0 %v3572
  %3806 = vmatpush.msra.mxu0 %v3569
  %3807 = vmatmul.f32.gmra.mxu0 %v3471
  %v3808 = vpop.f32.mrf.mxu0
  %v3809 = vadd.f32 %v3789, %v3808
  %3810 = vdwg.mxu0
  %3811 = vmatpush.msra.mxu0 0.0
  %3812 = vmatpush.msra.mxu0 %v3659
  %3813 = vmatpush.msra.mxu0 %v3656
  %3814 = vmatpush.msra.mxu0 %v3653
  %3815 = vmatpush.msra.mxu0 %v3650
  %3816 = vmatpush.msra.mxu0 %v3647
  %3817 = vmatpush.msra.mxu0 %v3644
  %3818 = vmatpush.msra.mxu0 %v3641
  %3819 = vmatpush.msra.mxu0 %v3638
  %3820 = vmatpush.msra.mxu0 %v3635
  %3821 = vmatpush.msra.mxu0 %v3632
  %3822 = vmatpush.msra.mxu0 %v3629
  %3823 = vmatpush.msra.mxu0 %v3626
  %3824 = vmatpush.msra.mxu0 %v3623
  %3825 = vmatpush.msra.mxu0 %v3620
  %3826 = vmatpush.msra.mxu0 %v3617
  %3827 = vmatmul.f32.gmra.mxu0 %v3669
  %v3828 = vpop.f32.mrf.mxu0
  %v3829 = vadd.f32 %v3809, %v3828
  %3830 = vdwg.mxu0
  %3831 = vmatpush.msra.mxu0 %v3519
  %3832 = vmatpush.msra.mxu0 %v3516
  %3833 = vmatpush.msra.mxu0 %v3513
  %3834 = vmatpush.msra.mxu0 %v3510
  %3835 = vmatpush.msra.mxu0 %v3507
  %3836 = vmatpush.msra.mxu0 %v3504
  %3837 = vmatpush.msra.mxu0 %v3501
  %3838 = vmatpush.msra.mxu0 %v3498
  %3839 = vmatpush.msra.mxu0 %v3495
  %3840 = vmatpush.msra.mxu0 %v3492
  %3841 = vmatpush.msra.mxu0 %v3489
  %3842 = vmatpush.msra.mxu0 %v3486
  %3843 = vmatpush.msra.mxu0 %v3483
  %3844 = vmatpush.msra.mxu0 %v3480
  %3845 = vmatpush.msra.mxu0 %v3477
  %3846 = vmatpush.msra.mxu0 %v3474
  %3847 = vmatmul.f32.gmra.mxu0 %v3449
  %v3848 = vpop.f32.mrf.mxu0
  %v3849 = vadd.f32 %v3665, %v3848
  %3850 = vdwg.mxu0
  %3851 = vmatpush.msra.mxu0 %v3567
  %3852 = vmatpush.msra.mxu0 %v3564
  %3853 = vmatpush.msra.mxu0 %v3561
  %3854 = vmatpush.msra.mxu0 %v3558
  %3855 = vmatpush.msra.mxu0 %v3555
  %3856 = vmatpush.msra.mxu0 %v3552
  %3857 = vmatpush.msra.mxu0 %v3549
  %3858 = vmatpush.msra.mxu0 %v3546
  %3859 = vmatpush.msra.mxu0 %v3543
  %3860 = vmatpush.msra.mxu0 %v3540
  %3861 = vmatpush.msra.mxu0 %v3537
  %3862 = vmatpush.msra.mxu0 %v3534
  %3863 = vmatpush.msra.mxu0 %v3531
  %3864 = vmatpush.msra.mxu0 %v3528
  %3865 = vmatpush.msra.mxu0 %v3525
  %3866 = vmatpush.msra.mxu0 %v3522
  %3867 = vmatmul.f32.gmra.mxu0 %v3470
  %v3868 = vpop.f32.mrf.mxu0
  %v3869 = vadd.f32 %v3849, %v3868
  %3870 = vdwg.mxu0
  %3871 = vmatpush.msra.mxu0 %v3615
  %3872 = vmatpush.msra.mxu0 %v3612
  %3873 = vmatpush.msra.mxu0 %v3609
  %3874 = vmatpush.msra.mxu0 %v3606
  %3875 = vmatpush.msra.mxu0 %v3603
  %3876 = vmatpush.msra.mxu0 %v3600
  %3877 = vmatpush.msra.mxu0 %v3597
  %3878 = vmatpush.msra.mxu0 %v3594
  %3879 = vmatpush.msra.mxu0 %v3591
  %3880 = vmatpush.msra.mxu0 %v3588
  %3881 = vmatpush.msra.mxu0 %v3585
  %3882 = vmatpush.msra.mxu0 %v3582
  %3883 = vmatpush.msra.mxu0 %v3579
  %3884 = vmatpush.msra.mxu0 %v3576
  %3885 = vmatpush.msra.mxu0 %v3573
  %3886 = vmatpush.msra.mxu0 %v3570
  %3887 = vmatmul.f32.gmra.mxu0 %v3471
  %v3888 = vpop.f32.mrf.mxu0
  %v3889 = vadd.f32 %v3869, %v3888
  %3890 = vdwg.mxu0
  %3891 = vmatpush.msra.mxu0 0.0
  %3892 = vmatpush.msra.mxu0 %v3660
  %3893 = vmatpush.msra.mxu0 %v3657
  %3894 = vmatpush.msra.mxu0 %v3654
  %3895 = vmatpush.msra.mxu0 %v3651
  %3896 = vmatpush.msra.mxu0 %v3648
  %3897 = vmatpush.msra.mxu0 %v3645
  %3898 = vmatpush.msra.mxu0 %v3642
  %3899 = vmatpush.msra.mxu0 %v3639
  %3900 = vmatpush.msra.mxu0 %v3636
  %3901 = vmatpush.msra.mxu0 %v3633
  %3902 = vmatpush.msra.mxu0 %v3630
  %3903 = vmatpush.msra.mxu0 %v3627
  %3904 = vmatpush.msra.mxu0 %v3624
  %3905 = vmatpush.msra.mxu0 %v3621
  %3906 = vmatpush.msra.mxu0 %v3618
  %3907 = vmatmul.f32.gmra.mxu0 %v3669
  %v3908 = vpop.f32.mrf.mxu0
  %v3909 = vadd.f32 %v3889, %v3908
  %3910 = vdwg.mxu0
  %v3911 = vtanh.pop %v3749
  %v3912 = vtanh.pop %v3829
  %v3913 = vtanh.pop %v3909
  %3916 = vrot.lane.b32.xlu0 %v3911, 48
  %v3917 = vpop.permute.xlu0 %3916
  %3918 = vrot.lane.b32.xlu0 %v3912, 48
  %v3919 = vpop.permute.xlu0 %3918
  %v3920 = vsel %vm488, %v3917, %v3919
  %v3922 = vadd.f32 %v3911, %v3920
  %3923 = vrot.lane.b32.xlu0 %v3912, 96
  %v3924 = vpop.permute.xlu0 %3923
  %v3926 = vadd.f32 %v3922, %v3924
  %3928 = vrot.lane.b32.xlu0 %v3912, 16
  %v3929 = vpop.permute.xlu0 %3928
  %3930 = vrot.lane.b32.xlu0 %v3913, 16
  %v3931 = vpop.permute.xlu0 %3930
  %v3932 = vsel %vm501, %v3929, %v3931
  %v3934 = vadd.f32 %v3926, %v3932
  %v3935 = vmul.f32 %v3934, 0.25
  %s3936 = scalar_lea.vmem %s3, 56
  %3937 = vst.msk [vmem:[%s3936] sm:$0x1f] %vm506, %v3935
  // Predicated region
  $region14: #{lenet5_forward.4} parent=0 // pred_check
    _
  $region15: #{lenet5_forward.4} parent=0 // pred_check_branch
    %3939 = sbr.rel (0) target = $region17
  $region16: #{lenet5_forward.4} parent=0 // pred_region
    _
  $region17: #{lenet5_forward.4} parent=0 // pred_fallthru
    _
  // Predicated region
  $region18: #{lenet5_forward.4} parent=0 // pred_check
    _
  $region19: #{lenet5_forward.4} parent=0 // pred_check_branch
    %3941 = sbr.rel (0) target = $region21
  $region20: #{lenet5_forward.4} parent=0 // pred_region
    _
  $region21: #{lenet5_forward.4} parent=0 // pred_fallthru
    _

</llo_original>
